<compile_context>
chip_gen: v5e
topology: v5e:2x2
jax: 0.10.0
libtpu: 0.0.40
codegen_flags: <defaults>
</compile_context>

<pallas_src>
import math

import jax
import jax.numpy as jnp
from jax.experimental import pallas as pl
from jax.experimental.pallas import tpu as pltpu

MAX_HAND = 14
NUM_HAI = 34
TOKEN_PAD = 34

# Small hyper-parameters consistent with the module's constructor (scaled down).
D_MODEL = 32
N_HEAD = 4
NUM_LAYERS = 2
DIM_FF = 64
HEAD_DIM = D_MODEL // N_HEAD
S_PAD = 16                  # seq 14 padded to 16 (sublane-friendly)
HEAD_OUT_PAD = 128          # head output padded 34 -> 128 lanes (dense vst)
NEG_INF = -1e9
LN_EPS = 1e-5
B_TILE_MAX = 64             # batch-tile cap; ~3 MiB live intermediates at bt=64


# ----------------------------------------------------------------------------
# math helpers (usable inside kernels)
# ----------------------------------------------------------------------------
def _gelu_tanh(x):
    # tanh-approximate GELU: single EUP tanh, ~half the VALU ops of an erf poly.
    # Max abs deviation from the exact erf GELU is ~3e-4 (fine at 5e-3 tolerance).
    # TODO(synk): switch to exact-erf GELU if Mosaic gains a lax.erf lowering and
    # bit-tighter parity with PyTorch is ever required.
    c = math.sqrt(2.0 / math.pi)
    return 0.5 * x * (1.0 + jnp.tanh(c * (x + 0.044715 * (x * x * x))))


def _layer_norm(x, gamma, beta):
    mu = jnp.mean(x, axis=-1, keepdims=True)
    var = jnp.mean((x - mu) ** 2, axis=-1, keepdims=True)
    return (x - mu) * jax.lax.rsqrt(var + LN_EPS) * gamma + beta


# ----------------------------------------------------------------------------
# fused Pallas kernel: 2 encoder layers + final LN + mean-pool + head
# ----------------------------------------------------------------------------
def _mahjong_fused_kernel(h_ref, bias_ref,
                          wqk_ref, bqk_ref, wfold_ref, bout_ref,
                          ln1g_ref, ln1b_ref, w1_ref, b1_ref, w2_ref, b2_ref,
                          ln2g_ref, ln2b_ref,
                          fng_ref, fnb_ref, wh_ref, bh_ref,
                          out_ref):
    bt = h_ref.shape[0]                         # batch tile
    M = bt * S_PAD
    h = h_ref[...].reshape(M, D_MODEL)          # (M, 32) token-major activations

    # Key-padding bias (0 / -1e9), tiled head-wise along lanes: (bt,16,64).
    # Built once, hoisted out of the layer loop.
    bias_b = jnp.broadcast_to(bias_ref[...], (bt, S_PAD, S_PAD))
    bias_hcat = jnp.concatenate([bias_b] * N_HEAD, axis=-1)

    # Per-head sublane masks over K^T's 32 feature rows (used to build the
    # block-diagonal K so all 4 head score tiles fall out of ONE matmul).
    drow = jax.lax.broadcasted_iota(jnp.int32, (1, D_MODEL, S_PAD), 1)
    sub_masks = [
        ((drow >= hd * HEAD_DIM) & (drow < (hd + 1) * HEAD_DIM)).astype(jnp.float32)
        for hd in range(N_HEAD)
    ]

    for l in range(NUM_LAYERS):                 # static unroll over the 2 layers
        # ---- self-attention (Wv@Wo folded host-side; Q pre-scaled by 1/sqrt(hd)) ----
        qk = jnp.dot(h, wqk_ref[l], preferred_element_type=jnp.float32) + bqk_ref[l]
        qk3 = qk.reshape(bt, S_PAD, 2 * D_MODEL)
        q3 = qk3[:, :, :D_MODEL]                          # (bt, 16, 32)
        kt = jnp.swapaxes(qk3[:, :, D_MODEL:], 1, 2)      # (bt, 32, 16): 1 xpose/layer
        # block-diagonal K: head h's 8 feature rows land in lane block h, so one
        # (16,32)x(32,64) matmul per batch row yields all four (16,16) score tiles.
        kbig = jnp.concatenate([kt * m for m in sub_masks], axis=-1)       # (bt,32,64)
        s_all = jnp.einsum("bqd,bdk->bqk", q3, kbig,
                           preferred_element_type=jnp.float32) + bias_hcat  # (bt,16,64)

        # ---- head-batched softmax: per-16-lane max/sum, one 64-lane exp/normalize ----
        m_parts = [jnp.max(s_all[:, :, hd * S_PAD:(hd + 1) * S_PAD],
                           axis=-1, keepdims=True) for hd in range(N_HEAD)]
        m_cat = jnp.concatenate(
            [jnp.broadcast_to(m, (bt, S_PAD, S_PAD)) for m in m_parts], axis=-1)
        e_all = jnp.exp(s_all - m_cat)                    # single exp over all heads
        inv_parts = [pl.reciprocal(jnp.sum(e_all[:, :, hd * S_PAD:(hd + 1) * S_PAD],
                                           axis=-1, keepdims=True), approx=True)
                     for hd in range(N_HEAD)]
        inv_cat = jnp.concatenate(
            [jnp.broadcast_to(v, (bt, S_PAD, S_PAD)) for v in inv_parts], axis=-1)
        p_all = e_all * inv_cat                           # (bt, 16, 64)

        # ---- V'_h = h @ (Wv_h^T @ Wo_h), all heads in one dot; attn = sum_h P_h V'_h ----
        vcat = jnp.dot(h, wfold_ref[l], preferred_element_type=jnp.float32)
        vcat3 = vcat.reshape(bt, S_PAD, N_HEAD * D_MODEL)  # head h at lanes 32h..32h+31
        attn3 = None
        for hd in range(N_HEAD):
            part = jnp.einsum("bqk,bkd->bqd",
                              p_all[:, :, hd * S_PAD:(hd + 1) * S_PAD],
                              vcat3[:, :, hd * D_MODEL:(hd + 1) * D_MODEL],
                              preferred_element_type=jnp.float32)
            attn3 = part if attn3 is None else attn3 + part
        attn = attn3.reshape(M, D_MODEL) + bout_ref[l]     # folded bias: bv@Wo^T + bo

        # ---- post-norm encoder layer ----
        x = _layer_norm(h + attn, ln1g_ref[l], ln1b_ref[l])
        ff = jnp.dot(x, w1_ref[l], preferred_element_type=jnp.float32) + b1_ref[l]
        ff = _gelu_tanh(ff)
        ff = jnp.dot(ff, w2_ref[l], preferred_element_type=jnp.float32) + b2_ref[l]
        h = _layer_norm(x + ff, ln2g_ref[l], ln2b_ref[l])

    # ---- final LayerNorm + masked mean pool (exclude padded rows 14,15) + head ----
    hn = _layer_norm(h, fng_ref[...], fnb_ref[...]).reshape(bt, S_PAD, D_MODEL)
    pos = jax.lax.broadcasted_iota(jnp.int32, (bt, S_PAD, D_MODEL), 1)
    valid = (pos < MAX_HAND).astype(jnp.float32)
    pooled = jnp.sum(hn * valid, axis=1) * (1.0 / float(MAX_HAND))        # (bt, 32)
    out_ref[...] = (jnp.dot(pooled, wh_ref[...], preferred_element_type=jnp.float32)
                    + bh_ref[...])                                        # (bt, 128)


# ----------------------------------------------------------------------------
# host-side parameter packing (folded + lane-packed weights)
# ----------------------------------------------------------------------------
def _pack_params(params):
    scale = 1.0 / math.sqrt(HEAD_DIM)
    hi = jax.lax.Precision.HIGHEST          # one-time host-side folds stay exact f32
    wqk_l, bqk_l, wfold_l, bout_l = [], [], [], []
    g1_l, be1_l, w1_l, b1_l, w2_l, b2_l, g2_l, be2_l = ([] for _ in range(8))
    for lp in params["layers"]:
        wq = lp["in_proj_w"][:D_MODEL]
        wk = lp["in_proj_w"][D_MODEL:2 * D_MODEL]
        wv = lp["in_proj_w"][2 * D_MODEL:]
        bq = lp["in_proj_b"][:D_MODEL]
        bk = lp["in_proj_b"][D_MODEL:2 * D_MODEL]
        bv = lp["in_proj_b"][2 * D_MODEL:]
        wo_t = lp["out_proj_w"].T                                            # (32, 32)
        # Q/K slab: lanes 0..31 = Q (1/sqrt(hd) folded in), lanes 32..63 = K
        wqk_l.append(jnp.concatenate([wq.T * scale, wk.T], axis=1))          # (32, 64)
        bqk_l.append(jnp.concatenate([bq * scale, bk])[None, :])             # (1, 64)
        # Fold each head's Wv into the output projection: Wfold_h = Wv_h^T @ Wo_h
        folds = [jnp.dot(wv[hd * HEAD_DIM:(hd + 1) * HEAD_DIM].T,
                         wo_t[hd * HEAD_DIM:(hd + 1) * HEAD_DIM], precision=hi)
                 for hd in range(N_HEAD)]
        wfold_l.append(jnp.concatenate(folds, axis=1))                       # (32, 128)
        # Softmax rows sum to 1 => V's bias contributes exactly bv @ Wo^T.
        bout_l.append((jnp.dot(bv, wo_t, precision=hi)
                       + lp["out_proj_b"])[None, :])                         # (1, 32)
        g1_l.append(lp["ln1_g"].reshape(1, D_MODEL)); be1_l.append(lp["ln1_b"].reshape(1, D_MODEL))
        w1_l.append(lp["lin1_w"].T); b1_l.append(lp["lin1_b"].reshape(1, DIM_FF))
        w2_l.append(lp["lin2_w"].T); b2_l.append(lp["lin2_b"].reshape(1, D_MODEL))
        g2_l.append(lp["ln2_g"].reshape(1, D_MODEL)); be2_l.append(lp["ln2_b"].reshape(1, D_MODEL))

    stk = lambda ts: jnp.stack(ts, axis=0)
    wh = jnp.zeros((D_MODEL, HEAD_OUT_PAD), jnp.float32).at[:, :NUM_HAI].set(params["head_w"].T)
    bh = jnp.zeros((1, HEAD_OUT_PAD), jnp.float32).at[:, :NUM_HAI].set(params["head_b"][None])
    return (stk(wqk_l), stk(bqk_l), stk(wfold_l), stk(bout_l),
            stk(g1_l), stk(be1_l), stk(w1_l), stk(b1_l), stk(w2_l), stk(b2_l),
            stk(g2_l), stk(be2_l),
            params["norm_g"].reshape(1, D_MODEL), params["norm_b"].reshape(1, D_MODEL),
            wh, bh)


def _full_spec(shape):
    return pl.BlockSpec(shape, lambda *_: (0,) * len(shape))


def _round_up(v, m):
    return (v + m - 1) // m * m


def _choose_batch_tile(b):
    if b <= 8:
        return 8
    # >= 2 grid steps for B >= 16 (v7x megacore), ~>= 4 steps for larger B so the
    # activation/output DMA overlaps compute; tile capped at B_TILE_MAX rows.
    return max(8, min(B_TILE_MAX, _round_up((b + 3) // 4, 8)))


# ----------------------------------------------------------------------------
# forward pass (Pallas)
# ----------------------------------------------------------------------------
def kernel_forward(x, params):
    B, S = x.shape
    assert S == MAX_HAND
    # glue: embedding gather + positional embedding, pad seq 14 -> 16
    h = params["embed"][x] + params["pos_emb"][None, :, :]
    h = jnp.pad(h, ((0, 0), (0, S_PAD - MAX_HAND), (0, 0))).astype(jnp.float32)
    key_mask = jnp.pad(x == TOKEN_PAD, ((0, 0), (0, S_PAD - MAX_HAND)),
                       constant_values=True)
    bias = jnp.where(key_mask, NEG_INF, 0.0).astype(jnp.float32)[:, None, :]  # (B,1,16)

    packed = _pack_params(params)

    b_tile = _choose_batch_tile(B)
    b_pad = _round_up(B, b_tile)
    n_tiles = b_pad // b_tile
    if b_pad != B:
        h = jnp.pad(h, ((0, b_pad - B), (0, 0), (0, 0)))
        bias = jnp.pad(bias, ((0, b_pad - B), (0, 0), (0, 0)))

    in_specs = [
        pl.BlockSpec((b_tile, S_PAD, D_MODEL), lambda b: (b, 0, 0)),  # activations
        pl.BlockSpec((b_tile, 1, S_PAD), lambda b: (b, 0, 0)),        # key-pad bias
    ] + [_full_spec(t.shape) for t in packed]                         # all weights

    out = pl.pallas_call(
        _mahjong_fused_kernel,
        out_shape=jax.ShapeDtypeStruct((b_pad, HEAD_OUT_PAD), jnp.float32),
        grid=(n_tiles,),
        in_specs=in_specs,
        out_specs=pl.BlockSpec((b_tile, HEAD_OUT_PAD), lambda b: (b, 0)),
        compiler_params=pltpu.CompilerParams(
            dimension_semantics=("parallel",),     # batch tiles shard across TCs (v7x)
            vmem_limit_bytes=32 * 1024 * 1024),    # deliberate; ~3 MiB live @ bt=64
    )(h, bias, *packed)
    return out[:B, :NUM_HAI]


# ----------------------------------------------------------------------------
# deterministic parameter init (PyTorch layout)
# ----------------------------------------------------------------------------
def init_model(key):
    def nxt():
        nonlocal key
        key, sub = jax.random.split(key)
        return sub

    std = 0.05
    p = {
        "embed": jax.random.normal(nxt(), (NUM_HAI + 1, D_MODEL), jnp.float32) * std,
        "pos_emb": jax.random.normal(nxt(), (MAX_HAND, D_MODEL), jnp.float32) * std,
        "norm_g": jnp.ones((D_MODEL,), jnp.float32),
        "norm_b": jnp.zeros((D_MODEL,), jnp.float32),
        "head_w": jax.random.normal(nxt(), (NUM_HAI, D_MODEL), jnp.float32) * std,
        "head_b": jnp.zeros((NUM_HAI,), jnp.float32),
        "layers": [],
    }
    for _ in range(NUM_LAYERS):
        p["layers"].append({
            "in_proj_w": jax.random.normal(nxt(), (3 * D_MODEL, D_MODEL), jnp.float32) * std,
            "in_proj_b": jax.random.normal(nxt(), (3 * D_MODEL,), jnp.float32) * std,
            "out_proj_w": jax.random.normal(nxt(), (D_MODEL, D_MODEL), jnp.float32) * std,
            "out_proj_b": jnp.zeros((D_MODEL,), jnp.float32),
            "lin1_w": jax.random.normal(nxt(), (DIM_FF, D_MODEL), jnp.float32) * std,
            "lin1_b": jax.random.normal(nxt(), (DIM_FF,), jnp.float32) * std,
            "lin2_w": jax.random.normal(nxt(), (D_MODEL, DIM_FF), jnp.float32) * std,
            "lin2_b": jax.random.normal(nxt(), (D_MODEL,), jnp.float32) * std,
            "ln1_g": jnp.ones((D_MODEL,), jnp.float32),
            "ln1_b": jnp.zeros((D_MODEL,), jnp.float32),
            "ln2_g": jnp.ones((D_MODEL,), jnp.float32),
            "ln2_b": jnp.zeros((D_MODEL,), jnp.float32),
        })
    return p


# ----------------------------------------------------------------------------
# pure-JAX reference (standard "slow path" encoder semantics, S = 14)
# ----------------------------------------------------------------------------
def reference_forward(x, params):
    B, S = x.shape
    mask = (x == TOKEN_PAD)
    h = params["embed"][x] + params["pos_emb"][None]
    bias = jnp.where(mask, NEG_INF, 0.0)[:, None, None, :]

    def split_heads(t):
        return t.reshape(B, S, N_HEAD, HEAD_DIM).transpose(0, 2, 1, 3)

    for lp in params["layers"]:
        qkv = h @ lp["in_proj_w"].T + lp["in_proj_b"]
        q, k, v = jnp.split(qkv, 3, axis=-1)
        qh, kh, vh = split_heads(q), split_heads(k), split_heads(v)
        s = jnp.einsum("bhqd,bhkd->bhqk", qh, kh) / math.sqrt(HEAD_DIM) + bias
        p = jax.nn.softmax(s, axis=-1)
        o = jnp.einsum("bhqk,bhkd->bhqd", p, vh).transpose(0, 2, 1, 3).reshape(B, S, D_MODEL)
        o = o @ lp["out_proj_w"].T + lp["out_proj_b"]
        h = _layer_norm(h + o, lp["ln1_g"], lp["ln1_b"])
        ff = jax.nn.gelu(h @ lp["lin1_w"].T + lp["lin1_b"], approximate=False)
        ff = ff @ lp["lin2_w"].T + lp["lin2_b"]
        h = _layer_norm(h + ff, lp["ln2_g"], lp["ln2_b"])

    h = _layer_norm(h, params["norm_g"], params["norm_b"])
    pooled = h.mean(axis=1)
    return pooled @ params["head_w"].T + params["head_b"]


if __name__ == "__main__":
    key = jax.random.PRNGKey(0)
    pkey, xkey = jax.random.split(key)
    params = init_model(pkey)

    B = 2
    x = jax.random.randint(xkey, (B, MAX_HAND), 0, NUM_HAI, dtype=jnp.int32)
    # put some PAD tokens at the tail to exercise the key-padding mask
    x = x.at[0, 11:].set(TOKEN_PAD)
    x = x.at[1, 9:].set(TOKEN_PAD)

    out = jax.block_until_ready(kernel_forward(x, params))
    ref = jax.block_until_ready(reference_forward(x, params))

    assert out.shape == (B, NUM_HAI)
    err = float(jnp.max(jnp.abs(out - ref)))
    if err > 5e-3:
        raise AssertionError(f"kernel/reference mismatch: max abs err = {err}")
    print("KERNEL_OK")
</pallas_src>

<mosaic_0001>
module attributes {stable_mosaic.version = 11 : i64} {
  func.func @_mahjong_fused_kernel(%arg0: i32, %arg1: memref<8x16x32xf32, #tpu.memory_space<vmem>>, %arg2: memref<8x1x16xf32, #tpu.memory_space<vmem>>, %arg3: memref<2x32x64xf32, #tpu.memory_space<vmem>>, %arg4: memref<2x1x64xf32, #tpu.memory_space<vmem>>, %arg5: memref<2x32x128xf32, #tpu.memory_space<vmem>>, %arg6: memref<2x1x32xf32, #tpu.memory_space<vmem>>, %arg7: memref<2x1x32xf32, #tpu.memory_space<vmem>>, %arg8: memref<2x1x32xf32, #tpu.memory_space<vmem>>, %arg9: memref<2x32x64xf32, #tpu.memory_space<vmem>>, %arg10: memref<2x1x64xf32, #tpu.memory_space<vmem>>, %arg11: memref<2x64x32xf32, #tpu.memory_space<vmem>>, %arg12: memref<2x1x32xf32, #tpu.memory_space<vmem>>, %arg13: memref<2x1x32xf32, #tpu.memory_space<vmem>>, %arg14: memref<2x1x32xf32, #tpu.memory_space<vmem>>, %arg15: memref<1x32xf32, #tpu.memory_space<vmem>>, %arg16: memref<1x32xf32, #tpu.memory_space<vmem>>, %arg17: memref<32x128xf32, #tpu.memory_space<vmem>>, %arg18: memref<1x128xf32, #tpu.memory_space<vmem>>, %arg19: memref<8x128xf32, #tpu.memory_space<vmem>>) attributes {dimension_semantics = [#tpu.dimension_semantics<parallel>], iteration_bounds = array<i64: 1>, scalar_prefetch = 0 : i64, scratch_operands = 0 : i64, tpu.core_type = #tpu.core_type<tc>, window_params = [{transform_indices = @transform_0, window_bounds = array<i64: 8, 16, 32>}, {transform_indices = @transform_1, window_bounds = array<i64: 8, 1, 16>}, {pipeline_mode = #tpu.pipeline_mode<synchronous>, transform_indices = @transform_2, window_bounds = array<i64: 2, 32, 64>}, {pipeline_mode = #tpu.pipeline_mode<synchronous>, transform_indices = @transform_3, window_bounds = array<i64: 2, 1, 64>}, {pipeline_mode = #tpu.pipeline_mode<synchronous>, transform_indices = @transform_4, window_bounds = array<i64: 2, 32, 128>}, {pipeline_mode = #tpu.pipeline_mode<synchronous>, transform_indices = @transform_5, window_bounds = array<i64: 2, 1, 32>}, {pipeline_mode = #tpu.pipeline_mode<synchronous>, transform_indices = @transform_6, window_bounds = array<i64: 2, 1, 32>}, {pipeline_mode = #tpu.pipeline_mode<synchronous>, transform_indices = @transform_7, window_bounds = array<i64: 2, 1, 32>}, {pipeline_mode = #tpu.pipeline_mode<synchronous>, transform_indices = @transform_8, window_bounds = array<i64: 2, 32, 64>}, {pipeline_mode = #tpu.pipeline_mode<synchronous>, transform_indices = @transform_9, window_bounds = array<i64: 2, 1, 64>}, {pipeline_mode = #tpu.pipeline_mode<synchronous>, transform_indices = @transform_10, window_bounds = array<i64: 2, 64, 32>}, {pipeline_mode = #tpu.pipeline_mode<synchronous>, transform_indices = @transform_11, window_bounds = array<i64: 2, 1, 32>}, {pipeline_mode = #tpu.pipeline_mode<synchronous>, transform_indices = @transform_12, window_bounds = array<i64: 2, 1, 32>}, {pipeline_mode = #tpu.pipeline_mode<synchronous>, transform_indices = @transform_13, window_bounds = array<i64: 2, 1, 32>}, {pipeline_mode = #tpu.pipeline_mode<synchronous>, transform_indices = @transform_14, window_bounds = array<i64: 1, 32>}, {pipeline_mode = #tpu.pipeline_mode<synchronous>, transform_indices = @transform_15, window_bounds = array<i64: 1, 32>}, {pipeline_mode = #tpu.pipeline_mode<synchronous>, transform_indices = @transform_16, window_bounds = array<i64: 32, 128>}, {pipeline_mode = #tpu.pipeline_mode<synchronous>, transform_indices = @transform_17, window_bounds = array<i64: 1, 128>}, {transform_indices = @transform_18, window_bounds = array<i64: 8, 128>}]} {
    %c0 = arith.constant 0 : index
    %c0_0 = arith.constant 0 : index
    %c0_1 = arith.constant 0 : index
    %0 = vector.load %arg1[%c0, %c0_0, %c0_1] : memref<8x16x32xf32, #tpu.memory_space<vmem>>, vector<8x16x32xf32>
    %1 = vector.shape_cast %0 : vector<8x16x32xf32> to vector<128x32xf32>
    %c0_2 = arith.constant 0 : index
    %c0_3 = arith.constant 0 : index
    %c0_4 = arith.constant 0 : index
    %2 = vector.load %arg2[%c0_2, %c0_3, %c0_4] : memref<8x1x16xf32, #tpu.memory_space<vmem>>, vector<8x1x16xf32>
    %3 = vector.shape_cast %2 : vector<8x1x16xf32> to vector<8x1x16xf32>
    %4 = vector.broadcast %3 : vector<8x1x16xf32> to vector<8x16x16xf32>
    %5 = tpu.concatenate %4, %4, %4, %4 in 2 : vector<8x16x16xf32>, vector<8x16x16xf32>, vector<8x16x16xf32>, vector<8x16x16xf32> -> vector<8x16x64xf32>
    %6 = tpu.iota {dimensions = array<i32: 1>} : vector<1x32x16xi32>
    %c0_i32 = arith.constant 0 : i32
    %7 = vector.broadcast %c0_i32 : i32 to vector<1x32x16xi32>
    %8 = arith.cmpi sge, %6, %7 : vector<1x32x16xi32>
    %c8_i32 = arith.constant 8 : i32
    %9 = vector.broadcast %c8_i32 : i32 to vector<1x32x16xi32>
    %10 = arith.cmpi slt, %6, %9 : vector<1x32x16xi32>
    %11 = arith.andi %8, %10 : vector<1x32x16xi1>
    %12 = arith.extui %11 : vector<1x32x16xi1> to vector<1x32x16xi32>
    %13 = arith.sitofp %12 : vector<1x32x16xi32> to vector<1x32x16xf32>
    %c8_i32_5 = arith.constant 8 : i32
    %14 = vector.broadcast %c8_i32_5 : i32 to vector<1x32x16xi32>
    %15 = arith.cmpi sge, %6, %14 : vector<1x32x16xi32>
    %c16_i32 = arith.constant 16 : i32
    %16 = vector.broadcast %c16_i32 : i32 to vector<1x32x16xi32>
    %17 = arith.cmpi slt, %6, %16 : vector<1x32x16xi32>
    %18 = arith.andi %15, %17 : vector<1x32x16xi1>
    %19 = arith.extui %18 : vector<1x32x16xi1> to vector<1x32x16xi32>
    %20 = arith.sitofp %19 : vector<1x32x16xi32> to vector<1x32x16xf32>
    %c16_i32_6 = arith.constant 16 : i32
    %21 = vector.broadcast %c16_i32_6 : i32 to vector<1x32x16xi32>
    %22 = arith.cmpi sge, %6, %21 : vector<1x32x16xi32>
    %c24_i32 = arith.constant 24 : i32
    %23 = vector.broadcast %c24_i32 : i32 to vector<1x32x16xi32>
    %24 = arith.cmpi slt, %6, %23 : vector<1x32x16xi32>
    %25 = arith.andi %22, %24 : vector<1x32x16xi1>
    %26 = arith.extui %25 : vector<1x32x16xi1> to vector<1x32x16xi32>
    %27 = arith.sitofp %26 : vector<1x32x16xi32> to vector<1x32x16xf32>
    %c24_i32_7 = arith.constant 24 : i32
    %28 = vector.broadcast %c24_i32_7 : i32 to vector<1x32x16xi32>
    %29 = arith.cmpi sge, %6, %28 : vector<1x32x16xi32>
    %c32_i32 = arith.constant 32 : i32
    %30 = vector.broadcast %c32_i32 : i32 to vector<1x32x16xi32>
    %31 = arith.cmpi slt, %6, %30 : vector<1x32x16xi32>
    %32 = arith.andi %29, %31 : vector<1x32x16xi1>
    %33 = arith.extui %32 : vector<1x32x16xi1> to vector<1x32x16xi32>
    %34 = arith.sitofp %33 : vector<1x32x16xi32> to vector<1x32x16xf32>
    %c0_8 = arith.constant 0 : index
    %c0_9 = arith.constant 0 : index
    %c0_10 = arith.constant 0 : index
    %35 = vector.load %arg3[%c0_8, %c0_9, %c0_10] : memref<2x32x64xf32, #tpu.memory_space<vmem>>, vector<1x32x64xf32>
    %36 = vector.shape_cast %35 : vector<1x32x64xf32> to vector<32x64xf32>
    %cst = arith.constant dense<0.000000e+00> : vector<128x64xf32>
    %37 = tpu.matmul %1, %36, %cst {dimension_numbers = #tpu.dot_dimension_numbers<[1], [0], [0], [1], [0, 0, 1, 1], [], []>} : vector<128x32xf32>, vector<32x64xf32>, vector<128x64xf32> -> vector<128x64xf32>
    %c0_11 = arith.constant 0 : index
    %c0_12 = arith.constant 0 : index
    %c0_13 = arith.constant 0 : index
    %38 = vector.load %arg4[%c0_11, %c0_12, %c0_13] : memref<2x1x64xf32, #tpu.memory_space<vmem>>, vector<1x1x64xf32>
    %39 = vector.shape_cast %38 : vector<1x1x64xf32> to vector<1x64xf32>
    %40 = vector.broadcast %39 : vector<1x64xf32> to vector<128x64xf32>
    %41 = arith.addf %37, %40 : vector<128x64xf32>
    %42 = vector.shape_cast %41 : vector<128x64xf32> to vector<8x16x64xf32>
    %43 = vector.extract_strided_slice %42 {offsets = [0, 0, 0], sizes = [8, 16, 32], strides = [1, 1, 1]} : vector<8x16x64xf32> to vector<8x16x32xf32>
    %44 = vector.extract_strided_slice %42 {offsets = [0, 0, 32], sizes = [8, 16, 32], strides = [1, 1, 1]} : vector<8x16x64xf32> to vector<8x16x32xf32>
    %45 = tpu.transpose %44, [0, 2, 1] : vector<8x16x32xf32> -> vector<8x32x16xf32>
    %46 = vector.broadcast %13 : vector<1x32x16xf32> to vector<8x32x16xf32>
    %47 = arith.mulf %45, %46 : vector<8x32x16xf32>
    %48 = vector.broadcast %20 : vector<1x32x16xf32> to vector<8x32x16xf32>
    %49 = arith.mulf %45, %48 : vector<8x32x16xf32>
    %50 = vector.broadcast %27 : vector<1x32x16xf32> to vector<8x32x16xf32>
    %51 = arith.mulf %45, %50 : vector<8x32x16xf32>
    %52 = vector.broadcast %34 : vector<1x32x16xf32> to vector<8x32x16xf32>
    %53 = arith.mulf %45, %52 : vector<8x32x16xf32>
    %54 = tpu.concatenate %47, %49, %51, %53 in 2 : vector<8x32x16xf32>, vector<8x32x16xf32>, vector<8x32x16xf32>, vector<8x32x16xf32> -> vector<8x32x64xf32>
    "tpu.trace_start"() <{level = 10 : i32, message = "bqd,bdk->bqk"}> : () -> ()
    %cst_14 = arith.constant dense<0.000000e+00> : vector<8x16x64xf32>
    %55 = tpu.matmul %43, %54, %cst_14 {dimension_numbers = #tpu.dot_dimension_numbers<[2], [1], [1], [2], [0, 0, 0, 1, 1, 2], [0], [0]>} : vector<8x16x32xf32>, vector<8x32x64xf32>, vector<8x16x64xf32> -> vector<8x16x64xf32>
    "tpu.trace_stop"() : () -> ()
    %56 = arith.addf %55, %5 : vector<8x16x64xf32>
    %57 = vector.extract_strided_slice %56 {offsets = [0, 0, 0], sizes = [8, 16, 16], strides = [1, 1, 1]} : vector<8x16x64xf32> to vector<8x16x16xf32>
    %cst_15 = arith.constant dense<0xFF800000> : vector<8x16xf32>
    %58 = vector.multi_reduction <maximumf>, %57, %cst_15 [2] : vector<8x16x16xf32> to vector<8x16xf32>
    %59 = vector.shape_cast %58 : vector<8x16xf32> to vector<8x16x1xf32>
    %60 = vector.extract_strided_slice %56 {offsets = [0, 0, 16], sizes = [8, 16, 16], strides = [1, 1, 1]} : vector<8x16x64xf32> to vector<8x16x16xf32>
    %cst_16 = arith.constant dense<0xFF800000> : vector<8x16xf32>
    %61 = vector.multi_reduction <maximumf>, %60, %cst_16 [2] : vector<8x16x16xf32> to vector<8x16xf32>
    %62 = vector.shape_cast %61 : vector<8x16xf32> to vector<8x16x1xf32>
    %63 = vector.extract_strided_slice %56 {offsets = [0, 0, 32], sizes = [8, 16, 16], strides = [1, 1, 1]} : vector<8x16x64xf32> to vector<8x16x16xf32>
    %cst_17 = arith.constant dense<0xFF800000> : vector<8x16xf32>
    %64 = vector.multi_reduction <maximumf>, %63, %cst_17 [2] : vector<8x16x16xf32> to vector<8x16xf32>
    %65 = vector.shape_cast %64 : vector<8x16xf32> to vector<8x16x1xf32>
    %66 = vector.extract_strided_slice %56 {offsets = [0, 0, 48], sizes = [8, 16, 16], strides = [1, 1, 1]} : vector<8x16x64xf32> to vector<8x16x16xf32>
    %cst_18 = arith.constant dense<0xFF800000> : vector<8x16xf32>
    %67 = vector.multi_reduction <maximumf>, %66, %cst_18 [2] : vector<8x16x16xf32> to vector<8x16xf32>
    %68 = vector.shape_cast %67 : vector<8x16xf32> to vector<8x16x1xf32>
    %69 = vector.shape_cast %59 : vector<8x16x1xf32> to vector<8x16x1xf32>
    %70 = vector.broadcast %69 : vector<8x16x1xf32> to vector<8x16x16xf32>
    %71 = vector.shape_cast %62 : vector<8x16x1xf32> to vector<8x16x1xf32>
    %72 = vector.broadcast %71 : vector<8x16x1xf32> to vector<8x16x16xf32>
    %73 = vector.shape_cast %65 : vector<8x16x1xf32> to vector<8x16x1xf32>
    %74 = vector.broadcast %73 : vector<8x16x1xf32> to vector<8x16x16xf32>
    %75 = vector.shape_cast %68 : vector<8x16x1xf32> to vector<8x16x1xf32>
    %76 = vector.broadcast %75 : vector<8x16x1xf32> to vector<8x16x16xf32>
    %77 = tpu.concatenate %70, %72, %74, %76 in 2 : vector<8x16x16xf32>, vector<8x16x16xf32>, vector<8x16x16xf32>, vector<8x16x16xf32> -> vector<8x16x64xf32>
    %78 = arith.subf %56, %77 : vector<8x16x64xf32>
    %79 = math.exp %78 : vector<8x16x64xf32>
    %80 = vector.extract_strided_slice %79 {offsets = [0, 0, 0], sizes = [8, 16, 16], strides = [1, 1, 1]} : vector<8x16x64xf32> to vector<8x16x16xf32>
    %cst_19 = arith.constant dense<0.000000e+00> : vector<8x16xf32>
    %81 = vector.multi_reduction <add>, %80, %cst_19 [2] : vector<8x16x16xf32> to vector<8x16xf32>
    %82 = vector.shape_cast %81 : vector<8x16xf32> to vector<8x16x1xf32>
    %83 = tpu.reciprocal %82 {approx = true} : vector<8x16x1xf32> -> vector<8x16x1xf32>
    %84 = vector.extract_strided_slice %79 {offsets = [0, 0, 16], sizes = [8, 16, 16], strides = [1, 1, 1]} : vector<8x16x64xf32> to vector<8x16x16xf32>
    %cst_20 = arith.constant dense<0.000000e+00> : vector<8x16xf32>
    %85 = vector.multi_reduction <add>, %84, %cst_20 [2] : vector<8x16x16xf32> to vector<8x16xf32>
    %86 = vector.shape_cast %85 : vector<8x16xf32> to vector<8x16x1xf32>
    %87 = tpu.reciprocal %86 {approx = true} : vector<8x16x1xf32> -> vector<8x16x1xf32>
    %88 = vector.extract_strided_slice %79 {offsets = [0, 0, 32], sizes = [8, 16, 16], strides = [1, 1, 1]} : vector<8x16x64xf32> to vector<8x16x16xf32>
    %cst_21 = arith.constant dense<0.000000e+00> : vector<8x16xf32>
    %89 = vector.multi_reduction <add>, %88, %cst_21 [2] : vector<8x16x16xf32> to vector<8x16xf32>
    %90 = vector.shape_cast %89 : vector<8x16xf32> to vector<8x16x1xf32>
    %91 = tpu.reciprocal %90 {approx = true} : vector<8x16x1xf32> -> vector<8x16x1xf32>
    %92 = vector.extract_strided_slice %79 {offsets = [0, 0, 48], sizes = [8, 16, 16], strides = [1, 1, 1]} : vector<8x16x64xf32> to vector<8x16x16xf32>
    %cst_22 = arith.constant dense<0.000000e+00> : vector<8x16xf32>
    %93 = vector.multi_reduction <add>, %92, %cst_22 [2] : vector<8x16x16xf32> to vector<8x16xf32>
    %94 = vector.shape_cast %93 : vector<8x16xf32> to vector<8x16x1xf32>
    %95 = tpu.reciprocal %94 {approx = true} : vector<8x16x1xf32> -> vector<8x16x1xf32>
    %96 = vector.shape_cast %83 : vector<8x16x1xf32> to vector<8x16x1xf32>
    %97 = vector.broadcast %96 : vector<8x16x1xf32> to vector<8x16x16xf32>
    %98 = vector.shape_cast %87 : vector<8x16x1xf32> to vector<8x16x1xf32>
    %99 = vector.broadcast %98 : vector<8x16x1xf32> to vector<8x16x16xf32>
    %100 = vector.shape_cast %91 : vector<8x16x1xf32> to vector<8x16x1xf32>
    %101 = vector.broadcast %100 : vector<8x16x1xf32> to vector<8x16x16xf32>
    %102 = vector.shape_cast %95 : vector<8x16x1xf32> to vector<8x16x1xf32>
    %103 = vector.broadcast %102 : vector<8x16x1xf32> to vector<8x16x16xf32>
    %104 = tpu.concatenate %97, %99, %101, %103 in 2 : vector<8x16x16xf32>, vector<8x16x16xf32>, vector<8x16x16xf32>, vector<8x16x16xf32> -> vector<8x16x64xf32>
    %105 = arith.mulf %79, %104 : vector<8x16x64xf32>
    %c0_23 = arith.constant 0 : index
    %c0_24 = arith.constant 0 : index
    %c0_25 = arith.constant 0 : index
    %106 = vector.load %arg5[%c0_23, %c0_24, %c0_25] : memref<2x32x128xf32, #tpu.memory_space<vmem>>, vector<1x32x128xf32>
    %107 = vector.shape_cast %106 : vector<1x32x128xf32> to vector<32x128xf32>
    %cst_26 = arith.constant dense<0.000000e+00> : vector<128x128xf32>
    %108 = tpu.matmul %1, %107, %cst_26 {dimension_numbers = #tpu.dot_dimension_numbers<[1], [0], [0], [1], [0, 0, 1, 1], [], []>} : vector<128x32xf32>, vector<32x128xf32>, vector<128x128xf32> -> vector<128x128xf32>
    %109 = vector.shape_cast %108 : vector<128x128xf32> to vector<8x16x128xf32>
    %110 = vector.extract_strided_slice %105 {offsets = [0, 0, 0], sizes = [8, 16, 16], strides = [1, 1, 1]} : vector<8x16x64xf32> to vector<8x16x16xf32>
    %111 = vector.extract_strided_slice %109 {offsets = [0, 0, 0], sizes = [8, 16, 32], strides = [1, 1, 1]} : vector<8x16x128xf32> to vector<8x16x32xf32>
    "tpu.trace_start"() <{level = 10 : i32, message = "bqk,bkd->bqd"}> : () -> ()
    %cst_27 = arith.constant dense<0.000000e+00> : vector<8x16x32xf32>
    %112 = tpu.matmul %110, %111, %cst_27 {dimension_numbers = #tpu.dot_dimension_numbers<[2], [1], [1], [2], [0, 0, 0, 1, 1, 2], [0], [0]>} : vector<8x16x16xf32>, vector<8x16x32xf32>, vector<8x16x32xf32> -> vector<8x16x32xf32>
    "tpu.trace_stop"() : () -> ()
    %113 = vector.extract_strided_slice %105 {offsets = [0, 0, 16], sizes = [8, 16, 16], strides = [1, 1, 1]} : vector<8x16x64xf32> to vector<8x16x16xf32>
    %114 = vector.extract_strided_slice %109 {offsets = [0, 0, 32], sizes = [8, 16, 32], strides = [1, 1, 1]} : vector<8x16x128xf32> to vector<8x16x32xf32>
    "tpu.trace_start"() <{level = 10 : i32, message = "bqk,bkd->bqd"}> : () -> ()
    %cst_28 = arith.constant dense<0.000000e+00> : vector<8x16x32xf32>
    %115 = tpu.matmul %113, %114, %cst_28 {dimension_numbers = #tpu.dot_dimension_numbers<[2], [1], [1], [2], [0, 0, 0, 1, 1, 2], [0], [0]>} : vector<8x16x16xf32>, vector<8x16x32xf32>, vector<8x16x32xf32> -> vector<8x16x32xf32>
    "tpu.trace_stop"() : () -> ()
    %116 = arith.addf %112, %115 : vector<8x16x32xf32>
    %117 = vector.extract_strided_slice %105 {offsets = [0, 0, 32], sizes = [8, 16, 16], strides = [1, 1, 1]} : vector<8x16x64xf32> to vector<8x16x16xf32>
    %118 = vector.extract_strided_slice %109 {offsets = [0, 0, 64], sizes = [8, 16, 32], strides = [1, 1, 1]} : vector<8x16x128xf32> to vector<8x16x32xf32>
    "tpu.trace_start"() <{level = 10 : i32, message = "bqk,bkd->bqd"}> : () -> ()
    %cst_29 = arith.constant dense<0.000000e+00> : vector<8x16x32xf32>
    %119 = tpu.matmul %117, %118, %cst_29 {dimension_numbers = #tpu.dot_dimension_numbers<[2], [1], [1], [2], [0, 0, 0, 1, 1, 2], [0], [0]>} : vector<8x16x16xf32>, vector<8x16x32xf32>, vector<8x16x32xf32> -> vector<8x16x32xf32>
    "tpu.trace_stop"() : () -> ()
    %120 = arith.addf %116, %119 : vector<8x16x32xf32>
    %121 = vector.extract_strided_slice %105 {offsets = [0, 0, 48], sizes = [8, 16, 16], strides = [1, 1, 1]} : vector<8x16x64xf32> to vector<8x16x16xf32>
    %122 = vector.extract_strided_slice %109 {offsets = [0, 0, 96], sizes = [8, 16, 32], strides = [1, 1, 1]} : vector<8x16x128xf32> to vector<8x16x32xf32>
    "tpu.trace_start"() <{level = 10 : i32, message = "bqk,bkd->bqd"}> : () -> ()
    %cst_30 = arith.constant dense<0.000000e+00> : vector<8x16x32xf32>
    %123 = tpu.matmul %121, %122, %cst_30 {dimension_numbers = #tpu.dot_dimension_numbers<[2], [1], [1], [2], [0, 0, 0, 1, 1, 2], [0], [0]>} : vector<8x16x16xf32>, vector<8x16x32xf32>, vector<8x16x32xf32> -> vector<8x16x32xf32>
    "tpu.trace_stop"() : () -> ()
    %124 = arith.addf %120, %123 : vector<8x16x32xf32>
    %125 = vector.shape_cast %124 : vector<8x16x32xf32> to vector<128x32xf32>
    %c0_31 = arith.constant 0 : index
    %c0_32 = arith.constant 0 : index
    %c0_33 = arith.constant 0 : index
    %126 = vector.load %arg6[%c0_31, %c0_32, %c0_33] : memref<2x1x32xf32, #tpu.memory_space<vmem>>, vector<1x1x32xf32>
    %127 = vector.shape_cast %126 : vector<1x1x32xf32> to vector<1x32xf32>
    %128 = vector.broadcast %127 : vector<1x32xf32> to vector<128x32xf32>
    %129 = arith.addf %125, %128 : vector<128x32xf32>
    %130 = arith.addf %1, %129 : vector<128x32xf32>
    %c0_34 = arith.constant 0 : index
    %c0_35 = arith.constant 0 : index
    %c0_36 = arith.constant 0 : index
    %131 = vector.load %arg7[%c0_34, %c0_35, %c0_36] : memref<2x1x32xf32, #tpu.memory_space<vmem>>, vector<1x1x32xf32>
    %132 = vector.shape_cast %131 : vector<1x1x32xf32> to vector<1x32xf32>
    %c0_37 = arith.constant 0 : index
    %c0_38 = arith.constant 0 : index
    %c0_39 = arith.constant 0 : index
    %133 = vector.load %arg8[%c0_37, %c0_38, %c0_39] : memref<2x1x32xf32, #tpu.memory_space<vmem>>, vector<1x1x32xf32>
    %134 = vector.shape_cast %133 : vector<1x1x32xf32> to vector<1x32xf32>
    %cst_40 = arith.constant dense<0.000000e+00> : vector<128xf32>
    %135 = vector.multi_reduction <add>, %130, %cst_40 [1] : vector<128x32xf32> to vector<128xf32>
    %136 = vector.shape_cast %135 : vector<128xf32> to vector<128x1xf32>
    %cst_41 = arith.constant 3.200000e+01 : f32
    %137 = vector.broadcast %cst_41 : f32 to vector<128x1xf32>
    %138 = arith.divf %136, %137 : vector<128x1xf32>
    %139 = vector.broadcast %138 : vector<128x1xf32> to vector<128x32xf32>
    %140 = arith.subf %130, %139 : vector<128x32xf32>
    %141 = arith.mulf %140, %140 : vector<128x32xf32>
    %cst_42 = arith.constant dense<0.000000e+00> : vector<128xf32>
    %142 = vector.multi_reduction <add>, %141, %cst_42 [1] : vector<128x32xf32> to vector<128xf32>
    %143 = vector.shape_cast %142 : vector<128xf32> to vector<128x1xf32>
    %cst_43 = arith.constant 3.200000e+01 : f32
    %144 = vector.broadcast %cst_43 : f32 to vector<128x1xf32>
    %145 = arith.divf %143, %144 : vector<128x1xf32>
    %146 = vector.broadcast %138 : vector<128x1xf32> to vector<128x32xf32>
    %147 = arith.subf %130, %146 : vector<128x32xf32>
    %cst_44 = arith.constant 9.99999974E-6 : f32
    %148 = vector.broadcast %cst_44 : f32 to vector<128x1xf32>
    %149 = arith.addf %145, %148 : vector<128x1xf32>
    %150 = math.rsqrt %149 : vector<128x1xf32>
    %151 = vector.broadcast %150 : vector<128x1xf32> to vector<128x32xf32>
    %152 = arith.mulf %147, %151 : vector<128x32xf32>
    %153 = vector.broadcast %132 : vector<1x32xf32> to vector<128x32xf32>
    %154 = arith.mulf %152, %153 : vector<128x32xf32>
    %155 = vector.broadcast %134 : vector<1x32xf32> to vector<128x32xf32>
    %156 = arith.addf %154, %155 : vector<128x32xf32>
    %c0_45 = arith.constant 0 : index
    %c0_46 = arith.constant 0 : index
    %c0_47 = arith.constant 0 : index
    %157 = vector.load %arg9[%c0_45, %c0_46, %c0_47] : memref<2x32x64xf32, #tpu.memory_space<vmem>>, vector<1x32x64xf32>
    %158 = vector.shape_cast %157 : vector<1x32x64xf32> to vector<32x64xf32>
    %cst_48 = arith.constant dense<0.000000e+00> : vector<128x64xf32>
    %159 = tpu.matmul %156, %158, %cst_48 {dimension_numbers = #tpu.dot_dimension_numbers<[1], [0], [0], [1], [0, 0, 1, 1], [], []>} : vector<128x32xf32>, vector<32x64xf32>, vector<128x64xf32> -> vector<128x64xf32>
    %c0_49 = arith.constant 0 : index
    %c0_50 = arith.constant 0 : index
    %c0_51 = arith.constant 0 : index
    %160 = vector.load %arg10[%c0_49, %c0_50, %c0_51] : memref<2x1x64xf32, #tpu.memory_space<vmem>>, vector<1x1x64xf32>
    %161 = vector.shape_cast %160 : vector<1x1x64xf32> to vector<1x64xf32>
    %162 = vector.broadcast %161 : vector<1x64xf32> to vector<128x64xf32>
    %163 = arith.addf %159, %162 : vector<128x64xf32>
    %cst_52 = arith.constant 5.000000e-01 : f32
    %164 = vector.broadcast %cst_52 : f32 to vector<128x64xf32>
    %165 = arith.mulf %164, %163 : vector<128x64xf32>
    %166 = arith.mulf %163, %163 : vector<128x64xf32>
    %167 = arith.mulf %166, %163 : vector<128x64xf32>
    %cst_53 = arith.constant 4.471500e-02 : f32
    %168 = vector.broadcast %cst_53 : f32 to vector<128x64xf32>
    %169 = arith.mulf %168, %167 : vector<128x64xf32>
    %170 = arith.addf %163, %169 : vector<128x64xf32>
    %cst_54 = arith.constant 0.797884583 : f32
    %171 = vector.broadcast %cst_54 : f32 to vector<128x64xf32>
    %172 = arith.mulf %171, %170 : vector<128x64xf32>
    %173 = math.tanh %172 : vector<128x64xf32>
    %cst_55 = arith.constant 1.000000e+00 : f32
    %174 = vector.broadcast %cst_55 : f32 to vector<128x64xf32>
    %175 = arith.addf %174, %173 : vector<128x64xf32>
    %176 = arith.mulf %165, %175 : vector<128x64xf32>
    %c0_56 = arith.constant 0 : index
    %c0_57 = arith.constant 0 : index
    %c0_58 = arith.constant 0 : index
    %177 = vector.load %arg11[%c0_56, %c0_57, %c0_58] : memref<2x64x32xf32, #tpu.memory_space<vmem>>, vector<1x64x32xf32>
    %178 = vector.shape_cast %177 : vector<1x64x32xf32> to vector<64x32xf32>
    %cst_59 = arith.constant dense<0.000000e+00> : vector<128x32xf32>
    %179 = tpu.matmul %176, %178, %cst_59 {dimension_numbers = #tpu.dot_dimension_numbers<[1], [0], [0], [1], [0, 0, 1, 1], [], []>} : vector<128x64xf32>, vector<64x32xf32>, vector<128x32xf32> -> vector<128x32xf32>
    %c0_60 = arith.constant 0 : index
    %c0_61 = arith.constant 0 : index
    %c0_62 = arith.constant 0 : index
    %180 = vector.load %arg12[%c0_60, %c0_61, %c0_62] : memref<2x1x32xf32, #tpu.memory_space<vmem>>, vector<1x1x32xf32>
    %181 = vector.shape_cast %180 : vector<1x1x32xf32> to vector<1x32xf32>
    %182 = vector.broadcast %181 : vector<1x32xf32> to vector<128x32xf32>
    %183 = arith.addf %179, %182 : vector<128x32xf32>
    %184 = arith.addf %156, %183 : vector<128x32xf32>
    %c0_63 = arith.constant 0 : index
    %c0_64 = arith.constant 0 : index
    %c0_65 = arith.constant 0 : index
    %185 = vector.load %arg13[%c0_63, %c0_64, %c0_65] : memref<2x1x32xf32, #tpu.memory_space<vmem>>, vector<1x1x32xf32>
    %186 = vector.shape_cast %185 : vector<1x1x32xf32> to vector<1x32xf32>
    %c0_66 = arith.constant 0 : index
    %c0_67 = arith.constant 0 : index
    %c0_68 = arith.constant 0 : index
    %187 = vector.load %arg14[%c0_66, %c0_67, %c0_68] : memref<2x1x32xf32, #tpu.memory_space<vmem>>, vector<1x1x32xf32>
    %188 = vector.shape_cast %187 : vector<1x1x32xf32> to vector<1x32xf32>
    %cst_69 = arith.constant dense<0.000000e+00> : vector<128xf32>
    %189 = vector.multi_reduction <add>, %184, %cst_69 [1] : vector<128x32xf32> to vector<128xf32>
    %190 = vector.shape_cast %189 : vector<128xf32> to vector<128x1xf32>
    %cst_70 = arith.constant 3.200000e+01 : f32
    %191 = vector.broadcast %cst_70 : f32 to vector<128x1xf32>
    %192 = arith.divf %190, %191 : vector<128x1xf32>
    %193 = vector.broadcast %192 : vector<128x1xf32> to vector<128x32xf32>
    %194 = arith.subf %184, %193 : vector<128x32xf32>
    %195 = arith.mulf %194, %194 : vector<128x32xf32>
    %cst_71 = arith.constant dense<0.000000e+00> : vector<128xf32>
    %196 = vector.multi_reduction <add>, %195, %cst_71 [1] : vector<128x32xf32> to vector<128xf32>
    %197 = vector.shape_cast %196 : vector<128xf32> to vector<128x1xf32>
    %cst_72 = arith.constant 3.200000e+01 : f32
    %198 = vector.broadcast %cst_72 : f32 to vector<128x1xf32>
    %199 = arith.divf %197, %198 : vector<128x1xf32>
    %200 = vector.broadcast %192 : vector<128x1xf32> to vector<128x32xf32>
    %201 = arith.subf %184, %200 : vector<128x32xf32>
    %cst_73 = arith.constant 9.99999974E-6 : f32
    %202 = vector.broadcast %cst_73 : f32 to vector<128x1xf32>
    %203 = arith.addf %199, %202 : vector<128x1xf32>
    %204 = math.rsqrt %203 : vector<128x1xf32>
    %205 = vector.broadcast %204 : vector<128x1xf32> to vector<128x32xf32>
    %206 = arith.mulf %201, %205 : vector<128x32xf32>
    %207 = vector.broadcast %186 : vector<1x32xf32> to vector<128x32xf32>
    %208 = arith.mulf %206, %207 : vector<128x32xf32>
    %209 = vector.broadcast %188 : vector<1x32xf32> to vector<128x32xf32>
    %210 = arith.addf %208, %209 : vector<128x32xf32>
    %c1 = arith.constant 1 : index
    %c0_74 = arith.constant 0 : index
    %c0_75 = arith.constant 0 : index
    %211 = vector.load %arg3[%c1, %c0_74, %c0_75] : memref<2x32x64xf32, #tpu.memory_space<vmem>>, vector<1x32x64xf32>
    %212 = vector.shape_cast %211 : vector<1x32x64xf32> to vector<32x64xf32>
    %cst_76 = arith.constant dense<0.000000e+00> : vector<128x64xf32>
    %213 = tpu.matmul %210, %212, %cst_76 {dimension_numbers = #tpu.dot_dimension_numbers<[1], [0], [0], [1], [0, 0, 1, 1], [], []>} : vector<128x32xf32>, vector<32x64xf32>, vector<128x64xf32> -> vector<128x64xf32>
    %c1_77 = arith.constant 1 : index
    %c0_78 = arith.constant 0 : index
    %c0_79 = arith.constant 0 : index
    %214 = vector.load %arg4[%c1_77, %c0_78, %c0_79] : memref<2x1x64xf32, #tpu.memory_space<vmem>>, vector<1x1x64xf32>
    %215 = vector.shape_cast %214 : vector<1x1x64xf32> to vector<1x64xf32>
    %216 = vector.broadcast %215 : vector<1x64xf32> to vector<128x64xf32>
    %217 = arith.addf %213, %216 : vector<128x64xf32>
    %218 = vector.shape_cast %217 : vector<128x64xf32> to vector<8x16x64xf32>
    %219 = vector.extract_strided_slice %218 {offsets = [0, 0, 0], sizes = [8, 16, 32], strides = [1, 1, 1]} : vector<8x16x64xf32> to vector<8x16x32xf32>
    %220 = vector.extract_strided_slice %218 {offsets = [0, 0, 32], sizes = [8, 16, 32], strides = [1, 1, 1]} : vector<8x16x64xf32> to vector<8x16x32xf32>
    %221 = tpu.transpose %220, [0, 2, 1] : vector<8x16x32xf32> -> vector<8x32x16xf32>
    %222 = vector.broadcast %13 : vector<1x32x16xf32> to vector<8x32x16xf32>
    %223 = arith.mulf %221, %222 : vector<8x32x16xf32>
    %224 = vector.broadcast %20 : vector<1x32x16xf32> to vector<8x32x16xf32>
    %225 = arith.mulf %221, %224 : vector<8x32x16xf32>
    %226 = vector.broadcast %27 : vector<1x32x16xf32> to vector<8x32x16xf32>
    %227 = arith.mulf %221, %226 : vector<8x32x16xf32>
    %228 = vector.broadcast %34 : vector<1x32x16xf32> to vector<8x32x16xf32>
    %229 = arith.mulf %221, %228 : vector<8x32x16xf32>
    %230 = tpu.concatenate %223, %225, %227, %229 in 2 : vector<8x32x16xf32>, vector<8x32x16xf32>, vector<8x32x16xf32>, vector<8x32x16xf32> -> vector<8x32x64xf32>
    "tpu.trace_start"() <{level = 10 : i32, message = "bqd,bdk->bqk"}> : () -> ()
    %cst_80 = arith.constant dense<0.000000e+00> : vector<8x16x64xf32>
    %231 = tpu.matmul %219, %230, %cst_80 {dimension_numbers = #tpu.dot_dimension_numbers<[2], [1], [1], [2], [0, 0, 0, 1, 1, 2], [0], [0]>} : vector<8x16x32xf32>, vector<8x32x64xf32>, vector<8x16x64xf32> -> vector<8x16x64xf32>
    "tpu.trace_stop"() : () -> ()
    %232 = arith.addf %231, %5 : vector<8x16x64xf32>
    %233 = vector.extract_strided_slice %232 {offsets = [0, 0, 0], sizes = [8, 16, 16], strides = [1, 1, 1]} : vector<8x16x64xf32> to vector<8x16x16xf32>
    %cst_81 = arith.constant dense<0xFF800000> : vector<8x16xf32>
    %234 = vector.multi_reduction <maximumf>, %233, %cst_81 [2] : vector<8x16x16xf32> to vector<8x16xf32>
    %235 = vector.shape_cast %234 : vector<8x16xf32> to vector<8x16x1xf32>
    %236 = vector.extract_strided_slice %232 {offsets = [0, 0, 16], sizes = [8, 16, 16], strides = [1, 1, 1]} : vector<8x16x64xf32> to vector<8x16x16xf32>
    %cst_82 = arith.constant dense<0xFF800000> : vector<8x16xf32>
    %237 = vector.multi_reduction <maximumf>, %236, %cst_82 [2] : vector<8x16x16xf32> to vector<8x16xf32>
    %238 = vector.shape_cast %237 : vector<8x16xf32> to vector<8x16x1xf32>
    %239 = vector.extract_strided_slice %232 {offsets = [0, 0, 32], sizes = [8, 16, 16], strides = [1, 1, 1]} : vector<8x16x64xf32> to vector<8x16x16xf32>
    %cst_83 = arith.constant dense<0xFF800000> : vector<8x16xf32>
    %240 = vector.multi_reduction <maximumf>, %239, %cst_83 [2] : vector<8x16x16xf32> to vector<8x16xf32>
    %241 = vector.shape_cast %240 : vector<8x16xf32> to vector<8x16x1xf32>
    %242 = vector.extract_strided_slice %232 {offsets = [0, 0, 48], sizes = [8, 16, 16], strides = [1, 1, 1]} : vector<8x16x64xf32> to vector<8x16x16xf32>
    %cst_84 = arith.constant dense<0xFF800000> : vector<8x16xf32>
    %243 = vector.multi_reduction <maximumf>, %242, %cst_84 [2] : vector<8x16x16xf32> to vector<8x16xf32>
    %244 = vector.shape_cast %243 : vector<8x16xf32> to vector<8x16x1xf32>
    %245 = vector.shape_cast %235 : vector<8x16x1xf32> to vector<8x16x1xf32>
    %246 = vector.broadcast %245 : vector<8x16x1xf32> to vector<8x16x16xf32>
    %247 = vector.shape_cast %238 : vector<8x16x1xf32> to vector<8x16x1xf32>
    %248 = vector.broadcast %247 : vector<8x16x1xf32> to vector<8x16x16xf32>
    %249 = vector.shape_cast %241 : vector<8x16x1xf32> to vector<8x16x1xf32>
    %250 = vector.broadcast %249 : vector<8x16x1xf32> to vector<8x16x16xf32>
    %251 = vector.shape_cast %244 : vector<8x16x1xf32> to vector<8x16x1xf32>
    %252 = vector.broadcast %251 : vector<8x16x1xf32> to vector<8x16x16xf32>
    %253 = tpu.concatenate %246, %248, %250, %252 in 2 : vector<8x16x16xf32>, vector<8x16x16xf32>, vector<8x16x16xf32>, vector<8x16x16xf32> -> vector<8x16x64xf32>
    %254 = arith.subf %232, %253 : vector<8x16x64xf32>
    %255 = math.exp %254 : vector<8x16x64xf32>
    %256 = vector.extract_strided_slice %255 {offsets = [0, 0, 0], sizes = [8, 16, 16], strides = [1, 1, 1]} : vector<8x16x64xf32> to vector<8x16x16xf32>
    %cst_85 = arith.constant dense<0.000000e+00> : vector<8x16xf32>
    %257 = vector.multi_reduction <add>, %256, %cst_85 [2] : vector<8x16x16xf32> to vector<8x16xf32>
    %258 = vector.shape_cast %257 : vector<8x16xf32> to vector<8x16x1xf32>
    %259 = tpu.reciprocal %258 {approx = true} : vector<8x16x1xf32> -> vector<8x16x1xf32>
    %260 = vector.extract_strided_slice %255 {offsets = [0, 0, 16], sizes = [8, 16, 16], strides = [1, 1, 1]} : vector<8x16x64xf32> to vector<8x16x16xf32>
    %cst_86 = arith.constant dense<0.000000e+00> : vector<8x16xf32>
    %261 = vector.multi_reduction <add>, %260, %cst_86 [2] : vector<8x16x16xf32> to vector<8x16xf32>
    %262 = vector.shape_cast %261 : vector<8x16xf32> to vector<8x16x1xf32>
    %263 = tpu.reciprocal %262 {approx = true} : vector<8x16x1xf32> -> vector<8x16x1xf32>
    %264 = vector.extract_strided_slice %255 {offsets = [0, 0, 32], sizes = [8, 16, 16], strides = [1, 1, 1]} : vector<8x16x64xf32> to vector<8x16x16xf32>
    %cst_87 = arith.constant dense<0.000000e+00> : vector<8x16xf32>
    %265 = vector.multi_reduction <add>, %264, %cst_87 [2] : vector<8x16x16xf32> to vector<8x16xf32>
    %266 = vector.shape_cast %265 : vector<8x16xf32> to vector<8x16x1xf32>
    %267 = tpu.reciprocal %266 {approx = true} : vector<8x16x1xf32> -> vector<8x16x1xf32>
    %268 = vector.extract_strided_slice %255 {offsets = [0, 0, 48], sizes = [8, 16, 16], strides = [1, 1, 1]} : vector<8x16x64xf32> to vector<8x16x16xf32>
    %cst_88 = arith.constant dense<0.000000e+00> : vector<8x16xf32>
    %269 = vector.multi_reduction <add>, %268, %cst_88 [2] : vector<8x16x16xf32> to vector<8x16xf32>
    %270 = vector.shape_cast %269 : vector<8x16xf32> to vector<8x16x1xf32>
    %271 = tpu.reciprocal %270 {approx = true} : vector<8x16x1xf32> -> vector<8x16x1xf32>
    %272 = vector.shape_cast %259 : vector<8x16x1xf32> to vector<8x16x1xf32>
    %273 = vector.broadcast %272 : vector<8x16x1xf32> to vector<8x16x16xf32>
    %274 = vector.shape_cast %263 : vector<8x16x1xf32> to vector<8x16x1xf32>
    %275 = vector.broadcast %274 : vector<8x16x1xf32> to vector<8x16x16xf32>
    %276 = vector.shape_cast %267 : vector<8x16x1xf32> to vector<8x16x1xf32>
    %277 = vector.broadcast %276 : vector<8x16x1xf32> to vector<8x16x16xf32>
    %278 = vector.shape_cast %271 : vector<8x16x1xf32> to vector<8x16x1xf32>
    %279 = vector.broadcast %278 : vector<8x16x1xf32> to vector<8x16x16xf32>
    %280 = tpu.concatenate %273, %275, %277, %279 in 2 : vector<8x16x16xf32>, vector<8x16x16xf32>, vector<8x16x16xf32>, vector<8x16x16xf32> -> vector<8x16x64xf32>
    %281 = arith.mulf %255, %280 : vector<8x16x64xf32>
    %c1_89 = arith.constant 1 : index
    %c0_90 = arith.constant 0 : index
    %c0_91 = arith.constant 0 : index
    %282 = vector.load %arg5[%c1_89, %c0_90, %c0_91] : memref<2x32x128xf32, #tpu.memory_space<vmem>>, vector<1x32x128xf32>
    %283 = vector.shape_cast %282 : vector<1x32x128xf32> to vector<32x128xf32>
    %cst_92 = arith.constant dense<0.000000e+00> : vector<128x128xf32>
    %284 = tpu.matmul %210, %283, %cst_92 {dimension_numbers = #tpu.dot_dimension_numbers<[1], [0], [0], [1], [0, 0, 1, 1], [], []>} : vector<128x32xf32>, vector<32x128xf32>, vector<128x128xf32> -> vector<128x128xf32>
    %285 = vector.shape_cast %284 : vector<128x128xf32> to vector<8x16x128xf32>
    %286 = vector.extract_strided_slice %281 {offsets = [0, 0, 0], sizes = [8, 16, 16], strides = [1, 1, 1]} : vector<8x16x64xf32> to vector<8x16x16xf32>
    %287 = vector.extract_strided_slice %285 {offsets = [0, 0, 0], sizes = [8, 16, 32], strides = [1, 1, 1]} : vector<8x16x128xf32> to vector<8x16x32xf32>
    "tpu.trace_start"() <{level = 10 : i32, message = "bqk,bkd->bqd"}> : () -> ()
    %cst_93 = arith.constant dense<0.000000e+00> : vector<8x16x32xf32>
    %288 = tpu.matmul %286, %287, %cst_93 {dimension_numbers = #tpu.dot_dimension_numbers<[2], [1], [1], [2], [0, 0, 0, 1, 1, 2], [0], [0]>} : vector<8x16x16xf32>, vector<8x16x32xf32>, vector<8x16x32xf32> -> vector<8x16x32xf32>
    "tpu.trace_stop"() : () -> ()
    %289 = vector.extract_strided_slice %281 {offsets = [0, 0, 16], sizes = [8, 16, 16], strides = [1, 1, 1]} : vector<8x16x64xf32> to vector<8x16x16xf32>
    %290 = vector.extract_strided_slice %285 {offsets = [0, 0, 32], sizes = [8, 16, 32], strides = [1, 1, 1]} : vector<8x16x128xf32> to vector<8x16x32xf32>
    "tpu.trace_start"() <{level = 10 : i32, message = "bqk,bkd->bqd"}> : () -> ()
    %cst_94 = arith.constant dense<0.000000e+00> : vector<8x16x32xf32>
    %291 = tpu.matmul %289, %290, %cst_94 {dimension_numbers = #tpu.dot_dimension_numbers<[2], [1], [1], [2], [0, 0, 0, 1, 1, 2], [0], [0]>} : vector<8x16x16xf32>, vector<8x16x32xf32>, vector<8x16x32xf32> -> vector<8x16x32xf32>
    "tpu.trace_stop"() : () -> ()
    %292 = arith.addf %288, %291 : vector<8x16x32xf32>
    %293 = vector.extract_strided_slice %281 {offsets = [0, 0, 32], sizes = [8, 16, 16], strides = [1, 1, 1]} : vector<8x16x64xf32> to vector<8x16x16xf32>
    %294 = vector.extract_strided_slice %285 {offsets = [0, 0, 64], sizes = [8, 16, 32], strides = [1, 1, 1]} : vector<8x16x128xf32> to vector<8x16x32xf32>
    "tpu.trace_start"() <{level = 10 : i32, message = "bqk,bkd->bqd"}> : () -> ()
    %cst_95 = arith.constant dense<0.000000e+00> : vector<8x16x32xf32>
    %295 = tpu.matmul %293, %294, %cst_95 {dimension_numbers = #tpu.dot_dimension_numbers<[2], [1], [1], [2], [0, 0, 0, 1, 1, 2], [0], [0]>} : vector<8x16x16xf32>, vector<8x16x32xf32>, vector<8x16x32xf32> -> vector<8x16x32xf32>
    "tpu.trace_stop"() : () -> ()
    %296 = arith.addf %292, %295 : vector<8x16x32xf32>
    %297 = vector.extract_strided_slice %281 {offsets = [0, 0, 48], sizes = [8, 16, 16], strides = [1, 1, 1]} : vector<8x16x64xf32> to vector<8x16x16xf32>
    %298 = vector.extract_strided_slice %285 {offsets = [0, 0, 96], sizes = [8, 16, 32], strides = [1, 1, 1]} : vector<8x16x128xf32> to vector<8x16x32xf32>
    "tpu.trace_start"() <{level = 10 : i32, message = "bqk,bkd->bqd"}> : () -> ()
    %cst_96 = arith.constant dense<0.000000e+00> : vector<8x16x32xf32>
    %299 = tpu.matmul %297, %298, %cst_96 {dimension_numbers = #tpu.dot_dimension_numbers<[2], [1], [1], [2], [0, 0, 0, 1, 1, 2], [0], [0]>} : vector<8x16x16xf32>, vector<8x16x32xf32>, vector<8x16x32xf32> -> vector<8x16x32xf32>
    "tpu.trace_stop"() : () -> ()
    %300 = arith.addf %296, %299 : vector<8x16x32xf32>
    %301 = vector.shape_cast %300 : vector<8x16x32xf32> to vector<128x32xf32>
    %c1_97 = arith.constant 1 : index
    %c0_98 = arith.constant 0 : index
    %c0_99 = arith.constant 0 : index
    %302 = vector.load %arg6[%c1_97, %c0_98, %c0_99] : memref<2x1x32xf32, #tpu.memory_space<vmem>>, vector<1x1x32xf32>
    %303 = vector.shape_cast %302 : vector<1x1x32xf32> to vector<1x32xf32>
    %304 = vector.broadcast %303 : vector<1x32xf32> to vector<128x32xf32>
    %305 = arith.addf %301, %304 : vector<128x32xf32>
    %306 = arith.addf %210, %305 : vector<128x32xf32>
    %c1_100 = arith.constant 1 : index
    %c0_101 = arith.constant 0 : index
    %c0_102 = arith.constant 0 : index
    %307 = vector.load %arg7[%c1_100, %c0_101, %c0_102] : memref<2x1x32xf32, #tpu.memory_space<vmem>>, vector<1x1x32xf32>
    %308 = vector.shape_cast %307 : vector<1x1x32xf32> to vector<1x32xf32>
    %c1_103 = arith.constant 1 : index
    %c0_104 = arith.constant 0 : index
    %c0_105 = arith.constant 0 : index
    %309 = vector.load %arg8[%c1_103, %c0_104, %c0_105] : memref<2x1x32xf32, #tpu.memory_space<vmem>>, vector<1x1x32xf32>
    %310 = vector.shape_cast %309 : vector<1x1x32xf32> to vector<1x32xf32>
    %cst_106 = arith.constant dense<0.000000e+00> : vector<128xf32>
    %311 = vector.multi_reduction <add>, %306, %cst_106 [1] : vector<128x32xf32> to vector<128xf32>
    %312 = vector.shape_cast %311 : vector<128xf32> to vector<128x1xf32>
    %cst_107 = arith.constant 3.200000e+01 : f32
    %313 = vector.broadcast %cst_107 : f32 to vector<128x1xf32>
    %314 = arith.divf %312, %313 : vector<128x1xf32>
    %315 = vector.broadcast %314 : vector<128x1xf32> to vector<128x32xf32>
    %316 = arith.subf %306, %315 : vector<128x32xf32>
    %317 = arith.mulf %316, %316 : vector<128x32xf32>
    %cst_108 = arith.constant dense<0.000000e+00> : vector<128xf32>
    %318 = vector.multi_reduction <add>, %317, %cst_108 [1] : vector<128x32xf32> to vector<128xf32>
    %319 = vector.shape_cast %318 : vector<128xf32> to vector<128x1xf32>
    %cst_109 = arith.constant 3.200000e+01 : f32
    %320 = vector.broadcast %cst_109 : f32 to vector<128x1xf32>
    %321 = arith.divf %319, %320 : vector<128x1xf32>
    %322 = vector.broadcast %314 : vector<128x1xf32> to vector<128x32xf32>
    %323 = arith.subf %306, %322 : vector<128x32xf32>
    %cst_110 = arith.constant 9.99999974E-6 : f32
    %324 = vector.broadcast %cst_110 : f32 to vector<128x1xf32>
    %325 = arith.addf %321, %324 : vector<128x1xf32>
    %326 = math.rsqrt %325 : vector<128x1xf32>
    %327 = vector.broadcast %326 : vector<128x1xf32> to vector<128x32xf32>
    %328 = arith.mulf %323, %327 : vector<128x32xf32>
    %329 = vector.broadcast %308 : vector<1x32xf32> to vector<128x32xf32>
    %330 = arith.mulf %328, %329 : vector<128x32xf32>
    %331 = vector.broadcast %310 : vector<1x32xf32> to vector<128x32xf32>
    %332 = arith.addf %330, %331 : vector<128x32xf32>
    %c1_111 = arith.constant 1 : index
    %c0_112 = arith.constant 0 : index
    %c0_113 = arith.constant 0 : index
    %333 = vector.load %arg9[%c1_111, %c0_112, %c0_113] : memref<2x32x64xf32, #tpu.memory_space<vmem>>, vector<1x32x64xf32>
    %334 = vector.shape_cast %333 : vector<1x32x64xf32> to vector<32x64xf32>
    %cst_114 = arith.constant dense<0.000000e+00> : vector<128x64xf32>
    %335 = tpu.matmul %332, %334, %cst_114 {dimension_numbers = #tpu.dot_dimension_numbers<[1], [0], [0], [1], [0, 0, 1, 1], [], []>} : vector<128x32xf32>, vector<32x64xf32>, vector<128x64xf32> -> vector<128x64xf32>
    %c1_115 = arith.constant 1 : index
    %c0_116 = arith.constant 0 : index
    %c0_117 = arith.constant 0 : index
    %336 = vector.load %arg10[%c1_115, %c0_116, %c0_117] : memref<2x1x64xf32, #tpu.memory_space<vmem>>, vector<1x1x64xf32>
    %337 = vector.shape_cast %336 : vector<1x1x64xf32> to vector<1x64xf32>
    %338 = vector.broadcast %337 : vector<1x64xf32> to vector<128x64xf32>
    %339 = arith.addf %335, %338 : vector<128x64xf32>
    %cst_118 = arith.constant 5.000000e-01 : f32
    %340 = vector.broadcast %cst_118 : f32 to vector<128x64xf32>
    %341 = arith.mulf %340, %339 : vector<128x64xf32>
    %342 = arith.mulf %339, %339 : vector<128x64xf32>
    %343 = arith.mulf %342, %339 : vector<128x64xf32>
    %cst_119 = arith.constant 4.471500e-02 : f32
    %344 = vector.broadcast %cst_119 : f32 to vector<128x64xf32>
    %345 = arith.mulf %344, %343 : vector<128x64xf32>
    %346 = arith.addf %339, %345 : vector<128x64xf32>
    %cst_120 = arith.constant 0.797884583 : f32
    %347 = vector.broadcast %cst_120 : f32 to vector<128x64xf32>
    %348 = arith.mulf %347, %346 : vector<128x64xf32>
    %349 = math.tanh %348 : vector<128x64xf32>
    %cst_121 = arith.constant 1.000000e+00 : f32
    %350 = vector.broadcast %cst_121 : f32 to vector<128x64xf32>
    %351 = arith.addf %350, %349 : vector<128x64xf32>
    %352 = arith.mulf %341, %351 : vector<128x64xf32>
    %c1_122 = arith.constant 1 : index
    %c0_123 = arith.constant 0 : index
    %c0_124 = arith.constant 0 : index
    %353 = vector.load %arg11[%c1_122, %c0_123, %c0_124] : memref<2x64x32xf32, #tpu.memory_space<vmem>>, vector<1x64x32xf32>
    %354 = vector.shape_cast %353 : vector<1x64x32xf32> to vector<64x32xf32>
    %cst_125 = arith.constant dense<0.000000e+00> : vector<128x32xf32>
    %355 = tpu.matmul %352, %354, %cst_125 {dimension_numbers = #tpu.dot_dimension_numbers<[1], [0], [0], [1], [0, 0, 1, 1], [], []>} : vector<128x64xf32>, vector<64x32xf32>, vector<128x32xf32> -> vector<128x32xf32>
    %c1_126 = arith.constant 1 : index
    %c0_127 = arith.constant 0 : index
    %c0_128 = arith.constant 0 : index
    %356 = vector.load %arg12[%c1_126, %c0_127, %c0_128] : memref<2x1x32xf32, #tpu.memory_space<vmem>>, vector<1x1x32xf32>
    %357 = vector.shape_cast %356 : vector<1x1x32xf32> to vector<1x32xf32>
    %358 = vector.broadcast %357 : vector<1x32xf32> to vector<128x32xf32>
    %359 = arith.addf %355, %358 : vector<128x32xf32>
    %360 = arith.addf %332, %359 : vector<128x32xf32>
    %c1_129 = arith.constant 1 : index
    %c0_130 = arith.constant 0 : index
    %c0_131 = arith.constant 0 : index
    %361 = vector.load %arg13[%c1_129, %c0_130, %c0_131] : memref<2x1x32xf32, #tpu.memory_space<vmem>>, vector<1x1x32xf32>
    %362 = vector.shape_cast %361 : vector<1x1x32xf32> to vector<1x32xf32>
    %c1_132 = arith.constant 1 : index
    %c0_133 = arith.constant 0 : index
    %c0_134 = arith.constant 0 : index
    %363 = vector.load %arg14[%c1_132, %c0_133, %c0_134] : memref<2x1x32xf32, #tpu.memory_space<vmem>>, vector<1x1x32xf32>
    %364 = vector.shape_cast %363 : vector<1x1x32xf32> to vector<1x32xf32>
    %cst_135 = arith.constant dense<0.000000e+00> : vector<128xf32>
    %365 = vector.multi_reduction <add>, %360, %cst_135 [1] : vector<128x32xf32> to vector<128xf32>
    %366 = vector.shape_cast %365 : vector<128xf32> to vector<128x1xf32>
    %cst_136 = arith.constant 3.200000e+01 : f32
    %367 = vector.broadcast %cst_136 : f32 to vector<128x1xf32>
    %368 = arith.divf %366, %367 : vector<128x1xf32>
    %369 = vector.broadcast %368 : vector<128x1xf32> to vector<128x32xf32>
    %370 = arith.subf %360, %369 : vector<128x32xf32>
    %371 = arith.mulf %370, %370 : vector<128x32xf32>
    %cst_137 = arith.constant dense<0.000000e+00> : vector<128xf32>
    %372 = vector.multi_reduction <add>, %371, %cst_137 [1] : vector<128x32xf32> to vector<128xf32>
    %373 = vector.shape_cast %372 : vector<128xf32> to vector<128x1xf32>
    %cst_138 = arith.constant 3.200000e+01 : f32
    %374 = vector.broadcast %cst_138 : f32 to vector<128x1xf32>
    %375 = arith.divf %373, %374 : vector<128x1xf32>
    %376 = vector.broadcast %368 : vector<128x1xf32> to vector<128x32xf32>
    %377 = arith.subf %360, %376 : vector<128x32xf32>
    %cst_139 = arith.constant 9.99999974E-6 : f32
    %378 = vector.broadcast %cst_139 : f32 to vector<128x1xf32>
    %379 = arith.addf %375, %378 : vector<128x1xf32>
    %380 = math.rsqrt %379 : vector<128x1xf32>
    %381 = vector.broadcast %380 : vector<128x1xf32> to vector<128x32xf32>
    %382 = arith.mulf %377, %381 : vector<128x32xf32>
    %383 = vector.broadcast %362 : vector<1x32xf32> to vector<128x32xf32>
    %384 = arith.mulf %382, %383 : vector<128x32xf32>
    %385 = vector.broadcast %364 : vector<1x32xf32> to vector<128x32xf32>
    %386 = arith.addf %384, %385 : vector<128x32xf32>
    %c0_140 = arith.constant 0 : index
    %c0_141 = arith.constant 0 : index
    %387 = vector.load %arg15[%c0_140, %c0_141] : memref<1x32xf32, #tpu.memory_space<vmem>>, vector<1x32xf32>
    %c0_142 = arith.constant 0 : index
    %c0_143 = arith.constant 0 : index
    %388 = vector.load %arg16[%c0_142, %c0_143] : memref<1x32xf32, #tpu.memory_space<vmem>>, vector<1x32xf32>
    %cst_144 = arith.constant dense<0.000000e+00> : vector<128xf32>
    %389 = vector.multi_reduction <add>, %386, %cst_144 [1] : vector<128x32xf32> to vector<128xf32>
    %390 = vector.shape_cast %389 : vector<128xf32> to vector<128x1xf32>
    %cst_145 = arith.constant 3.200000e+01 : f32
    %391 = vector.broadcast %cst_145 : f32 to vector<128x1xf32>
    %392 = arith.divf %390, %391 : vector<128x1xf32>
    %393 = vector.broadcast %392 : vector<128x1xf32> to vector<128x32xf32>
    %394 = arith.subf %386, %393 : vector<128x32xf32>
    %395 = arith.mulf %394, %394 : vector<128x32xf32>
    %cst_146 = arith.constant dense<0.000000e+00> : vector<128xf32>
    %396 = vector.multi_reduction <add>, %395, %cst_146 [1] : vector<128x32xf32> to vector<128xf32>
    %397 = vector.shape_cast %396 : vector<128xf32> to vector<128x1xf32>
    %cst_147 = arith.constant 3.200000e+01 : f32
    %398 = vector.broadcast %cst_147 : f32 to vector<128x1xf32>
    %399 = arith.divf %397, %398 : vector<128x1xf32>
    %400 = vector.broadcast %392 : vector<128x1xf32> to vector<128x32xf32>
    %401 = arith.subf %386, %400 : vector<128x32xf32>
    %cst_148 = arith.constant 9.99999974E-6 : f32
    %402 = vector.broadcast %cst_148 : f32 to vector<128x1xf32>
    %403 = arith.addf %399, %402 : vector<128x1xf32>
    %404 = math.rsqrt %403 : vector<128x1xf32>
    %405 = vector.broadcast %404 : vector<128x1xf32> to vector<128x32xf32>
    %406 = arith.mulf %401, %405 : vector<128x32xf32>
    %407 = vector.broadcast %387 : vector<1x32xf32> to vector<128x32xf32>
    %408 = arith.mulf %406, %407 : vector<128x32xf32>
    %409 = vector.broadcast %388 : vector<1x32xf32> to vector<128x32xf32>
    %410 = arith.addf %408, %409 : vector<128x32xf32>
    %411 = vector.shape_cast %410 : vector<128x32xf32> to vector<8x16x32xf32>
    %412 = tpu.iota {dimensions = array<i32: 1>} : vector<8x16x32xi32>
    %c14_i32 = arith.constant 14 : i32
    %413 = vector.broadcast %c14_i32 : i32 to vector<8x16x32xi32>
    %414 = arith.cmpi slt, %412, %413 : vector<8x16x32xi32>
    %415 = arith.extui %414 : vector<8x16x32xi1> to vector<8x16x32xi32>
    %416 = arith.sitofp %415 : vector<8x16x32xi32> to vector<8x16x32xf32>
    %417 = arith.mulf %411, %416 : vector<8x16x32xf32>
    %cst_149 = arith.constant dense<0.000000e+00> : vector<8x32xf32>
    %418 = vector.multi_reduction <add>, %417, %cst_149 [1] : vector<8x16x32xf32> to vector<8x32xf32>
    %cst_150 = arith.constant 0.0714285746 : f32
    %419 = vector.broadcast %cst_150 : f32 to vector<8x32xf32>
    %420 = arith.mulf %418, %419 : vector<8x32xf32>
    %c0_151 = arith.constant 0 : index
    %c0_152 = arith.constant 0 : index
    %421 = vector.load %arg17[%c0_151, %c0_152] : memref<32x128xf32, #tpu.memory_space<vmem>>, vector<32x128xf32>
    %cst_153 = arith.constant dense<0.000000e+00> : vector<8x128xf32>
    %422 = tpu.matmul %420, %421, %cst_153 {dimension_numbers = #tpu.dot_dimension_numbers<[1], [0], [0], [1], [0, 0, 1, 1], [], []>} : vector<8x32xf32>, vector<32x128xf32>, vector<8x128xf32> -> vector<8x128xf32>
    %c0_154 = arith.constant 0 : index
    %c0_155 = arith.constant 0 : index
    %423 = vector.load %arg18[%c0_154, %c0_155] : memref<1x128xf32, #tpu.memory_space<vmem>>, vector<1x128xf32>
    %424 = vector.broadcast %423 : vector<1x128xf32> to vector<8x128xf32>
    %425 = arith.addf %422, %424 : vector<8x128xf32>
    %c0_156 = arith.constant 0 : index
    %c0_157 = arith.constant 0 : index
    %426 = vector.load %arg19[%c0_156, %c0_157] : memref<8x128xf32, #tpu.memory_space<vmem>>, vector<8x128xf32>
    tpu.vector_store %arg19[%c0_156, %c0_157], %425 {strides = array<i32>} : memref<8x128xf32, #tpu.memory_space<vmem>>, vector<8x128xf32>,
    return
  }
  func.func @transform_0(%arg0: i32) -> (i32, i32, i32) {
    %c0_i32 = arith.constant 0 : i32
    %c0_i32_0 = arith.constant 0 : i32
    %c0_i32_1 = arith.constant 0 : i32
    return %arg0, %c0_i32, %c0_i32_0 : i32, i32, i32
  }
  func.func @transform_1(%arg0: i32) -> (i32, i32, i32) {
    %c0_i32 = arith.constant 0 : i32
    %c0_i32_0 = arith.constant 0 : i32
    %c0_i32_1 = arith.constant 0 : i32
    return %arg0, %c0_i32, %c0_i32_0 : i32, i32, i32
  }
  func.func @transform_2(%arg0: i32) -> (i32, i32, i32) {
    %c0_i32 = arith.constant 0 : i32
    %c0_i32_0 = arith.constant 0 : i32
    %c0_i32_1 = arith.constant 0 : i32
    %c0_i32_2 = arith.constant 0 : i32
    return %c0_i32, %c0_i32_0, %c0_i32_1 : i32, i32, i32
  }
  func.func @transform_3(%arg0: i32) -> (i32, i32, i32) {
    %c0_i32 = arith.constant 0 : i32
    %c0_i32_0 = arith.constant 0 : i32
    %c0_i32_1 = arith.constant 0 : i32
    %c0_i32_2 = arith.constant 0 : i32
    return %c0_i32, %c0_i32_0, %c0_i32_1 : i32, i32, i32
  }
  func.func @transform_4(%arg0: i32) -> (i32, i32, i32) {
    %c0_i32 = arith.constant 0 : i32
    %c0_i32_0 = arith.constant 0 : i32
    %c0_i32_1 = arith.constant 0 : i32
    %c0_i32_2 = arith.constant 0 : i32
    return %c0_i32, %c0_i32_0, %c0_i32_1 : i32, i32, i32
  }
  func.func @transform_5(%arg0: i32) -> (i32, i32, i32) {
    %c0_i32 = arith.constant 0 : i32
    %c0_i32_0 = arith.constant 0 : i32
    %c0_i32_1 = arith.constant 0 : i32
    %c0_i32_2 = arith.constant 0 : i32
    return %c0_i32, %c0_i32_0, %c0_i32_1 : i32, i32, i32
  }
  func.func @transform_6(%arg0: i32) -> (i32, i32, i32) {
    %c0_i32 = arith.constant 0 : i32
    %c0_i32_0 = arith.constant 0 : i32
    %c0_i32_1 = arith.constant 0 : i32
    %c0_i32_2 = arith.constant 0 : i32
    return %c0_i32, %c0_i32_0, %c0_i32_1 : i32, i32, i32
  }
  func.func @transform_7(%arg0: i32) -> (i32, i32, i32) {
    %c0_i32 = arith.constant 0 : i32
    %c0_i32_0 = arith.constant 0 : i32
    %c0_i32_1 = arith.constant 0 : i32
    %c0_i32_2 = arith.constant 0 : i32
    return %c0_i32, %c0_i32_0, %c0_i32_1 : i32, i32, i32
  }
  func.func @transform_8(%arg0: i32) -> (i32, i32, i32) {
    %c0_i32 = arith.constant 0 : i32
    %c0_i32_0 = arith.constant 0 : i32
    %c0_i32_1 = arith.constant 0 : i32
    %c0_i32_2 = arith.constant 0 : i32
    return %c0_i32, %c0_i32_0, %c0_i32_1 : i32, i32, i32
  }
  func.func @transform_9(%arg0: i32) -> (i32, i32, i32) {
    %c0_i32 = arith.constant 0 : i32
    %c0_i32_0 = arith.constant 0 : i32
    %c0_i32_1 = arith.constant 0 : i32
    %c0_i32_2 = arith.constant 0 : i32
    return %c0_i32, %c0_i32_0, %c0_i32_1 : i32, i32, i32
  }
  func.func @transform_10(%arg0: i32) -> (i32, i32, i32) {
    %c0_i32 = arith.constant 0 : i32
    %c0_i32_0 = arith.constant 0 : i32
    %c0_i32_1 = arith.constant 0 : i32
    %c0_i32_2 = arith.constant 0 : i32
    return %c0_i32, %c0_i32_0, %c0_i32_1 : i32, i32, i32
  }
  func.func @transform_11(%arg0: i32) -> (i32, i32, i32) {
    %c0_i32 = arith.constant 0 : i32
    %c0_i32_0 = arith.constant 0 : i32
    %c0_i32_1 = arith.constant 0 : i32
    %c0_i32_2 = arith.constant 0 : i32
    return %c0_i32, %c0_i32_0, %c0_i32_1 : i32, i32, i32
  }
  func.func @transform_12(%arg0: i32) -> (i32, i32, i32) {
    %c0_i32 = arith.constant 0 : i32
    %c0_i32_0 = arith.constant 0 : i32
    %c0_i32_1 = arith.constant 0 : i32
    %c0_i32_2 = arith.constant 0 : i32
    return %c0_i32, %c0_i32_0, %c0_i32_1 : i32, i32, i32
  }
  func.func @transform_13(%arg0: i32) -> (i32, i32, i32) {
    %c0_i32 = arith.constant 0 : i32
    %c0_i32_0 = arith.constant 0 : i32
    %c0_i32_1 = arith.constant 0 : i32
    %c0_i32_2 = arith.constant 0 : i32
    return %c0_i32, %c0_i32_0, %c0_i32_1 : i32, i32, i32
  }
  func.func @transform_14(%arg0: i32) -> (i32, i32) {
    %c0_i32 = arith.constant 0 : i32
    %c0_i32_0 = arith.constant 0 : i32
    %c0_i32_1 = arith.constant 0 : i32
    return %c0_i32, %c0_i32_0 : i32, i32
  }
  func.func @transform_15(%arg0: i32) -> (i32, i32) {
    %c0_i32 = arith.constant 0 : i32
    %c0_i32_0 = arith.constant 0 : i32
    %c0_i32_1 = arith.constant 0 : i32
    return %c0_i32, %c0_i32_0 : i32, i32
  }
  func.func @transform_16(%arg0: i32) -> (i32, i32) {
    %c0_i32 = arith.constant 0 : i32
    %c0_i32_0 = arith.constant 0 : i32
    %c0_i32_1 = arith.constant 0 : i32
    return %c0_i32, %c0_i32_0 : i32, i32
  }
  func.func @transform_17(%arg0: i32) -> (i32, i32) {
    %c0_i32 = arith.constant 0 : i32
    %c0_i32_0 = arith.constant 0 : i32
    %c0_i32_1 = arith.constant 0 : i32
    return %c0_i32, %c0_i32_0 : i32, i32
  }
  func.func @transform_18(%arg0: i32) -> (i32, i32) {
    %c0_i32 = arith.constant 0 : i32
    %c0_i32_0 = arith.constant 0 : i32
    return %arg0, %c0_i32 : i32, i32
  }
}

</mosaic_0001>

<llo_original>
// kernel: tpu_custom_call.1
$region0: #{tpu_custom_call.1}
  #allocation0 [shape = 'u32[]', space=smem, size = 0x4, offset = 0x4, fixed_abs, tag = 'smem constant byte address 0x4 - core index']
  #allocation1 [shape = 'u32[72,128]{1,0:T(1,128)}', space=vmem, size = 0x9000, scoped, tag = 'internal scratch']
  %s0 = inlined_call_operand.vmem [shape: f32[8,16,32], index: 0, kind: input, shape index: {}]
  %s1 = inlined_call_operand.hbm [shape: f32[8,1,16], index: 1, kind: input, shape index: {}]
  %s2 = inlined_call_operand.vmem [shape: f32[2,32,64], index: 2, kind: input, shape index: {}]
  %s3 = inlined_call_operand.vmem [shape: f32[2,1,64], index: 3, kind: input, shape index: {}]
  %s4 = inlined_call_operand.hbm [shape: f32[2,32,128], index: 4, kind: input, shape index: {}]
  %s5 = inlined_call_operand.hbm [shape: f32[2,1,32], index: 5, kind: input, shape index: {}]
  %s6 = inlined_call_operand.vmem [shape: f32[2,1,32], index: 6, kind: input, shape index: {}]
  %s7 = inlined_call_operand.hbm [shape: f32[2,1,32], index: 7, kind: input, shape index: {}]
  %s8 = inlined_call_operand.hbm [shape: f32[2,32,64], index: 8, kind: input, shape index: {}]
  %s9 = inlined_call_operand.vmem [shape: f32[2,1,64], index: 9, kind: input, shape index: {}]
  %s10 = inlined_call_operand.vmem [shape: f32[2,64,32], index: 10, kind: input, shape index: {}]
  %s11 = inlined_call_operand.vmem [shape: f32[2,1,32], index: 11, kind: input, shape index: {}]
  %s12 = inlined_call_operand.vmem [shape: f32[2,1,32], index: 12, kind: input, shape index: {}]
  %s13 = inlined_call_operand.hbm [shape: f32[2,1,32], index: 13, kind: input, shape index: {}]
  %s14 = inlined_call_operand.vmem [shape: f32[1,32], index: 14, kind: input, shape index: {}]
  %s15 = inlined_call_operand.vmem [shape: f32[1,32], index: 15, kind: input, shape index: {}]
  %s16 = inlined_call_operand.hbm [shape: f32[32,128], index: 16, kind: input, shape index: {}]
  %s17 = inlined_call_operand.vmem [shape: f32[1,128], index: 17, kind: input, shape index: {}]
  %s18 = inlined_call_operand.hbm [shape: f32[8,128], index: 18, kind: output, shape index: {}]
  %s19 = sld [smem:[#allocation0]]
  $region110: #{tpu_custom_call.1} parent=0
    _
  %s21 = ssub.s32 1, %s19
  %s22 = scalar_select 0, %s21, %s19
  $region1: #{tpu_custom_call.1} parent=0
    #allocation2 [shape = 'u8[4096]{0}', space=vmem, size = 0x1000, scoped, tag = 'input window, operand 1, single buffered']
    #allocation3 [shape = 's32[1]{0}', space=sflag, size = 0x4, scoped, tag = 'scoped memory for tpu_custom_call.1']
    #allocation4 [shape = 's32[1]{0}', space=sflag, size = 0x4, scoped, tag = 'scoped memory for tpu_custom_call.1']
    #allocation5 [shape = 'u8[32768]{0}', space=vmem, size = 0x8000, scoped, tag = 'input window, operand 4, single buffered']
    #allocation6 [shape = 's32[1]{0}', space=sflag, size = 0x4, scoped, tag = 'scoped memory for tpu_custom_call.1']
    #allocation7 [shape = 'u8[1024]{0}', space=vmem, size = 0x400, scoped, tag = 'input window, operand 5, single buffered']
    #allocation8 [shape = 'u8[1024]{0}', space=vmem, size = 0x400, scoped, tag = 'input window, operand 7, single buffered']
    #allocation9 [shape = 's32[1]{0}', space=sflag, size = 0x4, scoped, tag = 'scoped memory for tpu_custom_call.1']
    #allocation10 [shape = 'u8[32768]{0}', space=vmem, size = 0x8000, scoped, tag = 'input window, operand 8, single buffered']
    #allocation11 [shape = 'u8[1024]{0}', space=vmem, size = 0x400, scoped, tag = 'input window, operand 13, single buffered']
    #allocation12 [shape = 's32[1]{0}', space=sflag, size = 0x4, scoped, tag = 'scoped memory for tpu_custom_call.1']
    #allocation13 [shape = 'u8[16384]{0}', space=vmem, size = 0x4000, scoped, tag = 'input window, operand 16, single buffered']
    #allocation14 [shape = 'u8[4096]{0}', space=vmem, size = 0x1000, scoped, tag = 'output window, operand 0, single buffered']
    %23 = vsyncpa [#allocation3], 0
    %24 = vsyncpa [#allocation6], 0
    %25 = vsyncpa [#allocation9], 0
    %26 = vsyncpa [#allocation12], 0
    %27 = vsyncpa [#allocation4], 0
    // Predicated region
    $region2: #{tpu_custom_call.1} parent=1 // pred_check
      _
    $region3: #{tpu_custom_call.1} parent=1 // pred_check_branch
      %29 = sbr.rel (0) target = $region5
    $region4: #{tpu_custom_call.1} parent=1 // pred_region
      _
    $region5: #{tpu_custom_call.1} parent=1 // pred_fallthru
      _
    // Predicated region
    $region6: #{tpu_custom_call.1} parent=1 // pred_check
      _
    $region7: #{tpu_custom_call.1} parent=1 // pred_check_branch
      %31 = sbr.rel (0) target = $region9
    $region8: #{tpu_custom_call.1} parent=1 // pred_region
      %33 = vsyncadd [#allocation3], 0
      %s34 = sshll.u32 %s1, 4
      %s35 = int_to_ptr.hbm [resolvable:$true] %s34
      %s36 = sshll.u32 [#allocation2], 4
      %s37 = int_to_ptr.vmem [resolvable:$true] %s36
      %42 = dma.hbm_to_vmem [thread:$0]  %s35, 128, %s37, [#allocation3], 16, 16, 1
    $region9: #{tpu_custom_call.1} parent=1 // pred_fallthru
      _
    // Predicated region
    $region10: #{tpu_custom_call.1} parent=1 // pred_check
      _
    $region11: #{tpu_custom_call.1} parent=1 // pred_check_branch
      %44 = sbr.rel (0) target = $region13
    $region12: #{tpu_custom_call.1} parent=1 // pred_region
      _
    $region13: #{tpu_custom_call.1} parent=1 // pred_fallthru
      _
    // Predicated region
    $region14: #{tpu_custom_call.1} parent=1 // pred_check
      _
    $region15: #{tpu_custom_call.1} parent=1 // pred_check_branch
      %46 = sbr.rel (0) target = $region17
    $region16: #{tpu_custom_call.1} parent=1 // pred_region
      _
    $region17: #{tpu_custom_call.1} parent=1 // pred_fallthru
      _
    // Predicated region
    $region18: #{tpu_custom_call.1} parent=1 // pred_check
      _
    $region19: #{tpu_custom_call.1} parent=1 // pred_check_branch
      %48 = sbr.rel (0) target = $region21
    $region20: #{tpu_custom_call.1} parent=1 // pred_region
      %50 = vsyncadd [#allocation6], 0
      %s51 = sshll.u32 %s4, 4
      %s52 = int_to_ptr.hbm [resolvable:$true] %s51
      %s53 = sshll.u32 [#allocation5], 4
      %s54 = int_to_ptr.vmem [resolvable:$true] %s53
      %59 = dma.hbm_to_vmem [thread:$0]  %s52, 1024, %s54, [#allocation6], 128, 128, 8
    $region21: #{tpu_custom_call.1} parent=1 // pred_fallthru
      _
    // Predicated region
    $region22: #{tpu_custom_call.1} parent=1 // pred_check
      _
    $region23: #{tpu_custom_call.1} parent=1 // pred_check_branch
      %61 = sbr.rel (0) target = $region25
    $region24: #{tpu_custom_call.1} parent=1 // pred_region
      %63 = vsyncadd [#allocation6], 0
      %s64 = sshll.u32 %s5, 4
      %s65 = int_to_ptr.hbm [resolvable:$true] %s64
      %s66 = sshll.u32 [#allocation7], 4
      %s67 = int_to_ptr.vmem [resolvable:$true] %s66
      %72 = dma.hbm_to_vmem [thread:$0]  %s65, 32, %s67, [#allocation6], 16, 16, 1
    $region25: #{tpu_custom_call.1} parent=1 // pred_fallthru
      _
    // Predicated region
    $region26: #{tpu_custom_call.1} parent=1 // pred_check
      _
    $region27: #{tpu_custom_call.1} parent=1 // pred_check_branch
      %74 = sbr.rel (0) target = $region29
    $region28: #{tpu_custom_call.1} parent=1 // pred_region
      _
    $region29: #{tpu_custom_call.1} parent=1 // pred_fallthru
      _
    // Predicated region
    $region30: #{tpu_custom_call.1} parent=1 // pred_check
      _
    $region31: #{tpu_custom_call.1} parent=1 // pred_check_branch
      %76 = sbr.rel (0) target = $region33
    $region32: #{tpu_custom_call.1} parent=1 // pred_region
      %78 = vsyncadd [#allocation9], 0
      %s79 = sshll.u32 %s7, 4
      %s80 = int_to_ptr.hbm [resolvable:$true] %s79
      %s81 = sshll.u32 [#allocation8], 4
      %s82 = int_to_ptr.vmem [resolvable:$true] %s81
      %87 = dma.hbm_to_vmem [thread:$0]  %s80, 32, %s82, [#allocation9], 16, 16, 1
    $region33: #{tpu_custom_call.1} parent=1 // pred_fallthru
      _
    // Predicated region
    $region34: #{tpu_custom_call.1} parent=1 // pred_check
      _
    $region35: #{tpu_custom_call.1} parent=1 // pred_check_branch
      %89 = sbr.rel (0) target = $region37
    $region36: #{tpu_custom_call.1} parent=1 // pred_region
      %91 = vsyncadd [#allocation9], 0
      %s92 = sshll.u32 %s8, 4
      %s93 = int_to_ptr.hbm [resolvable:$true] %s92
      %s94 = sshll.u32 [#allocation10], 4
      %s95 = int_to_ptr.vmem [resolvable:$true] %s94
      %100 = dma.hbm_to_vmem [thread:$0]  %s93, 1024, %s95, [#allocation9], 128, 128, 8
    $region37: #{tpu_custom_call.1} parent=1 // pred_fallthru
      _
    // Predicated region
    $region38: #{tpu_custom_call.1} parent=1 // pred_check
      _
    $region39: #{tpu_custom_call.1} parent=1 // pred_check_branch
      %102 = sbr.rel (0) target = $region41
    $region40: #{tpu_custom_call.1} parent=1 // pred_region
      _
    $region41: #{tpu_custom_call.1} parent=1 // pred_fallthru
      _
    // Predicated region
    $region42: #{tpu_custom_call.1} parent=1 // pred_check
      _
    $region43: #{tpu_custom_call.1} parent=1 // pred_check_branch
      %104 = sbr.rel (0) target = $region45
    $region44: #{tpu_custom_call.1} parent=1 // pred_region
      _
    $region45: #{tpu_custom_call.1} parent=1 // pred_fallthru
      _
    // Predicated region
    $region46: #{tpu_custom_call.1} parent=1 // pred_check
      _
    $region47: #{tpu_custom_call.1} parent=1 // pred_check_branch
      %106 = sbr.rel (0) target = $region49
    $region48: #{tpu_custom_call.1} parent=1 // pred_region
      _
    $region49: #{tpu_custom_call.1} parent=1 // pred_fallthru
      _
    // Predicated region
    $region50: #{tpu_custom_call.1} parent=1 // pred_check
      _
    $region51: #{tpu_custom_call.1} parent=1 // pred_check_branch
      %108 = sbr.rel (0) target = $region53
    $region52: #{tpu_custom_call.1} parent=1 // pred_region
      _
    $region53: #{tpu_custom_call.1} parent=1 // pred_fallthru
      _
    // Predicated region
    $region54: #{tpu_custom_call.1} parent=1 // pred_check
      _
    $region55: #{tpu_custom_call.1} parent=1 // pred_check_branch
      %110 = sbr.rel (0) target = $region57
    $region56: #{tpu_custom_call.1} parent=1 // pred_region
      %112 = vsyncadd [#allocation12], 0
      %s113 = sshll.u32 %s13, 4
      %s114 = int_to_ptr.hbm [resolvable:$true] %s113
      %s115 = sshll.u32 [#allocation11], 4
      %s116 = int_to_ptr.vmem [resolvable:$true] %s115
      %121 = dma.hbm_to_vmem [thread:$0]  %s114, 32, %s116, [#allocation12], 16, 16, 1
    $region57: #{tpu_custom_call.1} parent=1 // pred_fallthru
      _
    // Predicated region
    $region58: #{tpu_custom_call.1} parent=1 // pred_check
      _
    $region59: #{tpu_custom_call.1} parent=1 // pred_check_branch
      %123 = sbr.rel (0) target = $region61
    $region60: #{tpu_custom_call.1} parent=1 // pred_region
      _
    $region61: #{tpu_custom_call.1} parent=1 // pred_fallthru
      _
    // Predicated region
    $region62: #{tpu_custom_call.1} parent=1 // pred_check
      _
    $region63: #{tpu_custom_call.1} parent=1 // pred_check_branch
      %125 = sbr.rel (0) target = $region65
    $region64: #{tpu_custom_call.1} parent=1 // pred_region
      _
    $region65: #{tpu_custom_call.1} parent=1 // pred_fallthru
      _
    // Predicated region
    $region66: #{tpu_custom_call.1} parent=1 // pred_check
      _
    $region67: #{tpu_custom_call.1} parent=1 // pred_check_branch
      %127 = sbr.rel (0) target = $region69
    $region68: #{tpu_custom_call.1} parent=1 // pred_region
      %129 = vsyncadd [#allocation12], 0
      %s130 = sshll.u32 %s16, 4
      %s131 = int_to_ptr.hbm [resolvable:$true] %s130
      %s132 = sshll.u32 [#allocation13], 4
      %s133 = int_to_ptr.vmem [resolvable:$true] %s132
      %138 = dma.hbm_to_vmem [thread:$0]  %s131, 512, %s133, [#allocation12], 128, 128, 8
    $region69: #{tpu_custom_call.1} parent=1 // pred_fallthru
      _
    // Predicated region
    $region70: #{tpu_custom_call.1} parent=1 // pred_check
      _
    $region71: #{tpu_custom_call.1} parent=1 // pred_check_branch
      %140 = sbr.rel (0) target = $region73
    $region72: #{tpu_custom_call.1} parent=1 // pred_region
      _
    $region73: #{tpu_custom_call.1} parent=1 // pred_fallthru
      _
    // Predicated region
    $region74: #{tpu_custom_call.1} parent=1 // pred_check
      _
    $region75: #{tpu_custom_call.1} parent=1 // pred_check_branch
      %142 = sbr.rel (0) target = $region77
    $region76: #{tpu_custom_call.1} parent=1 // pred_region
      %144 = dma.done [#allocation3], 128
    $region77: #{tpu_custom_call.1} parent=1 // pred_fallthru
      _
    // Predicated region
    $region78: #{tpu_custom_call.1} parent=1 // pred_check
      _
    $region79: #{tpu_custom_call.1} parent=1 // pred_check_branch
      %146 = sbr.rel (0) target = $region81
    $region80: #{tpu_custom_call.1} parent=1 // pred_region
      %148 = dma.done [#allocation6], 1024
    $region81: #{tpu_custom_call.1} parent=1 // pred_fallthru
      _
    // Predicated region
    $region82: #{tpu_custom_call.1} parent=1 // pred_check
      _
    $region83: #{tpu_custom_call.1} parent=1 // pred_check_branch
      %150 = sbr.rel (0) target = $region85
    $region84: #{tpu_custom_call.1} parent=1 // pred_region
      %152 = dma.done [#allocation6], 32
    $region85: #{tpu_custom_call.1} parent=1 // pred_fallthru
      _
    // Predicated region
    $region86: #{tpu_custom_call.1} parent=1 // pred_check
      _
    $region87: #{tpu_custom_call.1} parent=1 // pred_check_branch
      %154 = sbr.rel (0) target = $region89
    $region88: #{tpu_custom_call.1} parent=1 // pred_region
      %156 = dma.done [#allocation9], 32
    $region89: #{tpu_custom_call.1} parent=1 // pred_fallthru
      _
    // Predicated region
    $region90: #{tpu_custom_call.1} parent=1 // pred_check
      _
    $region91: #{tpu_custom_call.1} parent=1 // pred_check_branch
      %158 = sbr.rel (0) target = $region93
    $region92: #{tpu_custom_call.1} parent=1 // pred_region
      %160 = dma.done [#allocation9], 1024
    $region93: #{tpu_custom_call.1} parent=1 // pred_fallthru
      _
    // Predicated region
    $region94: #{tpu_custom_call.1} parent=1 // pred_check
      _
    $region95: #{tpu_custom_call.1} parent=1 // pred_check_branch
      %162 = sbr.rel (0) target = $region97
    $region96: #{tpu_custom_call.1} parent=1 // pred_region
      %164 = dma.done [#allocation12], 32
    $region97: #{tpu_custom_call.1} parent=1 // pred_fallthru
      _
    // Predicated region
    $region98: #{tpu_custom_call.1} parent=1 // pred_check
      _
    $region99: #{tpu_custom_call.1} parent=1 // pred_check_branch
      %166 = sbr.rel (0) target = $region101
    $region100: #{tpu_custom_call.1} parent=1 // pred_region
      %168 = dma.done [#allocation12], 512
    $region101: #{tpu_custom_call.1} parent=1 // pred_fallthru
      _
    %v169 = vld [vmem:[%s0] sm:$0xff]
    %v170 = vld [vmem:[%s0 + $0x8] sm:$0xff]
    %v171 = vld [vmem:[%s0 + $0x10] sm:$0xff]
    %v172 = vld [vmem:[%s0 + $0x18] sm:$0xff]
    %v173 = vld [vmem:[%s0 + $0x20] sm:$0xff]
    %v174 = vld [vmem:[%s0 + $0x28] sm:$0xff]
    %v175 = vld [vmem:[%s0 + $0x30] sm:$0xff]
    %v176 = vld [vmem:[%s0 + $0x38] sm:$0xff]
    %v177 = vld [vmem:[%s0 + $0x40] sm:$0xff]
    %v178 = vld [vmem:[%s0 + $0x48] sm:$0xff]
    %v179 = vld [vmem:[%s0 + $0x50] sm:$0xff]
    %v180 = vld [vmem:[%s0 + $0x58] sm:$0xff]
    %v181 = vld [vmem:[%s0 + $0x60] sm:$0xff]
    %v182 = vld [vmem:[%s0 + $0x68] sm:$0xff]
    %v183 = vld [vmem:[%s0 + $0x70] sm:$0xff]
    %v184 = vld [vmem:[%s0 + $0x78] sm:$0xff]
    %v185 = vld [vmem:[#allocation2] sm:$0x1]
    %v186 = vld [vmem:[#allocation2 + $0x1] sm:$0x1]
    %v187 = vld [vmem:[#allocation2 + $0x2] sm:$0x1]
    %v188 = vld [vmem:[#allocation2 + $0x3] sm:$0x1]
    %v189 = vld [vmem:[#allocation2 + $0x4] sm:$0x1]
    %v190 = vld [vmem:[#allocation2 + $0x5] sm:$0x1]
    %v191 = vld [vmem:[#allocation2 + $0x6] sm:$0x1]
    %v192 = vld [vmem:[#allocation2 + $0x7] sm:$0x1]
    %v201 = vperm.slane %v185, 0
    %v202 = vperm.slane %v186, 0
    %v203 = vperm.slane %v187, 0
    %v204 = vperm.slane %v188, 0
    %v205 = vperm.slane %v189, 0
    %v206 = vperm.slane %v190, 0
    %v207 = vperm.slane %v191, 0
    %v208 = vperm.slane %v192, 0
    %217 = vrot.lane.b32.xlu0 %v201, 16
    %v218 = vpop.permute.xlu0 %217
    %219 = vrot.lane.b32.xlu0 %v202, 16
    %v220 = vpop.permute.xlu0 %219
    %221 = vrot.lane.b32.xlu0 %v203, 16
    %v222 = vpop.permute.xlu0 %221
    %223 = vrot.lane.b32.xlu0 %v204, 16
    %v224 = vpop.permute.xlu0 %223
    %225 = vrot.lane.b32.xlu0 %v205, 16
    %v226 = vpop.permute.xlu0 %225
    %227 = vrot.lane.b32.xlu0 %v206, 16
    %v228 = vpop.permute.xlu0 %227
    %229 = vrot.lane.b32.xlu0 %v207, 16
    %v230 = vpop.permute.xlu0 %229
    %231 = vrot.lane.b32.xlu0 %v208, 16
    %v232 = vpop.permute.xlu0 %231
    %241 = vrot.lane.b32.xlu0 %v201, 32
    %v242 = vpop.permute.xlu0 %241
    %243 = vrot.lane.b32.xlu0 %v202, 32
    %v244 = vpop.permute.xlu0 %243
    %245 = vrot.lane.b32.xlu0 %v203, 32
    %v246 = vpop.permute.xlu0 %245
    %247 = vrot.lane.b32.xlu0 %v204, 32
    %v248 = vpop.permute.xlu0 %247
    %249 = vrot.lane.b32.xlu0 %v205, 32
    %v250 = vpop.permute.xlu0 %249
    %251 = vrot.lane.b32.xlu0 %v206, 32
    %v252 = vpop.permute.xlu0 %251
    %253 = vrot.lane.b32.xlu0 %v207, 32
    %v254 = vpop.permute.xlu0 %253
    %255 = vrot.lane.b32.xlu0 %v208, 32
    %v256 = vpop.permute.xlu0 %255
    %265 = vrot.lane.b32.xlu0 %v201, 48
    %v266 = vpop.permute.xlu0 %265
    %267 = vrot.lane.b32.xlu0 %v202, 48
    %v268 = vpop.permute.xlu0 %267
    %269 = vrot.lane.b32.xlu0 %v203, 48
    %v270 = vpop.permute.xlu0 %269
    %271 = vrot.lane.b32.xlu0 %v204, 48
    %v272 = vpop.permute.xlu0 %271
    %273 = vrot.lane.b32.xlu0 %v205, 48
    %v274 = vpop.permute.xlu0 %273
    %275 = vrot.lane.b32.xlu0 %v206, 48
    %v276 = vpop.permute.xlu0 %275
    %277 = vrot.lane.b32.xlu0 %v207, 48
    %v278 = vpop.permute.xlu0 %277
    %279 = vrot.lane.b32.xlu0 %v208, 48
    %v280 = vpop.permute.xlu0 %279
    %vm289 = vcmask 130048
    %v290 = vsel %vm289, %v201, %v218
    %v291 = vsel %vm289, %v202, %v220
    %v292 = vsel %vm289, %v203, %v222
    %v293 = vsel %vm289, %v204, %v224
    %v294 = vsel %vm289, %v205, %v226
    %v295 = vsel %vm289, %v206, %v228
    %v296 = vsel %vm289, %v207, %v230
    %v297 = vsel %vm289, %v208, %v232
    %vm298 = vcmask 261120
    %v299 = vsel %vm298, %v290, %v242
    %v300 = vsel %vm298, %v291, %v244
    %v301 = vsel %vm298, %v292, %v246
    %v302 = vsel %vm298, %v293, %v248
    %v303 = vsel %vm298, %v294, %v250
    %v304 = vsel %vm298, %v295, %v252
    %v305 = vsel %vm298, %v296, %v254
    %v306 = vsel %vm298, %v297, %v256
    %vm307 = vcmask 392192
    %v308 = vsel %vm307, %v299, %v266
    %v309 = vsel %vm307, %v300, %v268
    %v310 = vsel %vm307, %v301, %v270
    %v311 = vsel %vm307, %v302, %v272
    %v312 = vsel %vm307, %v303, %v274
    %v313 = vsel %vm307, %v304, %v276
    %v314 = vsel %vm307, %v305, %v278
    %v315 = vsel %vm307, %v306, %v280
    %v316 = vlaneseq
    %v317 = vshrl.u32 %v316, 7
    %v318 = vadd.s32 %v317, 8
    %v319 = vadd.s32 %v317, 16
    %v320 = vadd.s32 %v317, 24
    %vm321 = vcmp.ge.s32.totalorder %v317, 0
    %vm322 = vcmp.ge.s32.totalorder %v318, 0
    %vm323 = vcmp.ge.s32.totalorder %v319, 0
    %vm324 = vcmp.ge.s32.totalorder %v320, 0
    %vm325 = vcmp.lt.s32.totalorder %v317, 8
    %vm326 = vcmp.lt.s32.totalorder %v318, 8
    %vm327 = vcmp.lt.s32.totalorder %v319, 8
    %vm328 = vcmp.lt.s32.totalorder %v320, 8
    %vm329 = vmand %vm321, %vm325
    %vm330 = vmand %vm322, %vm326
    %vm331 = vmand %vm323, %vm327
    %vm332 = vmand %vm324, %vm328
    %v333 = vsel %vm329, 1, 0
    %v334 = vsel %vm330, 1, 0
    %v335 = vsel %vm331, 1, 0
    %v336 = vsel %vm332, 1, 0
    %v337 = vcvt.s32.f32 %v333
    %v338 = vcvt.s32.f32 %v334
    %v339 = vcvt.s32.f32 %v335
    %v340 = vcvt.s32.f32 %v336
    %vm341 = vcmp.ge.s32.totalorder %v317, 8
    %vm342 = vcmp.ge.s32.totalorder %v318, 8
    %vm343 = vcmp.ge.s32.totalorder %v319, 8
    %vm344 = vcmp.ge.s32.totalorder %v320, 8
    %vm345 = vcmp.lt.s32.totalorder %v317, 16
    %vm346 = vcmp.lt.s32.totalorder %v318, 16
    %vm347 = vcmp.lt.s32.totalorder %v319, 16
    %vm348 = vcmp.lt.s32.totalorder %v320, 16
    %vm349 = vmand %vm341, %vm345
    %vm350 = vmand %vm342, %vm346
    %vm351 = vmand %vm343, %vm347
    %vm352 = vmand %vm344, %vm348
    %v353 = vsel %vm349, 1, 0
    %v354 = vsel %vm350, 1, 0
    %v355 = vsel %vm351, 1, 0
    %v356 = vsel %vm352, 1, 0
    %v357 = vcvt.s32.f32 %v353
    %v358 = vcvt.s32.f32 %v354
    %v359 = vcvt.s32.f32 %v355
    %v360 = vcvt.s32.f32 %v356
    %vm361 = vcmp.ge.s32.totalorder %v317, 16
    %vm362 = vcmp.ge.s32.totalorder %v318, 16
    %vm363 = vcmp.ge.s32.totalorder %v319, 16
    %vm364 = vcmp.ge.s32.totalorder %v320, 16
    %vm365 = vcmp.lt.s32.totalorder %v317, 24
    %vm366 = vcmp.lt.s32.totalorder %v318, 24
    %vm367 = vcmp.lt.s32.totalorder %v319, 24
    %vm368 = vcmp.lt.s32.totalorder %v320, 24
    %vm369 = vmand %vm361, %vm365
    %vm370 = vmand %vm362, %vm366
    %vm371 = vmand %vm363, %vm367
    %vm372 = vmand %vm364, %vm368
    %v373 = vsel %vm369, 1, 0
    %v374 = vsel %vm370, 1, 0
    %v375 = vsel %vm371, 1, 0
    %v376 = vsel %vm372, 1, 0
    %v377 = vcvt.s32.f32 %v373
    %v378 = vcvt.s32.f32 %v374
    %v379 = vcvt.s32.f32 %v375
    %v380 = vcvt.s32.f32 %v376
    %vm381 = vcmp.ge.s32.totalorder %v317, 24
    %vm382 = vcmp.ge.s32.totalorder %v318, 24
    %vm383 = vcmp.ge.s32.totalorder %v319, 24
    %vm384 = vcmp.ge.s32.totalorder %v320, 24
    %vm385 = vcmp.lt.s32.totalorder %v317, 32
    %vm386 = vcmp.lt.s32.totalorder %v318, 32
    %vm387 = vcmp.lt.s32.totalorder %v319, 32
    %vm388 = vcmp.lt.s32.totalorder %v320, 32
    %vm389 = vmand %vm381, %vm385
    %vm390 = vmand %vm382, %vm386
    %vm391 = vmand %vm383, %vm387
    %vm392 = vmand %vm384, %vm388
    %v393 = vsel %vm389, 1, 0
    %v394 = vsel %vm390, 1, 0
    %v395 = vsel %vm391, 1, 0
    %v396 = vsel %vm392, 1, 0
    %v397 = vcvt.s32.f32 %v393
    %v398 = vcvt.s32.f32 %v394
    %v399 = vcvt.s32.f32 %v395
    %v400 = vcvt.s32.f32 %v396
    %v401 = vld [vmem:[%s2] sm:$0xff]
    %v402 = vld [vmem:[%s2 + $0x8] sm:$0xff]
    %v403 = vld [vmem:[%s2 + $0x10] sm:$0xff]
    %v404 = vld [vmem:[%s2 + $0x18] sm:$0xff]
    %v405 = vld [vmem:[%s3] sm:$0x1]
    %v407 = vperm.slane %v405, 0
    %v410 = vsel %vm298, %v169, 0
    %v413 = vsel %vm298, %v170, 0
    %v416 = vsel %vm298, %v171, 0
    %v419 = vsel %vm298, %v172, 0
    %v422 = vsel %vm298, %v173, 0
    %v425 = vsel %vm298, %v174, 0
    %v428 = vsel %vm298, %v175, 0
    %v431 = vsel %vm298, %v176, 0
    %v434 = vsel %vm298, %v177, 0
    %v437 = vsel %vm298, %v178, 0
    %v440 = vsel %vm298, %v179, 0
    %v443 = vsel %vm298, %v180, 0
    %v446 = vsel %vm298, %v181, 0
    %v449 = vsel %vm298, %v182, 0
    %v452 = vsel %vm298, %v183, 0
    %v455 = vsel %vm298, %v184, 0
    %457 = vmatpush.msra.mxu0 0.0
    %458 = vmatpush.msra.mxu0 0.0
    %459 = vmatpush.msra.mxu0 0.0
    %460 = vmatpush.msra.mxu0 0.0
    %461 = vmatpush.msra.mxu0 0.0
    %462 = vmatpush.msra.mxu0 0.0
    %463 = vmatpush.msra.mxu0 0.0
    %464 = vmatpush.msra.mxu0 0.0
    %465 = vmatpush.msra.mxu0 0.0
    %466 = vmatpush.msra.mxu0 0.0
    %467 = vmatpush.msra.mxu0 0.0
    %468 = vmatpush.msra.mxu0 0.0
    %469 = vmatpush.msra.mxu0 %v404
    %470 = vmatpush.msra.mxu0 %v403
    %471 = vmatpush.msra.mxu0 %v402
    %472 = vmatpush.msra.mxu0 %v401
    %473 = vmatmul.f32.gmra.mxu0 %v410
    %v474 = vpop.f32.mrf.mxu0
    %v475 = vadd.f32 %v407, %v474
    %476 = vmatmul.f32.gmra.mxu0 %v413
    %v477 = vpop.f32.mrf.mxu0
    %v478 = vadd.f32 %v407, %v477
    %479 = vmatmul.f32.gmra.mxu0 %v416
    %v480 = vpop.f32.mrf.mxu0
    %v481 = vadd.f32 %v407, %v480
    %482 = vmatmul.f32.gmra.mxu0 %v419
    %v483 = vpop.f32.mrf.mxu0
    %v484 = vadd.f32 %v407, %v483
    %485 = vmatmul.f32.gmra.mxu0 %v422
    %v486 = vpop.f32.mrf.mxu0
    %v487 = vadd.f32 %v407, %v486
    %488 = vmatmul.f32.gmra.mxu0 %v425
    %v489 = vpop.f32.mrf.mxu0
    %v490 = vadd.f32 %v407, %v489
    %491 = vmatmul.f32.gmra.mxu0 %v428
    %v492 = vpop.f32.mrf.mxu0
    %v493 = vadd.f32 %v407, %v492
    %494 = vmatmul.f32.gmra.mxu0 %v431
    %v495 = vpop.f32.mrf.mxu0
    %v496 = vadd.f32 %v407, %v495
    %497 = vmatmul.f32.gmra.mxu0 %v434
    %v498 = vpop.f32.mrf.mxu0
    %v499 = vadd.f32 %v407, %v498
    %500 = vmatmul.f32.gmra.mxu0 %v437
    %v501 = vpop.f32.mrf.mxu0
    %v502 = vadd.f32 %v407, %v501
    %503 = vmatmul.f32.gmra.mxu0 %v440
    %v504 = vpop.f32.mrf.mxu0
    %v505 = vadd.f32 %v407, %v504
    %506 = vmatmul.f32.gmra.mxu0 %v443
    %v507 = vpop.f32.mrf.mxu0
    %v508 = vadd.f32 %v407, %v507
    %509 = vmatmul.f32.gmra.mxu0 %v446
    %v510 = vpop.f32.mrf.mxu0
    %v511 = vadd.f32 %v407, %v510
    %512 = vmatmul.f32.gmra.mxu0 %v449
    %v513 = vpop.f32.mrf.mxu0
    %v514 = vadd.f32 %v407, %v513
    %515 = vmatmul.f32.gmra.mxu0 %v452
    %v516 = vpop.f32.mrf.mxu0
    %v517 = vadd.f32 %v407, %v516
    %518 = vmatmul.f32.gmra.mxu0 %v455
    %v519 = vpop.f32.mrf.mxu0
    %v520 = vadd.f32 %v407, %v519
    %521 = vdwg.mxu0
    %538 = vrot.lane.b32.xlu0 %v475, 96
    %v539 = vpop.permute.xlu0 %538
    %540 = vrot.lane.b32.xlu0 %v478, 96
    %v541 = vpop.permute.xlu0 %540
    %542 = vrot.lane.b32.xlu0 %v481, 96
    %v543 = vpop.permute.xlu0 %542
    %544 = vrot.lane.b32.xlu0 %v484, 96
    %v545 = vpop.permute.xlu0 %544
    %546 = vrot.lane.b32.xlu0 %v487, 96
    %v547 = vpop.permute.xlu0 %546
    %548 = vrot.lane.b32.xlu0 %v490, 96
    %v549 = vpop.permute.xlu0 %548
    %550 = vrot.lane.b32.xlu0 %v493, 96
    %v551 = vpop.permute.xlu0 %550
    %552 = vrot.lane.b32.xlu0 %v496, 96
    %v553 = vpop.permute.xlu0 %552
    %554 = vrot.lane.b32.xlu0 %v499, 96
    %v555 = vpop.permute.xlu0 %554
    %556 = vrot.lane.b32.xlu0 %v502, 96
    %v557 = vpop.permute.xlu0 %556
    %558 = vrot.lane.b32.xlu0 %v505, 96
    %v559 = vpop.permute.xlu0 %558
    %560 = vrot.lane.b32.xlu0 %v508, 96
    %v561 = vpop.permute.xlu0 %560
    %562 = vrot.lane.b32.xlu0 %v511, 96
    %v563 = vpop.permute.xlu0 %562
    %564 = vrot.lane.b32.xlu0 %v514, 96
    %v565 = vpop.permute.xlu0 %564
    %566 = vrot.lane.b32.xlu0 %v517, 96
    %v567 = vpop.permute.xlu0 %566
    %568 = vrot.lane.b32.xlu0 %v520, 96
    %v569 = vpop.permute.xlu0 %568
    %586 = vxpose.xlu0.b32.start [1/16] %v539, 128
    %587 = vxpose.xlu0.b32.cont [2/16] %v541, 128
    %588 = vxpose.xlu0.b32.cont [3/16] 0.0, 128
    %589 = vxpose.xlu0.b32.cont [4/16] 0.0, 128
    %590 = vxpose.xlu0.b32.cont [5/16] 0.0, 128
    %591 = vxpose.xlu0.b32.cont [6/16] 0.0, 128
    %592 = vxpose.xlu0.b32.cont [7/16] 0.0, 128
    %593 = vxpose.xlu0.b32.cont [8/16] 0.0, 128
    %594 = vxpose.xlu0.b32.cont [9/16] 0.0, 128
    %595 = vxpose.xlu0.b32.cont [10/16] 0.0, 128
    %596 = vxpose.xlu0.b32.cont [11/16] 0.0, 128
    %597 = vxpose.xlu0.b32.cont [12/16] 0.0, 128
    %598 = vxpose.xlu0.b32.cont [13/16] 0.0, 128
    %599 = vxpose.xlu0.b32.cont [14/16] 0.0, 128
    %600 = vxpose.xlu0.b32.cont [15/16] 0.0, 128
    %601 = vxpose.xlu0.b32.end [16/16] 0.0, 128
    %v602 = vpop.trf.xlu0
    %v603 = vpop.trf.xlu0
    %v604 = vpop.trf.xlu0
    %v605 = vpop.trf.xlu0
    %v606 = vpop.trf.xlu0
    %v607 = vpop.trf.xlu0
    %v608 = vpop.trf.xlu0
    %v609 = vpop.trf.xlu0
    %v610 = vpop.trf.xlu0
    %v611 = vpop.trf.xlu0
    %v612 = vpop.trf.xlu0
    %v613 = vpop.trf.xlu0
    %v614 = vpop.trf.xlu0
    %v615 = vpop.trf.xlu0
    %v616 = vpop.trf.xlu0
    %v617 = vpop.trf.xlu0
    %618 = vxpose.xlu0.b32.start [1/16] %v543, 128
    %619 = vxpose.xlu0.b32.cont [2/16] %v545, 128
    %620 = vxpose.xlu0.b32.cont [3/16] 0.0, 128
    %621 = vxpose.xlu0.b32.cont [4/16] 0.0, 128
    %622 = vxpose.xlu0.b32.cont [5/16] 0.0, 128
    %623 = vxpose.xlu0.b32.cont [6/16] 0.0, 128
    %624 = vxpose.xlu0.b32.cont [7/16] 0.0, 128
    %625 = vxpose.xlu0.b32.cont [8/16] 0.0, 128
    %626 = vxpose.xlu0.b32.cont [9/16] 0.0, 128
    %627 = vxpose.xlu0.b32.cont [10/16] 0.0, 128
    %628 = vxpose.xlu0.b32.cont [11/16] 0.0, 128
    %629 = vxpose.xlu0.b32.cont [12/16] 0.0, 128
    %630 = vxpose.xlu0.b32.cont [13/16] 0.0, 128
    %631 = vxpose.xlu0.b32.cont [14/16] 0.0, 128
    %632 = vxpose.xlu0.b32.cont [15/16] 0.0, 128
    %633 = vxpose.xlu0.b32.end [16/16] 0.0, 128
    %v634 = vpop.trf.xlu0
    %v635 = vpop.trf.xlu0
    %v636 = vpop.trf.xlu0
    %v637 = vpop.trf.xlu0
    %v638 = vpop.trf.xlu0
    %v639 = vpop.trf.xlu0
    %v640 = vpop.trf.xlu0
    %v641 = vpop.trf.xlu0
    %v642 = vpop.trf.xlu0
    %v643 = vpop.trf.xlu0
    %v644 = vpop.trf.xlu0
    %v645 = vpop.trf.xlu0
    %v646 = vpop.trf.xlu0
    %v647 = vpop.trf.xlu0
    %v648 = vpop.trf.xlu0
    %v649 = vpop.trf.xlu0
    %650 = vxpose.xlu0.b32.start [1/16] %v547, 128
    %651 = vxpose.xlu0.b32.cont [2/16] %v549, 128
    %652 = vxpose.xlu0.b32.cont [3/16] 0.0, 128
    %653 = vxpose.xlu0.b32.cont [4/16] 0.0, 128
    %654 = vxpose.xlu0.b32.cont [5/16] 0.0, 128
    %655 = vxpose.xlu0.b32.cont [6/16] 0.0, 128
    %656 = vxpose.xlu0.b32.cont [7/16] 0.0, 128
    %657 = vxpose.xlu0.b32.cont [8/16] 0.0, 128
    %658 = vxpose.xlu0.b32.cont [9/16] 0.0, 128
    %659 = vxpose.xlu0.b32.cont [10/16] 0.0, 128
    %660 = vxpose.xlu0.b32.cont [11/16] 0.0, 128
    %661 = vxpose.xlu0.b32.cont [12/16] 0.0, 128
    %662 = vxpose.xlu0.b32.cont [13/16] 0.0, 128
    %663 = vxpose.xlu0.b32.cont [14/16] 0.0, 128
    %664 = vxpose.xlu0.b32.cont [15/16] 0.0, 128
    %665 = vxpose.xlu0.b32.end [16/16] 0.0, 128
    %v666 = vpop.trf.xlu0
    %v667 = vpop.trf.xlu0
    %v668 = vpop.trf.xlu0
    %v669 = vpop.trf.xlu0
    %v670 = vpop.trf.xlu0
    %v671 = vpop.trf.xlu0
    %v672 = vpop.trf.xlu0
    %v673 = vpop.trf.xlu0
    %v674 = vpop.trf.xlu0
    %v675 = vpop.trf.xlu0
    %v676 = vpop.trf.xlu0
    %v677 = vpop.trf.xlu0
    %v678 = vpop.trf.xlu0
    %v679 = vpop.trf.xlu0
    %v680 = vpop.trf.xlu0
    %v681 = vpop.trf.xlu0
    %682 = vxpose.xlu0.b32.start [1/16] %v551, 128
    %683 = vxpose.xlu0.b32.cont [2/16] %v553, 128
    %684 = vxpose.xlu0.b32.cont [3/16] 0.0, 128
    %685 = vxpose.xlu0.b32.cont [4/16] 0.0, 128
    %686 = vxpose.xlu0.b32.cont [5/16] 0.0, 128
    %687 = vxpose.xlu0.b32.cont [6/16] 0.0, 128
    %688 = vxpose.xlu0.b32.cont [7/16] 0.0, 128
    %689 = vxpose.xlu0.b32.cont [8/16] 0.0, 128
    %690 = vxpose.xlu0.b32.cont [9/16] 0.0, 128
    %691 = vxpose.xlu0.b32.cont [10/16] 0.0, 128
    %692 = vxpose.xlu0.b32.cont [11/16] 0.0, 128
    %693 = vxpose.xlu0.b32.cont [12/16] 0.0, 128
    %694 = vxpose.xlu0.b32.cont [13/16] 0.0, 128
    %695 = vxpose.xlu0.b32.cont [14/16] 0.0, 128
    %696 = vxpose.xlu0.b32.cont [15/16] 0.0, 128
    %697 = vxpose.xlu0.b32.end [16/16] 0.0, 128
    %v698 = vpop.trf.xlu0
    %v699 = vpop.trf.xlu0
    %v700 = vpop.trf.xlu0
    %v701 = vpop.trf.xlu0
    %v702 = vpop.trf.xlu0
    %v703 = vpop.trf.xlu0
    %v704 = vpop.trf.xlu0
    %v705 = vpop.trf.xlu0
    %v706 = vpop.trf.xlu0
    %v707 = vpop.trf.xlu0
    %v708 = vpop.trf.xlu0
    %v709 = vpop.trf.xlu0
    %v710 = vpop.trf.xlu0
    %v711 = vpop.trf.xlu0
    %v712 = vpop.trf.xlu0
    %v713 = vpop.trf.xlu0
    %714 = vxpose.xlu0.b32.start [1/16] %v555, 128
    %715 = vxpose.xlu0.b32.cont [2/16] %v557, 128
    %716 = vxpose.xlu0.b32.cont [3/16] 0.0, 128
    %717 = vxpose.xlu0.b32.cont [4/16] 0.0, 128
    %718 = vxpose.xlu0.b32.cont [5/16] 0.0, 128
    %719 = vxpose.xlu0.b32.cont [6/16] 0.0, 128
    %720 = vxpose.xlu0.b32.cont [7/16] 0.0, 128
    %721 = vxpose.xlu0.b32.cont [8/16] 0.0, 128
    %722 = vxpose.xlu0.b32.cont [9/16] 0.0, 128
    %723 = vxpose.xlu0.b32.cont [10/16] 0.0, 128
    %724 = vxpose.xlu0.b32.cont [11/16] 0.0, 128
    %725 = vxpose.xlu0.b32.cont [12/16] 0.0, 128
    %726 = vxpose.xlu0.b32.cont [13/16] 0.0, 128
    %727 = vxpose.xlu0.b32.cont [14/16] 0.0, 128
    %728 = vxpose.xlu0.b32.cont [15/16] 0.0, 128
    %729 = vxpose.xlu0.b32.end [16/16] 0.0, 128
    %v730 = vpop.trf.xlu0
    %v731 = vpop.trf.xlu0
    %v732 = vpop.trf.xlu0
    %v733 = vpop.trf.xlu0
    %v734 = vpop.trf.xlu0
    %v735 = vpop.trf.xlu0
    %v736 = vpop.trf.xlu0
    %v737 = vpop.trf.xlu0
    %v738 = vpop.trf.xlu0
    %v739 = vpop.trf.xlu0
    %v740 = vpop.trf.xlu0
    %v741 = vpop.trf.xlu0
    %v742 = vpop.trf.xlu0
    %v743 = vpop.trf.xlu0
    %v744 = vpop.trf.xlu0
    %v745 = vpop.trf.xlu0
    %746 = vxpose.xlu0.b32.start [1/16] %v559, 128
    %747 = vxpose.xlu0.b32.cont [2/16] %v561, 128
    %748 = vxpose.xlu0.b32.cont [3/16] 0.0, 128
    %749 = vxpose.xlu0.b32.cont [4/16] 0.0, 128
    %750 = vxpose.xlu0.b32.cont [5/16] 0.0, 128
    %751 = vxpose.xlu0.b32.cont [6/16] 0.0, 128
    %752 = vxpose.xlu0.b32.cont [7/16] 0.0, 128
    %753 = vxpose.xlu0.b32.cont [8/16] 0.0, 128
    %754 = vxpose.xlu0.b32.cont [9/16] 0.0, 128
    %755 = vxpose.xlu0.b32.cont [10/16] 0.0, 128
    %756 = vxpose.xlu0.b32.cont [11/16] 0.0, 128
    %757 = vxpose.xlu0.b32.cont [12/16] 0.0, 128
    %758 = vxpose.xlu0.b32.cont [13/16] 0.0, 128
    %759 = vxpose.xlu0.b32.cont [14/16] 0.0, 128
    %760 = vxpose.xlu0.b32.cont [15/16] 0.0, 128
    %761 = vxpose.xlu0.b32.end [16/16] 0.0, 128
    %v762 = vpop.trf.xlu0
    %v763 = vpop.trf.xlu0
    %v764 = vpop.trf.xlu0
    %v765 = vpop.trf.xlu0
    %v766 = vpop.trf.xlu0
    %v767 = vpop.trf.xlu0
    %v768 = vpop.trf.xlu0
    %v769 = vpop.trf.xlu0
    %v770 = vpop.trf.xlu0
    %v771 = vpop.trf.xlu0
    %v772 = vpop.trf.xlu0
    %v773 = vpop.trf.xlu0
    %v774 = vpop.trf.xlu0
    %v775 = vpop.trf.xlu0
    %v776 = vpop.trf.xlu0
    %v777 = vpop.trf.xlu0
    %778 = vxpose.xlu0.b32.start [1/16] %v563, 128
    %779 = vxpose.xlu0.b32.cont [2/16] %v565, 128
    %780 = vxpose.xlu0.b32.cont [3/16] 0.0, 128
    %781 = vxpose.xlu0.b32.cont [4/16] 0.0, 128
    %782 = vxpose.xlu0.b32.cont [5/16] 0.0, 128
    %783 = vxpose.xlu0.b32.cont [6/16] 0.0, 128
    %784 = vxpose.xlu0.b32.cont [7/16] 0.0, 128
    %785 = vxpose.xlu0.b32.cont [8/16] 0.0, 128
    %786 = vxpose.xlu0.b32.cont [9/16] 0.0, 128
    %787 = vxpose.xlu0.b32.cont [10/16] 0.0, 128
    %788 = vxpose.xlu0.b32.cont [11/16] 0.0, 128
    %789 = vxpose.xlu0.b32.cont [12/16] 0.0, 128
    %790 = vxpose.xlu0.b32.cont [13/16] 0.0, 128
    %791 = vxpose.xlu0.b32.cont [14/16] 0.0, 128
    %792 = vxpose.xlu0.b32.cont [15/16] 0.0, 128
    %793 = vxpose.xlu0.b32.end [16/16] 0.0, 128
    %v794 = vpop.trf.xlu0
    %v795 = vpop.trf.xlu0
    %v796 = vpop.trf.xlu0
    %v797 = vpop.trf.xlu0
    %v798 = vpop.trf.xlu0
    %v799 = vpop.trf.xlu0
    %v800 = vpop.trf.xlu0
    %v801 = vpop.trf.xlu0
    %v802 = vpop.trf.xlu0
    %v803 = vpop.trf.xlu0
    %v804 = vpop.trf.xlu0
    %v805 = vpop.trf.xlu0
    %v806 = vpop.trf.xlu0
    %v807 = vpop.trf.xlu0
    %v808 = vpop.trf.xlu0
    %v809 = vpop.trf.xlu0
    %810 = vxpose.xlu0.b32.start [1/16] %v567, 128
    %811 = vxpose.xlu0.b32.cont [2/16] %v569, 128
    %812 = vxpose.xlu0.b32.cont [3/16] 0.0, 128
    %813 = vxpose.xlu0.b32.cont [4/16] 0.0, 128
    %814 = vxpose.xlu0.b32.cont [5/16] 0.0, 128
    %815 = vxpose.xlu0.b32.cont [6/16] 0.0, 128
    %816 = vxpose.xlu0.b32.cont [7/16] 0.0, 128
    %817 = vxpose.xlu0.b32.cont [8/16] 0.0, 128
    %818 = vxpose.xlu0.b32.cont [9/16] 0.0, 128
    %819 = vxpose.xlu0.b32.cont [10/16] 0.0, 128
    %820 = vxpose.xlu0.b32.cont [11/16] 0.0, 128
    %821 = vxpose.xlu0.b32.cont [12/16] 0.0, 128
    %822 = vxpose.xlu0.b32.cont [13/16] 0.0, 128
    %823 = vxpose.xlu0.b32.cont [14/16] 0.0, 128
    %824 = vxpose.xlu0.b32.cont [15/16] 0.0, 128
    %825 = vxpose.xlu0.b32.end [16/16] 0.0, 128
    %v826 = vpop.trf.xlu0
    %v827 = vpop.trf.xlu0
    %v828 = vpop.trf.xlu0
    %v829 = vpop.trf.xlu0
    %v830 = vpop.trf.xlu0
    %v831 = vpop.trf.xlu0
    %v832 = vpop.trf.xlu0
    %v833 = vpop.trf.xlu0
    %v834 = vpop.trf.xlu0
    %v835 = vpop.trf.xlu0
    %v836 = vpop.trf.xlu0
    %v837 = vpop.trf.xlu0
    %v838 = vpop.trf.xlu0
    %v839 = vpop.trf.xlu0
    %v840 = vpop.trf.xlu0
    %v841 = vpop.trf.xlu0
    %v842 = vmul.f32 %v602, %v337
    %v843 = vmul.f32 %v603, %v338
    %v844 = vmul.f32 %v604, %v339
    %v845 = vmul.f32 %v605, %v340
    %v846 = vmul.f32 %v634, %v337
    %v847 = vmul.f32 %v635, %v338
    %v848 = vmul.f32 %v636, %v339
    %v849 = vmul.f32 %v637, %v340
    %v850 = vmul.f32 %v666, %v337
    %v851 = vmul.f32 %v667, %v338
    %v852 = vmul.f32 %v668, %v339
    %v853 = vmul.f32 %v669, %v340
    %v854 = vmul.f32 %v698, %v337
    %v855 = vmul.f32 %v699, %v338
    %v856 = vmul.f32 %v700, %v339
    %v857 = vmul.f32 %v701, %v340
    %v858 = vmul.f32 %v730, %v337
    %v859 = vmul.f32 %v731, %v338
    %v860 = vmul.f32 %v732, %v339
    %v861 = vmul.f32 %v733, %v340
    %v862 = vmul.f32 %v762, %v337
    %v863 = vmul.f32 %v763, %v338
    %v864 = vmul.f32 %v764, %v339
    %v865 = vmul.f32 %v765, %v340
    %v866 = vmul.f32 %v794, %v337
    %v867 = vmul.f32 %v795, %v338
    %v868 = vmul.f32 %v796, %v339
    %v869 = vmul.f32 %v797, %v340
    %v870 = vmul.f32 %v826, %v337
    %v871 = vmul.f32 %v827, %v338
    %v872 = vmul.f32 %v828, %v339
    %v873 = vmul.f32 %v829, %v340
    %v874 = vmul.f32 %v602, %v357
    %v875 = vmul.f32 %v603, %v358
    %v876 = vmul.f32 %v604, %v359
    %v877 = vmul.f32 %v605, %v360
    %v878 = vmul.f32 %v634, %v357
    %v879 = vmul.f32 %v635, %v358
    %v880 = vmul.f32 %v636, %v359
    %v881 = vmul.f32 %v637, %v360
    %v882 = vmul.f32 %v666, %v357
    %v883 = vmul.f32 %v667, %v358
    %v884 = vmul.f32 %v668, %v359
    %v885 = vmul.f32 %v669, %v360
    %v886 = vmul.f32 %v698, %v357
    %v887 = vmul.f32 %v699, %v358
    %v888 = vmul.f32 %v700, %v359
    %v889 = vmul.f32 %v701, %v360
    %v890 = vmul.f32 %v730, %v357
    %v891 = vmul.f32 %v731, %v358
    %v892 = vmul.f32 %v732, %v359
    %v893 = vmul.f32 %v733, %v360
    %v894 = vmul.f32 %v762, %v357
    %v895 = vmul.f32 %v763, %v358
    %v896 = vmul.f32 %v764, %v359
    %v897 = vmul.f32 %v765, %v360
    %v898 = vmul.f32 %v794, %v357
    %v899 = vmul.f32 %v795, %v358
    %v900 = vmul.f32 %v796, %v359
    %v901 = vmul.f32 %v797, %v360
    %v902 = vmul.f32 %v826, %v357
    %v903 = vmul.f32 %v827, %v358
    %v904 = vmul.f32 %v828, %v359
    %v905 = vmul.f32 %v829, %v360
    %v906 = vmul.f32 %v602, %v377
    %v907 = vmul.f32 %v603, %v378
    %v908 = vmul.f32 %v604, %v379
    %v909 = vmul.f32 %v605, %v380
    %v910 = vmul.f32 %v634, %v377
    %v911 = vmul.f32 %v635, %v378
    %v912 = vmul.f32 %v636, %v379
    %v913 = vmul.f32 %v637, %v380
    %v914 = vmul.f32 %v666, %v377
    %v915 = vmul.f32 %v667, %v378
    %v916 = vmul.f32 %v668, %v379
    %v917 = vmul.f32 %v669, %v380
    %v918 = vmul.f32 %v698, %v377
    %v919 = vmul.f32 %v699, %v378
    %v920 = vmul.f32 %v700, %v379
    %v921 = vmul.f32 %v701, %v380
    %v922 = vmul.f32 %v730, %v377
    %v923 = vmul.f32 %v731, %v378
    %v924 = vmul.f32 %v732, %v379
    %v925 = vmul.f32 %v733, %v380
    %v926 = vmul.f32 %v762, %v377
    %v927 = vmul.f32 %v763, %v378
    %v928 = vmul.f32 %v764, %v379
    %v929 = vmul.f32 %v765, %v380
    %v930 = vmul.f32 %v794, %v377
    %v931 = vmul.f32 %v795, %v378
    %v932 = vmul.f32 %v796, %v379
    %v933 = vmul.f32 %v797, %v380
    %v934 = vmul.f32 %v826, %v377
    %v935 = vmul.f32 %v827, %v378
    %v936 = vmul.f32 %v828, %v379
    %v937 = vmul.f32 %v829, %v380
    %v938 = vmul.f32 %v602, %v397
    %v939 = vmul.f32 %v603, %v398
    %v940 = vmul.f32 %v604, %v399
    %v941 = vmul.f32 %v605, %v400
    %v942 = vmul.f32 %v634, %v397
    %v943 = vmul.f32 %v635, %v398
    %v944 = vmul.f32 %v636, %v399
    %v945 = vmul.f32 %v637, %v400
    %v946 = vmul.f32 %v666, %v397
    %v947 = vmul.f32 %v667, %v398
    %v948 = vmul.f32 %v668, %v399
    %v949 = vmul.f32 %v669, %v400
    %v950 = vmul.f32 %v698, %v397
    %v951 = vmul.f32 %v699, %v398
    %v952 = vmul.f32 %v700, %v399
    %v953 = vmul.f32 %v701, %v400
    %v954 = vmul.f32 %v730, %v397
    %v955 = vmul.f32 %v731, %v398
    %v956 = vmul.f32 %v732, %v399
    %v957 = vmul.f32 %v733, %v400
    %v958 = vmul.f32 %v762, %v397
    %v959 = vmul.f32 %v763, %v398
    %v960 = vmul.f32 %v764, %v399
    %v961 = vmul.f32 %v765, %v400
    %v962 = vmul.f32 %v794, %v397
    %v963 = vmul.f32 %v795, %v398
    %v964 = vmul.f32 %v796, %v399
    %v965 = vmul.f32 %v797, %v400
    %v966 = vmul.f32 %v826, %v397
    %v967 = vmul.f32 %v827, %v398
    %v968 = vmul.f32 %v828, %v399
    %v969 = vmul.f32 %v829, %v400
    %1002 = vrot.lane.b32.xlu0 %v874, 16
    %v1003 = vpop.permute.xlu0 %1002
    %1004 = vrot.lane.b32.xlu0 %v875, 16
    %v1005 = vpop.permute.xlu0 %1004
    %1006 = vrot.lane.b32.xlu0 %v876, 16
    %v1007 = vpop.permute.xlu0 %1006
    %1008 = vrot.lane.b32.xlu0 %v877, 16
    %v1009 = vpop.permute.xlu0 %1008
    %1010 = vrot.lane.b32.xlu0 %v878, 16
    %v1011 = vpop.permute.xlu0 %1010
    %1012 = vrot.lane.b32.xlu0 %v879, 16
    %v1013 = vpop.permute.xlu0 %1012
    %1014 = vrot.lane.b32.xlu0 %v880, 16
    %v1015 = vpop.permute.xlu0 %1014
    %1016 = vrot.lane.b32.xlu0 %v881, 16
    %v1017 = vpop.permute.xlu0 %1016
    %1018 = vrot.lane.b32.xlu0 %v882, 16
    %v1019 = vpop.permute.xlu0 %1018
    %1020 = vrot.lane.b32.xlu0 %v883, 16
    %v1021 = vpop.permute.xlu0 %1020
    %1022 = vrot.lane.b32.xlu0 %v884, 16
    %v1023 = vpop.permute.xlu0 %1022
    %1024 = vrot.lane.b32.xlu0 %v885, 16
    %v1025 = vpop.permute.xlu0 %1024
    %1026 = vrot.lane.b32.xlu0 %v886, 16
    %v1027 = vpop.permute.xlu0 %1026
    %1028 = vrot.lane.b32.xlu0 %v887, 16
    %v1029 = vpop.permute.xlu0 %1028
    %1030 = vrot.lane.b32.xlu0 %v888, 16
    %v1031 = vpop.permute.xlu0 %1030
    %1032 = vrot.lane.b32.xlu0 %v889, 16
    %v1033 = vpop.permute.xlu0 %1032
    %1034 = vrot.lane.b32.xlu0 %v890, 16
    %v1035 = vpop.permute.xlu0 %1034
    %1036 = vrot.lane.b32.xlu0 %v891, 16
    %v1037 = vpop.permute.xlu0 %1036
    %1038 = vrot.lane.b32.xlu0 %v892, 16
    %v1039 = vpop.permute.xlu0 %1038
    %1040 = vrot.lane.b32.xlu0 %v893, 16
    %v1041 = vpop.permute.xlu0 %1040
    %1042 = vrot.lane.b32.xlu0 %v894, 16
    %v1043 = vpop.permute.xlu0 %1042
    %1044 = vrot.lane.b32.xlu0 %v895, 16
    %v1045 = vpop.permute.xlu0 %1044
    %1046 = vrot.lane.b32.xlu0 %v896, 16
    %v1047 = vpop.permute.xlu0 %1046
    %1048 = vrot.lane.b32.xlu0 %v897, 16
    %v1049 = vpop.permute.xlu0 %1048
    %1050 = vrot.lane.b32.xlu0 %v898, 16
    %v1051 = vpop.permute.xlu0 %1050
    %1052 = vrot.lane.b32.xlu0 %v899, 16
    %v1053 = vpop.permute.xlu0 %1052
    %1054 = vrot.lane.b32.xlu0 %v900, 16
    %v1055 = vpop.permute.xlu0 %1054
    %1056 = vrot.lane.b32.xlu0 %v901, 16
    %v1057 = vpop.permute.xlu0 %1056
    %1058 = vrot.lane.b32.xlu0 %v902, 16
    %v1059 = vpop.permute.xlu0 %1058
    %1060 = vrot.lane.b32.xlu0 %v903, 16
    %v1061 = vpop.permute.xlu0 %1060
    %1062 = vrot.lane.b32.xlu0 %v904, 16
    %v1063 = vpop.permute.xlu0 %1062
    %1064 = vrot.lane.b32.xlu0 %v905, 16
    %v1065 = vpop.permute.xlu0 %1064
    %1130 = vrot.lane.b32.xlu0 %v906, 32
    %v1131 = vpop.permute.xlu0 %1130
    %1132 = vrot.lane.b32.xlu0 %v907, 32
    %v1133 = vpop.permute.xlu0 %1132
    %1134 = vrot.lane.b32.xlu0 %v908, 32
    %v1135 = vpop.permute.xlu0 %1134
    %1136 = vrot.lane.b32.xlu0 %v909, 32
    %v1137 = vpop.permute.xlu0 %1136
    %1138 = vrot.lane.b32.xlu0 %v910, 32
    %v1139 = vpop.permute.xlu0 %1138
    %1140 = vrot.lane.b32.xlu0 %v911, 32
    %v1141 = vpop.permute.xlu0 %1140
    %1142 = vrot.lane.b32.xlu0 %v912, 32
    %v1143 = vpop.permute.xlu0 %1142
    %1144 = vrot.lane.b32.xlu0 %v913, 32
    %v1145 = vpop.permute.xlu0 %1144
    %1146 = vrot.lane.b32.xlu0 %v914, 32
    %v1147 = vpop.permute.xlu0 %1146
    %1148 = vrot.lane.b32.xlu0 %v915, 32
    %v1149 = vpop.permute.xlu0 %1148
    %1150 = vrot.lane.b32.xlu0 %v916, 32
    %v1151 = vpop.permute.xlu0 %1150
    %1152 = vrot.lane.b32.xlu0 %v917, 32
    %v1153 = vpop.permute.xlu0 %1152
    %1154 = vrot.lane.b32.xlu0 %v918, 32
    %v1155 = vpop.permute.xlu0 %1154
    %1156 = vrot.lane.b32.xlu0 %v919, 32
    %v1157 = vpop.permute.xlu0 %1156
    %1158 = vrot.lane.b32.xlu0 %v920, 32
    %v1159 = vpop.permute.xlu0 %1158
    %1160 = vrot.lane.b32.xlu0 %v921, 32
    %v1161 = vpop.permute.xlu0 %1160
    %1162 = vrot.lane.b32.xlu0 %v922, 32
    %v1163 = vpop.permute.xlu0 %1162
    %1164 = vrot.lane.b32.xlu0 %v923, 32
    %v1165 = vpop.permute.xlu0 %1164
    %1166 = vrot.lane.b32.xlu0 %v924, 32
    %v1167 = vpop.permute.xlu0 %1166
    %1168 = vrot.lane.b32.xlu0 %v925, 32
    %v1169 = vpop.permute.xlu0 %1168
    %1170 = vrot.lane.b32.xlu0 %v926, 32
    %v1171 = vpop.permute.xlu0 %1170
    %1172 = vrot.lane.b32.xlu0 %v927, 32
    %v1173 = vpop.permute.xlu0 %1172
    %1174 = vrot.lane.b32.xlu0 %v928, 32
    %v1175 = vpop.permute.xlu0 %1174
    %1176 = vrot.lane.b32.xlu0 %v929, 32
    %v1177 = vpop.permute.xlu0 %1176
    %1178 = vrot.lane.b32.xlu0 %v930, 32
    %v1179 = vpop.permute.xlu0 %1178
    %1180 = vrot.lane.b32.xlu0 %v931, 32
    %v1181 = vpop.permute.xlu0 %1180
    %1182 = vrot.lane.b32.xlu0 %v932, 32
    %v1183 = vpop.permute.xlu0 %1182
    %1184 = vrot.lane.b32.xlu0 %v933, 32
    %v1185 = vpop.permute.xlu0 %1184
    %1186 = vrot.lane.b32.xlu0 %v934, 32
    %v1187 = vpop.permute.xlu0 %1186
    %1188 = vrot.lane.b32.xlu0 %v935, 32
    %v1189 = vpop.permute.xlu0 %1188
    %1190 = vrot.lane.b32.xlu0 %v936, 32
    %v1191 = vpop.permute.xlu0 %1190
    %1192 = vrot.lane.b32.xlu0 %v937, 32
    %v1193 = vpop.permute.xlu0 %1192
    %1258 = vrot.lane.b32.xlu0 %v938, 48
    %v1259 = vpop.permute.xlu0 %1258
    %1260 = vrot.lane.b32.xlu0 %v939, 48
    %v1261 = vpop.permute.xlu0 %1260
    %1262 = vrot.lane.b32.xlu0 %v940, 48
    %v1263 = vpop.permute.xlu0 %1262
    %1264 = vrot.lane.b32.xlu0 %v941, 48
    %v1265 = vpop.permute.xlu0 %1264
    %1266 = vrot.lane.b32.xlu0 %v942, 48
    %v1267 = vpop.permute.xlu0 %1266
    %1268 = vrot.lane.b32.xlu0 %v943, 48
    %v1269 = vpop.permute.xlu0 %1268
    %1270 = vrot.lane.b32.xlu0 %v944, 48
    %v1271 = vpop.permute.xlu0 %1270
    %1272 = vrot.lane.b32.xlu0 %v945, 48
    %v1273 = vpop.permute.xlu0 %1272
    %1274 = vrot.lane.b32.xlu0 %v946, 48
    %v1275 = vpop.permute.xlu0 %1274
    %1276 = vrot.lane.b32.xlu0 %v947, 48
    %v1277 = vpop.permute.xlu0 %1276
    %1278 = vrot.lane.b32.xlu0 %v948, 48
    %v1279 = vpop.permute.xlu0 %1278
    %1280 = vrot.lane.b32.xlu0 %v949, 48
    %v1281 = vpop.permute.xlu0 %1280
    %1282 = vrot.lane.b32.xlu0 %v950, 48
    %v1283 = vpop.permute.xlu0 %1282
    %1284 = vrot.lane.b32.xlu0 %v951, 48
    %v1285 = vpop.permute.xlu0 %1284
    %1286 = vrot.lane.b32.xlu0 %v952, 48
    %v1287 = vpop.permute.xlu0 %1286
    %1288 = vrot.lane.b32.xlu0 %v953, 48
    %v1289 = vpop.permute.xlu0 %1288
    %1290 = vrot.lane.b32.xlu0 %v954, 48
    %v1291 = vpop.permute.xlu0 %1290
    %1292 = vrot.lane.b32.xlu0 %v955, 48
    %v1293 = vpop.permute.xlu0 %1292
    %1294 = vrot.lane.b32.xlu0 %v956, 48
    %v1295 = vpop.permute.xlu0 %1294
    %1296 = vrot.lane.b32.xlu0 %v957, 48
    %v1297 = vpop.permute.xlu0 %1296
    %1298 = vrot.lane.b32.xlu0 %v958, 48
    %v1299 = vpop.permute.xlu0 %1298
    %1300 = vrot.lane.b32.xlu0 %v959, 48
    %v1301 = vpop.permute.xlu0 %1300
    %1302 = vrot.lane.b32.xlu0 %v960, 48
    %v1303 = vpop.permute.xlu0 %1302
    %1304 = vrot.lane.b32.xlu0 %v961, 48
    %v1305 = vpop.permute.xlu0 %1304
    %1306 = vrot.lane.b32.xlu0 %v962, 48
    %v1307 = vpop.permute.xlu0 %1306
    %1308 = vrot.lane.b32.xlu0 %v963, 48
    %v1309 = vpop.permute.xlu0 %1308
    %1310 = vrot.lane.b32.xlu0 %v964, 48
    %v1311 = vpop.permute.xlu0 %1310
    %1312 = vrot.lane.b32.xlu0 %v965, 48
    %v1313 = vpop.permute.xlu0 %1312
    %1314 = vrot.lane.b32.xlu0 %v966, 48
    %v1315 = vpop.permute.xlu0 %1314
    %1316 = vrot.lane.b32.xlu0 %v967, 48
    %v1317 = vpop.permute.xlu0 %1316
    %1318 = vrot.lane.b32.xlu0 %v968, 48
    %v1319 = vpop.permute.xlu0 %1318
    %1320 = vrot.lane.b32.xlu0 %v969, 48
    %v1321 = vpop.permute.xlu0 %1320
    %v1354 = vsel %vm289, %v842, %v1003
    %v1355 = vsel %vm289, %v843, %v1005
    %v1356 = vsel %vm289, %v844, %v1007
    %v1357 = vsel %vm289, %v845, %v1009
    %v1358 = vsel %vm289, %v846, %v1011
    %v1359 = vsel %vm289, %v847, %v1013
    %v1360 = vsel %vm289, %v848, %v1015
    %v1361 = vsel %vm289, %v849, %v1017
    %v1362 = vsel %vm289, %v850, %v1019
    %v1363 = vsel %vm289, %v851, %v1021
    %v1364 = vsel %vm289, %v852, %v1023
    %v1365 = vsel %vm289, %v853, %v1025
    %v1366 = vsel %vm289, %v854, %v1027
    %v1367 = vsel %vm289, %v855, %v1029
    %v1368 = vsel %vm289, %v856, %v1031
    %v1369 = vsel %vm289, %v857, %v1033
    %v1370 = vsel %vm289, %v858, %v1035
    %v1371 = vsel %vm289, %v859, %v1037
    %v1372 = vsel %vm289, %v860, %v1039
    %v1373 = vsel %vm289, %v861, %v1041
    %v1374 = vsel %vm289, %v862, %v1043
    %v1375 = vsel %vm289, %v863, %v1045
    %v1376 = vsel %vm289, %v864, %v1047
    %v1377 = vsel %vm289, %v865, %v1049
    %v1378 = vsel %vm289, %v866, %v1051
    %v1379 = vsel %vm289, %v867, %v1053
    %v1380 = vsel %vm289, %v868, %v1055
    %v1381 = vsel %vm289, %v869, %v1057
    %v1382 = vsel %vm289, %v870, %v1059
    %v1383 = vsel %vm289, %v871, %v1061
    %v1384 = vsel %vm289, %v872, %v1063
    %v1385 = vsel %vm289, %v873, %v1065
    %v1386 = vsel %vm298, %v1354, %v1131
    %v1387 = vsel %vm298, %v1355, %v1133
    %v1388 = vsel %vm298, %v1356, %v1135
    %v1389 = vsel %vm298, %v1357, %v1137
    %v1390 = vsel %vm298, %v1358, %v1139
    %v1391 = vsel %vm298, %v1359, %v1141
    %v1392 = vsel %vm298, %v1360, %v1143
    %v1393 = vsel %vm298, %v1361, %v1145
    %v1394 = vsel %vm298, %v1362, %v1147
    %v1395 = vsel %vm298, %v1363, %v1149
    %v1396 = vsel %vm298, %v1364, %v1151
    %v1397 = vsel %vm298, %v1365, %v1153
    %v1398 = vsel %vm298, %v1366, %v1155
    %v1399 = vsel %vm298, %v1367, %v1157
    %v1400 = vsel %vm298, %v1368, %v1159
    %v1401 = vsel %vm298, %v1369, %v1161
    %v1402 = vsel %vm298, %v1370, %v1163
    %v1403 = vsel %vm298, %v1371, %v1165
    %v1404 = vsel %vm298, %v1372, %v1167
    %v1405 = vsel %vm298, %v1373, %v1169
    %v1406 = vsel %vm298, %v1374, %v1171
    %v1407 = vsel %vm298, %v1375, %v1173
    %v1408 = vsel %vm298, %v1376, %v1175
    %v1409 = vsel %vm298, %v1377, %v1177
    %v1410 = vsel %vm298, %v1378, %v1179
    %v1411 = vsel %vm298, %v1379, %v1181
    %v1412 = vsel %vm298, %v1380, %v1183
    %v1413 = vsel %vm298, %v1381, %v1185
    %v1414 = vsel %vm298, %v1382, %v1187
    %v1415 = vsel %vm298, %v1383, %v1189
    %v1416 = vsel %vm298, %v1384, %v1191
    %v1417 = vsel %vm298, %v1385, %v1193
    %v1418 = vsel %vm307, %v1386, %v1259
    %v1419 = vsel %vm307, %v1387, %v1261
    %v1420 = vsel %vm307, %v1388, %v1263
    %v1421 = vsel %vm307, %v1389, %v1265
    %v1422 = vsel %vm307, %v1390, %v1267
    %v1423 = vsel %vm307, %v1391, %v1269
    %v1424 = vsel %vm307, %v1392, %v1271
    %v1425 = vsel %vm307, %v1393, %v1273
    %v1426 = vsel %vm307, %v1394, %v1275
    %v1427 = vsel %vm307, %v1395, %v1277
    %v1428 = vsel %vm307, %v1396, %v1279
    %v1429 = vsel %vm307, %v1397, %v1281
    %v1430 = vsel %vm307, %v1398, %v1283
    %v1431 = vsel %vm307, %v1399, %v1285
    %v1432 = vsel %vm307, %v1400, %v1287
    %v1433 = vsel %vm307, %v1401, %v1289
    %v1434 = vsel %vm307, %v1402, %v1291
    %v1435 = vsel %vm307, %v1403, %v1293
    %v1436 = vsel %vm307, %v1404, %v1295
    %v1437 = vsel %vm307, %v1405, %v1297
    %v1438 = vsel %vm307, %v1406, %v1299
    %v1439 = vsel %vm307, %v1407, %v1301
    %v1440 = vsel %vm307, %v1408, %v1303
    %v1441 = vsel %vm307, %v1409, %v1305
    %v1442 = vsel %vm307, %v1410, %v1307
    %v1443 = vsel %vm307, %v1411, %v1309
    %v1444 = vsel %vm307, %v1412, %v1311
    %v1445 = vsel %vm307, %v1413, %v1313
    %v1446 = vsel %vm307, %v1414, %v1315
    %v1447 = vsel %vm307, %v1415, %v1317
    %v1448 = vsel %vm307, %v1416, %v1319
    %v1449 = vsel %vm307, %v1417, %v1321
    %v1450 = vsel %vm298, %v475, 0
    %v1452 = vsel %vm298, %v478, 0
    %1454 = vmatpush.msra.mxu0 0.0
    %1455 = vmatpush.msra.mxu0 0.0
    %1456 = vmatpush.msra.mxu0 0.0
    %1457 = vmatpush.msra.mxu0 0.0
    %1458 = vmatpush.msra.mxu0 0.0
    %1459 = vmatpush.msra.mxu0 0.0
    %1460 = vmatpush.msra.mxu0 0.0
    %1461 = vmatpush.msra.mxu0 0.0
    %1462 = vmatpush.msra.mxu0 0.0
    %1463 = vmatpush.msra.mxu0 0.0
    %1464 = vmatpush.msra.mxu0 0.0
    %1465 = vmatpush.msra.mxu0 0.0
    %1466 = vmatpush.msra.mxu0 %v1421
    %1467 = vmatpush.msra.mxu0 %v1420
    %1468 = vmatpush.msra.mxu0 %v1419
    %1469 = vmatpush.msra.mxu0 %v1418
    %1470 = vmatmul.f32.gmra.mxu0 %v1450
    %v1471 = vpop.f32.mrf.mxu0
    %v1472 = vadd.f32 %v308, %v1471
    %1473 = vmatmul.f32.gmra.mxu0 %v1452
    %v1474 = vpop.f32.mrf.mxu0
    %v1475 = vadd.f32 %v308, %v1474
    %1476 = vdwg.mxu0
    %v1477 = vsel %vm298, %v481, 0
    %v1479 = vsel %vm298, %v484, 0
    %1481 = vmatpush.msra.mxu0 0.0
    %1482 = vmatpush.msra.mxu0 0.0
    %1483 = vmatpush.msra.mxu0 0.0
    %1484 = vmatpush.msra.mxu0 0.0
    %1485 = vmatpush.msra.mxu0 0.0
    %1486 = vmatpush.msra.mxu0 0.0
    %1487 = vmatpush.msra.mxu0 0.0
    %1488 = vmatpush.msra.mxu0 0.0
    %1489 = vmatpush.msra.mxu0 0.0
    %1490 = vmatpush.msra.mxu0 0.0
    %1491 = vmatpush.msra.mxu0 0.0
    %1492 = vmatpush.msra.mxu0 0.0
    %1493 = vmatpush.msra.mxu0 %v1425
    %1494 = vmatpush.msra.mxu0 %v1424
    %1495 = vmatpush.msra.mxu0 %v1423
    %1496 = vmatpush.msra.mxu0 %v1422
    %1497 = vmatmul.f32.gmra.mxu0 %v1477
    %v1498 = vpop.f32.mrf.mxu0
    %v1499 = vadd.f32 %v309, %v1498
    %1500 = vmatmul.f32.gmra.mxu0 %v1479
    %v1501 = vpop.f32.mrf.mxu0
    %v1502 = vadd.f32 %v309, %v1501
    %1503 = vdwg.mxu0
    %v1504 = vsel %vm298, %v487, 0
    %v1506 = vsel %vm298, %v490, 0
    %1508 = vmatpush.msra.mxu0 0.0
    %1509 = vmatpush.msra.mxu0 0.0
    %1510 = vmatpush.msra.mxu0 0.0
    %1511 = vmatpush.msra.mxu0 0.0
    %1512 = vmatpush.msra.mxu0 0.0
    %1513 = vmatpush.msra.mxu0 0.0
    %1514 = vmatpush.msra.mxu0 0.0
    %1515 = vmatpush.msra.mxu0 0.0
    %1516 = vmatpush.msra.mxu0 0.0
    %1517 = vmatpush.msra.mxu0 0.0
    %1518 = vmatpush.msra.mxu0 0.0
    %1519 = vmatpush.msra.mxu0 0.0
    %1520 = vmatpush.msra.mxu0 %v1429
    %1521 = vmatpush.msra.mxu0 %v1428
    %1522 = vmatpush.msra.mxu0 %v1427
    %1523 = vmatpush.msra.mxu0 %v1426
    %1524 = vmatmul.f32.gmra.mxu0 %v1504
    %v1525 = vpop.f32.mrf.mxu0
    %v1526 = vadd.f32 %v310, %v1525
    %1527 = vmatmul.f32.gmra.mxu0 %v1506
    %v1528 = vpop.f32.mrf.mxu0
    %v1529 = vadd.f32 %v310, %v1528
    %1530 = vdwg.mxu0
    %v1531 = vsel %vm298, %v493, 0
    %v1533 = vsel %vm298, %v496, 0
    %1535 = vmatpush.msra.mxu0 0.0
    %1536 = vmatpush.msra.mxu0 0.0
    %1537 = vmatpush.msra.mxu0 0.0
    %1538 = vmatpush.msra.mxu0 0.0
    %1539 = vmatpush.msra.mxu0 0.0
    %1540 = vmatpush.msra.mxu0 0.0
    %1541 = vmatpush.msra.mxu0 0.0
    %1542 = vmatpush.msra.mxu0 0.0
    %1543 = vmatpush.msra.mxu0 0.0
    %1544 = vmatpush.msra.mxu0 0.0
    %1545 = vmatpush.msra.mxu0 0.0
    %1546 = vmatpush.msra.mxu0 0.0
    %1547 = vmatpush.msra.mxu0 %v1433
    %1548 = vmatpush.msra.mxu0 %v1432
    %1549 = vmatpush.msra.mxu0 %v1431
    %1550 = vmatpush.msra.mxu0 %v1430
    %1551 = vmatmul.f32.gmra.mxu0 %v1531
    %v1552 = vpop.f32.mrf.mxu0
    %v1553 = vadd.f32 %v311, %v1552
    %1554 = vmatmul.f32.gmra.mxu0 %v1533
    %v1555 = vpop.f32.mrf.mxu0
    %v1556 = vadd.f32 %v311, %v1555
    %1557 = vdwg.mxu0
    %v1558 = vsel %vm298, %v499, 0
    %v1560 = vsel %vm298, %v502, 0
    %1562 = vmatpush.msra.mxu0 0.0
    %1563 = vmatpush.msra.mxu0 0.0
    %1564 = vmatpush.msra.mxu0 0.0
    %1565 = vmatpush.msra.mxu0 0.0
    %1566 = vmatpush.msra.mxu0 0.0
    %1567 = vmatpush.msra.mxu0 0.0
    %1568 = vmatpush.msra.mxu0 0.0
    %1569 = vmatpush.msra.mxu0 0.0
    %1570 = vmatpush.msra.mxu0 0.0
    %1571 = vmatpush.msra.mxu0 0.0
    %1572 = vmatpush.msra.mxu0 0.0
    %1573 = vmatpush.msra.mxu0 0.0
    %1574 = vmatpush.msra.mxu0 %v1437
    %1575 = vmatpush.msra.mxu0 %v1436
    %1576 = vmatpush.msra.mxu0 %v1435
    %1577 = vmatpush.msra.mxu0 %v1434
    %1578 = vmatmul.f32.gmra.mxu0 %v1558
    %v1579 = vpop.f32.mrf.mxu0
    %v1580 = vadd.f32 %v312, %v1579
    %1581 = vmatmul.f32.gmra.mxu0 %v1560
    %v1582 = vpop.f32.mrf.mxu0
    %v1583 = vadd.f32 %v312, %v1582
    %1584 = vdwg.mxu0
    %v1585 = vsel %vm298, %v505, 0
    %v1587 = vsel %vm298, %v508, 0
    %1589 = vmatpush.msra.mxu0 0.0
    %1590 = vmatpush.msra.mxu0 0.0
    %1591 = vmatpush.msra.mxu0 0.0
    %1592 = vmatpush.msra.mxu0 0.0
    %1593 = vmatpush.msra.mxu0 0.0
    %1594 = vmatpush.msra.mxu0 0.0
    %1595 = vmatpush.msra.mxu0 0.0
    %1596 = vmatpush.msra.mxu0 0.0
    %1597 = vmatpush.msra.mxu0 0.0
    %1598 = vmatpush.msra.mxu0 0.0
    %1599 = vmatpush.msra.mxu0 0.0
    %1600 = vmatpush.msra.mxu0 0.0
    %1601 = vmatpush.msra.mxu0 %v1441
    %1602 = vmatpush.msra.mxu0 %v1440
    %1603 = vmatpush.msra.mxu0 %v1439
    %1604 = vmatpush.msra.mxu0 %v1438
    %1605 = vmatmul.f32.gmra.mxu0 %v1585
    %v1606 = vpop.f32.mrf.mxu0
    %v1607 = vadd.f32 %v313, %v1606
    %1608 = vmatmul.f32.gmra.mxu0 %v1587
    %v1609 = vpop.f32.mrf.mxu0
    %v1610 = vadd.f32 %v313, %v1609
    %1611 = vdwg.mxu0
    %v1612 = vsel %vm298, %v511, 0
    %v1614 = vsel %vm298, %v514, 0
    %1616 = vmatpush.msra.mxu0 0.0
    %1617 = vmatpush.msra.mxu0 0.0
    %1618 = vmatpush.msra.mxu0 0.0
    %1619 = vmatpush.msra.mxu0 0.0
    %1620 = vmatpush.msra.mxu0 0.0
    %1621 = vmatpush.msra.mxu0 0.0
    %1622 = vmatpush.msra.mxu0 0.0
    %1623 = vmatpush.msra.mxu0 0.0
    %1624 = vmatpush.msra.mxu0 0.0
    %1625 = vmatpush.msra.mxu0 0.0
    %1626 = vmatpush.msra.mxu0 0.0
    %1627 = vmatpush.msra.mxu0 0.0
    %1628 = vmatpush.msra.mxu0 %v1445
    %1629 = vmatpush.msra.mxu0 %v1444
    %1630 = vmatpush.msra.mxu0 %v1443
    %1631 = vmatpush.msra.mxu0 %v1442
    %1632 = vmatmul.f32.gmra.mxu0 %v1612
    %v1633 = vpop.f32.mrf.mxu0
    %v1634 = vadd.f32 %v314, %v1633
    %1635 = vmatmul.f32.gmra.mxu0 %v1614
    %v1636 = vpop.f32.mrf.mxu0
    %v1637 = vadd.f32 %v314, %v1636
    %1638 = vdwg.mxu0
    %v1639 = vsel %vm298, %v517, 0
    %v1641 = vsel %vm298, %v520, 0
    %1643 = vmatpush.msra.mxu0 0.0
    %1644 = vmatpush.msra.mxu0 0.0
    %1645 = vmatpush.msra.mxu0 0.0
    %1646 = vmatpush.msra.mxu0 0.0
    %1647 = vmatpush.msra.mxu0 0.0
    %1648 = vmatpush.msra.mxu0 0.0
    %1649 = vmatpush.msra.mxu0 0.0
    %1650 = vmatpush.msra.mxu0 0.0
    %1651 = vmatpush.msra.mxu0 0.0
    %1652 = vmatpush.msra.mxu0 0.0
    %1653 = vmatpush.msra.mxu0 0.0
    %1654 = vmatpush.msra.mxu0 0.0
    %1655 = vmatpush.msra.mxu0 %v1449
    %1656 = vmatpush.msra.mxu0 %v1448
    %1657 = vmatpush.msra.mxu0 %v1447
    %1658 = vmatpush.msra.mxu0 %v1446
    %1659 = vmatmul.f32.gmra.mxu0 %v1639
    %v1660 = vpop.f32.mrf.mxu0
    %v1661 = vadd.f32 %v315, %v1660
    %1662 = vmatmul.f32.gmra.mxu0 %v1641
    %v1663 = vpop.f32.mrf.mxu0
    %v1664 = vadd.f32 %v315, %v1663
    %1665 = vdwg.mxu0
    %v1666 = vsel %vm289, %v1472, -inf
    %1667 = vmax.xlane.f32.xlu0 %v1666
    %v1668 = vpop.xlane.xlu0 %1667
    %v1669 = vsel %vm289, %v1475, -inf
    %1670 = vmax.xlane.f32.xlu0 %v1669
    %v1671 = vpop.xlane.xlu0 %1670
    %v1672 = vsel %vm289, %v1499, -inf
    %1673 = vmax.xlane.f32.xlu0 %v1672
    %v1674 = vpop.xlane.xlu0 %1673
    %v1675 = vsel %vm289, %v1502, -inf
    %1676 = vmax.xlane.f32.xlu0 %v1675
    %v1677 = vpop.xlane.xlu0 %1676
    %v1678 = vsel %vm289, %v1526, -inf
    %1679 = vmax.xlane.f32.xlu0 %v1678
    %v1680 = vpop.xlane.xlu0 %1679
    %v1681 = vsel %vm289, %v1529, -inf
    %1682 = vmax.xlane.f32.xlu0 %v1681
    %v1683 = vpop.xlane.xlu0 %1682
    %v1684 = vsel %vm289, %v1553, -inf
    %1685 = vmax.xlane.f32.xlu0 %v1684
    %v1686 = vpop.xlane.xlu0 %1685
    %v1687 = vsel %vm289, %v1556, -inf
    %1688 = vmax.xlane.f32.xlu0 %v1687
    %v1689 = vpop.xlane.xlu0 %1688
    %v1690 = vsel %vm289, %v1580, -inf
    %1691 = vmax.xlane.f32.xlu0 %v1690
    %v1692 = vpop.xlane.xlu0 %1691
    %v1693 = vsel %vm289, %v1583, -inf
    %1694 = vmax.xlane.f32.xlu0 %v1693
    %v1695 = vpop.xlane.xlu0 %1694
    %v1696 = vsel %vm289, %v1607, -inf
    %1697 = vmax.xlane.f32.xlu0 %v1696
    %v1698 = vpop.xlane.xlu0 %1697
    %v1699 = vsel %vm289, %v1610, -inf
    %1700 = vmax.xlane.f32.xlu0 %v1699
    %v1701 = vpop.xlane.xlu0 %1700
    %v1702 = vsel %vm289, %v1634, -inf
    %1703 = vmax.xlane.f32.xlu0 %v1702
    %v1704 = vpop.xlane.xlu0 %1703
    %v1705 = vsel %vm289, %v1637, -inf
    %1706 = vmax.xlane.f32.xlu0 %v1705
    %v1707 = vpop.xlane.xlu0 %1706
    %v1708 = vsel %vm289, %v1661, -inf
    %1709 = vmax.xlane.f32.xlu0 %v1708
    %v1710 = vpop.xlane.xlu0 %1709
    %v1711 = vsel %vm289, %v1664, -inf
    %1712 = vmax.xlane.f32.xlu0 %v1711
    %v1713 = vpop.xlane.xlu0 %1712
    %vm1714 = vcmask 261248
    %v1715 = vsel %vm1714, %v1472, -inf
    %1716 = vmax.xlane.f32.xlu0 %v1715
    %v1717 = vpop.xlane.xlu0 %1716
    %v1718 = vsel %vm1714, %v1475, -inf
    %1719 = vmax.xlane.f32.xlu0 %v1718
    %v1720 = vpop.xlane.xlu0 %1719
    %v1721 = vsel %vm1714, %v1499, -inf
    %1722 = vmax.xlane.f32.xlu0 %v1721
    %v1723 = vpop.xlane.xlu0 %1722
    %v1724 = vsel %vm1714, %v1502, -inf
    %1725 = vmax.xlane.f32.xlu0 %v1724
    %v1726 = vpop.xlane.xlu0 %1725
    %v1727 = vsel %vm1714, %v1526, -inf
    %1728 = vmax.xlane.f32.xlu0 %v1727
    %v1729 = vpop.xlane.xlu0 %1728
    %v1730 = vsel %vm1714, %v1529, -inf
    %1731 = vmax.xlane.f32.xlu0 %v1730
    %v1732 = vpop.xlane.xlu0 %1731
    %v1733 = vsel %vm1714, %v1553, -inf
    %1734 = vmax.xlane.f32.xlu0 %v1733
    %v1735 = vpop.xlane.xlu0 %1734
    %v1736 = vsel %vm1714, %v1556, -inf
    %1737 = vmax.xlane.f32.xlu0 %v1736
    %v1738 = vpop.xlane.xlu0 %1737
    %v1739 = vsel %vm1714, %v1580, -inf
    %1740 = vmax.xlane.f32.xlu0 %v1739
    %v1741 = vpop.xlane.xlu0 %1740
    %v1742 = vsel %vm1714, %v1583, -inf
    %1743 = vmax.xlane.f32.xlu0 %v1742
    %v1744 = vpop.xlane.xlu0 %1743
    %v1745 = vsel %vm1714, %v1607, -inf
    %1746 = vmax.xlane.f32.xlu0 %v1745
    %v1747 = vpop.xlane.xlu0 %1746
    %v1748 = vsel %vm1714, %v1610, -inf
    %1749 = vmax.xlane.f32.xlu0 %v1748
    %v1750 = vpop.xlane.xlu0 %1749
    %v1751 = vsel %vm1714, %v1634, -inf
    %1752 = vmax.xlane.f32.xlu0 %v1751
    %v1753 = vpop.xlane.xlu0 %1752
    %v1754 = vsel %vm1714, %v1637, -inf
    %1755 = vmax.xlane.f32.xlu0 %v1754
    %v1756 = vpop.xlane.xlu0 %1755
    %v1757 = vsel %vm1714, %v1661, -inf
    %1758 = vmax.xlane.f32.xlu0 %v1757
    %v1759 = vpop.xlane.xlu0 %1758
    %v1760 = vsel %vm1714, %v1664, -inf
    %1761 = vmax.xlane.f32.xlu0 %v1760
    %v1762 = vpop.xlane.xlu0 %1761
    %vm1763 = vcmask 392448
    %v1764 = vsel %vm1763, %v1472, -inf
    %1765 = vmax.xlane.f32.xlu0 %v1764
    %v1766 = vpop.xlane.xlu0 %1765
    %v1767 = vsel %vm1763, %v1475, -inf
    %1768 = vmax.xlane.f32.xlu0 %v1767
    %v1769 = vpop.xlane.xlu0 %1768
    %v1770 = vsel %vm1763, %v1499, -inf
    %1771 = vmax.xlane.f32.xlu0 %v1770
    %v1772 = vpop.xlane.xlu0 %1771
    %v1773 = vsel %vm1763, %v1502, -inf
    %1774 = vmax.xlane.f32.xlu0 %v1773
    %v1775 = vpop.xlane.xlu0 %1774
    %v1776 = vsel %vm1763, %v1526, -inf
    %1777 = vmax.xlane.f32.xlu0 %v1776
    %v1778 = vpop.xlane.xlu0 %1777
    %v1779 = vsel %vm1763, %v1529, -inf
    %1780 = vmax.xlane.f32.xlu0 %v1779
    %v1781 = vpop.xlane.xlu0 %1780
    %v1782 = vsel %vm1763, %v1553, -inf
    %1783 = vmax.xlane.f32.xlu0 %v1782
    %v1784 = vpop.xlane.xlu0 %1783
    %v1785 = vsel %vm1763, %v1556, -inf
    %1786 = vmax.xlane.f32.xlu0 %v1785
    %v1787 = vpop.xlane.xlu0 %1786
    %v1788 = vsel %vm1763, %v1580, -inf
    %1789 = vmax.xlane.f32.xlu0 %v1788
    %v1790 = vpop.xlane.xlu0 %1789
    %v1791 = vsel %vm1763, %v1583, -inf
    %1792 = vmax.xlane.f32.xlu0 %v1791
    %v1793 = vpop.xlane.xlu0 %1792
    %v1794 = vsel %vm1763, %v1607, -inf
    %1795 = vmax.xlane.f32.xlu0 %v1794
    %v1796 = vpop.xlane.xlu0 %1795
    %v1797 = vsel %vm1763, %v1610, -inf
    %1798 = vmax.xlane.f32.xlu0 %v1797
    %v1799 = vpop.xlane.xlu0 %1798
    %v1800 = vsel %vm1763, %v1634, -inf
    %1801 = vmax.xlane.f32.xlu0 %v1800
    %v1802 = vpop.xlane.xlu0 %1801
    %v1803 = vsel %vm1763, %v1637, -inf
    %1804 = vmax.xlane.f32.xlu0 %v1803
    %v1805 = vpop.xlane.xlu0 %1804
    %v1806 = vsel %vm1763, %v1661, -inf
    %1807 = vmax.xlane.f32.xlu0 %v1806
    %v1808 = vpop.xlane.xlu0 %1807
    %v1809 = vsel %vm1763, %v1664, -inf
    %1810 = vmax.xlane.f32.xlu0 %v1809
    %v1811 = vpop.xlane.xlu0 %1810
    %vm1812 = vcmask 523648
    %v1813 = vsel %vm1812, %v1472, -inf
    %1814 = vmax.xlane.f32.xlu0 %v1813
    %v1815 = vpop.xlane.xlu0 %1814
    %v1816 = vsel %vm1812, %v1475, -inf
    %1817 = vmax.xlane.f32.xlu0 %v1816
    %v1818 = vpop.xlane.xlu0 %1817
    %v1819 = vsel %vm1812, %v1499, -inf
    %1820 = vmax.xlane.f32.xlu0 %v1819
    %v1821 = vpop.xlane.xlu0 %1820
    %v1822 = vsel %vm1812, %v1502, -inf
    %1823 = vmax.xlane.f32.xlu0 %v1822
    %v1824 = vpop.xlane.xlu0 %1823
    %v1825 = vsel %vm1812, %v1526, -inf
    %1826 = vmax.xlane.f32.xlu0 %v1825
    %v1827 = vpop.xlane.xlu0 %1826
    %v1828 = vsel %vm1812, %v1529, -inf
    %1829 = vmax.xlane.f32.xlu0 %v1828
    %v1830 = vpop.xlane.xlu0 %1829
    %v1831 = vsel %vm1812, %v1553, -inf
    %1832 = vmax.xlane.f32.xlu0 %v1831
    %v1833 = vpop.xlane.xlu0 %1832
    %v1834 = vsel %vm1812, %v1556, -inf
    %1835 = vmax.xlane.f32.xlu0 %v1834
    %v1836 = vpop.xlane.xlu0 %1835
    %v1837 = vsel %vm1812, %v1580, -inf
    %1838 = vmax.xlane.f32.xlu0 %v1837
    %v1839 = vpop.xlane.xlu0 %1838
    %v1840 = vsel %vm1812, %v1583, -inf
    %1841 = vmax.xlane.f32.xlu0 %v1840
    %v1842 = vpop.xlane.xlu0 %1841
    %v1843 = vsel %vm1812, %v1607, -inf
    %1844 = vmax.xlane.f32.xlu0 %v1843
    %v1845 = vpop.xlane.xlu0 %1844
    %v1846 = vsel %vm1812, %v1610, -inf
    %1847 = vmax.xlane.f32.xlu0 %v1846
    %v1848 = vpop.xlane.xlu0 %1847
    %v1849 = vsel %vm1812, %v1634, -inf
    %1850 = vmax.xlane.f32.xlu0 %v1849
    %v1851 = vpop.xlane.xlu0 %1850
    %v1852 = vsel %vm1812, %v1637, -inf
    %1853 = vmax.xlane.f32.xlu0 %v1852
    %v1854 = vpop.xlane.xlu0 %1853
    %v1855 = vsel %vm1812, %v1661, -inf
    %1856 = vmax.xlane.f32.xlu0 %v1855
    %v1857 = vpop.xlane.xlu0 %1856
    %v1858 = vsel %vm1812, %v1664, -inf
    %1859 = vmax.xlane.f32.xlu0 %v1858
    %v1860 = vpop.xlane.xlu0 %1859
    %v1861 = vsel %vm289, %v1668, %v1717
    %v1862 = vsel %vm289, %v1671, %v1720
    %v1863 = vsel %vm289, %v1674, %v1723
    %v1864 = vsel %vm289, %v1677, %v1726
    %v1865 = vsel %vm289, %v1680, %v1729
    %v1866 = vsel %vm289, %v1683, %v1732
    %v1867 = vsel %vm289, %v1686, %v1735
    %v1868 = vsel %vm289, %v1689, %v1738
    %v1869 = vsel %vm289, %v1692, %v1741
    %v1870 = vsel %vm289, %v1695, %v1744
    %v1871 = vsel %vm289, %v1698, %v1747
    %v1872 = vsel %vm289, %v1701, %v1750
    %v1873 = vsel %vm289, %v1704, %v1753
    %v1874 = vsel %vm289, %v1707, %v1756
    %v1875 = vsel %vm289, %v1710, %v1759
    %v1876 = vsel %vm289, %v1713, %v1762
    %v1877 = vsel %vm298, %v1861, %v1766
    %v1878 = vsel %vm298, %v1862, %v1769
    %v1879 = vsel %vm298, %v1863, %v1772
    %v1880 = vsel %vm298, %v1864, %v1775
    %v1881 = vsel %vm298, %v1865, %v1778
    %v1882 = vsel %vm298, %v1866, %v1781
    %v1883 = vsel %vm298, %v1867, %v1784
    %v1884 = vsel %vm298, %v1868, %v1787
    %v1885 = vsel %vm298, %v1869, %v1790
    %v1886 = vsel %vm298, %v1870, %v1793
    %v1887 = vsel %vm298, %v1871, %v1796
    %v1888 = vsel %vm298, %v1872, %v1799
    %v1889 = vsel %vm298, %v1873, %v1802
    %v1890 = vsel %vm298, %v1874, %v1805
    %v1891 = vsel %vm298, %v1875, %v1808
    %v1892 = vsel %vm298, %v1876, %v1811
    %v1893 = vsel %vm307, %v1877, %v1815
    %v1894 = vsel %vm307, %v1878, %v1818
    %v1895 = vsel %vm307, %v1879, %v1821
    %v1896 = vsel %vm307, %v1880, %v1824
    %v1897 = vsel %vm307, %v1881, %v1827
    %v1898 = vsel %vm307, %v1882, %v1830
    %v1899 = vsel %vm307, %v1883, %v1833
    %v1900 = vsel %vm307, %v1884, %v1836
    %v1901 = vsel %vm307, %v1885, %v1839
    %v1902 = vsel %vm307, %v1886, %v1842
    %v1903 = vsel %vm307, %v1887, %v1845
    %v1904 = vsel %vm307, %v1888, %v1848
    %v1905 = vsel %vm307, %v1889, %v1851
    %v1906 = vsel %vm307, %v1890, %v1854
    %v1907 = vsel %vm307, %v1891, %v1857
    %v1908 = vsel %vm307, %v1892, %v1860
    %v1909 = vsub.f32 %v1472, %v1893
    %v1910 = vsub.f32 %v1475, %v1894
    %v1911 = vsub.f32 %v1499, %v1895
    %v1912 = vsub.f32 %v1502, %v1896
    %v1913 = vsub.f32 %v1526, %v1897
    %v1914 = vsub.f32 %v1529, %v1898
    %v1915 = vsub.f32 %v1553, %v1899
    %v1916 = vsub.f32 %v1556, %v1900
    %v1917 = vsub.f32 %v1580, %v1901
    %v1918 = vsub.f32 %v1583, %v1902
    %v1919 = vsub.f32 %v1607, %v1903
    %v1920 = vsub.f32 %v1610, %v1904
    %v1921 = vsub.f32 %v1634, %v1905
    %v1922 = vsub.f32 %v1637, %v1906
    %v1923 = vsub.f32 %v1661, %v1907
    %v1924 = vsub.f32 %v1664, %v1908
    %v1925 = vmul.f32 %v1909, 1.442695
    %v1926 = vpow.pop %v1925
    %v1927 = vmul.f32 %v1910, 1.442695
    %v1928 = vpow.pop %v1927
    %v1929 = vmul.f32 %v1911, 1.442695
    %v1930 = vpow.pop %v1929
    %v1931 = vmul.f32 %v1912, 1.442695
    %v1932 = vpow.pop %v1931
    %v1933 = vmul.f32 %v1913, 1.442695
    %v1934 = vpow.pop %v1933
    %v1935 = vmul.f32 %v1914, 1.442695
    %v1936 = vpow.pop %v1935
    %v1937 = vmul.f32 %v1915, 1.442695
    %v1938 = vpow.pop %v1937
    %v1939 = vmul.f32 %v1916, 1.442695
    %v1940 = vpow.pop %v1939
    %v1941 = vmul.f32 %v1917, 1.442695
    %v1942 = vpow.pop %v1941
    %v1943 = vmul.f32 %v1918, 1.442695
    %v1944 = vpow.pop %v1943
    %v1945 = vmul.f32 %v1919, 1.442695
    %v1946 = vpow.pop %v1945
    %v1947 = vmul.f32 %v1920, 1.442695
    %v1948 = vpow.pop %v1947
    %v1949 = vmul.f32 %v1921, 1.442695
    %v1950 = vpow.pop %v1949
    %v1951 = vmul.f32 %v1922, 1.442695
    %v1952 = vpow.pop %v1951
    %v1953 = vmul.f32 %v1923, 1.442695
    %v1954 = vpow.pop %v1953
    %v1955 = vmul.f32 %v1924, 1.442695
    %v1956 = vpow.pop %v1955
    %v1957 = vsel %vm289, %v1926, 0.0
    %1958 = vadd.xlane.f32.xlu0 %v1957
    %v1959 = vpop.xlane.xlu0 %1958
    %v1960 = vsel %vm289, %v1928, 0.0
    %1961 = vadd.xlane.f32.xlu0 %v1960
    %v1962 = vpop.xlane.xlu0 %1961
    %v1963 = vsel %vm289, %v1930, 0.0
    %1964 = vadd.xlane.f32.xlu0 %v1963
    %v1965 = vpop.xlane.xlu0 %1964
    %v1966 = vsel %vm289, %v1932, 0.0
    %1967 = vadd.xlane.f32.xlu0 %v1966
    %v1968 = vpop.xlane.xlu0 %1967
    %v1969 = vsel %vm289, %v1934, 0.0
    %1970 = vadd.xlane.f32.xlu0 %v1969
    %v1971 = vpop.xlane.xlu0 %1970
    %v1972 = vsel %vm289, %v1936, 0.0
    %1973 = vadd.xlane.f32.xlu0 %v1972
    %v1974 = vpop.xlane.xlu0 %1973
    %v1975 = vsel %vm289, %v1938, 0.0
    %1976 = vadd.xlane.f32.xlu0 %v1975
    %v1977 = vpop.xlane.xlu0 %1976
    %v1978 = vsel %vm289, %v1940, 0.0
    %1979 = vadd.xlane.f32.xlu0 %v1978
    %v1980 = vpop.xlane.xlu0 %1979
    %v1981 = vsel %vm289, %v1942, 0.0
    %1982 = vadd.xlane.f32.xlu0 %v1981
    %v1983 = vpop.xlane.xlu0 %1982
    %v1984 = vsel %vm289, %v1944, 0.0
    %1985 = vadd.xlane.f32.xlu0 %v1984
    %v1986 = vpop.xlane.xlu0 %1985
    %v1987 = vsel %vm289, %v1946, 0.0
    %1988 = vadd.xlane.f32.xlu0 %v1987
    %v1989 = vpop.xlane.xlu0 %1988
    %v1990 = vsel %vm289, %v1948, 0.0
    %1991 = vadd.xlane.f32.xlu0 %v1990
    %v1992 = vpop.xlane.xlu0 %1991
    %v1993 = vsel %vm289, %v1950, 0.0
    %1994 = vadd.xlane.f32.xlu0 %v1993
    %v1995 = vpop.xlane.xlu0 %1994
    %v1996 = vsel %vm289, %v1952, 0.0
    %1997 = vadd.xlane.f32.xlu0 %v1996
    %v1998 = vpop.xlane.xlu0 %1997
    %v1999 = vsel %vm289, %v1954, 0.0
    %2000 = vadd.xlane.f32.xlu0 %v1999
    %v2001 = vpop.xlane.xlu0 %2000
    %v2002 = vsel %vm289, %v1956, 0.0
    %2003 = vadd.xlane.f32.xlu0 %v2002
    %v2004 = vpop.xlane.xlu0 %2003
    %v2005 = vrcp.pop %v1959
    %v2006 = vrcp.pop %v1962
    %v2007 = vrcp.pop %v1965
    %v2008 = vrcp.pop %v1968
    %v2009 = vrcp.pop %v1971
    %v2010 = vrcp.pop %v1974
    %v2011 = vrcp.pop %v1977
    %v2012 = vrcp.pop %v1980
    %v2013 = vrcp.pop %v1983
    %v2014 = vrcp.pop %v1986
    %v2015 = vrcp.pop %v1989
    %v2016 = vrcp.pop %v1992
    %v2017 = vrcp.pop %v1995
    %v2018 = vrcp.pop %v1998
    %v2019 = vrcp.pop %v2001
    %v2020 = vrcp.pop %v2004
    %2037 = vrot.lane.b32.xlu0 %v1926, 112
    %v2038 = vpop.permute.xlu0 %2037
    %2039 = vrot.lane.b32.xlu0 %v1928, 112
    %v2040 = vpop.permute.xlu0 %2039
    %2041 = vrot.lane.b32.xlu0 %v1930, 112
    %v2042 = vpop.permute.xlu0 %2041
    %2043 = vrot.lane.b32.xlu0 %v1932, 112
    %v2044 = vpop.permute.xlu0 %2043
    %2045 = vrot.lane.b32.xlu0 %v1934, 112
    %v2046 = vpop.permute.xlu0 %2045
    %2047 = vrot.lane.b32.xlu0 %v1936, 112
    %v2048 = vpop.permute.xlu0 %2047
    %2049 = vrot.lane.b32.xlu0 %v1938, 112
    %v2050 = vpop.permute.xlu0 %2049
    %2051 = vrot.lane.b32.xlu0 %v1940, 112
    %v2052 = vpop.permute.xlu0 %2051
    %2053 = vrot.lane.b32.xlu0 %v1942, 112
    %v2054 = vpop.permute.xlu0 %2053
    %2055 = vrot.lane.b32.xlu0 %v1944, 112
    %v2056 = vpop.permute.xlu0 %2055
    %2057 = vrot.lane.b32.xlu0 %v1946, 112
    %v2058 = vpop.permute.xlu0 %2057
    %2059 = vrot.lane.b32.xlu0 %v1948, 112
    %v2060 = vpop.permute.xlu0 %2059
    %2061 = vrot.lane.b32.xlu0 %v1950, 112
    %v2062 = vpop.permute.xlu0 %2061
    %2063 = vrot.lane.b32.xlu0 %v1952, 112
    %v2064 = vpop.permute.xlu0 %2063
    %2065 = vrot.lane.b32.xlu0 %v1954, 112
    %v2066 = vpop.permute.xlu0 %2065
    %2067 = vrot.lane.b32.xlu0 %v1956, 112
    %v2068 = vpop.permute.xlu0 %2067
    %v2085 = vsel %vm289, %v2038, 0.0
    %2086 = vadd.xlane.f32.xlu0 %v2085
    %v2087 = vpop.xlane.xlu0 %2086
    %v2088 = vsel %vm289, %v2040, 0.0
    %2089 = vadd.xlane.f32.xlu0 %v2088
    %v2090 = vpop.xlane.xlu0 %2089
    %v2091 = vsel %vm289, %v2042, 0.0
    %2092 = vadd.xlane.f32.xlu0 %v2091
    %v2093 = vpop.xlane.xlu0 %2092
    %v2094 = vsel %vm289, %v2044, 0.0
    %2095 = vadd.xlane.f32.xlu0 %v2094
    %v2096 = vpop.xlane.xlu0 %2095
    %v2097 = vsel %vm289, %v2046, 0.0
    %2098 = vadd.xlane.f32.xlu0 %v2097
    %v2099 = vpop.xlane.xlu0 %2098
    %v2100 = vsel %vm289, %v2048, 0.0
    %2101 = vadd.xlane.f32.xlu0 %v2100
    %v2102 = vpop.xlane.xlu0 %2101
    %v2103 = vsel %vm289, %v2050, 0.0
    %2104 = vadd.xlane.f32.xlu0 %v2103
    %v2105 = vpop.xlane.xlu0 %2104
    %v2106 = vsel %vm289, %v2052, 0.0
    %2107 = vadd.xlane.f32.xlu0 %v2106
    %v2108 = vpop.xlane.xlu0 %2107
    %v2109 = vsel %vm289, %v2054, 0.0
    %2110 = vadd.xlane.f32.xlu0 %v2109
    %v2111 = vpop.xlane.xlu0 %2110
    %v2112 = vsel %vm289, %v2056, 0.0
    %2113 = vadd.xlane.f32.xlu0 %v2112
    %v2114 = vpop.xlane.xlu0 %2113
    %v2115 = vsel %vm289, %v2058, 0.0
    %2116 = vadd.xlane.f32.xlu0 %v2115
    %v2117 = vpop.xlane.xlu0 %2116
    %v2118 = vsel %vm289, %v2060, 0.0
    %2119 = vadd.xlane.f32.xlu0 %v2118
    %v2120 = vpop.xlane.xlu0 %2119
    %v2121 = vsel %vm289, %v2062, 0.0
    %2122 = vadd.xlane.f32.xlu0 %v2121
    %v2123 = vpop.xlane.xlu0 %2122
    %v2124 = vsel %vm289, %v2064, 0.0
    %2125 = vadd.xlane.f32.xlu0 %v2124
    %v2126 = vpop.xlane.xlu0 %2125
    %v2127 = vsel %vm289, %v2066, 0.0
    %2128 = vadd.xlane.f32.xlu0 %v2127
    %v2129 = vpop.xlane.xlu0 %2128
    %v2130 = vsel %vm289, %v2068, 0.0
    %2131 = vadd.xlane.f32.xlu0 %v2130
    %v2132 = vpop.xlane.xlu0 %2131
    %v2133 = vrcp.pop %v2087
    %v2134 = vrcp.pop %v2090
    %v2135 = vrcp.pop %v2093
    %v2136 = vrcp.pop %v2096
    %v2137 = vrcp.pop %v2099
    %v2138 = vrcp.pop %v2102
    %v2139 = vrcp.pop %v2105
    %v2140 = vrcp.pop %v2108
    %v2141 = vrcp.pop %v2111
    %v2142 = vrcp.pop %v2114
    %v2143 = vrcp.pop %v2117
    %v2144 = vrcp.pop %v2120
    %v2145 = vrcp.pop %v2123
    %v2146 = vrcp.pop %v2126
    %v2147 = vrcp.pop %v2129
    %v2148 = vrcp.pop %v2132
    %2149 = vrot.lane.b32.xlu0 %v1926, 96
    %v2150 = vpop.permute.xlu0 %2149
    %2151 = vrot.lane.b32.xlu0 %v1928, 96
    %v2152 = vpop.permute.xlu0 %2151
    %2153 = vrot.lane.b32.xlu0 %v1930, 96
    %v2154 = vpop.permute.xlu0 %2153
    %2155 = vrot.lane.b32.xlu0 %v1932, 96
    %v2156 = vpop.permute.xlu0 %2155
    %2157 = vrot.lane.b32.xlu0 %v1934, 96
    %v2158 = vpop.permute.xlu0 %2157
    %2159 = vrot.lane.b32.xlu0 %v1936, 96
    %v2160 = vpop.permute.xlu0 %2159
    %2161 = vrot.lane.b32.xlu0 %v1938, 96
    %v2162 = vpop.permute.xlu0 %2161
    %2163 = vrot.lane.b32.xlu0 %v1940, 96
    %v2164 = vpop.permute.xlu0 %2163
    %2165 = vrot.lane.b32.xlu0 %v1942, 96
    %v2166 = vpop.permute.xlu0 %2165
    %2167 = vrot.lane.b32.xlu0 %v1944, 96
    %v2168 = vpop.permute.xlu0 %2167
    %2169 = vrot.lane.b32.xlu0 %v1946, 96
    %v2170 = vpop.permute.xlu0 %2169
    %2171 = vrot.lane.b32.xlu0 %v1948, 96
    %v2172 = vpop.permute.xlu0 %2171
    %2173 = vrot.lane.b32.xlu0 %v1950, 96
    %v2174 = vpop.permute.xlu0 %2173
    %2175 = vrot.lane.b32.xlu0 %v1952, 96
    %v2176 = vpop.permute.xlu0 %2175
    %2177 = vrot.lane.b32.xlu0 %v1954, 96
    %v2178 = vpop.permute.xlu0 %2177
    %2179 = vrot.lane.b32.xlu0 %v1956, 96
    %v2180 = vpop.permute.xlu0 %2179
    %v2197 = vsel %vm289, %v2150, 0.0
    %2198 = vadd.xlane.f32.xlu0 %v2197
    %v2199 = vpop.xlane.xlu0 %2198
    %v2200 = vsel %vm289, %v2152, 0.0
    %2201 = vadd.xlane.f32.xlu0 %v2200
    %v2202 = vpop.xlane.xlu0 %2201
    %v2203 = vsel %vm289, %v2154, 0.0
    %2204 = vadd.xlane.f32.xlu0 %v2203
    %v2205 = vpop.xlane.xlu0 %2204
    %v2206 = vsel %vm289, %v2156, 0.0
    %2207 = vadd.xlane.f32.xlu0 %v2206
    %v2208 = vpop.xlane.xlu0 %2207
    %v2209 = vsel %vm289, %v2158, 0.0
    %2210 = vadd.xlane.f32.xlu0 %v2209
    %v2211 = vpop.xlane.xlu0 %2210
    %v2212 = vsel %vm289, %v2160, 0.0
    %2213 = vadd.xlane.f32.xlu0 %v2212
    %v2214 = vpop.xlane.xlu0 %2213
    %v2215 = vsel %vm289, %v2162, 0.0
    %2216 = vadd.xlane.f32.xlu0 %v2215
    %v2217 = vpop.xlane.xlu0 %2216
    %v2218 = vsel %vm289, %v2164, 0.0
    %2219 = vadd.xlane.f32.xlu0 %v2218
    %v2220 = vpop.xlane.xlu0 %2219
    %v2221 = vsel %vm289, %v2166, 0.0
    %2222 = vadd.xlane.f32.xlu0 %v2221
    %v2223 = vpop.xlane.xlu0 %2222
    %v2224 = vsel %vm289, %v2168, 0.0
    %2225 = vadd.xlane.f32.xlu0 %v2224
    %v2226 = vpop.xlane.xlu0 %2225
    %v2227 = vsel %vm289, %v2170, 0.0
    %2228 = vadd.xlane.f32.xlu0 %v2227
    %v2229 = vpop.xlane.xlu0 %2228
    %v2230 = vsel %vm289, %v2172, 0.0
    %2231 = vadd.xlane.f32.xlu0 %v2230
    %v2232 = vpop.xlane.xlu0 %2231
    %v2233 = vsel %vm289, %v2174, 0.0
    %2234 = vadd.xlane.f32.xlu0 %v2233
    %v2235 = vpop.xlane.xlu0 %2234
    %v2236 = vsel %vm289, %v2176, 0.0
    %2237 = vadd.xlane.f32.xlu0 %v2236
    %v2238 = vpop.xlane.xlu0 %2237
    %v2239 = vsel %vm289, %v2178, 0.0
    %2240 = vadd.xlane.f32.xlu0 %v2239
    %v2241 = vpop.xlane.xlu0 %2240
    %v2242 = vsel %vm289, %v2180, 0.0
    %2243 = vadd.xlane.f32.xlu0 %v2242
    %v2244 = vpop.xlane.xlu0 %2243
    %v2245 = vrcp.pop %v2199
    %v2246 = vrcp.pop %v2202
    %v2247 = vrcp.pop %v2205
    %v2248 = vrcp.pop %v2208
    %v2249 = vrcp.pop %v2211
    %v2250 = vrcp.pop %v2214
    %v2251 = vrcp.pop %v2217
    %v2252 = vrcp.pop %v2220
    %v2253 = vrcp.pop %v2223
    %v2254 = vrcp.pop %v2226
    %v2255 = vrcp.pop %v2229
    %v2256 = vrcp.pop %v2232
    %v2257 = vrcp.pop %v2235
    %v2258 = vrcp.pop %v2238
    %v2259 = vrcp.pop %v2241
    %v2260 = vrcp.pop %v2244
    %2261 = vrot.lane.b32.xlu0 %v1926, 80
    %v2262 = vpop.permute.xlu0 %2261
    %2263 = vrot.lane.b32.xlu0 %v1928, 80
    %v2264 = vpop.permute.xlu0 %2263
    %2265 = vrot.lane.b32.xlu0 %v1930, 80
    %v2266 = vpop.permute.xlu0 %2265
    %2267 = vrot.lane.b32.xlu0 %v1932, 80
    %v2268 = vpop.permute.xlu0 %2267
    %2269 = vrot.lane.b32.xlu0 %v1934, 80
    %v2270 = vpop.permute.xlu0 %2269
    %2271 = vrot.lane.b32.xlu0 %v1936, 80
    %v2272 = vpop.permute.xlu0 %2271
    %2273 = vrot.lane.b32.xlu0 %v1938, 80
    %v2274 = vpop.permute.xlu0 %2273
    %2275 = vrot.lane.b32.xlu0 %v1940, 80
    %v2276 = vpop.permute.xlu0 %2275
    %2277 = vrot.lane.b32.xlu0 %v1942, 80
    %v2278 = vpop.permute.xlu0 %2277
    %2279 = vrot.lane.b32.xlu0 %v1944, 80
    %v2280 = vpop.permute.xlu0 %2279
    %2281 = vrot.lane.b32.xlu0 %v1946, 80
    %v2282 = vpop.permute.xlu0 %2281
    %2283 = vrot.lane.b32.xlu0 %v1948, 80
    %v2284 = vpop.permute.xlu0 %2283
    %2285 = vrot.lane.b32.xlu0 %v1950, 80
    %v2286 = vpop.permute.xlu0 %2285
    %2287 = vrot.lane.b32.xlu0 %v1952, 80
    %v2288 = vpop.permute.xlu0 %2287
    %2289 = vrot.lane.b32.xlu0 %v1954, 80
    %v2290 = vpop.permute.xlu0 %2289
    %2291 = vrot.lane.b32.xlu0 %v1956, 80
    %v2292 = vpop.permute.xlu0 %2291
    %v2309 = vsel %vm289, %v2262, 0.0
    %2310 = vadd.xlane.f32.xlu0 %v2309
    %v2311 = vpop.xlane.xlu0 %2310
    %v2312 = vsel %vm289, %v2264, 0.0
    %2313 = vadd.xlane.f32.xlu0 %v2312
    %v2314 = vpop.xlane.xlu0 %2313
    %v2315 = vsel %vm289, %v2266, 0.0
    %2316 = vadd.xlane.f32.xlu0 %v2315
    %v2317 = vpop.xlane.xlu0 %2316
    %v2318 = vsel %vm289, %v2268, 0.0
    %2319 = vadd.xlane.f32.xlu0 %v2318
    %v2320 = vpop.xlane.xlu0 %2319
    %v2321 = vsel %vm289, %v2270, 0.0
    %2322 = vadd.xlane.f32.xlu0 %v2321
    %v2323 = vpop.xlane.xlu0 %2322
    %v2324 = vsel %vm289, %v2272, 0.0
    %2325 = vadd.xlane.f32.xlu0 %v2324
    %v2326 = vpop.xlane.xlu0 %2325
    %v2327 = vsel %vm289, %v2274, 0.0
    %2328 = vadd.xlane.f32.xlu0 %v2327
    %v2329 = vpop.xlane.xlu0 %2328
    %v2330 = vsel %vm289, %v2276, 0.0
    %2331 = vadd.xlane.f32.xlu0 %v2330
    %v2332 = vpop.xlane.xlu0 %2331
    %v2333 = vsel %vm289, %v2278, 0.0
    %2334 = vadd.xlane.f32.xlu0 %v2333
    %v2335 = vpop.xlane.xlu0 %2334
    %v2336 = vsel %vm289, %v2280, 0.0
    %2337 = vadd.xlane.f32.xlu0 %v2336
    %v2338 = vpop.xlane.xlu0 %2337
    %v2339 = vsel %vm289, %v2282, 0.0
    %2340 = vadd.xlane.f32.xlu0 %v2339
    %v2341 = vpop.xlane.xlu0 %2340
    %v2342 = vsel %vm289, %v2284, 0.0
    %2343 = vadd.xlane.f32.xlu0 %v2342
    %v2344 = vpop.xlane.xlu0 %2343
    %v2345 = vsel %vm289, %v2286, 0.0
    %2346 = vadd.xlane.f32.xlu0 %v2345
    %v2347 = vpop.xlane.xlu0 %2346
    %v2348 = vsel %vm289, %v2288, 0.0
    %2349 = vadd.xlane.f32.xlu0 %v2348
    %v2350 = vpop.xlane.xlu0 %2349
    %v2351 = vsel %vm289, %v2290, 0.0
    %2352 = vadd.xlane.f32.xlu0 %v2351
    %v2353 = vpop.xlane.xlu0 %2352
    %v2354 = vsel %vm289, %v2292, 0.0
    %2355 = vadd.xlane.f32.xlu0 %v2354
    %v2356 = vpop.xlane.xlu0 %2355
    %v2357 = vrcp.pop %v2311
    %v2358 = vrcp.pop %v2314
    %v2359 = vrcp.pop %v2317
    %v2360 = vrcp.pop %v2320
    %v2361 = vrcp.pop %v2323
    %v2362 = vrcp.pop %v2326
    %v2363 = vrcp.pop %v2329
    %v2364 = vrcp.pop %v2332
    %v2365 = vrcp.pop %v2335
    %v2366 = vrcp.pop %v2338
    %v2367 = vrcp.pop %v2341
    %v2368 = vrcp.pop %v2344
    %v2369 = vrcp.pop %v2347
    %v2370 = vrcp.pop %v2350
    %v2371 = vrcp.pop %v2353
    %v2372 = vrcp.pop %v2356
    %v2373 = vsel %vm289, %v2005, %v2133
    %v2374 = vsel %vm289, %v2006, %v2134
    %v2375 = vsel %vm289, %v2007, %v2135
    %v2376 = vsel %vm289, %v2008, %v2136
    %v2377 = vsel %vm289, %v2009, %v2137
    %v2378 = vsel %vm289, %v2010, %v2138
    %v2379 = vsel %vm289, %v2011, %v2139
    %v2380 = vsel %vm289, %v2012, %v2140
    %v2381 = vsel %vm289, %v2013, %v2141
    %v2382 = vsel %vm289, %v2014, %v2142
    %v2383 = vsel %vm289, %v2015, %v2143
    %v2384 = vsel %vm289, %v2016, %v2144
    %v2385 = vsel %vm289, %v2017, %v2145
    %v2386 = vsel %vm289, %v2018, %v2146
    %v2387 = vsel %vm289, %v2019, %v2147
    %v2388 = vsel %vm289, %v2020, %v2148
    %v2389 = vsel %vm298, %v2373, %v2245
    %v2390 = vsel %vm298, %v2374, %v2246
    %v2391 = vsel %vm298, %v2375, %v2247
    %v2392 = vsel %vm298, %v2376, %v2248
    %v2393 = vsel %vm298, %v2377, %v2249
    %v2394 = vsel %vm298, %v2378, %v2250
    %v2395 = vsel %vm298, %v2379, %v2251
    %v2396 = vsel %vm298, %v2380, %v2252
    %v2397 = vsel %vm298, %v2381, %v2253
    %v2398 = vsel %vm298, %v2382, %v2254
    %v2399 = vsel %vm298, %v2383, %v2255
    %v2400 = vsel %vm298, %v2384, %v2256
    %v2401 = vsel %vm298, %v2385, %v2257
    %v2402 = vsel %vm298, %v2386, %v2258
    %v2403 = vsel %vm298, %v2387, %v2259
    %v2404 = vsel %vm298, %v2388, %v2260
    %v2405 = vsel %vm307, %v2389, %v2357
    %v2406 = vsel %vm307, %v2390, %v2358
    %v2407 = vsel %vm307, %v2391, %v2359
    %v2408 = vsel %vm307, %v2392, %v2360
    %v2409 = vsel %vm307, %v2393, %v2361
    %v2410 = vsel %vm307, %v2394, %v2362
    %v2411 = vsel %vm307, %v2395, %v2363
    %v2412 = vsel %vm307, %v2396, %v2364
    %v2413 = vsel %vm307, %v2397, %v2365
    %v2414 = vsel %vm307, %v2398, %v2366
    %v2415 = vsel %vm307, %v2399, %v2367
    %v2416 = vsel %vm307, %v2400, %v2368
    %v2417 = vsel %vm307, %v2401, %v2369
    %v2418 = vsel %vm307, %v2402, %v2370
    %v2419 = vsel %vm307, %v2403, %v2371
    %v2420 = vsel %vm307, %v2404, %v2372
    %v2421 = vmul.f32 %v1926, %v2405
    %v2422 = vmul.f32 %v1928, %v2406
    %v2423 = vmul.f32 %v1930, %v2407
    %v2424 = vmul.f32 %v1932, %v2408
    %v2425 = vmul.f32 %v1934, %v2409
    %v2426 = vmul.f32 %v1936, %v2410
    %v2427 = vmul.f32 %v1938, %v2411
    %v2428 = vmul.f32 %v1940, %v2412
    %v2429 = vmul.f32 %v1942, %v2413
    %v2430 = vmul.f32 %v1944, %v2414
    %v2431 = vmul.f32 %v1946, %v2415
    %v2432 = vmul.f32 %v1948, %v2416
    %v2433 = vmul.f32 %v1950, %v2417
    %v2434 = vmul.f32 %v1952, %v2418
    %v2435 = vmul.f32 %v1954, %v2419
    %v2436 = vmul.f32 %v1956, %v2420
    %v2437 = vld [vmem:[#allocation5] sm:$0xff]
    %v2438 = vld [vmem:[#allocation5 + $0x8] sm:$0xff]
    %v2439 = vld [vmem:[#allocation5 + $0x10] sm:$0xff]
    %v2440 = vld [vmem:[#allocation5 + $0x18] sm:$0xff]
    %2441 = vmatpush.msra.mxu0 0.0
    %2442 = vmatpush.msra.mxu0 0.0
    %2443 = vmatpush.msra.mxu0 0.0
    %2444 = vmatpush.msra.mxu0 0.0
    %2445 = vmatpush.msra.mxu0 0.0
    %2446 = vmatpush.msra.mxu0 0.0
    %2447 = vmatpush.msra.mxu0 0.0
    %2448 = vmatpush.msra.mxu0 0.0
    %2449 = vmatpush.msra.mxu0 0.0
    %2450 = vmatpush.msra.mxu0 0.0
    %2451 = vmatpush.msra.mxu0 0.0
    %2452 = vmatpush.msra.mxu0 0.0
    %2453 = vmatpush.msra.mxu0 %v2440
    %2454 = vmatpush.msra.mxu0 %v2439
    %2455 = vmatpush.msra.mxu0 %v2438
    %2456 = vmatpush.msra.mxu0 %v2437
    %2457 = vmatmul.f32.gmra.mxu0 %v410
    %v2458 = vpop.f32.mrf.mxu0
    %v2459 = vadd.f32 0.0, %v2458
    %2460 = vmatmul.f32.gmra.mxu0 %v413
    %v2461 = vpop.f32.mrf.mxu0
    %v2462 = vadd.f32 0.0, %v2461
    %2463 = vmatmul.f32.gmra.mxu0 %v416
    %v2464 = vpop.f32.mrf.mxu0
    %v2465 = vadd.f32 0.0, %v2464
    %2466 = vmatmul.f32.gmra.mxu0 %v419
    %v2467 = vpop.f32.mrf.mxu0
    %v2468 = vadd.f32 0.0, %v2467
    %2469 = vmatmul.f32.gmra.mxu0 %v422
    %v2470 = vpop.f32.mrf.mxu0
    %v2471 = vadd.f32 0.0, %v2470
    %2472 = vmatmul.f32.gmra.mxu0 %v425
    %v2473 = vpop.f32.mrf.mxu0
    %v2474 = vadd.f32 0.0, %v2473
    %2475 = vmatmul.f32.gmra.mxu0 %v428
    %v2476 = vpop.f32.mrf.mxu0
    %v2477 = vadd.f32 0.0, %v2476
    %2478 = vmatmul.f32.gmra.mxu0 %v431
    %v2479 = vpop.f32.mrf.mxu0
    %v2480 = vadd.f32 0.0, %v2479
    %2481 = vmatmul.f32.gmra.mxu0 %v434
    %v2482 = vpop.f32.mrf.mxu0
    %v2483 = vadd.f32 0.0, %v2482
    %2484 = vmatmul.f32.gmra.mxu0 %v437
    %v2485 = vpop.f32.mrf.mxu0
    %v2486 = vadd.f32 0.0, %v2485
    %2487 = vmatmul.f32.gmra.mxu0 %v440
    %v2488 = vpop.f32.mrf.mxu0
    %v2489 = vadd.f32 0.0, %v2488
    %2490 = vmatmul.f32.gmra.mxu0 %v443
    %v2491 = vpop.f32.mrf.mxu0
    %v2492 = vadd.f32 0.0, %v2491
    %2493 = vmatmul.f32.gmra.mxu0 %v446
    %v2494 = vpop.f32.mrf.mxu0
    %v2495 = vadd.f32 0.0, %v2494
    %2496 = vmatmul.f32.gmra.mxu0 %v449
    %v2497 = vpop.f32.mrf.mxu0
    %v2498 = vadd.f32 0.0, %v2497
    %2499 = vmatmul.f32.gmra.mxu0 %v452
    %v2500 = vpop.f32.mrf.mxu0
    %v2501 = vadd.f32 0.0, %v2500
    %2502 = vmatmul.f32.gmra.mxu0 %v455
    %v2503 = vpop.f32.mrf.mxu0
    %v2504 = vadd.f32 0.0, %v2503
    %2505 = vdwg.mxu0
    %2508 = vrot.lane.b32.xlu0 %v2421, 112
    %v2509 = vpop.permute.xlu0 %2508
    %2510 = vrot.lane.b32.xlu0 %v2422, 112
    %v2511 = vpop.permute.xlu0 %2510
    %2514 = vrot.lane.b32.xlu0 %v2459, 96
    %v2515 = vpop.permute.xlu0 %2514
    %2516 = vrot.lane.b32.xlu0 %v2462, 96
    %v2517 = vpop.permute.xlu0 %2516
    %v2520 = vsel %vm289, %v2509, 0
    %v2522 = vsel %vm289, %v2511, 0
    %2524 = vmatpush.msra.mxu0 0.0
    %2525 = vmatpush.msra.mxu0 0.0
    %2526 = vmatpush.msra.mxu0 0.0
    %2527 = vmatpush.msra.mxu0 0.0
    %2528 = vmatpush.msra.mxu0 0.0
    %2529 = vmatpush.msra.mxu0 0.0
    %2530 = vmatpush.msra.mxu0 0.0
    %2531 = vmatpush.msra.mxu0 0.0
    %2532 = vmatpush.msra.mxu0 0.0
    %2533 = vmatpush.msra.mxu0 0.0
    %2534 = vmatpush.msra.mxu0 0.0
    %2535 = vmatpush.msra.mxu0 0.0
    %2536 = vmatpush.msra.mxu0 0.0
    %2537 = vmatpush.msra.mxu0 0.0
    %2538 = vmatpush.msra.mxu0 %v2517
    %2539 = vmatpush.msra.mxu0 %v2515
    %2540 = vmatmul.f32.gmra.mxu0 %v2520
    %v2541 = vpop.f32.mrf.mxu0
    %v2542 = vadd.f32 0.0, %v2541
    %2543 = vmatmul.f32.gmra.mxu0 %v2522
    %v2544 = vpop.f32.mrf.mxu0
    %v2545 = vadd.f32 0.0, %v2544
    %2546 = vdwg.mxu0
    %2549 = vrot.lane.b32.xlu0 %v2423, 112
    %v2550 = vpop.permute.xlu0 %2549
    %2551 = vrot.lane.b32.xlu0 %v2424, 112
    %v2552 = vpop.permute.xlu0 %2551
    %2555 = vrot.lane.b32.xlu0 %v2465, 96
    %v2556 = vpop.permute.xlu0 %2555
    %2557 = vrot.lane.b32.xlu0 %v2468, 96
    %v2558 = vpop.permute.xlu0 %2557
    %v2561 = vsel %vm289, %v2550, 0
    %v2563 = vsel %vm289, %v2552, 0
    %2565 = vmatpush.msra.mxu0 0.0
    %2566 = vmatpush.msra.mxu0 0.0
    %2567 = vmatpush.msra.mxu0 0.0
    %2568 = vmatpush.msra.mxu0 0.0
    %2569 = vmatpush.msra.mxu0 0.0
    %2570 = vmatpush.msra.mxu0 0.0
    %2571 = vmatpush.msra.mxu0 0.0
    %2572 = vmatpush.msra.mxu0 0.0
    %2573 = vmatpush.msra.mxu0 0.0
    %2574 = vmatpush.msra.mxu0 0.0
    %2575 = vmatpush.msra.mxu0 0.0
    %2576 = vmatpush.msra.mxu0 0.0
    %2577 = vmatpush.msra.mxu0 0.0
    %2578 = vmatpush.msra.mxu0 0.0
    %2579 = vmatpush.msra.mxu0 %v2558
    %2580 = vmatpush.msra.mxu0 %v2556
    %2581 = vmatmul.f32.gmra.mxu0 %v2561
    %v2582 = vpop.f32.mrf.mxu0
    %v2583 = vadd.f32 0.0, %v2582
    %2584 = vmatmul.f32.gmra.mxu0 %v2563
    %v2585 = vpop.f32.mrf.mxu0
    %v2586 = vadd.f32 0.0, %v2585
    %2587 = vdwg.mxu0
    %2590 = vrot.lane.b32.xlu0 %v2425, 112
    %v2591 = vpop.permute.xlu0 %2590
    %2592 = vrot.lane.b32.xlu0 %v2426, 112
    %v2593 = vpop.permute.xlu0 %2592
    %2596 = vrot.lane.b32.xlu0 %v2471, 96
    %v2597 = vpop.permute.xlu0 %2596
    %2598 = vrot.lane.b32.xlu0 %v2474, 96
    %v2599 = vpop.permute.xlu0 %2598
    %v2602 = vsel %vm289, %v2591, 0
    %v2604 = vsel %vm289, %v2593, 0
    %2606 = vmatpush.msra.mxu0 0.0
    %2607 = vmatpush.msra.mxu0 0.0
    %2608 = vmatpush.msra.mxu0 0.0
    %2609 = vmatpush.msra.mxu0 0.0
    %2610 = vmatpush.msra.mxu0 0.0
    %2611 = vmatpush.msra.mxu0 0.0
    %2612 = vmatpush.msra.mxu0 0.0
    %2613 = vmatpush.msra.mxu0 0.0
    %2614 = vmatpush.msra.mxu0 0.0
    %2615 = vmatpush.msra.mxu0 0.0
    %2616 = vmatpush.msra.mxu0 0.0
    %2617 = vmatpush.msra.mxu0 0.0
    %2618 = vmatpush.msra.mxu0 0.0
    %2619 = vmatpush.msra.mxu0 0.0
    %2620 = vmatpush.msra.mxu0 %v2599
    %2621 = vmatpush.msra.mxu0 %v2597
    %2622 = vmatmul.f32.gmra.mxu0 %v2602
    %v2623 = vpop.f32.mrf.mxu0
    %v2624 = vadd.f32 0.0, %v2623
    %2625 = vmatmul.f32.gmra.mxu0 %v2604
    %v2626 = vpop.f32.mrf.mxu0
    %v2627 = vadd.f32 0.0, %v2626
    %2628 = vdwg.mxu0
    %2631 = vrot.lane.b32.xlu0 %v2427, 112
    %v2632 = vpop.permute.xlu0 %2631
    %2633 = vrot.lane.b32.xlu0 %v2428, 112
    %v2634 = vpop.permute.xlu0 %2633
    %2637 = vrot.lane.b32.xlu0 %v2477, 96
    %v2638 = vpop.permute.xlu0 %2637
    %2639 = vrot.lane.b32.xlu0 %v2480, 96
    %v2640 = vpop.permute.xlu0 %2639
    %v2643 = vsel %vm289, %v2632, 0
    %v2645 = vsel %vm289, %v2634, 0
    %2647 = vmatpush.msra.mxu0 0.0
    %2648 = vmatpush.msra.mxu0 0.0
    %2649 = vmatpush.msra.mxu0 0.0
    %2650 = vmatpush.msra.mxu0 0.0
    %2651 = vmatpush.msra.mxu0 0.0
    %2652 = vmatpush.msra.mxu0 0.0
    %2653 = vmatpush.msra.mxu0 0.0
    %2654 = vmatpush.msra.mxu0 0.0
    %2655 = vmatpush.msra.mxu0 0.0
    %2656 = vmatpush.msra.mxu0 0.0
    %2657 = vmatpush.msra.mxu0 0.0
    %2658 = vmatpush.msra.mxu0 0.0
    %2659 = vmatpush.msra.mxu0 0.0
    %2660 = vmatpush.msra.mxu0 0.0
    %2661 = vmatpush.msra.mxu0 %v2640
    %2662 = vmatpush.msra.mxu0 %v2638
    %2663 = vmatmul.f32.gmra.mxu0 %v2643
    %v2664 = vpop.f32.mrf.mxu0
    %v2665 = vadd.f32 0.0, %v2664
    %2666 = vmatmul.f32.gmra.mxu0 %v2645
    %v2667 = vpop.f32.mrf.mxu0
    %v2668 = vadd.f32 0.0, %v2667
    %2669 = vdwg.mxu0
    %2672 = vrot.lane.b32.xlu0 %v2429, 112
    %v2673 = vpop.permute.xlu0 %2672
    %2674 = vrot.lane.b32.xlu0 %v2430, 112
    %v2675 = vpop.permute.xlu0 %2674
    %2678 = vrot.lane.b32.xlu0 %v2483, 96
    %v2679 = vpop.permute.xlu0 %2678
    %2680 = vrot.lane.b32.xlu0 %v2486, 96
    %v2681 = vpop.permute.xlu0 %2680
    %v2684 = vsel %vm289, %v2673, 0
    %v2686 = vsel %vm289, %v2675, 0
    %2688 = vmatpush.msra.mxu0 0.0
    %2689 = vmatpush.msra.mxu0 0.0
    %2690 = vmatpush.msra.mxu0 0.0
    %2691 = vmatpush.msra.mxu0 0.0
    %2692 = vmatpush.msra.mxu0 0.0
    %2693 = vmatpush.msra.mxu0 0.0
    %2694 = vmatpush.msra.mxu0 0.0
    %2695 = vmatpush.msra.mxu0 0.0
    %2696 = vmatpush.msra.mxu0 0.0
    %2697 = vmatpush.msra.mxu0 0.0
    %2698 = vmatpush.msra.mxu0 0.0
    %2699 = vmatpush.msra.mxu0 0.0
    %2700 = vmatpush.msra.mxu0 0.0
    %2701 = vmatpush.msra.mxu0 0.0
    %2702 = vmatpush.msra.mxu0 %v2681
    %2703 = vmatpush.msra.mxu0 %v2679
    %2704 = vmatmul.f32.gmra.mxu0 %v2684
    %v2705 = vpop.f32.mrf.mxu0
    %v2706 = vadd.f32 0.0, %v2705
    %2707 = vmatmul.f32.gmra.mxu0 %v2686
    %v2708 = vpop.f32.mrf.mxu0
    %v2709 = vadd.f32 0.0, %v2708
    %2710 = vdwg.mxu0
    %2713 = vrot.lane.b32.xlu0 %v2431, 112
    %v2714 = vpop.permute.xlu0 %2713
    %2715 = vrot.lane.b32.xlu0 %v2432, 112
    %v2716 = vpop.permute.xlu0 %2715
    %2719 = vrot.lane.b32.xlu0 %v2489, 96
    %v2720 = vpop.permute.xlu0 %2719
    %2721 = vrot.lane.b32.xlu0 %v2492, 96
    %v2722 = vpop.permute.xlu0 %2721
    %v2725 = vsel %vm289, %v2714, 0
    %v2727 = vsel %vm289, %v2716, 0
    %2729 = vmatpush.msra.mxu0 0.0
    %2730 = vmatpush.msra.mxu0 0.0
    %2731 = vmatpush.msra.mxu0 0.0
    %2732 = vmatpush.msra.mxu0 0.0
    %2733 = vmatpush.msra.mxu0 0.0
    %2734 = vmatpush.msra.mxu0 0.0
    %2735 = vmatpush.msra.mxu0 0.0
    %2736 = vmatpush.msra.mxu0 0.0
    %2737 = vmatpush.msra.mxu0 0.0
    %2738 = vmatpush.msra.mxu0 0.0
    %2739 = vmatpush.msra.mxu0 0.0
    %2740 = vmatpush.msra.mxu0 0.0
    %2741 = vmatpush.msra.mxu0 0.0
    %2742 = vmatpush.msra.mxu0 0.0
    %2743 = vmatpush.msra.mxu0 %v2722
    %2744 = vmatpush.msra.mxu0 %v2720
    %2745 = vmatmul.f32.gmra.mxu0 %v2725
    %v2746 = vpop.f32.mrf.mxu0
    %v2747 = vadd.f32 0.0, %v2746
    %2748 = vmatmul.f32.gmra.mxu0 %v2727
    %v2749 = vpop.f32.mrf.mxu0
    %v2750 = vadd.f32 0.0, %v2749
    %2751 = vdwg.mxu0
    %2754 = vrot.lane.b32.xlu0 %v2433, 112
    %v2755 = vpop.permute.xlu0 %2754
    %2756 = vrot.lane.b32.xlu0 %v2434, 112
    %v2757 = vpop.permute.xlu0 %2756
    %2760 = vrot.lane.b32.xlu0 %v2495, 96
    %v2761 = vpop.permute.xlu0 %2760
    %2762 = vrot.lane.b32.xlu0 %v2498, 96
    %v2763 = vpop.permute.xlu0 %2762
    %v2766 = vsel %vm289, %v2755, 0
    %v2768 = vsel %vm289, %v2757, 0
    %2770 = vmatpush.msra.mxu0 0.0
    %2771 = vmatpush.msra.mxu0 0.0
    %2772 = vmatpush.msra.mxu0 0.0
    %2773 = vmatpush.msra.mxu0 0.0
    %2774 = vmatpush.msra.mxu0 0.0
    %2775 = vmatpush.msra.mxu0 0.0
    %2776 = vmatpush.msra.mxu0 0.0
    %2777 = vmatpush.msra.mxu0 0.0
    %2778 = vmatpush.msra.mxu0 0.0
    %2779 = vmatpush.msra.mxu0 0.0
    %2780 = vmatpush.msra.mxu0 0.0
    %2781 = vmatpush.msra.mxu0 0.0
    %2782 = vmatpush.msra.mxu0 0.0
    %2783 = vmatpush.msra.mxu0 0.0
    %2784 = vmatpush.msra.mxu0 %v2763
    %2785 = vmatpush.msra.mxu0 %v2761
    %2786 = vmatmul.f32.gmra.mxu0 %v2766
    %v2787 = vpop.f32.mrf.mxu0
    %v2788 = vadd.f32 0.0, %v2787
    %2789 = vmatmul.f32.gmra.mxu0 %v2768
    %v2790 = vpop.f32.mrf.mxu0
    %v2791 = vadd.f32 0.0, %v2790
    %2792 = vdwg.mxu0
    %2795 = vrot.lane.b32.xlu0 %v2435, 112
    %v2796 = vpop.permute.xlu0 %2795
    %2797 = vrot.lane.b32.xlu0 %v2436, 112
    %v2798 = vpop.permute.xlu0 %2797
    %2801 = vrot.lane.b32.xlu0 %v2501, 96
    %v2802 = vpop.permute.xlu0 %2801
    %2803 = vrot.lane.b32.xlu0 %v2504, 96
    %v2804 = vpop.permute.xlu0 %2803
    %v2807 = vsel %vm289, %v2796, 0
    %v2809 = vsel %vm289, %v2798, 0
    %2811 = vmatpush.msra.mxu0 0.0
    %2812 = vmatpush.msra.mxu0 0.0
    %2813 = vmatpush.msra.mxu0 0.0
    %2814 = vmatpush.msra.mxu0 0.0
    %2815 = vmatpush.msra.mxu0 0.0
    %2816 = vmatpush.msra.mxu0 0.0
    %2817 = vmatpush.msra.mxu0 0.0
    %2818 = vmatpush.msra.mxu0 0.0
    %2819 = vmatpush.msra.mxu0 0.0
    %2820 = vmatpush.msra.mxu0 0.0
    %2821 = vmatpush.msra.mxu0 0.0
    %2822 = vmatpush.msra.mxu0 0.0
    %2823 = vmatpush.msra.mxu0 0.0
    %2824 = vmatpush.msra.mxu0 0.0
    %2825 = vmatpush.msra.mxu0 %v2804
    %2826 = vmatpush.msra.mxu0 %v2802
    %2827 = vmatmul.f32.gmra.mxu0 %v2807
    %v2828 = vpop.f32.mrf.mxu0
    %v2829 = vadd.f32 0.0, %v2828
    %2830 = vmatmul.f32.gmra.mxu0 %v2809
    %v2831 = vpop.f32.mrf.mxu0
    %v2832 = vadd.f32 0.0, %v2831
    %2833 = vdwg.mxu0
    %v2834 = vsel %vm289, %v2421, 0
    %v2836 = vsel %vm289, %v2422, 0
    %2838 = vmatpush.msra.mxu0 0.0
    %2839 = vmatpush.msra.mxu0 0.0
    %2840 = vmatpush.msra.mxu0 0.0
    %2841 = vmatpush.msra.mxu0 0.0
    %2842 = vmatpush.msra.mxu0 0.0
    %2843 = vmatpush.msra.mxu0 0.0
    %2844 = vmatpush.msra.mxu0 0.0
    %2845 = vmatpush.msra.mxu0 0.0
    %2846 = vmatpush.msra.mxu0 0.0
    %2847 = vmatpush.msra.mxu0 0.0
    %2848 = vmatpush.msra.mxu0 0.0
    %2849 = vmatpush.msra.mxu0 0.0
    %2850 = vmatpush.msra.mxu0 0.0
    %2851 = vmatpush.msra.mxu0 0.0
    %2852 = vmatpush.msra.mxu0 %v2462
    %2853 = vmatpush.msra.mxu0 %v2459
    %2854 = vmatmul.f32.gmra.mxu0 %v2834
    %v2855 = vpop.f32.mrf.mxu0
    %v2856 = vadd.f32 %v2542, %v2855
    %2857 = vmatmul.f32.gmra.mxu0 %v2836
    %v2858 = vpop.f32.mrf.mxu0
    %v2859 = vadd.f32 %v2545, %v2858
    %2860 = vdwg.mxu0
    %v2861 = vsel %vm289, %v2423, 0
    %v2863 = vsel %vm289, %v2424, 0
    %2865 = vmatpush.msra.mxu0 0.0
    %2866 = vmatpush.msra.mxu0 0.0
    %2867 = vmatpush.msra.mxu0 0.0
    %2868 = vmatpush.msra.mxu0 0.0
    %2869 = vmatpush.msra.mxu0 0.0
    %2870 = vmatpush.msra.mxu0 0.0
    %2871 = vmatpush.msra.mxu0 0.0
    %2872 = vmatpush.msra.mxu0 0.0
    %2873 = vmatpush.msra.mxu0 0.0
    %2874 = vmatpush.msra.mxu0 0.0
    %2875 = vmatpush.msra.mxu0 0.0
    %2876 = vmatpush.msra.mxu0 0.0
    %2877 = vmatpush.msra.mxu0 0.0
    %2878 = vmatpush.msra.mxu0 0.0
    %2879 = vmatpush.msra.mxu0 %v2468
    %2880 = vmatpush.msra.mxu0 %v2465
    %2881 = vmatmul.f32.gmra.mxu0 %v2861
    %v2882 = vpop.f32.mrf.mxu0
    %v2883 = vadd.f32 %v2583, %v2882
    %2884 = vmatmul.f32.gmra.mxu0 %v2863
    %v2885 = vpop.f32.mrf.mxu0
    %v2886 = vadd.f32 %v2586, %v2885
    %2887 = vdwg.mxu0
    %v2888 = vsel %vm289, %v2425, 0
    %v2890 = vsel %vm289, %v2426, 0
    %2892 = vmatpush.msra.mxu0 0.0
    %2893 = vmatpush.msra.mxu0 0.0
    %2894 = vmatpush.msra.mxu0 0.0
    %2895 = vmatpush.msra.mxu0 0.0
    %2896 = vmatpush.msra.mxu0 0.0
    %2897 = vmatpush.msra.mxu0 0.0
    %2898 = vmatpush.msra.mxu0 0.0
    %2899 = vmatpush.msra.mxu0 0.0
    %2900 = vmatpush.msra.mxu0 0.0
    %2901 = vmatpush.msra.mxu0 0.0
    %2902 = vmatpush.msra.mxu0 0.0
    %2903 = vmatpush.msra.mxu0 0.0
    %2904 = vmatpush.msra.mxu0 0.0
    %2905 = vmatpush.msra.mxu0 0.0
    %2906 = vmatpush.msra.mxu0 %v2474
    %2907 = vmatpush.msra.mxu0 %v2471
    %2908 = vmatmul.f32.gmra.mxu0 %v2888
    %v2909 = vpop.f32.mrf.mxu0
    %v2910 = vadd.f32 %v2624, %v2909
    %2911 = vmatmul.f32.gmra.mxu0 %v2890
    %v2912 = vpop.f32.mrf.mxu0
    %v2913 = vadd.f32 %v2627, %v2912
    %2914 = vdwg.mxu0
    %v2915 = vsel %vm289, %v2427, 0
    %v2917 = vsel %vm289, %v2428, 0
    %2919 = vmatpush.msra.mxu0 0.0
    %2920 = vmatpush.msra.mxu0 0.0
    %2921 = vmatpush.msra.mxu0 0.0
    %2922 = vmatpush.msra.mxu0 0.0
    %2923 = vmatpush.msra.mxu0 0.0
    %2924 = vmatpush.msra.mxu0 0.0
    %2925 = vmatpush.msra.mxu0 0.0
    %2926 = vmatpush.msra.mxu0 0.0
    %2927 = vmatpush.msra.mxu0 0.0
    %2928 = vmatpush.msra.mxu0 0.0
    %2929 = vmatpush.msra.mxu0 0.0
    %2930 = vmatpush.msra.mxu0 0.0
    %2931 = vmatpush.msra.mxu0 0.0
    %2932 = vmatpush.msra.mxu0 0.0
    %2933 = vmatpush.msra.mxu0 %v2480
    %2934 = vmatpush.msra.mxu0 %v2477
    %2935 = vmatmul.f32.gmra.mxu0 %v2915
    %v2936 = vpop.f32.mrf.mxu0
    %v2937 = vadd.f32 %v2665, %v2936
    %2938 = vmatmul.f32.gmra.mxu0 %v2917
    %v2939 = vpop.f32.mrf.mxu0
    %v2940 = vadd.f32 %v2668, %v2939
    %2941 = vdwg.mxu0
    %v2942 = vsel %vm289, %v2429, 0
    %v2944 = vsel %vm289, %v2430, 0
    %2946 = vmatpush.msra.mxu0 0.0
    %2947 = vmatpush.msra.mxu0 0.0
    %2948 = vmatpush.msra.mxu0 0.0
    %2949 = vmatpush.msra.mxu0 0.0
    %2950 = vmatpush.msra.mxu0 0.0
    %2951 = vmatpush.msra.mxu0 0.0
    %2952 = vmatpush.msra.mxu0 0.0
    %2953 = vmatpush.msra.mxu0 0.0
    %2954 = vmatpush.msra.mxu0 0.0
    %2955 = vmatpush.msra.mxu0 0.0
    %2956 = vmatpush.msra.mxu0 0.0
    %2957 = vmatpush.msra.mxu0 0.0
    %2958 = vmatpush.msra.mxu0 0.0
    %2959 = vmatpush.msra.mxu0 0.0
    %2960 = vmatpush.msra.mxu0 %v2486
    %2961 = vmatpush.msra.mxu0 %v2483
    %2962 = vmatmul.f32.gmra.mxu0 %v2942
    %v2963 = vpop.f32.mrf.mxu0
    %v2964 = vadd.f32 %v2706, %v2963
    %2965 = vmatmul.f32.gmra.mxu0 %v2944
    %v2966 = vpop.f32.mrf.mxu0
    %v2967 = vadd.f32 %v2709, %v2966
    %2968 = vdwg.mxu0
    %v2969 = vsel %vm289, %v2431, 0
    %v2971 = vsel %vm289, %v2432, 0
    %2973 = vmatpush.msra.mxu0 0.0
    %2974 = vmatpush.msra.mxu0 0.0
    %2975 = vmatpush.msra.mxu0 0.0
    %2976 = vmatpush.msra.mxu0 0.0
    %2977 = vmatpush.msra.mxu0 0.0
    %2978 = vmatpush.msra.mxu0 0.0
    %2979 = vmatpush.msra.mxu0 0.0
    %2980 = vmatpush.msra.mxu0 0.0
    %2981 = vmatpush.msra.mxu0 0.0
    %2982 = vmatpush.msra.mxu0 0.0
    %2983 = vmatpush.msra.mxu0 0.0
    %2984 = vmatpush.msra.mxu0 0.0
    %2985 = vmatpush.msra.mxu0 0.0
    %2986 = vmatpush.msra.mxu0 0.0
    %2987 = vmatpush.msra.mxu0 %v2492
    %2988 = vmatpush.msra.mxu0 %v2489
    %2989 = vmatmul.f32.gmra.mxu0 %v2969
    %v2990 = vpop.f32.mrf.mxu0
    %v2991 = vadd.f32 %v2747, %v2990
    %2992 = vmatmul.f32.gmra.mxu0 %v2971
    %v2993 = vpop.f32.mrf.mxu0
    %v2994 = vadd.f32 %v2750, %v2993
    %2995 = vdwg.mxu0
    %v2996 = vsel %vm289, %v2433, 0
    %v2998 = vsel %vm289, %v2434, 0
    %3000 = vmatpush.msra.mxu0 0.0
    %3001 = vmatpush.msra.mxu0 0.0
    %3002 = vmatpush.msra.mxu0 0.0
    %3003 = vmatpush.msra.mxu0 0.0
    %3004 = vmatpush.msra.mxu0 0.0
    %3005 = vmatpush.msra.mxu0 0.0
    %3006 = vmatpush.msra.mxu0 0.0
    %3007 = vmatpush.msra.mxu0 0.0
    %3008 = vmatpush.msra.mxu0 0.0
    %3009 = vmatpush.msra.mxu0 0.0
    %3010 = vmatpush.msra.mxu0 0.0
    %3011 = vmatpush.msra.mxu0 0.0
    %3012 = vmatpush.msra.mxu0 0.0
    %3013 = vmatpush.msra.mxu0 0.0
    %3014 = vmatpush.msra.mxu0 %v2498
    %3015 = vmatpush.msra.mxu0 %v2495
    %3016 = vmatmul.f32.gmra.mxu0 %v2996
    %v3017 = vpop.f32.mrf.mxu0
    %v3018 = vadd.f32 %v2788, %v3017
    %3019 = vmatmul.f32.gmra.mxu0 %v2998
    %v3020 = vpop.f32.mrf.mxu0
    %v3021 = vadd.f32 %v2791, %v3020
    %3022 = vdwg.mxu0
    %v3023 = vsel %vm289, %v2435, 0
    %v3025 = vsel %vm289, %v2436, 0
    %3027 = vmatpush.msra.mxu0 0.0
    %3028 = vmatpush.msra.mxu0 0.0
    %3029 = vmatpush.msra.mxu0 0.0
    %3030 = vmatpush.msra.mxu0 0.0
    %3031 = vmatpush.msra.mxu0 0.0
    %3032 = vmatpush.msra.mxu0 0.0
    %3033 = vmatpush.msra.mxu0 0.0
    %3034 = vmatpush.msra.mxu0 0.0
    %3035 = vmatpush.msra.mxu0 0.0
    %3036 = vmatpush.msra.mxu0 0.0
    %3037 = vmatpush.msra.mxu0 0.0
    %3038 = vmatpush.msra.mxu0 0.0
    %3039 = vmatpush.msra.mxu0 0.0
    %3040 = vmatpush.msra.mxu0 0.0
    %3041 = vmatpush.msra.mxu0 %v2504
    %3042 = vmatpush.msra.mxu0 %v2501
    %3043 = vmatmul.f32.gmra.mxu0 %v3023
    %v3044 = vpop.f32.mrf.mxu0
    %v3045 = vadd.f32 %v2829, %v3044
    %3046 = vmatmul.f32.gmra.mxu0 %v3025
    %v3047 = vpop.f32.mrf.mxu0
    %v3048 = vadd.f32 %v2832, %v3047
    %3049 = vdwg.mxu0
    %3050 = vrot.lane.b32.xlu0 %v2421, 96
    %v3051 = vpop.permute.xlu0 %3050
    %3052 = vrot.lane.b32.xlu0 %v2422, 96
    %v3053 = vpop.permute.xlu0 %3052
    %3054 = vrot.lane.b32.xlu0 %v2459, 64
    %v3055 = vpop.permute.xlu0 %3054
    %3056 = vrot.lane.b32.xlu0 %v2462, 64
    %v3057 = vpop.permute.xlu0 %3056
    %v3060 = vsel %vm289, %v3051, 0
    %v3062 = vsel %vm289, %v3053, 0
    %3064 = vmatpush.msra.mxu0 0.0
    %3065 = vmatpush.msra.mxu0 0.0
    %3066 = vmatpush.msra.mxu0 0.0
    %3067 = vmatpush.msra.mxu0 0.0
    %3068 = vmatpush.msra.mxu0 0.0
    %3069 = vmatpush.msra.mxu0 0.0
    %3070 = vmatpush.msra.mxu0 0.0
    %3071 = vmatpush.msra.mxu0 0.0
    %3072 = vmatpush.msra.mxu0 0.0
    %3073 = vmatpush.msra.mxu0 0.0
    %3074 = vmatpush.msra.mxu0 0.0
    %3075 = vmatpush.msra.mxu0 0.0
    %3076 = vmatpush.msra.mxu0 0.0
    %3077 = vmatpush.msra.mxu0 0.0
    %3078 = vmatpush.msra.mxu0 %v3057
    %3079 = vmatpush.msra.mxu0 %v3055
    %3080 = vmatmul.f32.gmra.mxu0 %v3060
    %v3081 = vpop.f32.mrf.mxu0
    %v3082 = vadd.f32 0.0, %v3081
    %3083 = vmatmul.f32.gmra.mxu0 %v3062
    %v3084 = vpop.f32.mrf.mxu0
    %v3085 = vadd.f32 0.0, %v3084
    %3086 = vdwg.mxu0
    %3087 = vrot.lane.b32.xlu0 %v2423, 96
    %v3088 = vpop.permute.xlu0 %3087
    %3089 = vrot.lane.b32.xlu0 %v2424, 96
    %v3090 = vpop.permute.xlu0 %3089
    %3091 = vrot.lane.b32.xlu0 %v2465, 64
    %v3092 = vpop.permute.xlu0 %3091
    %3093 = vrot.lane.b32.xlu0 %v2468, 64
    %v3094 = vpop.permute.xlu0 %3093
    %v3097 = vsel %vm289, %v3088, 0
    %v3099 = vsel %vm289, %v3090, 0
    %3101 = vmatpush.msra.mxu0 0.0
    %3102 = vmatpush.msra.mxu0 0.0
    %3103 = vmatpush.msra.mxu0 0.0
    %3104 = vmatpush.msra.mxu0 0.0
    %3105 = vmatpush.msra.mxu0 0.0
    %3106 = vmatpush.msra.mxu0 0.0
    %3107 = vmatpush.msra.mxu0 0.0
    %3108 = vmatpush.msra.mxu0 0.0
    %3109 = vmatpush.msra.mxu0 0.0
    %3110 = vmatpush.msra.mxu0 0.0
    %3111 = vmatpush.msra.mxu0 0.0
    %3112 = vmatpush.msra.mxu0 0.0
    %3113 = vmatpush.msra.mxu0 0.0
    %3114 = vmatpush.msra.mxu0 0.0
    %3115 = vmatpush.msra.mxu0 %v3094
    %3116 = vmatpush.msra.mxu0 %v3092
    %3117 = vmatmul.f32.gmra.mxu0 %v3097
    %v3118 = vpop.f32.mrf.mxu0
    %v3119 = vadd.f32 0.0, %v3118
    %3120 = vmatmul.f32.gmra.mxu0 %v3099
    %v3121 = vpop.f32.mrf.mxu0
    %v3122 = vadd.f32 0.0, %v3121
    %3123 = vdwg.mxu0
    %3124 = vrot.lane.b32.xlu0 %v2425, 96
    %v3125 = vpop.permute.xlu0 %3124
    %3126 = vrot.lane.b32.xlu0 %v2426, 96
    %v3127 = vpop.permute.xlu0 %3126
    %3128 = vrot.lane.b32.xlu0 %v2471, 64
    %v3129 = vpop.permute.xlu0 %3128
    %3130 = vrot.lane.b32.xlu0 %v2474, 64
    %v3131 = vpop.permute.xlu0 %3130
    %v3134 = vsel %vm289, %v3125, 0
    %v3136 = vsel %vm289, %v3127, 0
    %3138 = vmatpush.msra.mxu0 0.0
    %3139 = vmatpush.msra.mxu0 0.0
    %3140 = vmatpush.msra.mxu0 0.0
    %3141 = vmatpush.msra.mxu0 0.0
    %3142 = vmatpush.msra.mxu0 0.0
    %3143 = vmatpush.msra.mxu0 0.0
    %3144 = vmatpush.msra.mxu0 0.0
    %3145 = vmatpush.msra.mxu0 0.0
    %3146 = vmatpush.msra.mxu0 0.0
    %3147 = vmatpush.msra.mxu0 0.0
    %3148 = vmatpush.msra.mxu0 0.0
    %3149 = vmatpush.msra.mxu0 0.0
    %3150 = vmatpush.msra.mxu0 0.0
    %3151 = vmatpush.msra.mxu0 0.0
    %3152 = vmatpush.msra.mxu0 %v3131
    %3153 = vmatpush.msra.mxu0 %v3129
    %3154 = vmatmul.f32.gmra.mxu0 %v3134
    %v3155 = vpop.f32.mrf.mxu0
    %v3156 = vadd.f32 0.0, %v3155
    %3157 = vmatmul.f32.gmra.mxu0 %v3136
    %v3158 = vpop.f32.mrf.mxu0
    %v3159 = vadd.f32 0.0, %v3158
    %3160 = vdwg.mxu0
    %3161 = vrot.lane.b32.xlu0 %v2427, 96
    %v3162 = vpop.permute.xlu0 %3161
    %3163 = vrot.lane.b32.xlu0 %v2428, 96
    %v3164 = vpop.permute.xlu0 %3163
    %3165 = vrot.lane.b32.xlu0 %v2477, 64
    %v3166 = vpop.permute.xlu0 %3165
    %3167 = vrot.lane.b32.xlu0 %v2480, 64
    %v3168 = vpop.permute.xlu0 %3167
    %v3171 = vsel %vm289, %v3162, 0
    %v3173 = vsel %vm289, %v3164, 0
    %3175 = vmatpush.msra.mxu0 0.0
    %3176 = vmatpush.msra.mxu0 0.0
    %3177 = vmatpush.msra.mxu0 0.0
    %3178 = vmatpush.msra.mxu0 0.0
    %3179 = vmatpush.msra.mxu0 0.0
    %3180 = vmatpush.msra.mxu0 0.0
    %3181 = vmatpush.msra.mxu0 0.0
    %3182 = vmatpush.msra.mxu0 0.0
    %3183 = vmatpush.msra.mxu0 0.0
    %3184 = vmatpush.msra.mxu0 0.0
    %3185 = vmatpush.msra.mxu0 0.0
    %3186 = vmatpush.msra.mxu0 0.0
    %3187 = vmatpush.msra.mxu0 0.0
    %3188 = vmatpush.msra.mxu0 0.0
    %3189 = vmatpush.msra.mxu0 %v3168
    %3190 = vmatpush.msra.mxu0 %v3166
    %3191 = vmatmul.f32.gmra.mxu0 %v3171
    %v3192 = vpop.f32.mrf.mxu0
    %v3193 = vadd.f32 0.0, %v3192
    %3194 = vmatmul.f32.gmra.mxu0 %v3173
    %v3195 = vpop.f32.mrf.mxu0
    %v3196 = vadd.f32 0.0, %v3195
    %3197 = vdwg.mxu0
    %3198 = vrot.lane.b32.xlu0 %v2429, 96
    %v3199 = vpop.permute.xlu0 %3198
    %3200 = vrot.lane.b32.xlu0 %v2430, 96
    %v3201 = vpop.permute.xlu0 %3200
    %3202 = vrot.lane.b32.xlu0 %v2483, 64
    %v3203 = vpop.permute.xlu0 %3202
    %3204 = vrot.lane.b32.xlu0 %v2486, 64
    %v3205 = vpop.permute.xlu0 %3204
    %v3208 = vsel %vm289, %v3199, 0
    %v3210 = vsel %vm289, %v3201, 0
    %3212 = vmatpush.msra.mxu0 0.0
    %3213 = vmatpush.msra.mxu0 0.0
    %3214 = vmatpush.msra.mxu0 0.0
    %3215 = vmatpush.msra.mxu0 0.0
    %3216 = vmatpush.msra.mxu0 0.0
    %3217 = vmatpush.msra.mxu0 0.0
    %3218 = vmatpush.msra.mxu0 0.0
    %3219 = vmatpush.msra.mxu0 0.0
    %3220 = vmatpush.msra.mxu0 0.0
    %3221 = vmatpush.msra.mxu0 0.0
    %3222 = vmatpush.msra.mxu0 0.0
    %3223 = vmatpush.msra.mxu0 0.0
    %3224 = vmatpush.msra.mxu0 0.0
    %3225 = vmatpush.msra.mxu0 0.0
    %3226 = vmatpush.msra.mxu0 %v3205
    %3227 = vmatpush.msra.mxu0 %v3203
    %3228 = vmatmul.f32.gmra.mxu0 %v3208
    %v3229 = vpop.f32.mrf.mxu0
    %v3230 = vadd.f32 0.0, %v3229
    %3231 = vmatmul.f32.gmra.mxu0 %v3210
    %v3232 = vpop.f32.mrf.mxu0
    %v3233 = vadd.f32 0.0, %v3232
    %3234 = vdwg.mxu0
    %3235 = vrot.lane.b32.xlu0 %v2431, 96
    %v3236 = vpop.permute.xlu0 %3235
    %3237 = vrot.lane.b32.xlu0 %v2432, 96
    %v3238 = vpop.permute.xlu0 %3237
    %3239 = vrot.lane.b32.xlu0 %v2489, 64
    %v3240 = vpop.permute.xlu0 %3239
    %3241 = vrot.lane.b32.xlu0 %v2492, 64
    %v3242 = vpop.permute.xlu0 %3241
    %v3245 = vsel %vm289, %v3236, 0
    %v3247 = vsel %vm289, %v3238, 0
    %3249 = vmatpush.msra.mxu0 0.0
    %3250 = vmatpush.msra.mxu0 0.0
    %3251 = vmatpush.msra.mxu0 0.0
    %3252 = vmatpush.msra.mxu0 0.0
    %3253 = vmatpush.msra.mxu0 0.0
    %3254 = vmatpush.msra.mxu0 0.0
    %3255 = vmatpush.msra.mxu0 0.0
    %3256 = vmatpush.msra.mxu0 0.0
    %3257 = vmatpush.msra.mxu0 0.0
    %3258 = vmatpush.msra.mxu0 0.0
    %3259 = vmatpush.msra.mxu0 0.0
    %3260 = vmatpush.msra.mxu0 0.0
    %3261 = vmatpush.msra.mxu0 0.0
    %3262 = vmatpush.msra.mxu0 0.0
    %3263 = vmatpush.msra.mxu0 %v3242
    %3264 = vmatpush.msra.mxu0 %v3240
    %3265 = vmatmul.f32.gmra.mxu0 %v3245
    %v3266 = vpop.f32.mrf.mxu0
    %v3267 = vadd.f32 0.0, %v3266
    %3268 = vmatmul.f32.gmra.mxu0 %v3247
    %v3269 = vpop.f32.mrf.mxu0
    %v3270 = vadd.f32 0.0, %v3269
    %3271 = vdwg.mxu0
    %3272 = vrot.lane.b32.xlu0 %v2433, 96
    %v3273 = vpop.permute.xlu0 %3272
    %3274 = vrot.lane.b32.xlu0 %v2434, 96
    %v3275 = vpop.permute.xlu0 %3274
    %3276 = vrot.lane.b32.xlu0 %v2495, 64
    %v3277 = vpop.permute.xlu0 %3276
    %3278 = vrot.lane.b32.xlu0 %v2498, 64
    %v3279 = vpop.permute.xlu0 %3278
    %v3282 = vsel %vm289, %v3273, 0
    %v3284 = vsel %vm289, %v3275, 0
    %3286 = vmatpush.msra.mxu0 0.0
    %3287 = vmatpush.msra.mxu0 0.0
    %3288 = vmatpush.msra.mxu0 0.0
    %3289 = vmatpush.msra.mxu0 0.0
    %3290 = vmatpush.msra.mxu0 0.0
    %3291 = vmatpush.msra.mxu0 0.0
    %3292 = vmatpush.msra.mxu0 0.0
    %3293 = vmatpush.msra.mxu0 0.0
    %3294 = vmatpush.msra.mxu0 0.0
    %3295 = vmatpush.msra.mxu0 0.0
    %3296 = vmatpush.msra.mxu0 0.0
    %3297 = vmatpush.msra.mxu0 0.0
    %3298 = vmatpush.msra.mxu0 0.0
    %3299 = vmatpush.msra.mxu0 0.0
    %3300 = vmatpush.msra.mxu0 %v3279
    %3301 = vmatpush.msra.mxu0 %v3277
    %3302 = vmatmul.f32.gmra.mxu0 %v3282
    %v3303 = vpop.f32.mrf.mxu0
    %v3304 = vadd.f32 0.0, %v3303
    %3305 = vmatmul.f32.gmra.mxu0 %v3284
    %v3306 = vpop.f32.mrf.mxu0
    %v3307 = vadd.f32 0.0, %v3306
    %3308 = vdwg.mxu0
    %3309 = vrot.lane.b32.xlu0 %v2435, 96
    %v3310 = vpop.permute.xlu0 %3309
    %3311 = vrot.lane.b32.xlu0 %v2436, 96
    %v3312 = vpop.permute.xlu0 %3311
    %3313 = vrot.lane.b32.xlu0 %v2501, 64
    %v3314 = vpop.permute.xlu0 %3313
    %3315 = vrot.lane.b32.xlu0 %v2504, 64
    %v3316 = vpop.permute.xlu0 %3315
    %v3319 = vsel %vm289, %v3310, 0
    %v3321 = vsel %vm289, %v3312, 0
    %3323 = vmatpush.msra.mxu0 0.0
    %3324 = vmatpush.msra.mxu0 0.0
    %3325 = vmatpush.msra.mxu0 0.0
    %3326 = vmatpush.msra.mxu0 0.0
    %3327 = vmatpush.msra.mxu0 0.0
    %3328 = vmatpush.msra.mxu0 0.0
    %3329 = vmatpush.msra.mxu0 0.0
    %3330 = vmatpush.msra.mxu0 0.0
    %3331 = vmatpush.msra.mxu0 0.0
    %3332 = vmatpush.msra.mxu0 0.0
    %3333 = vmatpush.msra.mxu0 0.0
    %3334 = vmatpush.msra.mxu0 0.0
    %3335 = vmatpush.msra.mxu0 0.0
    %3336 = vmatpush.msra.mxu0 0.0
    %3337 = vmatpush.msra.mxu0 %v3316
    %3338 = vmatpush.msra.mxu0 %v3314
    %3339 = vmatmul.f32.gmra.mxu0 %v3319
    %v3340 = vpop.f32.mrf.mxu0
    %v3341 = vadd.f32 0.0, %v3340
    %3342 = vmatmul.f32.gmra.mxu0 %v3321
    %v3343 = vpop.f32.mrf.mxu0
    %v3344 = vadd.f32 0.0, %v3343
    %3345 = vdwg.mxu0
    %v3346 = vadd.f32 %v2856, %v3082
    %v3347 = vadd.f32 %v2859, %v3085
    %v3348 = vadd.f32 %v2883, %v3119
    %v3349 = vadd.f32 %v2886, %v3122
    %v3350 = vadd.f32 %v2910, %v3156
    %v3351 = vadd.f32 %v2913, %v3159
    %v3352 = vadd.f32 %v2937, %v3193
    %v3353 = vadd.f32 %v2940, %v3196
    %v3354 = vadd.f32 %v2964, %v3230
    %v3355 = vadd.f32 %v2967, %v3233
    %v3356 = vadd.f32 %v2991, %v3267
    %v3357 = vadd.f32 %v2994, %v3270
    %v3358 = vadd.f32 %v3018, %v3304
    %v3359 = vadd.f32 %v3021, %v3307
    %v3360 = vadd.f32 %v3045, %v3341
    %v3361 = vadd.f32 %v3048, %v3344
    %3362 = vrot.lane.b32.xlu0 %v2421, 80
    %v3363 = vpop.permute.xlu0 %3362
    %3364 = vrot.lane.b32.xlu0 %v2422, 80
    %v3365 = vpop.permute.xlu0 %3364
    %3366 = vrot.lane.b32.xlu0 %v2459, 32
    %v3367 = vpop.permute.xlu0 %3366
    %3368 = vrot.lane.b32.xlu0 %v2462, 32
    %v3369 = vpop.permute.xlu0 %3368
    %v3372 = vsel %vm289, %v3363, 0
    %v3374 = vsel %vm289, %v3365, 0
    %3376 = vmatpush.msra.mxu0 0.0
    %3377 = vmatpush.msra.mxu0 0.0
    %3378 = vmatpush.msra.mxu0 0.0
    %3379 = vmatpush.msra.mxu0 0.0
    %3380 = vmatpush.msra.mxu0 0.0
    %3381 = vmatpush.msra.mxu0 0.0
    %3382 = vmatpush.msra.mxu0 0.0
    %3383 = vmatpush.msra.mxu0 0.0
    %3384 = vmatpush.msra.mxu0 0.0
    %3385 = vmatpush.msra.mxu0 0.0
    %3386 = vmatpush.msra.mxu0 0.0
    %3387 = vmatpush.msra.mxu0 0.0
    %3388 = vmatpush.msra.mxu0 0.0
    %3389 = vmatpush.msra.mxu0 0.0
    %3390 = vmatpush.msra.mxu0 %v3369
    %3391 = vmatpush.msra.mxu0 %v3367
    %3392 = vmatmul.f32.gmra.mxu0 %v3372
    %v3393 = vpop.f32.mrf.mxu0
    %v3394 = vadd.f32 0.0, %v3393
    %3395 = vmatmul.f32.gmra.mxu0 %v3374
    %v3396 = vpop.f32.mrf.mxu0
    %v3397 = vadd.f32 0.0, %v3396
    %3398 = vdwg.mxu0
    %3399 = vrot.lane.b32.xlu0 %v2423, 80
    %v3400 = vpop.permute.xlu0 %3399
    %3401 = vrot.lane.b32.xlu0 %v2424, 80
    %v3402 = vpop.permute.xlu0 %3401
    %3403 = vrot.lane.b32.xlu0 %v2465, 32
    %v3404 = vpop.permute.xlu0 %3403
    %3405 = vrot.lane.b32.xlu0 %v2468, 32
    %v3406 = vpop.permute.xlu0 %3405
    %v3409 = vsel %vm289, %v3400, 0
    %v3411 = vsel %vm289, %v3402, 0
    %3413 = vmatpush.msra.mxu0 0.0
    %3414 = vmatpush.msra.mxu0 0.0
    %3415 = vmatpush.msra.mxu0 0.0
    %3416 = vmatpush.msra.mxu0 0.0
    %3417 = vmatpush.msra.mxu0 0.0
    %3418 = vmatpush.msra.mxu0 0.0
    %3419 = vmatpush.msra.mxu0 0.0
    %3420 = vmatpush.msra.mxu0 0.0
    %3421 = vmatpush.msra.mxu0 0.0
    %3422 = vmatpush.msra.mxu0 0.0
    %3423 = vmatpush.msra.mxu0 0.0
    %3424 = vmatpush.msra.mxu0 0.0
    %3425 = vmatpush.msra.mxu0 0.0
    %3426 = vmatpush.msra.mxu0 0.0
    %3427 = vmatpush.msra.mxu0 %v3406
    %3428 = vmatpush.msra.mxu0 %v3404
    %3429 = vmatmul.f32.gmra.mxu0 %v3409
    %v3430 = vpop.f32.mrf.mxu0
    %v3431 = vadd.f32 0.0, %v3430
    %3432 = vmatmul.f32.gmra.mxu0 %v3411
    %v3433 = vpop.f32.mrf.mxu0
    %v3434 = vadd.f32 0.0, %v3433
    %3435 = vdwg.mxu0
    %3436 = vrot.lane.b32.xlu0 %v2425, 80
    %v3437 = vpop.permute.xlu0 %3436
    %3438 = vrot.lane.b32.xlu0 %v2426, 80
    %v3439 = vpop.permute.xlu0 %3438
    %3440 = vrot.lane.b32.xlu0 %v2471, 32
    %v3441 = vpop.permute.xlu0 %3440
    %3442 = vrot.lane.b32.xlu0 %v2474, 32
    %v3443 = vpop.permute.xlu0 %3442
    %v3446 = vsel %vm289, %v3437, 0
    %v3448 = vsel %vm289, %v3439, 0
    %3450 = vmatpush.msra.mxu0 0.0
    %3451 = vmatpush.msra.mxu0 0.0
    %3452 = vmatpush.msra.mxu0 0.0
    %3453 = vmatpush.msra.mxu0 0.0
    %3454 = vmatpush.msra.mxu0 0.0
    %3455 = vmatpush.msra.mxu0 0.0
    %3456 = vmatpush.msra.mxu0 0.0
    %3457 = vmatpush.msra.mxu0 0.0
    %3458 = vmatpush.msra.mxu0 0.0
    %3459 = vmatpush.msra.mxu0 0.0
    %3460 = vmatpush.msra.mxu0 0.0
    %3461 = vmatpush.msra.mxu0 0.0
    %3462 = vmatpush.msra.mxu0 0.0
    %3463 = vmatpush.msra.mxu0 0.0
    %3464 = vmatpush.msra.mxu0 %v3443
    %3465 = vmatpush.msra.mxu0 %v3441
    %3466 = vmatmul.f32.gmra.mxu0 %v3446
    %v3467 = vpop.f32.mrf.mxu0
    %v3468 = vadd.f32 0.0, %v3467
    %3469 = vmatmul.f32.gmra.mxu0 %v3448
    %v3470 = vpop.f32.mrf.mxu0
    %v3471 = vadd.f32 0.0, %v3470
    %3472 = vdwg.mxu0
    %3473 = vrot.lane.b32.xlu0 %v2427, 80
    %v3474 = vpop.permute.xlu0 %3473
    %3475 = vrot.lane.b32.xlu0 %v2428, 80
    %v3476 = vpop.permute.xlu0 %3475
    %3477 = vrot.lane.b32.xlu0 %v2477, 32
    %v3478 = vpop.permute.xlu0 %3477
    %3479 = vrot.lane.b32.xlu0 %v2480, 32
    %v3480 = vpop.permute.xlu0 %3479
    %v3483 = vsel %vm289, %v3474, 0
    %v3485 = vsel %vm289, %v3476, 0
    %3487 = vmatpush.msra.mxu0 0.0
    %3488 = vmatpush.msra.mxu0 0.0
    %3489 = vmatpush.msra.mxu0 0.0
    %3490 = vmatpush.msra.mxu0 0.0
    %3491 = vmatpush.msra.mxu0 0.0
    %3492 = vmatpush.msra.mxu0 0.0
    %3493 = vmatpush.msra.mxu0 0.0
    %3494 = vmatpush.msra.mxu0 0.0
    %3495 = vmatpush.msra.mxu0 0.0
    %3496 = vmatpush.msra.mxu0 0.0
    %3497 = vmatpush.msra.mxu0 0.0
    %3498 = vmatpush.msra.mxu0 0.0
    %3499 = vmatpush.msra.mxu0 0.0
    %3500 = vmatpush.msra.mxu0 0.0
    %3501 = vmatpush.msra.mxu0 %v3480
    %3502 = vmatpush.msra.mxu0 %v3478
    %3503 = vmatmul.f32.gmra.mxu0 %v3483
    %v3504 = vpop.f32.mrf.mxu0
    %v3505 = vadd.f32 0.0, %v3504
    %3506 = vmatmul.f32.gmra.mxu0 %v3485
    %v3507 = vpop.f32.mrf.mxu0
    %v3508 = vadd.f32 0.0, %v3507
    %3509 = vdwg.mxu0
    %3510 = vrot.lane.b32.xlu0 %v2429, 80
    %v3511 = vpop.permute.xlu0 %3510
    %3512 = vrot.lane.b32.xlu0 %v2430, 80
    %v3513 = vpop.permute.xlu0 %3512
    %3514 = vrot.lane.b32.xlu0 %v2483, 32
    %v3515 = vpop.permute.xlu0 %3514
    %3516 = vrot.lane.b32.xlu0 %v2486, 32
    %v3517 = vpop.permute.xlu0 %3516
    %v3520 = vsel %vm289, %v3511, 0
    %v3522 = vsel %vm289, %v3513, 0
    %3524 = vmatpush.msra.mxu0 0.0
    %3525 = vmatpush.msra.mxu0 0.0
    %3526 = vmatpush.msra.mxu0 0.0
    %3527 = vmatpush.msra.mxu0 0.0
    %3528 = vmatpush.msra.mxu0 0.0
    %3529 = vmatpush.msra.mxu0 0.0
    %3530 = vmatpush.msra.mxu0 0.0
    %3531 = vmatpush.msra.mxu0 0.0
    %3532 = vmatpush.msra.mxu0 0.0
    %3533 = vmatpush.msra.mxu0 0.0
    %3534 = vmatpush.msra.mxu0 0.0
    %3535 = vmatpush.msra.mxu0 0.0
    %3536 = vmatpush.msra.mxu0 0.0
    %3537 = vmatpush.msra.mxu0 0.0
    %3538 = vmatpush.msra.mxu0 %v3517
    %3539 = vmatpush.msra.mxu0 %v3515
    %3540 = vmatmul.f32.gmra.mxu0 %v3520
    %v3541 = vpop.f32.mrf.mxu0
    %v3542 = vadd.f32 0.0, %v3541
    %3543 = vmatmul.f32.gmra.mxu0 %v3522
    %v3544 = vpop.f32.mrf.mxu0
    %v3545 = vadd.f32 0.0, %v3544
    %3546 = vdwg.mxu0
    %3547 = vrot.lane.b32.xlu0 %v2431, 80
    %v3548 = vpop.permute.xlu0 %3547
    %3549 = vrot.lane.b32.xlu0 %v2432, 80
    %v3550 = vpop.permute.xlu0 %3549
    %3551 = vrot.lane.b32.xlu0 %v2489, 32
    %v3552 = vpop.permute.xlu0 %3551
    %3553 = vrot.lane.b32.xlu0 %v2492, 32
    %v3554 = vpop.permute.xlu0 %3553
    %v3557 = vsel %vm289, %v3548, 0
    %v3559 = vsel %vm289, %v3550, 0
    %3561 = vmatpush.msra.mxu0 0.0
    %3562 = vmatpush.msra.mxu0 0.0
    %3563 = vmatpush.msra.mxu0 0.0
    %3564 = vmatpush.msra.mxu0 0.0
    %3565 = vmatpush.msra.mxu0 0.0
    %3566 = vmatpush.msra.mxu0 0.0
    %3567 = vmatpush.msra.mxu0 0.0
    %3568 = vmatpush.msra.mxu0 0.0
    %3569 = vmatpush.msra.mxu0 0.0
    %3570 = vmatpush.msra.mxu0 0.0
    %3571 = vmatpush.msra.mxu0 0.0
    %3572 = vmatpush.msra.mxu0 0.0
    %3573 = vmatpush.msra.mxu0 0.0
    %3574 = vmatpush.msra.mxu0 0.0
    %3575 = vmatpush.msra.mxu0 %v3554
    %3576 = vmatpush.msra.mxu0 %v3552
    %3577 = vmatmul.f32.gmra.mxu0 %v3557
    %v3578 = vpop.f32.mrf.mxu0
    %v3579 = vadd.f32 0.0, %v3578
    %3580 = vmatmul.f32.gmra.mxu0 %v3559
    %v3581 = vpop.f32.mrf.mxu0
    %v3582 = vadd.f32 0.0, %v3581
    %3583 = vdwg.mxu0
    %3584 = vrot.lane.b32.xlu0 %v2433, 80
    %v3585 = vpop.permute.xlu0 %3584
    %3586 = vrot.lane.b32.xlu0 %v2434, 80
    %v3587 = vpop.permute.xlu0 %3586
    %3588 = vrot.lane.b32.xlu0 %v2495, 32
    %v3589 = vpop.permute.xlu0 %3588
    %3590 = vrot.lane.b32.xlu0 %v2498, 32
    %v3591 = vpop.permute.xlu0 %3590
    %v3594 = vsel %vm289, %v3585, 0
    %v3596 = vsel %vm289, %v3587, 0
    %3598 = vmatpush.msra.mxu0 0.0
    %3599 = vmatpush.msra.mxu0 0.0
    %3600 = vmatpush.msra.mxu0 0.0
    %3601 = vmatpush.msra.mxu0 0.0
    %3602 = vmatpush.msra.mxu0 0.0
    %3603 = vmatpush.msra.mxu0 0.0
    %3604 = vmatpush.msra.mxu0 0.0
    %3605 = vmatpush.msra.mxu0 0.0
    %3606 = vmatpush.msra.mxu0 0.0
    %3607 = vmatpush.msra.mxu0 0.0
    %3608 = vmatpush.msra.mxu0 0.0
    %3609 = vmatpush.msra.mxu0 0.0
    %3610 = vmatpush.msra.mxu0 0.0
    %3611 = vmatpush.msra.mxu0 0.0
    %3612 = vmatpush.msra.mxu0 %v3591
    %3613 = vmatpush.msra.mxu0 %v3589
    %3614 = vmatmul.f32.gmra.mxu0 %v3594
    %v3615 = vpop.f32.mrf.mxu0
    %v3616 = vadd.f32 0.0, %v3615
    %3617 = vmatmul.f32.gmra.mxu0 %v3596
    %v3618 = vpop.f32.mrf.mxu0
    %v3619 = vadd.f32 0.0, %v3618
    %3620 = vdwg.mxu0
    %3621 = vrot.lane.b32.xlu0 %v2435, 80
    %v3622 = vpop.permute.xlu0 %3621
    %3623 = vrot.lane.b32.xlu0 %v2436, 80
    %v3624 = vpop.permute.xlu0 %3623
    %3625 = vrot.lane.b32.xlu0 %v2501, 32
    %v3626 = vpop.permute.xlu0 %3625
    %3627 = vrot.lane.b32.xlu0 %v2504, 32
    %v3628 = vpop.permute.xlu0 %3627
    %v3631 = vsel %vm289, %v3622, 0
    %v3633 = vsel %vm289, %v3624, 0
    %3635 = vmatpush.msra.mxu0 0.0
    %3636 = vmatpush.msra.mxu0 0.0
    %3637 = vmatpush.msra.mxu0 0.0
    %3638 = vmatpush.msra.mxu0 0.0
    %3639 = vmatpush.msra.mxu0 0.0
    %3640 = vmatpush.msra.mxu0 0.0
    %3641 = vmatpush.msra.mxu0 0.0
    %3642 = vmatpush.msra.mxu0 0.0
    %3643 = vmatpush.msra.mxu0 0.0
    %3644 = vmatpush.msra.mxu0 0.0
    %3645 = vmatpush.msra.mxu0 0.0
    %3646 = vmatpush.msra.mxu0 0.0
    %3647 = vmatpush.msra.mxu0 0.0
    %3648 = vmatpush.msra.mxu0 0.0
    %3649 = vmatpush.msra.mxu0 %v3628
    %3650 = vmatpush.msra.mxu0 %v3626
    %3651 = vmatmul.f32.gmra.mxu0 %v3631
    %v3652 = vpop.f32.mrf.mxu0
    %v3653 = vadd.f32 0.0, %v3652
    %3654 = vmatmul.f32.gmra.mxu0 %v3633
    %v3655 = vpop.f32.mrf.mxu0
    %v3656 = vadd.f32 0.0, %v3655
    %3657 = vdwg.mxu0
    %v3658 = vadd.f32 %v3346, %v3394
    %v3659 = vadd.f32 %v3347, %v3397
    %v3660 = vadd.f32 %v3348, %v3431
    %v3661 = vadd.f32 %v3349, %v3434
    %v3662 = vadd.f32 %v3350, %v3468
    %v3663 = vadd.f32 %v3351, %v3471
    %v3664 = vadd.f32 %v3352, %v3505
    %v3665 = vadd.f32 %v3353, %v3508
    %v3666 = vadd.f32 %v3354, %v3542
    %v3667 = vadd.f32 %v3355, %v3545
    %v3668 = vadd.f32 %v3356, %v3579
    %v3669 = vadd.f32 %v3357, %v3582
    %v3670 = vadd.f32 %v3358, %v3616
    %v3671 = vadd.f32 %v3359, %v3619
    %v3672 = vadd.f32 %v3360, %v3653
    %v3673 = vadd.f32 %v3361, %v3656
    %v3674 = vld [vmem:[#allocation7] sm:$0x1]
    %v3676 = vperm.slane %v3674, 0
    %v3678 = vadd.f32 %v3658, %v3676
    %v3679 = vadd.f32 %v3659, %v3676
    %v3680 = vadd.f32 %v3660, %v3676
    %v3681 = vadd.f32 %v3661, %v3676
    %v3682 = vadd.f32 %v3662, %v3676
    %v3683 = vadd.f32 %v3663, %v3676
    %v3684 = vadd.f32 %v3664, %v3676
    %v3685 = vadd.f32 %v3665, %v3676
    %v3686 = vadd.f32 %v3666, %v3676
    %v3687 = vadd.f32 %v3667, %v3676
    %v3688 = vadd.f32 %v3668, %v3676
    %v3689 = vadd.f32 %v3669, %v3676
    %v3690 = vadd.f32 %v3670, %v3676
    %v3691 = vadd.f32 %v3671, %v3676
    %v3692 = vadd.f32 %v3672, %v3676
    %v3693 = vadd.f32 %v3673, %v3676
    %v3694 = vadd.f32 %v169, %v3678
    %v3695 = vadd.f32 %v170, %v3679
    %v3696 = vadd.f32 %v171, %v3680
    %v3697 = vadd.f32 %v172, %v3681
    %v3698 = vadd.f32 %v173, %v3682
    %v3699 = vadd.f32 %v174, %v3683
    %v3700 = vadd.f32 %v175, %v3684
    %v3701 = vadd.f32 %v176, %v3685
    %v3702 = vadd.f32 %v177, %v3686
    %v3703 = vadd.f32 %v178, %v3687
    %v3704 = vadd.f32 %v179, %v3688
    %v3705 = vadd.f32 %v180, %v3689
    %v3706 = vadd.f32 %v181, %v3690
    %v3707 = vadd.f32 %v182, %v3691
    %v3708 = vadd.f32 %v183, %v3692
    %v3709 = vadd.f32 %v184, %v3693
    %v3710 = vld [vmem:[%s6] sm:$0x1]
    %v3711 = vld [vmem:[#allocation8] sm:$0x1]
    %v3712 = vsel %vm298, %v3694, 0.0
    %3713 = vadd.xlane.f32.xlu0 %v3712
    %v3714 = vpop.xlane.xlu0 %3713
    %v3715 = vsel %vm298, %v3695, 0.0
    %3716 = vadd.xlane.f32.xlu0 %v3715
    %v3717 = vpop.xlane.xlu0 %3716
    %v3718 = vsel %vm298, %v3696, 0.0
    %3719 = vadd.xlane.f32.xlu0 %v3718
    %v3720 = vpop.xlane.xlu0 %3719
    %v3721 = vsel %vm298, %v3697, 0.0
    %3722 = vadd.xlane.f32.xlu0 %v3721
    %v3723 = vpop.xlane.xlu0 %3722
    %v3724 = vsel %vm298, %v3698, 0.0
    %3725 = vadd.xlane.f32.xlu0 %v3724
    %v3726 = vpop.xlane.xlu0 %3725
    %v3727 = vsel %vm298, %v3699, 0.0
    %3728 = vadd.xlane.f32.xlu0 %v3727
    %v3729 = vpop.xlane.xlu0 %3728
    %v3730 = vsel %vm298, %v3700, 0.0
    %3731 = vadd.xlane.f32.xlu0 %v3730
    %v3732 = vpop.xlane.xlu0 %3731
    %v3733 = vsel %vm298, %v3701, 0.0
    %3734 = vadd.xlane.f32.xlu0 %v3733
    %v3735 = vpop.xlane.xlu0 %3734
    %v3736 = vsel %vm298, %v3702, 0.0
    %3737 = vadd.xlane.f32.xlu0 %v3736
    %v3738 = vpop.xlane.xlu0 %3737
    %v3739 = vsel %vm298, %v3703, 0.0
    %3740 = vadd.xlane.f32.xlu0 %v3739
    %v3741 = vpop.xlane.xlu0 %3740
    %v3742 = vsel %vm298, %v3704, 0.0
    %3743 = vadd.xlane.f32.xlu0 %v3742
    %v3744 = vpop.xlane.xlu0 %3743
    %v3745 = vsel %vm298, %v3705, 0.0
    %3746 = vadd.xlane.f32.xlu0 %v3745
    %v3747 = vpop.xlane.xlu0 %3746
    %v3748 = vsel %vm298, %v3706, 0.0
    %3749 = vadd.xlane.f32.xlu0 %v3748
    %v3750 = vpop.xlane.xlu0 %3749
    %v3751 = vsel %vm298, %v3707, 0.0
    %3752 = vadd.xlane.f32.xlu0 %v3751
    %v3753 = vpop.xlane.xlu0 %3752
    %v3754 = vsel %vm298, %v3708, 0.0
    %3755 = vadd.xlane.f32.xlu0 %v3754
    %v3756 = vpop.xlane.xlu0 %3755
    %v3757 = vsel %vm298, %v3709, 0.0
    %3758 = vadd.xlane.f32.xlu0 %v3757
    %v3759 = vpop.xlane.xlu0 %3758
    %v3760 = vrcp.pop 32.0
    %v3761 = vmul.f32 32.0, %v3760
    %v3762 = vsub.f32 1.0, %v3761
    %v3763 = vmul.f32 %v3760, %v3762
    %v3764 = vadd.f32 %v3760, %v3763
    %vm3765 = vweird.f32 %v3760
    %v3766 = vsel %vm3765, %v3760, %v3764
    %v3767 = vmul.f32 %v3714, %v3766
    %v3768 = vmul.f32 %v3717, %v3766
    %v3769 = vmul.f32 %v3720, %v3766
    %v3770 = vmul.f32 %v3723, %v3766
    %v3771 = vmul.f32 %v3726, %v3766
    %v3772 = vmul.f32 %v3729, %v3766
    %v3773 = vmul.f32 %v3732, %v3766
    %v3774 = vmul.f32 %v3735, %v3766
    %v3775 = vmul.f32 %v3738, %v3766
    %v3776 = vmul.f32 %v3741, %v3766
    %v3777 = vmul.f32 %v3744, %v3766
    %v3778 = vmul.f32 %v3747, %v3766
    %v3779 = vmul.f32 %v3750, %v3766
    %v3780 = vmul.f32 %v3753, %v3766
    %v3781 = vmul.f32 %v3756, %v3766
    %v3782 = vmul.f32 %v3759, %v3766
    %v3783 = vsub.f32 %v3694, %v3767
    %v3784 = vsub.f32 %v3695, %v3768
    %v3785 = vsub.f32 %v3696, %v3769
    %v3786 = vsub.f32 %v3697, %v3770
    %v3787 = vsub.f32 %v3698, %v3771
    %v3788 = vsub.f32 %v3699, %v3772
    %v3789 = vsub.f32 %v3700, %v3773
    %v3790 = vsub.f32 %v3701, %v3774
    %v3791 = vsub.f32 %v3702, %v3775
    %v3792 = vsub.f32 %v3703, %v3776
    %v3793 = vsub.f32 %v3704, %v3777
    %v3794 = vsub.f32 %v3705, %v3778
    %v3795 = vsub.f32 %v3706, %v3779
    %v3796 = vsub.f32 %v3707, %v3780
    %v3797 = vsub.f32 %v3708, %v3781
    %v3798 = vsub.f32 %v3709, %v3782
    %v3799 = vmul.f32 %v3783, %v3783
    %v3800 = vmul.f32 %v3784, %v3784
    %v3801 = vmul.f32 %v3785, %v3785
    %v3802 = vmul.f32 %v3786, %v3786
    %v3803 = vmul.f32 %v3787, %v3787
    %v3804 = vmul.f32 %v3788, %v3788
    %v3805 = vmul.f32 %v3789, %v3789
    %v3806 = vmul.f32 %v3790, %v3790
    %v3807 = vmul.f32 %v3791, %v3791
    %v3808 = vmul.f32 %v3792, %v3792
    %v3809 = vmul.f32 %v3793, %v3793
    %v3810 = vmul.f32 %v3794, %v3794
    %v3811 = vmul.f32 %v3795, %v3795
    %v3812 = vmul.f32 %v3796, %v3796
    %v3813 = vmul.f32 %v3797, %v3797
    %v3814 = vmul.f32 %v3798, %v3798
    %v3815 = vsel %vm298, %v3799, 0.0
    %3816 = vadd.xlane.f32.xlu0 %v3815
    %v3817 = vpop.xlane.xlu0 %3816
    %v3818 = vsel %vm298, %v3800, 0.0
    %3819 = vadd.xlane.f32.xlu0 %v3818
    %v3820 = vpop.xlane.xlu0 %3819
    %v3821 = vsel %vm298, %v3801, 0.0
    %3822 = vadd.xlane.f32.xlu0 %v3821
    %v3823 = vpop.xlane.xlu0 %3822
    %v3824 = vsel %vm298, %v3802, 0.0
    %3825 = vadd.xlane.f32.xlu0 %v3824
    %v3826 = vpop.xlane.xlu0 %3825
    %v3827 = vsel %vm298, %v3803, 0.0
    %3828 = vadd.xlane.f32.xlu0 %v3827
    %v3829 = vpop.xlane.xlu0 %3828
    %v3830 = vsel %vm298, %v3804, 0.0
    %3831 = vadd.xlane.f32.xlu0 %v3830
    %v3832 = vpop.xlane.xlu0 %3831
    %v3833 = vsel %vm298, %v3805, 0.0
    %3834 = vadd.xlane.f32.xlu0 %v3833
    %v3835 = vpop.xlane.xlu0 %3834
    %v3836 = vsel %vm298, %v3806, 0.0
    %3837 = vadd.xlane.f32.xlu0 %v3836
    %v3838 = vpop.xlane.xlu0 %3837
    %v3839 = vsel %vm298, %v3807, 0.0
    %3840 = vadd.xlane.f32.xlu0 %v3839
    %v3841 = vpop.xlane.xlu0 %3840
    %v3842 = vsel %vm298, %v3808, 0.0
    %3843 = vadd.xlane.f32.xlu0 %v3842
    %v3844 = vpop.xlane.xlu0 %3843
    %v3845 = vsel %vm298, %v3809, 0.0
    %3846 = vadd.xlane.f32.xlu0 %v3845
    %v3847 = vpop.xlane.xlu0 %3846
    %v3848 = vsel %vm298, %v3810, 0.0
    %3849 = vadd.xlane.f32.xlu0 %v3848
    %v3850 = vpop.xlane.xlu0 %3849
    %v3851 = vsel %vm298, %v3811, 0.0
    %3852 = vadd.xlane.f32.xlu0 %v3851
    %v3853 = vpop.xlane.xlu0 %3852
    %v3854 = vsel %vm298, %v3812, 0.0
    %3855 = vadd.xlane.f32.xlu0 %v3854
    %v3856 = vpop.xlane.xlu0 %3855
    %v3857 = vsel %vm298, %v3813, 0.0
    %3858 = vadd.xlane.f32.xlu0 %v3857
    %v3859 = vpop.xlane.xlu0 %3858
    %v3860 = vsel %vm298, %v3814, 0.0
    %3861 = vadd.xlane.f32.xlu0 %v3860
    %v3862 = vpop.xlane.xlu0 %3861
    %v3863 = vmul.f32 %v3817, %v3766
    %v3864 = vmul.f32 %v3820, %v3766
    %v3865 = vmul.f32 %v3823, %v3766
    %v3866 = vmul.f32 %v3826, %v3766
    %v3867 = vmul.f32 %v3829, %v3766
    %v3868 = vmul.f32 %v3832, %v3766
    %v3869 = vmul.f32 %v3835, %v3766
    %v3870 = vmul.f32 %v3838, %v3766
    %v3871 = vmul.f32 %v3841, %v3766
    %v3872 = vmul.f32 %v3844, %v3766
    %v3873 = vmul.f32 %v3847, %v3766
    %v3874 = vmul.f32 %v3850, %v3766
    %v3875 = vmul.f32 %v3853, %v3766
    %v3876 = vmul.f32 %v3856, %v3766
    %v3877 = vmul.f32 %v3859, %v3766
    %v3878 = vmul.f32 %v3862, %v3766
    %v3879 = vadd.f32 %v3863, 1e-05
    %v3880 = vadd.f32 %v3864, 1e-05
    %v3881 = vadd.f32 %v3865, 1e-05
    %v3882 = vadd.f32 %v3866, 1e-05
    %v3883 = vadd.f32 %v3867, 1e-05
    %v3884 = vadd.f32 %v3868, 1e-05
    %v3885 = vadd.f32 %v3869, 1e-05
    %v3886 = vadd.f32 %v3870, 1e-05
    %v3887 = vadd.f32 %v3871, 1e-05
    %v3888 = vadd.f32 %v3872, 1e-05
    %v3889 = vadd.f32 %v3873, 1e-05
    %v3890 = vadd.f32 %v3874, 1e-05
    %v3891 = vadd.f32 %v3875, 1e-05
    %v3892 = vadd.f32 %v3876, 1e-05
    %v3893 = vadd.f32 %v3877, 1e-05
    %v3894 = vadd.f32 %v3878, 1e-05
    %v3895 = vrsqrt.pop %v3879
    %v3896 = vmul.f32 %v3895, %v3879
    %v3897 = vmul.f32 %v3896, %v3895
    %v3898 = vmul.f32 0.5, %v3897
    %v3899 = vsub.f32 1.5, %v3898
    %v3900 = vmul.f32 %v3895, %v3899
    %vm3901 = vweird.f32 %v3879
    %vm3902 = vweird.f32 %v3895
    %vm3903 = vmor %vm3901, %vm3902
    %v3904 = vsel %vm3903, %v3895, %v3900
    %v3905 = vrsqrt.pop %v3880
    %v3906 = vmul.f32 %v3905, %v3880
    %v3907 = vmul.f32 %v3906, %v3905
    %v3908 = vmul.f32 0.5, %v3907
    %v3909 = vsub.f32 1.5, %v3908
    %v3910 = vmul.f32 %v3905, %v3909
    %vm3911 = vweird.f32 %v3880
    %vm3912 = vweird.f32 %v3905
    %vm3913 = vmor %vm3911, %vm3912
    %v3914 = vsel %vm3913, %v3905, %v3910
    %v3915 = vrsqrt.pop %v3881
    %v3916 = vmul.f32 %v3915, %v3881
    %v3917 = vmul.f32 %v3916, %v3915
    %v3918 = vmul.f32 0.5, %v3917
    %v3919 = vsub.f32 1.5, %v3918
    %v3920 = vmul.f32 %v3915, %v3919
    %vm3921 = vweird.f32 %v3881
    %vm3922 = vweird.f32 %v3915
    %vm3923 = vmor %vm3921, %vm3922
    %v3924 = vsel %vm3923, %v3915, %v3920
    %v3925 = vrsqrt.pop %v3882
    %v3926 = vmul.f32 %v3925, %v3882
    %v3927 = vmul.f32 %v3926, %v3925
    %v3928 = vmul.f32 0.5, %v3927
    %v3929 = vsub.f32 1.5, %v3928
    %v3930 = vmul.f32 %v3925, %v3929
    %vm3931 = vweird.f32 %v3882
    %vm3932 = vweird.f32 %v3925
    %vm3933 = vmor %vm3931, %vm3932
    %v3934 = vsel %vm3933, %v3925, %v3930
    %v3935 = vrsqrt.pop %v3883
    %v3936 = vmul.f32 %v3935, %v3883
    %v3937 = vmul.f32 %v3936, %v3935
    %v3938 = vmul.f32 0.5, %v3937
    %v3939 = vsub.f32 1.5, %v3938
    %v3940 = vmul.f32 %v3935, %v3939
    %vm3941 = vweird.f32 %v3883
    %vm3942 = vweird.f32 %v3935
    %vm3943 = vmor %vm3941, %vm3942
    %v3944 = vsel %vm3943, %v3935, %v3940
    %v3945 = vrsqrt.pop %v3884
    %v3946 = vmul.f32 %v3945, %v3884
    %v3947 = vmul.f32 %v3946, %v3945
    %v3948 = vmul.f32 0.5, %v3947
    %v3949 = vsub.f32 1.5, %v3948
    %v3950 = vmul.f32 %v3945, %v3949
    %vm3951 = vweird.f32 %v3884
    %vm3952 = vweird.f32 %v3945
    %vm3953 = vmor %vm3951, %vm3952
    %v3954 = vsel %vm3953, %v3945, %v3950
    %v3955 = vrsqrt.pop %v3885
    %v3956 = vmul.f32 %v3955, %v3885
    %v3957 = vmul.f32 %v3956, %v3955
    %v3958 = vmul.f32 0.5, %v3957
    %v3959 = vsub.f32 1.5, %v3958
    %v3960 = vmul.f32 %v3955, %v3959
    %vm3961 = vweird.f32 %v3885
    %vm3962 = vweird.f32 %v3955
    %vm3963 = vmor %vm3961, %vm3962
    %v3964 = vsel %vm3963, %v3955, %v3960
    %v3965 = vrsqrt.pop %v3886
    %v3966 = vmul.f32 %v3965, %v3886
    %v3967 = vmul.f32 %v3966, %v3965
    %v3968 = vmul.f32 0.5, %v3967
    %v3969 = vsub.f32 1.5, %v3968
    %v3970 = vmul.f32 %v3965, %v3969
    %vm3971 = vweird.f32 %v3886
    %vm3972 = vweird.f32 %v3965
    %vm3973 = vmor %vm3971, %vm3972
    %v3974 = vsel %vm3973, %v3965, %v3970
    %v3975 = vrsqrt.pop %v3887
    %v3976 = vmul.f32 %v3975, %v3887
    %v3977 = vmul.f32 %v3976, %v3975
    %v3978 = vmul.f32 0.5, %v3977
    %v3979 = vsub.f32 1.5, %v3978
    %v3980 = vmul.f32 %v3975, %v3979
    %vm3981 = vweird.f32 %v3887
    %vm3982 = vweird.f32 %v3975
    %vm3983 = vmor %vm3981, %vm3982
    %v3984 = vsel %vm3983, %v3975, %v3980
    %v3985 = vrsqrt.pop %v3888
    %v3986 = vmul.f32 %v3985, %v3888
    %v3987 = vmul.f32 %v3986, %v3985
    %v3988 = vmul.f32 0.5, %v3987
    %v3989 = vsub.f32 1.5, %v3988
    %v3990 = vmul.f32 %v3985, %v3989
    %vm3991 = vweird.f32 %v3888
    %vm3992 = vweird.f32 %v3985
    %vm3993 = vmor %vm3991, %vm3992
    %v3994 = vsel %vm3993, %v3985, %v3990
    %v3995 = vrsqrt.pop %v3889
    %v3996 = vmul.f32 %v3995, %v3889
    %v3997 = vmul.f32 %v3996, %v3995
    %v3998 = vmul.f32 0.5, %v3997
    %v3999 = vsub.f32 1.5, %v3998
    %v4000 = vmul.f32 %v3995, %v3999
    %vm4001 = vweird.f32 %v3889
    %vm4002 = vweird.f32 %v3995
    %vm4003 = vmor %vm4001, %vm4002
    %v4004 = vsel %vm4003, %v3995, %v4000
    %v4005 = vrsqrt.pop %v3890
    %v4006 = vmul.f32 %v4005, %v3890
    %v4007 = vmul.f32 %v4006, %v4005
    %v4008 = vmul.f32 0.5, %v4007
    %v4009 = vsub.f32 1.5, %v4008
    %v4010 = vmul.f32 %v4005, %v4009
    %vm4011 = vweird.f32 %v3890
    %vm4012 = vweird.f32 %v4005
    %vm4013 = vmor %vm4011, %vm4012
    %v4014 = vsel %vm4013, %v4005, %v4010
    %v4015 = vrsqrt.pop %v3891
    %v4016 = vmul.f32 %v4015, %v3891
    %v4017 = vmul.f32 %v4016, %v4015
    %v4018 = vmul.f32 0.5, %v4017
    %v4019 = vsub.f32 1.5, %v4018
    %v4020 = vmul.f32 %v4015, %v4019
    %vm4021 = vweird.f32 %v3891
    %vm4022 = vweird.f32 %v4015
    %vm4023 = vmor %vm4021, %vm4022
    %v4024 = vsel %vm4023, %v4015, %v4020
    %v4025 = vrsqrt.pop %v3892
    %v4026 = vmul.f32 %v4025, %v3892
    %v4027 = vmul.f32 %v4026, %v4025
    %v4028 = vmul.f32 0.5, %v4027
    %v4029 = vsub.f32 1.5, %v4028
    %v4030 = vmul.f32 %v4025, %v4029
    %vm4031 = vweird.f32 %v3892
    %vm4032 = vweird.f32 %v4025
    %vm4033 = vmor %vm4031, %vm4032
    %v4034 = vsel %vm4033, %v4025, %v4030
    %v4035 = vrsqrt.pop %v3893
    %v4036 = vmul.f32 %v4035, %v3893
    %v4037 = vmul.f32 %v4036, %v4035
    %v4038 = vmul.f32 0.5, %v4037
    %v4039 = vsub.f32 1.5, %v4038
    %v4040 = vmul.f32 %v4035, %v4039
    %vm4041 = vweird.f32 %v3893
    %vm4042 = vweird.f32 %v4035
    %vm4043 = vmor %vm4041, %vm4042
    %v4044 = vsel %vm4043, %v4035, %v4040
    %v4045 = vrsqrt.pop %v3894
    %v4046 = vmul.f32 %v4045, %v3894
    %v4047 = vmul.f32 %v4046, %v4045
    %v4048 = vmul.f32 0.5, %v4047
    %v4049 = vsub.f32 1.5, %v4048
    %v4050 = vmul.f32 %v4045, %v4049
    %vm4051 = vweird.f32 %v3894
    %vm4052 = vweird.f32 %v4045
    %vm4053 = vmor %vm4051, %vm4052
    %v4054 = vsel %vm4053, %v4045, %v4050
    %v4055 = vmul.f32 %v3783, %v3904
    %v4056 = vmul.f32 %v3784, %v3914
    %v4057 = vmul.f32 %v3785, %v3924
    %v4058 = vmul.f32 %v3786, %v3934
    %v4059 = vmul.f32 %v3787, %v3944
    %v4060 = vmul.f32 %v3788, %v3954
    %v4061 = vmul.f32 %v3789, %v3964
    %v4062 = vmul.f32 %v3790, %v3974
    %v4063 = vmul.f32 %v3791, %v3984
    %v4064 = vmul.f32 %v3792, %v3994
    %v4065 = vmul.f32 %v3793, %v4004
    %v4066 = vmul.f32 %v3794, %v4014
    %v4067 = vmul.f32 %v3795, %v4024
    %v4068 = vmul.f32 %v3796, %v4034
    %v4069 = vmul.f32 %v3797, %v4044
    %v4070 = vmul.f32 %v3798, %v4054
    %v4072 = vperm.slane %v3710, 0
    %v4074 = vmul.f32 %v4055, %v4072
    %v4075 = vmul.f32 %v4056, %v4072
    %v4076 = vmul.f32 %v4057, %v4072
    %v4077 = vmul.f32 %v4058, %v4072
    %v4078 = vmul.f32 %v4059, %v4072
    %v4079 = vmul.f32 %v4060, %v4072
    %v4080 = vmul.f32 %v4061, %v4072
    %v4081 = vmul.f32 %v4062, %v4072
    %v4082 = vmul.f32 %v4063, %v4072
    %v4083 = vmul.f32 %v4064, %v4072
    %v4084 = vmul.f32 %v4065, %v4072
    %v4085 = vmul.f32 %v4066, %v4072
    %v4086 = vmul.f32 %v4067, %v4072
    %v4087 = vmul.f32 %v4068, %v4072
    %v4088 = vmul.f32 %v4069, %v4072
    %v4089 = vmul.f32 %v4070, %v4072
    %v4091 = vperm.slane %v3711, 0
    %v4093 = vadd.f32 %v4074, %v4091
    %v4094 = vadd.f32 %v4075, %v4091
    %v4095 = vadd.f32 %v4076, %v4091
    %v4096 = vadd.f32 %v4077, %v4091
    %v4097 = vadd.f32 %v4078, %v4091
    %v4098 = vadd.f32 %v4079, %v4091
    %v4099 = vadd.f32 %v4080, %v4091
    %v4100 = vadd.f32 %v4081, %v4091
    %v4101 = vadd.f32 %v4082, %v4091
    %v4102 = vadd.f32 %v4083, %v4091
    %v4103 = vadd.f32 %v4084, %v4091
    %v4104 = vadd.f32 %v4085, %v4091
    %v4105 = vadd.f32 %v4086, %v4091
    %v4106 = vadd.f32 %v4087, %v4091
    %v4107 = vadd.f32 %v4088, %v4091
    %v4108 = vadd.f32 %v4089, %v4091
    %v4109 = vld [vmem:[#allocation10] sm:$0xff]
    %v4110 = vld [vmem:[#allocation10 + $0x8] sm:$0xff]
    %v4111 = vld [vmem:[#allocation10 + $0x10] sm:$0xff]
    %v4112 = vld [vmem:[#allocation10 + $0x18] sm:$0xff]
    %v4113 = vld [vmem:[%s9] sm:$0x1]
    %v4115 = vperm.slane %v4113, 0
    %v4118 = vsel %vm298, %v4093, 0
    %v4121 = vsel %vm298, %v4094, 0
    %v4124 = vsel %vm298, %v4095, 0
    %v4127 = vsel %vm298, %v4096, 0
    %v4130 = vsel %vm298, %v4097, 0
    %v4133 = vsel %vm298, %v4098, 0
    %v4136 = vsel %vm298, %v4099, 0
    %v4139 = vsel %vm298, %v4100, 0
    %v4142 = vsel %vm298, %v4101, 0
    %v4145 = vsel %vm298, %v4102, 0
    %v4148 = vsel %vm298, %v4103, 0
    %v4151 = vsel %vm298, %v4104, 0
    %v4154 = vsel %vm298, %v4105, 0
    %v4157 = vsel %vm298, %v4106, 0
    %v4160 = vsel %vm298, %v4107, 0
    %v4163 = vsel %vm298, %v4108, 0
    %4165 = vmatpush.msra.mxu0 0.0
    %4166 = vmatpush.msra.mxu0 0.0
    %4167 = vmatpush.msra.mxu0 0.0
    %4168 = vmatpush.msra.mxu0 0.0
    %4169 = vmatpush.msra.mxu0 0.0
    %4170 = vmatpush.msra.mxu0 0.0
    %4171 = vmatpush.msra.mxu0 0.0
    %4172 = vmatpush.msra.mxu0 0.0
    %4173 = vmatpush.msra.mxu0 0.0
    %4174 = vmatpush.msra.mxu0 0.0
    %4175 = vmatpush.msra.mxu0 0.0
    %4176 = vmatpush.msra.mxu0 0.0
    %4177 = vmatpush.msra.mxu0 %v4112
    %4178 = vmatpush.msra.mxu0 %v4111
    %4179 = vmatpush.msra.mxu0 %v4110
    %4180 = vmatpush.msra.mxu0 %v4109
    %4181 = vmatmul.f32.gmra.mxu0 %v4118
    %v4182 = vpop.f32.mrf.mxu0
    %v4183 = vadd.f32 %v4115, %v4182
    %4184 = vmatmul.f32.gmra.mxu0 %v4121
    %v4185 = vpop.f32.mrf.mxu0
    %v4186 = vadd.f32 %v4115, %v4185
    %4187 = vmatmul.f32.gmra.mxu0 %v4124
    %v4188 = vpop.f32.mrf.mxu0
    %v4189 = vadd.f32 %v4115, %v4188
    %4190 = vmatmul.f32.gmra.mxu0 %v4127
    %v4191 = vpop.f32.mrf.mxu0
    %v4192 = vadd.f32 %v4115, %v4191
    %4193 = vmatmul.f32.gmra.mxu0 %v4130
    %v4194 = vpop.f32.mrf.mxu0
    %v4195 = vadd.f32 %v4115, %v4194
    %4196 = vmatmul.f32.gmra.mxu0 %v4133
    %v4197 = vpop.f32.mrf.mxu0
    %v4198 = vadd.f32 %v4115, %v4197
    %4199 = vmatmul.f32.gmra.mxu0 %v4136
    %v4200 = vpop.f32.mrf.mxu0
    %v4201 = vadd.f32 %v4115, %v4200
    %4202 = vmatmul.f32.gmra.mxu0 %v4139
    %v4203 = vpop.f32.mrf.mxu0
    %v4204 = vadd.f32 %v4115, %v4203
    %4205 = vmatmul.f32.gmra.mxu0 %v4142
    %v4206 = vpop.f32.mrf.mxu0
    %v4207 = vadd.f32 %v4115, %v4206
    %4208 = vmatmul.f32.gmra.mxu0 %v4145
    %v4209 = vpop.f32.mrf.mxu0
    %v4210 = vadd.f32 %v4115, %v4209
    %4211 = vmatmul.f32.gmra.mxu0 %v4148
    %v4212 = vpop.f32.mrf.mxu0
    %v4213 = vadd.f32 %v4115, %v4212
    %4214 = vmatmul.f32.gmra.mxu0 %v4151
    %v4215 = vpop.f32.mrf.mxu0
    %v4216 = vadd.f32 %v4115, %v4215
    %4217 = vmatmul.f32.gmra.mxu0 %v4154
    %v4218 = vpop.f32.mrf.mxu0
    %v4219 = vadd.f32 %v4115, %v4218
    %4220 = vmatmul.f32.gmra.mxu0 %v4157
    %v4221 = vpop.f32.mrf.mxu0
    %v4222 = vadd.f32 %v4115, %v4221
    %4223 = vmatmul.f32.gmra.mxu0 %v4160
    %v4224 = vpop.f32.mrf.mxu0
    %v4225 = vadd.f32 %v4115, %v4224
    %4226 = vmatmul.f32.gmra.mxu0 %v4163
    %v4227 = vpop.f32.mrf.mxu0
    %v4228 = vadd.f32 %v4115, %v4227
    %4229 = vdwg.mxu0
    %v4230 = vmul.f32 %v4183, 0.5
    %v4231 = vmul.f32 %v4186, 0.5
    %v4232 = vmul.f32 %v4189, 0.5
    %v4233 = vmul.f32 %v4192, 0.5
    %v4234 = vmul.f32 %v4195, 0.5
    %v4235 = vmul.f32 %v4198, 0.5
    %v4236 = vmul.f32 %v4201, 0.5
    %v4237 = vmul.f32 %v4204, 0.5
    %v4238 = vmul.f32 %v4207, 0.5
    %v4239 = vmul.f32 %v4210, 0.5
    %v4240 = vmul.f32 %v4213, 0.5
    %v4241 = vmul.f32 %v4216, 0.5
    %v4242 = vmul.f32 %v4219, 0.5
    %v4243 = vmul.f32 %v4222, 0.5
    %v4244 = vmul.f32 %v4225, 0.5
    %v4245 = vmul.f32 %v4228, 0.5
    %v4246 = vmul.f32 %v4183, %v4183
    %v4247 = vmul.f32 %v4186, %v4186
    %v4248 = vmul.f32 %v4189, %v4189
    %v4249 = vmul.f32 %v4192, %v4192
    %v4250 = vmul.f32 %v4195, %v4195
    %v4251 = vmul.f32 %v4198, %v4198
    %v4252 = vmul.f32 %v4201, %v4201
    %v4253 = vmul.f32 %v4204, %v4204
    %v4254 = vmul.f32 %v4207, %v4207
    %v4255 = vmul.f32 %v4210, %v4210
    %v4256 = vmul.f32 %v4213, %v4213
    %v4257 = vmul.f32 %v4216, %v4216
    %v4258 = vmul.f32 %v4219, %v4219
    %v4259 = vmul.f32 %v4222, %v4222
    %v4260 = vmul.f32 %v4225, %v4225
    %v4261 = vmul.f32 %v4228, %v4228
    %v4262 = vmul.f32 %v4246, %v4183
    %v4263 = vmul.f32 %v4247, %v4186
    %v4264 = vmul.f32 %v4248, %v4189
    %v4265 = vmul.f32 %v4249, %v4192
    %v4266 = vmul.f32 %v4250, %v4195
    %v4267 = vmul.f32 %v4251, %v4198
    %v4268 = vmul.f32 %v4252, %v4201
    %v4269 = vmul.f32 %v4253, %v4204
    %v4270 = vmul.f32 %v4254, %v4207
    %v4271 = vmul.f32 %v4255, %v4210
    %v4272 = vmul.f32 %v4256, %v4213
    %v4273 = vmul.f32 %v4257, %v4216
    %v4274 = vmul.f32 %v4258, %v4219
    %v4275 = vmul.f32 %v4259, %v4222
    %v4276 = vmul.f32 %v4260, %v4225
    %v4277 = vmul.f32 %v4261, %v4228
    %v4278 = vmul.f32 %v4262, 0.044715
    %v4279 = vmul.f32 %v4263, 0.044715
    %v4280 = vmul.f32 %v4264, 0.044715
    %v4281 = vmul.f32 %v4265, 0.044715
    %v4282 = vmul.f32 %v4266, 0.044715
    %v4283 = vmul.f32 %v4267, 0.044715
    %v4284 = vmul.f32 %v4268, 0.044715
    %v4285 = vmul.f32 %v4269, 0.044715
    %v4286 = vmul.f32 %v4270, 0.044715
    %v4287 = vmul.f32 %v4271, 0.044715
    %v4288 = vmul.f32 %v4272, 0.044715
    %v4289 = vmul.f32 %v4273, 0.044715
    %v4290 = vmul.f32 %v4274, 0.044715
    %v4291 = vmul.f32 %v4275, 0.044715
    %v4292 = vmul.f32 %v4276, 0.044715
    %v4293 = vmul.f32 %v4277, 0.044715
    %v4294 = vadd.f32 %v4183, %v4278
    %v4295 = vadd.f32 %v4186, %v4279
    %v4296 = vadd.f32 %v4189, %v4280
    %v4297 = vadd.f32 %v4192, %v4281
    %v4298 = vadd.f32 %v4195, %v4282
    %v4299 = vadd.f32 %v4198, %v4283
    %v4300 = vadd.f32 %v4201, %v4284
    %v4301 = vadd.f32 %v4204, %v4285
    %v4302 = vadd.f32 %v4207, %v4286
    %v4303 = vadd.f32 %v4210, %v4287
    %v4304 = vadd.f32 %v4213, %v4288
    %v4305 = vadd.f32 %v4216, %v4289
    %v4306 = vadd.f32 %v4219, %v4290
    %v4307 = vadd.f32 %v4222, %v4291
    %v4308 = vadd.f32 %v4225, %v4292
    %v4309 = vadd.f32 %v4228, %v4293
    %v4310 = vmul.f32 %v4294, 0.7978846
    %v4311 = vmul.f32 %v4295, 0.7978846
    %v4312 = vmul.f32 %v4296, 0.7978846
    %v4313 = vmul.f32 %v4297, 0.7978846
    %v4314 = vmul.f32 %v4298, 0.7978846
    %v4315 = vmul.f32 %v4299, 0.7978846
    %v4316 = vmul.f32 %v4300, 0.7978846
    %v4317 = vmul.f32 %v4301, 0.7978846
    %v4318 = vmul.f32 %v4302, 0.7978846
    %v4319 = vmul.f32 %v4303, 0.7978846
    %v4320 = vmul.f32 %v4304, 0.7978846
    %v4321 = vmul.f32 %v4305, 0.7978846
    %v4322 = vmul.f32 %v4306, 0.7978846
    %v4323 = vmul.f32 %v4307, 0.7978846
    %v4324 = vmul.f32 %v4308, 0.7978846
    %v4325 = vmul.f32 %v4309, 0.7978846
    %v4326 = vtanh.pop %v4310
    %v4327 = vtanh.pop %v4311
    %v4328 = vtanh.pop %v4312
    %v4329 = vtanh.pop %v4313
    %v4330 = vtanh.pop %v4314
    %v4331 = vtanh.pop %v4315
    %v4332 = vtanh.pop %v4316
    %v4333 = vtanh.pop %v4317
    %v4334 = vtanh.pop %v4318
    %v4335 = vtanh.pop %v4319
    %v4336 = vtanh.pop %v4320
    %v4337 = vtanh.pop %v4321
    %v4338 = vtanh.pop %v4322
    %v4339 = vtanh.pop %v4323
    %v4340 = vtanh.pop %v4324
    %v4341 = vtanh.pop %v4325
    %v4342 = vadd.f32 %v4326, 1.0
    %v4343 = vadd.f32 %v4327, 1.0
    %v4344 = vadd.f32 %v4328, 1.0
    %v4345 = vadd.f32 %v4329, 1.0
    %v4346 = vadd.f32 %v4330, 1.0
    %v4347 = vadd.f32 %v4331, 1.0
    %v4348 = vadd.f32 %v4332, 1.0
    %v4349 = vadd.f32 %v4333, 1.0
    %v4350 = vadd.f32 %v4334, 1.0
    %v4351 = vadd.f32 %v4335, 1.0
    %v4352 = vadd.f32 %v4336, 1.0
    %v4353 = vadd.f32 %v4337, 1.0
    %v4354 = vadd.f32 %v4338, 1.0
    %v4355 = vadd.f32 %v4339, 1.0
    %v4356 = vadd.f32 %v4340, 1.0
    %v4357 = vadd.f32 %v4341, 1.0
    %v4358 = vmul.f32 %v4230, %v4342
    %v4359 = vmul.f32 %v4231, %v4343
    %v4360 = vmul.f32 %v4232, %v4344
    %v4361 = vmul.f32 %v4233, %v4345
    %v4362 = vmul.f32 %v4234, %v4346
    %v4363 = vmul.f32 %v4235, %v4347
    %v4364 = vmul.f32 %v4236, %v4348
    %v4365 = vmul.f32 %v4237, %v4349
    %v4366 = vmul.f32 %v4238, %v4350
    %v4367 = vmul.f32 %v4239, %v4351
    %v4368 = vmul.f32 %v4240, %v4352
    %v4369 = vmul.f32 %v4241, %v4353
    %v4370 = vmul.f32 %v4242, %v4354
    %v4371 = vmul.f32 %v4243, %v4355
    %v4372 = vmul.f32 %v4244, %v4356
    %v4373 = vmul.f32 %v4245, %v4357
    %v4374 = vld [vmem:[%s10] sm:$0xff]
    %v4375 = vld [vmem:[%s10 + $0x8] sm:$0xff]
    %v4376 = vld [vmem:[%s10 + $0x10] sm:$0xff]
    %v4377 = vld [vmem:[%s10 + $0x18] sm:$0xff]
    %v4378 = vld [vmem:[%s10 + $0x20] sm:$0xff]
    %v4379 = vld [vmem:[%s10 + $0x28] sm:$0xff]
    %v4380 = vld [vmem:[%s10 + $0x30] sm:$0xff]
    %v4381 = vld [vmem:[%s10 + $0x38] sm:$0xff]
    %v4382 = vld [vmem:[%s11] sm:$0x1]
    %v4384 = vperm.slane %v4382, 0
    %vm4386 = vcmask 523264
    %v4388 = vsel %vm4386, %v4358, 0
    %v4391 = vsel %vm4386, %v4359, 0
    %v4394 = vsel %vm4386, %v4360, 0
    %v4397 = vsel %vm4386, %v4361, 0
    %v4400 = vsel %vm4386, %v4362, 0
    %v4403 = vsel %vm4386, %v4363, 0
    %v4406 = vsel %vm4386, %v4364, 0
    %v4409 = vsel %vm4386, %v4365, 0
    %v4412 = vsel %vm4386, %v4366, 0
    %v4415 = vsel %vm4386, %v4367, 0
    %v4418 = vsel %vm4386, %v4368, 0
    %v4421 = vsel %vm4386, %v4369, 0
    %v4424 = vsel %vm4386, %v4370, 0
    %v4427 = vsel %vm4386, %v4371, 0
    %v4430 = vsel %vm4386, %v4372, 0
    %v4433 = vsel %vm4386, %v4373, 0
    %4435 = vmatpush.msra.mxu0 0.0
    %4436 = vmatpush.msra.mxu0 0.0
    %4437 = vmatpush.msra.mxu0 0.0
    %4438 = vmatpush.msra.mxu0 0.0
    %4439 = vmatpush.msra.mxu0 0.0
    %4440 = vmatpush.msra.mxu0 0.0
    %4441 = vmatpush.msra.mxu0 0.0
    %4442 = vmatpush.msra.mxu0 0.0
    %4443 = vmatpush.msra.mxu0 %v4381
    %4444 = vmatpush.msra.mxu0 %v4380
    %4445 = vmatpush.msra.mxu0 %v4379
    %4446 = vmatpush.msra.mxu0 %v4378
    %4447 = vmatpush.msra.mxu0 %v4377
    %4448 = vmatpush.msra.mxu0 %v4376
    %4449 = vmatpush.msra.mxu0 %v4375
    %4450 = vmatpush.msra.mxu0 %v4374
    %4451 = vmatmul.f32.gmra.mxu0 %v4388
    %v4452 = vpop.f32.mrf.mxu0
    %v4453 = vadd.f32 %v4384, %v4452
    %4454 = vmatmul.f32.gmra.mxu0 %v4391
    %v4455 = vpop.f32.mrf.mxu0
    %v4456 = vadd.f32 %v4384, %v4455
    %4457 = vmatmul.f32.gmra.mxu0 %v4394
    %v4458 = vpop.f32.mrf.mxu0
    %v4459 = vadd.f32 %v4384, %v4458
    %4460 = vmatmul.f32.gmra.mxu0 %v4397
    %v4461 = vpop.f32.mrf.mxu0
    %v4462 = vadd.f32 %v4384, %v4461
    %4463 = vmatmul.f32.gmra.mxu0 %v4400
    %v4464 = vpop.f32.mrf.mxu0
    %v4465 = vadd.f32 %v4384, %v4464
    %4466 = vmatmul.f32.gmra.mxu0 %v4403
    %v4467 = vpop.f32.mrf.mxu0
    %v4468 = vadd.f32 %v4384, %v4467
    %4469 = vmatmul.f32.gmra.mxu0 %v4406
    %v4470 = vpop.f32.mrf.mxu0
    %v4471 = vadd.f32 %v4384, %v4470
    %4472 = vmatmul.f32.gmra.mxu0 %v4409
    %v4473 = vpop.f32.mrf.mxu0
    %v4474 = vadd.f32 %v4384, %v4473
    %4475 = vmatmul.f32.gmra.mxu0 %v4412
    %v4476 = vpop.f32.mrf.mxu0
    %v4477 = vadd.f32 %v4384, %v4476
    %4478 = vmatmul.f32.gmra.mxu0 %v4415
    %v4479 = vpop.f32.mrf.mxu0
    %v4480 = vadd.f32 %v4384, %v4479
    %4481 = vmatmul.f32.gmra.mxu0 %v4418
    %v4482 = vpop.f32.mrf.mxu0
    %v4483 = vadd.f32 %v4384, %v4482
    %4484 = vmatmul.f32.gmra.mxu0 %v4421
    %v4485 = vpop.f32.mrf.mxu0
    %v4486 = vadd.f32 %v4384, %v4485
    %4487 = vmatmul.f32.gmra.mxu0 %v4424
    %v4488 = vpop.f32.mrf.mxu0
    %v4489 = vadd.f32 %v4384, %v4488
    %4490 = vmatmul.f32.gmra.mxu0 %v4427
    %v4491 = vpop.f32.mrf.mxu0
    %v4492 = vadd.f32 %v4384, %v4491
    %4493 = vmatmul.f32.gmra.mxu0 %v4430
    %v4494 = vpop.f32.mrf.mxu0
    %v4495 = vadd.f32 %v4384, %v4494
    %4496 = vmatmul.f32.gmra.mxu0 %v4433
    %v4497 = vpop.f32.mrf.mxu0
    %v4498 = vadd.f32 %v4384, %v4497
    %4499 = vdwg.mxu0
    %v4500 = vadd.f32 %v4093, %v4453
    %v4501 = vadd.f32 %v4094, %v4456
    %v4502 = vadd.f32 %v4095, %v4459
    %v4503 = vadd.f32 %v4096, %v4462
    %v4504 = vadd.f32 %v4097, %v4465
    %v4505 = vadd.f32 %v4098, %v4468
    %v4506 = vadd.f32 %v4099, %v4471
    %v4507 = vadd.f32 %v4100, %v4474
    %v4508 = vadd.f32 %v4101, %v4477
    %v4509 = vadd.f32 %v4102, %v4480
    %v4510 = vadd.f32 %v4103, %v4483
    %v4511 = vadd.f32 %v4104, %v4486
    %v4512 = vadd.f32 %v4105, %v4489
    %v4513 = vadd.f32 %v4106, %v4492
    %v4514 = vadd.f32 %v4107, %v4495
    %v4515 = vadd.f32 %v4108, %v4498
    %v4516 = vld [vmem:[%s12] sm:$0x1]
    %v4517 = vld [vmem:[#allocation11] sm:$0x1]
    %v4518 = vsel %vm298, %v4500, 0.0
    %4519 = vadd.xlane.f32.xlu0 %v4518
    %v4520 = vpop.xlane.xlu0 %4519
    %v4521 = vsel %vm298, %v4501, 0.0
    %4522 = vadd.xlane.f32.xlu0 %v4521
    %v4523 = vpop.xlane.xlu0 %4522
    %v4524 = vsel %vm298, %v4502, 0.0
    %4525 = vadd.xlane.f32.xlu0 %v4524
    %v4526 = vpop.xlane.xlu0 %4525
    %v4527 = vsel %vm298, %v4503, 0.0
    %4528 = vadd.xlane.f32.xlu0 %v4527
    %v4529 = vpop.xlane.xlu0 %4528
    %v4530 = vsel %vm298, %v4504, 0.0
    %4531 = vadd.xlane.f32.xlu0 %v4530
    %v4532 = vpop.xlane.xlu0 %4531
    %v4533 = vsel %vm298, %v4505, 0.0
    %4534 = vadd.xlane.f32.xlu0 %v4533
    %v4535 = vpop.xlane.xlu0 %4534
    %v4536 = vsel %vm298, %v4506, 0.0
    %4537 = vadd.xlane.f32.xlu0 %v4536
    %v4538 = vpop.xlane.xlu0 %4537
    %v4539 = vsel %vm298, %v4507, 0.0
    %4540 = vadd.xlane.f32.xlu0 %v4539
    %v4541 = vpop.xlane.xlu0 %4540
    %v4542 = vsel %vm298, %v4508, 0.0
    %4543 = vadd.xlane.f32.xlu0 %v4542
    %v4544 = vpop.xlane.xlu0 %4543
    %v4545 = vsel %vm298, %v4509, 0.0
    %4546 = vadd.xlane.f32.xlu0 %v4545
    %v4547 = vpop.xlane.xlu0 %4546
    %v4548 = vsel %vm298, %v4510, 0.0
    %4549 = vadd.xlane.f32.xlu0 %v4548
    %v4550 = vpop.xlane.xlu0 %4549
    %v4551 = vsel %vm298, %v4511, 0.0
    %4552 = vadd.xlane.f32.xlu0 %v4551
    %v4553 = vpop.xlane.xlu0 %4552
    %v4554 = vsel %vm298, %v4512, 0.0
    %4555 = vadd.xlane.f32.xlu0 %v4554
    %v4556 = vpop.xlane.xlu0 %4555
    %v4557 = vsel %vm298, %v4513, 0.0
    %4558 = vadd.xlane.f32.xlu0 %v4557
    %v4559 = vpop.xlane.xlu0 %4558
    %v4560 = vsel %vm298, %v4514, 0.0
    %4561 = vadd.xlane.f32.xlu0 %v4560
    %v4562 = vpop.xlane.xlu0 %4561
    %v4563 = vsel %vm298, %v4515, 0.0
    %4564 = vadd.xlane.f32.xlu0 %v4563
    %v4565 = vpop.xlane.xlu0 %4564
    %v4566 = vmul.f32 %v4520, %v3766
    %v4567 = vmul.f32 %v4523, %v3766
    %v4568 = vmul.f32 %v4526, %v3766
    %v4569 = vmul.f32 %v4529, %v3766
    %v4570 = vmul.f32 %v4532, %v3766
    %v4571 = vmul.f32 %v4535, %v3766
    %v4572 = vmul.f32 %v4538, %v3766
    %v4573 = vmul.f32 %v4541, %v3766
    %v4574 = vmul.f32 %v4544, %v3766
    %v4575 = vmul.f32 %v4547, %v3766
    %v4576 = vmul.f32 %v4550, %v3766
    %v4577 = vmul.f32 %v4553, %v3766
    %v4578 = vmul.f32 %v4556, %v3766
    %v4579 = vmul.f32 %v4559, %v3766
    %v4580 = vmul.f32 %v4562, %v3766
    %v4581 = vmul.f32 %v4565, %v3766
    %v4582 = vsub.f32 %v4500, %v4566
    %v4583 = vsub.f32 %v4501, %v4567
    %v4584 = vsub.f32 %v4502, %v4568
    %v4585 = vsub.f32 %v4503, %v4569
    %v4586 = vsub.f32 %v4504, %v4570
    %v4587 = vsub.f32 %v4505, %v4571
    %v4588 = vsub.f32 %v4506, %v4572
    %v4589 = vsub.f32 %v4507, %v4573
    %v4590 = vsub.f32 %v4508, %v4574
    %v4591 = vsub.f32 %v4509, %v4575
    %v4592 = vsub.f32 %v4510, %v4576
    %v4593 = vsub.f32 %v4511, %v4577
    %v4594 = vsub.f32 %v4512, %v4578
    %v4595 = vsub.f32 %v4513, %v4579
    %v4596 = vsub.f32 %v4514, %v4580
    %v4597 = vsub.f32 %v4515, %v4581
    %v4598 = vmul.f32 %v4582, %v4582
    %v4599 = vmul.f32 %v4583, %v4583
    %v4600 = vmul.f32 %v4584, %v4584
    %v4601 = vmul.f32 %v4585, %v4585
    %v4602 = vmul.f32 %v4586, %v4586
    %v4603 = vmul.f32 %v4587, %v4587
    %v4604 = vmul.f32 %v4588, %v4588
    %v4605 = vmul.f32 %v4589, %v4589
    %v4606 = vmul.f32 %v4590, %v4590
    %v4607 = vmul.f32 %v4591, %v4591
    %v4608 = vmul.f32 %v4592, %v4592
    %v4609 = vmul.f32 %v4593, %v4593
    %v4610 = vmul.f32 %v4594, %v4594
    %v4611 = vmul.f32 %v4595, %v4595
    %v4612 = vmul.f32 %v4596, %v4596
    %v4613 = vmul.f32 %v4597, %v4597
    %v4614 = vsel %vm298, %v4598, 0.0
    %4615 = vadd.xlane.f32.xlu0 %v4614
    %v4616 = vpop.xlane.xlu0 %4615
    %v4617 = vsel %vm298, %v4599, 0.0
    %4618 = vadd.xlane.f32.xlu0 %v4617
    %v4619 = vpop.xlane.xlu0 %4618
    %v4620 = vsel %vm298, %v4600, 0.0
    %4621 = vadd.xlane.f32.xlu0 %v4620
    %v4622 = vpop.xlane.xlu0 %4621
    %v4623 = vsel %vm298, %v4601, 0.0
    %4624 = vadd.xlane.f32.xlu0 %v4623
    %v4625 = vpop.xlane.xlu0 %4624
    %v4626 = vsel %vm298, %v4602, 0.0
    %4627 = vadd.xlane.f32.xlu0 %v4626
    %v4628 = vpop.xlane.xlu0 %4627
    %v4629 = vsel %vm298, %v4603, 0.0
    %4630 = vadd.xlane.f32.xlu0 %v4629
    %v4631 = vpop.xlane.xlu0 %4630
    %v4632 = vsel %vm298, %v4604, 0.0
    %4633 = vadd.xlane.f32.xlu0 %v4632
    %v4634 = vpop.xlane.xlu0 %4633
    %v4635 = vsel %vm298, %v4605, 0.0
    %4636 = vadd.xlane.f32.xlu0 %v4635
    %v4637 = vpop.xlane.xlu0 %4636
    %v4638 = vsel %vm298, %v4606, 0.0
    %4639 = vadd.xlane.f32.xlu0 %v4638
    %v4640 = vpop.xlane.xlu0 %4639
    %v4641 = vsel %vm298, %v4607, 0.0
    %4642 = vadd.xlane.f32.xlu0 %v4641
    %v4643 = vpop.xlane.xlu0 %4642
    %v4644 = vsel %vm298, %v4608, 0.0
    %4645 = vadd.xlane.f32.xlu0 %v4644
    %v4646 = vpop.xlane.xlu0 %4645
    %v4647 = vsel %vm298, %v4609, 0.0
    %4648 = vadd.xlane.f32.xlu0 %v4647
    %v4649 = vpop.xlane.xlu0 %4648
    %v4650 = vsel %vm298, %v4610, 0.0
    %4651 = vadd.xlane.f32.xlu0 %v4650
    %v4652 = vpop.xlane.xlu0 %4651
    %v4653 = vsel %vm298, %v4611, 0.0
    %4654 = vadd.xlane.f32.xlu0 %v4653
    %v4655 = vpop.xlane.xlu0 %4654
    %v4656 = vsel %vm298, %v4612, 0.0
    %4657 = vadd.xlane.f32.xlu0 %v4656
    %v4658 = vpop.xlane.xlu0 %4657
    %v4659 = vsel %vm298, %v4613, 0.0
    %4660 = vadd.xlane.f32.xlu0 %v4659
    %v4661 = vpop.xlane.xlu0 %4660
    %v4662 = vmul.f32 %v4616, %v3766
    %v4663 = vmul.f32 %v4619, %v3766
    %v4664 = vmul.f32 %v4622, %v3766
    %v4665 = vmul.f32 %v4625, %v3766
    %v4666 = vmul.f32 %v4628, %v3766
    %v4667 = vmul.f32 %v4631, %v3766
    %v4668 = vmul.f32 %v4634, %v3766
    %v4669 = vmul.f32 %v4637, %v3766
    %v4670 = vmul.f32 %v4640, %v3766
    %v4671 = vmul.f32 %v4643, %v3766
    %v4672 = vmul.f32 %v4646, %v3766
    %v4673 = vmul.f32 %v4649, %v3766
    %v4674 = vmul.f32 %v4652, %v3766
    %v4675 = vmul.f32 %v4655, %v3766
    %v4676 = vmul.f32 %v4658, %v3766
    %v4677 = vmul.f32 %v4661, %v3766
    %v4678 = vadd.f32 %v4662, 1e-05
    %v4679 = vadd.f32 %v4663, 1e-05
    %v4680 = vadd.f32 %v4664, 1e-05
    %v4681 = vadd.f32 %v4665, 1e-05
    %v4682 = vadd.f32 %v4666, 1e-05
    %v4683 = vadd.f32 %v4667, 1e-05
    %v4684 = vadd.f32 %v4668, 1e-05
    %v4685 = vadd.f32 %v4669, 1e-05
    %v4686 = vadd.f32 %v4670, 1e-05
    %v4687 = vadd.f32 %v4671, 1e-05
    %v4688 = vadd.f32 %v4672, 1e-05
    %v4689 = vadd.f32 %v4673, 1e-05
    %v4690 = vadd.f32 %v4674, 1e-05
    %v4691 = vadd.f32 %v4675, 1e-05
    %v4692 = vadd.f32 %v4676, 1e-05
    %v4693 = vadd.f32 %v4677, 1e-05
    %v4694 = vrsqrt.pop %v4678
    %v4695 = vmul.f32 %v4694, %v4678
    %v4696 = vmul.f32 %v4695, %v4694
    %v4697 = vmul.f32 0.5, %v4696
    %v4698 = vsub.f32 1.5, %v4697
    %v4699 = vmul.f32 %v4694, %v4698
    %vm4700 = vweird.f32 %v4678
    %vm4701 = vweird.f32 %v4694
    %vm4702 = vmor %vm4700, %vm4701
    %v4703 = vsel %vm4702, %v4694, %v4699
    %v4704 = vrsqrt.pop %v4679
    %v4705 = vmul.f32 %v4704, %v4679
    %v4706 = vmul.f32 %v4705, %v4704
    %v4707 = vmul.f32 0.5, %v4706
    %v4708 = vsub.f32 1.5, %v4707
    %v4709 = vmul.f32 %v4704, %v4708
    %vm4710 = vweird.f32 %v4679
    %vm4711 = vweird.f32 %v4704
    %vm4712 = vmor %vm4710, %vm4711
    %v4713 = vsel %vm4712, %v4704, %v4709
    %v4714 = vrsqrt.pop %v4680
    %v4715 = vmul.f32 %v4714, %v4680
    %v4716 = vmul.f32 %v4715, %v4714
    %v4717 = vmul.f32 0.5, %v4716
    %v4718 = vsub.f32 1.5, %v4717
    %v4719 = vmul.f32 %v4714, %v4718
    %vm4720 = vweird.f32 %v4680
    %vm4721 = vweird.f32 %v4714
    %vm4722 = vmor %vm4720, %vm4721
    %v4723 = vsel %vm4722, %v4714, %v4719
    %v4724 = vrsqrt.pop %v4681
    %v4725 = vmul.f32 %v4724, %v4681
    %v4726 = vmul.f32 %v4725, %v4724
    %v4727 = vmul.f32 0.5, %v4726
    %v4728 = vsub.f32 1.5, %v4727
    %v4729 = vmul.f32 %v4724, %v4728
    %vm4730 = vweird.f32 %v4681
    %vm4731 = vweird.f32 %v4724
    %vm4732 = vmor %vm4730, %vm4731
    %v4733 = vsel %vm4732, %v4724, %v4729
    %v4734 = vrsqrt.pop %v4682
    %v4735 = vmul.f32 %v4734, %v4682
    %v4736 = vmul.f32 %v4735, %v4734
    %v4737 = vmul.f32 0.5, %v4736
    %v4738 = vsub.f32 1.5, %v4737
    %v4739 = vmul.f32 %v4734, %v4738
    %vm4740 = vweird.f32 %v4682
    %vm4741 = vweird.f32 %v4734
    %vm4742 = vmor %vm4740, %vm4741
    %v4743 = vsel %vm4742, %v4734, %v4739
    %v4744 = vrsqrt.pop %v4683
    %v4745 = vmul.f32 %v4744, %v4683
    %v4746 = vmul.f32 %v4745, %v4744
    %v4747 = vmul.f32 0.5, %v4746
    %v4748 = vsub.f32 1.5, %v4747
    %v4749 = vmul.f32 %v4744, %v4748
    %vm4750 = vweird.f32 %v4683
    %vm4751 = vweird.f32 %v4744
    %vm4752 = vmor %vm4750, %vm4751
    %v4753 = vsel %vm4752, %v4744, %v4749
    %v4754 = vrsqrt.pop %v4684
    %v4755 = vmul.f32 %v4754, %v4684
    %v4756 = vmul.f32 %v4755, %v4754
    %v4757 = vmul.f32 0.5, %v4756
    %v4758 = vsub.f32 1.5, %v4757
    %v4759 = vmul.f32 %v4754, %v4758
    %vm4760 = vweird.f32 %v4684
    %vm4761 = vweird.f32 %v4754
    %vm4762 = vmor %vm4760, %vm4761
    %v4763 = vsel %vm4762, %v4754, %v4759
    %v4764 = vrsqrt.pop %v4685
    %v4765 = vmul.f32 %v4764, %v4685
    %v4766 = vmul.f32 %v4765, %v4764
    %v4767 = vmul.f32 0.5, %v4766
    %v4768 = vsub.f32 1.5, %v4767
    %v4769 = vmul.f32 %v4764, %v4768
    %vm4770 = vweird.f32 %v4685
    %vm4771 = vweird.f32 %v4764
    %vm4772 = vmor %vm4770, %vm4771
    %v4773 = vsel %vm4772, %v4764, %v4769
    %v4774 = vrsqrt.pop %v4686
    %v4775 = vmul.f32 %v4774, %v4686
    %v4776 = vmul.f32 %v4775, %v4774
    %v4777 = vmul.f32 0.5, %v4776
    %v4778 = vsub.f32 1.5, %v4777
    %v4779 = vmul.f32 %v4774, %v4778
    %vm4780 = vweird.f32 %v4686
    %vm4781 = vweird.f32 %v4774
    %vm4782 = vmor %vm4780, %vm4781
    %v4783 = vsel %vm4782, %v4774, %v4779
    %v4784 = vrsqrt.pop %v4687
    %v4785 = vmul.f32 %v4784, %v4687
    %v4786 = vmul.f32 %v4785, %v4784
    %v4787 = vmul.f32 0.5, %v4786
    %v4788 = vsub.f32 1.5, %v4787
    %v4789 = vmul.f32 %v4784, %v4788
    %vm4790 = vweird.f32 %v4687
    %vm4791 = vweird.f32 %v4784
    %vm4792 = vmor %vm4790, %vm4791
    %v4793 = vsel %vm4792, %v4784, %v4789
    %v4794 = vrsqrt.pop %v4688
    %v4795 = vmul.f32 %v4794, %v4688
    %v4796 = vmul.f32 %v4795, %v4794
    %v4797 = vmul.f32 0.5, %v4796
    %v4798 = vsub.f32 1.5, %v4797
    %v4799 = vmul.f32 %v4794, %v4798
    %vm4800 = vweird.f32 %v4688
    %vm4801 = vweird.f32 %v4794
    %vm4802 = vmor %vm4800, %vm4801
    %v4803 = vsel %vm4802, %v4794, %v4799
    %v4804 = vrsqrt.pop %v4689
    %v4805 = vmul.f32 %v4804, %v4689
    %v4806 = vmul.f32 %v4805, %v4804
    %v4807 = vmul.f32 0.5, %v4806
    %v4808 = vsub.f32 1.5, %v4807
    %v4809 = vmul.f32 %v4804, %v4808
    %vm4810 = vweird.f32 %v4689
    %vm4811 = vweird.f32 %v4804
    %vm4812 = vmor %vm4810, %vm4811
    %v4813 = vsel %vm4812, %v4804, %v4809
    %v4814 = vrsqrt.pop %v4690
    %v4815 = vmul.f32 %v4814, %v4690
    %v4816 = vmul.f32 %v4815, %v4814
    %v4817 = vmul.f32 0.5, %v4816
    %v4818 = vsub.f32 1.5, %v4817
    %v4819 = vmul.f32 %v4814, %v4818
    %vm4820 = vweird.f32 %v4690
    %vm4821 = vweird.f32 %v4814
    %vm4822 = vmor %vm4820, %vm4821
    %v4823 = vsel %vm4822, %v4814, %v4819
    %v4824 = vrsqrt.pop %v4691
    %v4825 = vmul.f32 %v4824, %v4691
    %v4826 = vmul.f32 %v4825, %v4824
    %v4827 = vmul.f32 0.5, %v4826
    %v4828 = vsub.f32 1.5, %v4827
    %v4829 = vmul.f32 %v4824, %v4828
    %vm4830 = vweird.f32 %v4691
    %vm4831 = vweird.f32 %v4824
    %vm4832 = vmor %vm4830, %vm4831
    %v4833 = vsel %vm4832, %v4824, %v4829
    %v4834 = vrsqrt.pop %v4692
    %v4835 = vmul.f32 %v4834, %v4692
    %v4836 = vmul.f32 %v4835, %v4834
    %v4837 = vmul.f32 0.5, %v4836
    %v4838 = vsub.f32 1.5, %v4837
    %v4839 = vmul.f32 %v4834, %v4838
    %vm4840 = vweird.f32 %v4692
    %vm4841 = vweird.f32 %v4834
    %vm4842 = vmor %vm4840, %vm4841
    %v4843 = vsel %vm4842, %v4834, %v4839
    %v4844 = vrsqrt.pop %v4693
    %v4845 = vmul.f32 %v4844, %v4693
    %v4846 = vmul.f32 %v4845, %v4844
    %v4847 = vmul.f32 0.5, %v4846
    %v4848 = vsub.f32 1.5, %v4847
    %v4849 = vmul.f32 %v4844, %v4848
    %vm4850 = vweird.f32 %v4693
    %vm4851 = vweird.f32 %v4844
    %vm4852 = vmor %vm4850, %vm4851
    %v4853 = vsel %vm4852, %v4844, %v4849
    %v4854 = vmul.f32 %v4582, %v4703
    %v4855 = vmul.f32 %v4583, %v4713
    %v4856 = vmul.f32 %v4584, %v4723
    %v4857 = vmul.f32 %v4585, %v4733
    %v4858 = vmul.f32 %v4586, %v4743
    %v4859 = vmul.f32 %v4587, %v4753
    %v4860 = vmul.f32 %v4588, %v4763
    %v4861 = vmul.f32 %v4589, %v4773
    %v4862 = vmul.f32 %v4590, %v4783
    %v4863 = vmul.f32 %v4591, %v4793
    %v4864 = vmul.f32 %v4592, %v4803
    %v4865 = vmul.f32 %v4593, %v4813
    %v4866 = vmul.f32 %v4594, %v4823
    %v4867 = vmul.f32 %v4595, %v4833
    %v4868 = vmul.f32 %v4596, %v4843
    %v4869 = vmul.f32 %v4597, %v4853
    %v4871 = vperm.slane %v4516, 0
    %v4873 = vmul.f32 %v4854, %v4871
    %v4874 = vmul.f32 %v4855, %v4871
    %v4875 = vmul.f32 %v4856, %v4871
    %v4876 = vmul.f32 %v4857, %v4871
    %v4877 = vmul.f32 %v4858, %v4871
    %v4878 = vmul.f32 %v4859, %v4871
    %v4879 = vmul.f32 %v4860, %v4871
    %v4880 = vmul.f32 %v4861, %v4871
    %v4881 = vmul.f32 %v4862, %v4871
    %v4882 = vmul.f32 %v4863, %v4871
    %v4883 = vmul.f32 %v4864, %v4871
    %v4884 = vmul.f32 %v4865, %v4871
    %v4885 = vmul.f32 %v4866, %v4871
    %v4886 = vmul.f32 %v4867, %v4871
    %v4887 = vmul.f32 %v4868, %v4871
    %v4888 = vmul.f32 %v4869, %v4871
    %v4890 = vperm.slane %v4517, 0
    %v4892 = vadd.f32 %v4873, %v4890
    %v4893 = vadd.f32 %v4874, %v4890
    %v4894 = vadd.f32 %v4875, %v4890
    %v4895 = vadd.f32 %v4876, %v4890
    %v4896 = vadd.f32 %v4877, %v4890
    %v4897 = vadd.f32 %v4878, %v4890
    %v4898 = vadd.f32 %v4879, %v4890
    %v4899 = vadd.f32 %v4880, %v4890
    %v4900 = vadd.f32 %v4881, %v4890
    %v4901 = vadd.f32 %v4882, %v4890
    %v4902 = vadd.f32 %v4883, %v4890
    %v4903 = vadd.f32 %v4884, %v4890
    %v4904 = vadd.f32 %v4885, %v4890
    %v4905 = vadd.f32 %v4886, %v4890
    %v4906 = vadd.f32 %v4887, %v4890
    %v4907 = vadd.f32 %v4888, %v4890
    %s4908 = scalar_lea.vmem %s2, 32
    %v4909 = vld [vmem:[%s4908] sm:$0xff]
    %v4910 = vld [vmem:[%s4908 + $0x8] sm:$0xff]
    %v4911 = vld [vmem:[%s4908 + $0x10] sm:$0xff]
    %v4912 = vld [vmem:[%s4908 + $0x18] sm:$0xff]
    %s4913 = scalar_lea.vmem %s3, 1
    %v4914 = vld [vmem:[%s4913] sm:$0x1]
    %v4916 = vperm.slane %v4914, 0
    %v4919 = vsel %vm298, %v4892, 0
    %v4922 = vsel %vm298, %v4893, 0
    %v4925 = vsel %vm298, %v4894, 0
    %v4928 = vsel %vm298, %v4895, 0
    %v4931 = vsel %vm298, %v4896, 0
    %v4934 = vsel %vm298, %v4897, 0
    %v4937 = vsel %vm298, %v4898, 0
    %v4940 = vsel %vm298, %v4899, 0
    %v4943 = vsel %vm298, %v4900, 0
    %v4946 = vsel %vm298, %v4901, 0
    %v4949 = vsel %vm298, %v4902, 0
    %v4952 = vsel %vm298, %v4903, 0
    %v4955 = vsel %vm298, %v4904, 0
    %v4958 = vsel %vm298, %v4905, 0
    %v4961 = vsel %vm298, %v4906, 0
    %v4964 = vsel %vm298, %v4907, 0
    %4966 = vmatpush.msra.mxu0 0.0
    %4967 = vmatpush.msra.mxu0 0.0
    %4968 = vmatpush.msra.mxu0 0.0
    %4969 = vmatpush.msra.mxu0 0.0
    %4970 = vmatpush.msra.mxu0 0.0
    %4971 = vmatpush.msra.mxu0 0.0
    %4972 = vmatpush.msra.mxu0 0.0
    %4973 = vmatpush.msra.mxu0 0.0
    %4974 = vmatpush.msra.mxu0 0.0
    %4975 = vmatpush.msra.mxu0 0.0
    %4976 = vmatpush.msra.mxu0 0.0
    %4977 = vmatpush.msra.mxu0 0.0
    %4978 = vmatpush.msra.mxu0 %v4912
    %4979 = vmatpush.msra.mxu0 %v4911
    %4980 = vmatpush.msra.mxu0 %v4910
    %4981 = vmatpush.msra.mxu0 %v4909
    %4982 = vmatmul.f32.gmra.mxu0 %v4919
    %v4983 = vpop.f32.mrf.mxu0
    %v4984 = vadd.f32 %v4916, %v4983
    %4985 = vmatmul.f32.gmra.mxu0 %v4922
    %v4986 = vpop.f32.mrf.mxu0
    %v4987 = vadd.f32 %v4916, %v4986
    %4988 = vmatmul.f32.gmra.mxu0 %v4925
    %v4989 = vpop.f32.mrf.mxu0
    %v4990 = vadd.f32 %v4916, %v4989
    %4991 = vmatmul.f32.gmra.mxu0 %v4928
    %v4992 = vpop.f32.mrf.mxu0
    %v4993 = vadd.f32 %v4916, %v4992
    %4994 = vmatmul.f32.gmra.mxu0 %v4931
    %v4995 = vpop.f32.mrf.mxu0
    %v4996 = vadd.f32 %v4916, %v4995
    %4997 = vmatmul.f32.gmra.mxu0 %v4934
    %v4998 = vpop.f32.mrf.mxu0
    %v4999 = vadd.f32 %v4916, %v4998
    %5000 = vmatmul.f32.gmra.mxu0 %v4937
    %v5001 = vpop.f32.mrf.mxu0
    %v5002 = vadd.f32 %v4916, %v5001
    %5003 = vmatmul.f32.gmra.mxu0 %v4940
    %v5004 = vpop.f32.mrf.mxu0
    %v5005 = vadd.f32 %v4916, %v5004
    %5006 = vmatmul.f32.gmra.mxu0 %v4943
    %v5007 = vpop.f32.mrf.mxu0
    %v5008 = vadd.f32 %v4916, %v5007
    %5009 = vmatmul.f32.gmra.mxu0 %v4946
    %v5010 = vpop.f32.mrf.mxu0
    %v5011 = vadd.f32 %v4916, %v5010
    %5012 = vmatmul.f32.gmra.mxu0 %v4949
    %v5013 = vpop.f32.mrf.mxu0
    %v5014 = vadd.f32 %v4916, %v5013
    %5015 = vmatmul.f32.gmra.mxu0 %v4952
    %v5016 = vpop.f32.mrf.mxu0
    %v5017 = vadd.f32 %v4916, %v5016
    %5018 = vmatmul.f32.gmra.mxu0 %v4955
    %v5019 = vpop.f32.mrf.mxu0
    %v5020 = vadd.f32 %v4916, %v5019
    %5021 = vmatmul.f32.gmra.mxu0 %v4958
    %v5022 = vpop.f32.mrf.mxu0
    %v5023 = vadd.f32 %v4916, %v5022
    %5024 = vmatmul.f32.gmra.mxu0 %v4961
    %v5025 = vpop.f32.mrf.mxu0
    %v5026 = vadd.f32 %v4916, %v5025
    %5027 = vmatmul.f32.gmra.mxu0 %v4964
    %v5028 = vpop.f32.mrf.mxu0
    %v5029 = vadd.f32 %v4916, %v5028
    %5030 = vdwg.mxu0
    %5047 = vrot.lane.b32.xlu0 %v4984, 96
    %v5048 = vpop.permute.xlu0 %5047
    %5049 = vrot.lane.b32.xlu0 %v4987, 96
    %v5050 = vpop.permute.xlu0 %5049
    %5051 = vrot.lane.b32.xlu0 %v4990, 96
    %v5052 = vpop.permute.xlu0 %5051
    %5053 = vrot.lane.b32.xlu0 %v4993, 96
    %v5054 = vpop.permute.xlu0 %5053
    %5055 = vrot.lane.b32.xlu0 %v4996, 96
    %v5056 = vpop.permute.xlu0 %5055
    %5057 = vrot.lane.b32.xlu0 %v4999, 96
    %v5058 = vpop.permute.xlu0 %5057
    %5059 = vrot.lane.b32.xlu0 %v5002, 96
    %v5060 = vpop.permute.xlu0 %5059
    %5061 = vrot.lane.b32.xlu0 %v5005, 96
    %v5062 = vpop.permute.xlu0 %5061
    %5063 = vrot.lane.b32.xlu0 %v5008, 96
    %v5064 = vpop.permute.xlu0 %5063
    %5065 = vrot.lane.b32.xlu0 %v5011, 96
    %v5066 = vpop.permute.xlu0 %5065
    %5067 = vrot.lane.b32.xlu0 %v5014, 96
    %v5068 = vpop.permute.xlu0 %5067
    %5069 = vrot.lane.b32.xlu0 %v5017, 96
    %v5070 = vpop.permute.xlu0 %5069
    %5071 = vrot.lane.b32.xlu0 %v5020, 96
    %v5072 = vpop.permute.xlu0 %5071
    %5073 = vrot.lane.b32.xlu0 %v5023, 96
    %v5074 = vpop.permute.xlu0 %5073
    %5075 = vrot.lane.b32.xlu0 %v5026, 96
    %v5076 = vpop.permute.xlu0 %5075
    %5077 = vrot.lane.b32.xlu0 %v5029, 96
    %v5078 = vpop.permute.xlu0 %5077
    %5095 = vxpose.xlu0.b32.start [1/16] %v5048, 128
    %5096 = vxpose.xlu0.b32.cont [2/16] %v5050, 128
    %5097 = vxpose.xlu0.b32.cont [3/16] 0.0, 128
    %5098 = vxpose.xlu0.b32.cont [4/16] 0.0, 128
    %5099 = vxpose.xlu0.b32.cont [5/16] 0.0, 128
    %5100 = vxpose.xlu0.b32.cont [6/16] 0.0, 128
    %5101 = vxpose.xlu0.b32.cont [7/16] 0.0, 128
    %5102 = vxpose.xlu0.b32.cont [8/16] 0.0, 128
    %5103 = vxpose.xlu0.b32.cont [9/16] 0.0, 128
    %5104 = vxpose.xlu0.b32.cont [10/16] 0.0, 128
    %5105 = vxpose.xlu0.b32.cont [11/16] 0.0, 128
    %5106 = vxpose.xlu0.b32.cont [12/16] 0.0, 128
    %5107 = vxpose.xlu0.b32.cont [13/16] 0.0, 128
    %5108 = vxpose.xlu0.b32.cont [14/16] 0.0, 128
    %5109 = vxpose.xlu0.b32.cont [15/16] 0.0, 128
    %5110 = vxpose.xlu0.b32.end [16/16] 0.0, 128
    %v5111 = vpop.trf.xlu0
    %v5112 = vpop.trf.xlu0
    %v5113 = vpop.trf.xlu0
    %v5114 = vpop.trf.xlu0
    %v5115 = vpop.trf.xlu0
    %v5116 = vpop.trf.xlu0
    %v5117 = vpop.trf.xlu0
    %v5118 = vpop.trf.xlu0
    %v5119 = vpop.trf.xlu0
    %v5120 = vpop.trf.xlu0
    %v5121 = vpop.trf.xlu0
    %v5122 = vpop.trf.xlu0
    %v5123 = vpop.trf.xlu0
    %v5124 = vpop.trf.xlu0
    %v5125 = vpop.trf.xlu0
    %v5126 = vpop.trf.xlu0
    %5127 = vxpose.xlu0.b32.start [1/16] %v5052, 128
    %5128 = vxpose.xlu0.b32.cont [2/16] %v5054, 128
    %5129 = vxpose.xlu0.b32.cont [3/16] 0.0, 128
    %5130 = vxpose.xlu0.b32.cont [4/16] 0.0, 128
    %5131 = vxpose.xlu0.b32.cont [5/16] 0.0, 128
    %5132 = vxpose.xlu0.b32.cont [6/16] 0.0, 128
    %5133 = vxpose.xlu0.b32.cont [7/16] 0.0, 128
    %5134 = vxpose.xlu0.b32.cont [8/16] 0.0, 128
    %5135 = vxpose.xlu0.b32.cont [9/16] 0.0, 128
    %5136 = vxpose.xlu0.b32.cont [10/16] 0.0, 128
    %5137 = vxpose.xlu0.b32.cont [11/16] 0.0, 128
    %5138 = vxpose.xlu0.b32.cont [12/16] 0.0, 128
    %5139 = vxpose.xlu0.b32.cont [13/16] 0.0, 128
    %5140 = vxpose.xlu0.b32.cont [14/16] 0.0, 128
    %5141 = vxpose.xlu0.b32.cont [15/16] 0.0, 128
    %5142 = vxpose.xlu0.b32.end [16/16] 0.0, 128
    %v5143 = vpop.trf.xlu0
    %v5144 = vpop.trf.xlu0
    %v5145 = vpop.trf.xlu0
    %v5146 = vpop.trf.xlu0
    %v5147 = vpop.trf.xlu0
    %v5148 = vpop.trf.xlu0
    %v5149 = vpop.trf.xlu0
    %v5150 = vpop.trf.xlu0
    %v5151 = vpop.trf.xlu0
    %v5152 = vpop.trf.xlu0
    %v5153 = vpop.trf.xlu0
    %v5154 = vpop.trf.xlu0
    %v5155 = vpop.trf.xlu0
    %v5156 = vpop.trf.xlu0
    %v5157 = vpop.trf.xlu0
    %v5158 = vpop.trf.xlu0
    %5159 = vxpose.xlu0.b32.start [1/16] %v5056, 128
    %5160 = vxpose.xlu0.b32.cont [2/16] %v5058, 128
    %5161 = vxpose.xlu0.b32.cont [3/16] 0.0, 128
    %5162 = vxpose.xlu0.b32.cont [4/16] 0.0, 128
    %5163 = vxpose.xlu0.b32.cont [5/16] 0.0, 128
    %5164 = vxpose.xlu0.b32.cont [6/16] 0.0, 128
    %5165 = vxpose.xlu0.b32.cont [7/16] 0.0, 128
    %5166 = vxpose.xlu0.b32.cont [8/16] 0.0, 128
    %5167 = vxpose.xlu0.b32.cont [9/16] 0.0, 128
    %5168 = vxpose.xlu0.b32.cont [10/16] 0.0, 128
    %5169 = vxpose.xlu0.b32.cont [11/16] 0.0, 128
    %5170 = vxpose.xlu0.b32.cont [12/16] 0.0, 128
    %5171 = vxpose.xlu0.b32.cont [13/16] 0.0, 128
    %5172 = vxpose.xlu0.b32.cont [14/16] 0.0, 128
    %5173 = vxpose.xlu0.b32.cont [15/16] 0.0, 128
    %5174 = vxpose.xlu0.b32.end [16/16] 0.0, 128
    %v5175 = vpop.trf.xlu0
    %v5176 = vpop.trf.xlu0
    %v5177 = vpop.trf.xlu0
    %v5178 = vpop.trf.xlu0
    %v5179 = vpop.trf.xlu0
    %v5180 = vpop.trf.xlu0
    %v5181 = vpop.trf.xlu0
    %v5182 = vpop.trf.xlu0
    %v5183 = vpop.trf.xlu0
    %v5184 = vpop.trf.xlu0
    %v5185 = vpop.trf.xlu0
    %v5186 = vpop.trf.xlu0
    %v5187 = vpop.trf.xlu0
    %v5188 = vpop.trf.xlu0
    %v5189 = vpop.trf.xlu0
    %v5190 = vpop.trf.xlu0
    %5191 = vxpose.xlu0.b32.start [1/16] %v5060, 128
    %5192 = vxpose.xlu0.b32.cont [2/16] %v5062, 128
    %5193 = vxpose.xlu0.b32.cont [3/16] 0.0, 128
    %5194 = vxpose.xlu0.b32.cont [4/16] 0.0, 128
    %5195 = vxpose.xlu0.b32.cont [5/16] 0.0, 128
    %5196 = vxpose.xlu0.b32.cont [6/16] 0.0, 128
    %5197 = vxpose.xlu0.b32.cont [7/16] 0.0, 128
    %5198 = vxpose.xlu0.b32.cont [8/16] 0.0, 128
    %5199 = vxpose.xlu0.b32.cont [9/16] 0.0, 128
    %5200 = vxpose.xlu0.b32.cont [10/16] 0.0, 128
    %5201 = vxpose.xlu0.b32.cont [11/16] 0.0, 128
    %5202 = vxpose.xlu0.b32.cont [12/16] 0.0, 128
    %5203 = vxpose.xlu0.b32.cont [13/16] 0.0, 128
    %5204 = vxpose.xlu0.b32.cont [14/16] 0.0, 128
    %5205 = vxpose.xlu0.b32.cont [15/16] 0.0, 128
    %5206 = vxpose.xlu0.b32.end [16/16] 0.0, 128
    %v5207 = vpop.trf.xlu0
    %v5208 = vpop.trf.xlu0
    %v5209 = vpop.trf.xlu0
    %v5210 = vpop.trf.xlu0
    %v5211 = vpop.trf.xlu0
    %v5212 = vpop.trf.xlu0
    %v5213 = vpop.trf.xlu0
    %v5214 = vpop.trf.xlu0
    %v5215 = vpop.trf.xlu0
    %v5216 = vpop.trf.xlu0
    %v5217 = vpop.trf.xlu0
    %v5218 = vpop.trf.xlu0
    %v5219 = vpop.trf.xlu0
    %v5220 = vpop.trf.xlu0
    %v5221 = vpop.trf.xlu0
    %v5222 = vpop.trf.xlu0
    %5223 = vxpose.xlu0.b32.start [1/16] %v5064, 128
    %5224 = vxpose.xlu0.b32.cont [2/16] %v5066, 128
    %5225 = vxpose.xlu0.b32.cont [3/16] 0.0, 128
    %5226 = vxpose.xlu0.b32.cont [4/16] 0.0, 128
    %5227 = vxpose.xlu0.b32.cont [5/16] 0.0, 128
    %5228 = vxpose.xlu0.b32.cont [6/16] 0.0, 128
    %5229 = vxpose.xlu0.b32.cont [7/16] 0.0, 128
    %5230 = vxpose.xlu0.b32.cont [8/16] 0.0, 128
    %5231 = vxpose.xlu0.b32.cont [9/16] 0.0, 128
    %5232 = vxpose.xlu0.b32.cont [10/16] 0.0, 128
    %5233 = vxpose.xlu0.b32.cont [11/16] 0.0, 128
    %5234 = vxpose.xlu0.b32.cont [12/16] 0.0, 128
    %5235 = vxpose.xlu0.b32.cont [13/16] 0.0, 128
    %5236 = vxpose.xlu0.b32.cont [14/16] 0.0, 128
    %5237 = vxpose.xlu0.b32.cont [15/16] 0.0, 128
    %5238 = vxpose.xlu0.b32.end [16/16] 0.0, 128
    %v5239 = vpop.trf.xlu0
    %v5240 = vpop.trf.xlu0
    %v5241 = vpop.trf.xlu0
    %v5242 = vpop.trf.xlu0
    %v5243 = vpop.trf.xlu0
    %v5244 = vpop.trf.xlu0
    %v5245 = vpop.trf.xlu0
    %v5246 = vpop.trf.xlu0
    %v5247 = vpop.trf.xlu0
    %v5248 = vpop.trf.xlu0
    %v5249 = vpop.trf.xlu0
    %v5250 = vpop.trf.xlu0
    %v5251 = vpop.trf.xlu0
    %v5252 = vpop.trf.xlu0
    %v5253 = vpop.trf.xlu0
    %v5254 = vpop.trf.xlu0
    %5255 = vxpose.xlu0.b32.start [1/16] %v5068, 128
    %5256 = vxpose.xlu0.b32.cont [2/16] %v5070, 128
    %5257 = vxpose.xlu0.b32.cont [3/16] 0.0, 128
    %5258 = vxpose.xlu0.b32.cont [4/16] 0.0, 128
    %5259 = vxpose.xlu0.b32.cont [5/16] 0.0, 128
    %5260 = vxpose.xlu0.b32.cont [6/16] 0.0, 128
    %5261 = vxpose.xlu0.b32.cont [7/16] 0.0, 128
    %5262 = vxpose.xlu0.b32.cont [8/16] 0.0, 128
    %5263 = vxpose.xlu0.b32.cont [9/16] 0.0, 128
    %5264 = vxpose.xlu0.b32.cont [10/16] 0.0, 128
    %5265 = vxpose.xlu0.b32.cont [11/16] 0.0, 128
    %5266 = vxpose.xlu0.b32.cont [12/16] 0.0, 128
    %5267 = vxpose.xlu0.b32.cont [13/16] 0.0, 128
    %5268 = vxpose.xlu0.b32.cont [14/16] 0.0, 128
    %5269 = vxpose.xlu0.b32.cont [15/16] 0.0, 128
    %5270 = vxpose.xlu0.b32.end [16/16] 0.0, 128
    %v5271 = vpop.trf.xlu0
    %v5272 = vpop.trf.xlu0
    %v5273 = vpop.trf.xlu0
    %v5274 = vpop.trf.xlu0
    %v5275 = vpop.trf.xlu0
    %v5276 = vpop.trf.xlu0
    %v5277 = vpop.trf.xlu0
    %v5278 = vpop.trf.xlu0
    %v5279 = vpop.trf.xlu0
    %v5280 = vpop.trf.xlu0
    %v5281 = vpop.trf.xlu0
    %v5282 = vpop.trf.xlu0
    %v5283 = vpop.trf.xlu0
    %v5284 = vpop.trf.xlu0
    %v5285 = vpop.trf.xlu0
    %v5286 = vpop.trf.xlu0
    %5287 = vxpose.xlu0.b32.start [1/16] %v5072, 128
    %5288 = vxpose.xlu0.b32.cont [2/16] %v5074, 128
    %5289 = vxpose.xlu0.b32.cont [3/16] 0.0, 128
    %5290 = vxpose.xlu0.b32.cont [4/16] 0.0, 128
    %5291 = vxpose.xlu0.b32.cont [5/16] 0.0, 128
    %5292 = vxpose.xlu0.b32.cont [6/16] 0.0, 128
    %5293 = vxpose.xlu0.b32.cont [7/16] 0.0, 128
    %5294 = vxpose.xlu0.b32.cont [8/16] 0.0, 128
    %5295 = vxpose.xlu0.b32.cont [9/16] 0.0, 128
    %5296 = vxpose.xlu0.b32.cont [10/16] 0.0, 128
    %5297 = vxpose.xlu0.b32.cont [11/16] 0.0, 128
    %5298 = vxpose.xlu0.b32.cont [12/16] 0.0, 128
    %5299 = vxpose.xlu0.b32.cont [13/16] 0.0, 128
    %5300 = vxpose.xlu0.b32.cont [14/16] 0.0, 128
    %5301 = vxpose.xlu0.b32.cont [15/16] 0.0, 128
    %5302 = vxpose.xlu0.b32.end [16/16] 0.0, 128
    %v5303 = vpop.trf.xlu0
    %v5304 = vpop.trf.xlu0
    %v5305 = vpop.trf.xlu0
    %v5306 = vpop.trf.xlu0
    %v5307 = vpop.trf.xlu0
    %v5308 = vpop.trf.xlu0
    %v5309 = vpop.trf.xlu0
    %v5310 = vpop.trf.xlu0
    %v5311 = vpop.trf.xlu0
    %v5312 = vpop.trf.xlu0
    %v5313 = vpop.trf.xlu0
    %v5314 = vpop.trf.xlu0
    %v5315 = vpop.trf.xlu0
    %v5316 = vpop.trf.xlu0
    %v5317 = vpop.trf.xlu0
    %v5318 = vpop.trf.xlu0
    %5319 = vxpose.xlu0.b32.start [1/16] %v5076, 128
    %5320 = vxpose.xlu0.b32.cont [2/16] %v5078, 128
    %5321 = vxpose.xlu0.b32.cont [3/16] 0.0, 128
    %5322 = vxpose.xlu0.b32.cont [4/16] 0.0, 128
    %5323 = vxpose.xlu0.b32.cont [5/16] 0.0, 128
    %5324 = vxpose.xlu0.b32.cont [6/16] 0.0, 128
    %5325 = vxpose.xlu0.b32.cont [7/16] 0.0, 128
    %5326 = vxpose.xlu0.b32.cont [8/16] 0.0, 128
    %5327 = vxpose.xlu0.b32.cont [9/16] 0.0, 128
    %5328 = vxpose.xlu0.b32.cont [10/16] 0.0, 128
    %5329 = vxpose.xlu0.b32.cont [11/16] 0.0, 128
    %5330 = vxpose.xlu0.b32.cont [12/16] 0.0, 128
    %5331 = vxpose.xlu0.b32.cont [13/16] 0.0, 128
    %5332 = vxpose.xlu0.b32.cont [14/16] 0.0, 128
    %5333 = vxpose.xlu0.b32.cont [15/16] 0.0, 128
    %5334 = vxpose.xlu0.b32.end [16/16] 0.0, 128
    %v5335 = vpop.trf.xlu0
    %v5336 = vpop.trf.xlu0
    %v5337 = vpop.trf.xlu0
    %v5338 = vpop.trf.xlu0
    %v5339 = vpop.trf.xlu0
    %v5340 = vpop.trf.xlu0
    %v5341 = vpop.trf.xlu0
    %v5342 = vpop.trf.xlu0
    %v5343 = vpop.trf.xlu0
    %v5344 = vpop.trf.xlu0
    %v5345 = vpop.trf.xlu0
    %v5346 = vpop.trf.xlu0
    %v5347 = vpop.trf.xlu0
    %v5348 = vpop.trf.xlu0
    %v5349 = vpop.trf.xlu0
    %v5350 = vpop.trf.xlu0
    %v5351 = vmul.f32 %v5111, %v337
    %v5352 = vmul.f32 %v5112, %v338
    %v5353 = vmul.f32 %v5113, %v339
    %v5354 = vmul.f32 %v5114, %v340
    %v5355 = vmul.f32 %v5143, %v337
    %v5356 = vmul.f32 %v5144, %v338
    %v5357 = vmul.f32 %v5145, %v339
    %v5358 = vmul.f32 %v5146, %v340
    %v5359 = vmul.f32 %v5175, %v337
    %v5360 = vmul.f32 %v5176, %v338
    %v5361 = vmul.f32 %v5177, %v339
    %v5362 = vmul.f32 %v5178, %v340
    %v5363 = vmul.f32 %v5207, %v337
    %v5364 = vmul.f32 %v5208, %v338
    %v5365 = vmul.f32 %v5209, %v339
    %v5366 = vmul.f32 %v5210, %v340
    %v5367 = vmul.f32 %v5239, %v337
    %v5368 = vmul.f32 %v5240, %v338
    %v5369 = vmul.f32 %v5241, %v339
    %v5370 = vmul.f32 %v5242, %v340
    %v5371 = vmul.f32 %v5271, %v337
    %v5372 = vmul.f32 %v5272, %v338
    %v5373 = vmul.f32 %v5273, %v339
    %v5374 = vmul.f32 %v5274, %v340
    %v5375 = vmul.f32 %v5303, %v337
    %v5376 = vmul.f32 %v5304, %v338
    %v5377 = vmul.f32 %v5305, %v339
    %v5378 = vmul.f32 %v5306, %v340
    %v5379 = vmul.f32 %v5335, %v337
    %v5380 = vmul.f32 %v5336, %v338
    %v5381 = vmul.f32 %v5337, %v339
    %v5382 = vmul.f32 %v5338, %v340
    %v5383 = vmul.f32 %v5111, %v357
    %v5384 = vmul.f32 %v5112, %v358
    %v5385 = vmul.f32 %v5113, %v359
    %v5386 = vmul.f32 %v5114, %v360
    %v5387 = vmul.f32 %v5143, %v357
    %v5388 = vmul.f32 %v5144, %v358
    %v5389 = vmul.f32 %v5145, %v359
    %v5390 = vmul.f32 %v5146, %v360
    %v5391 = vmul.f32 %v5175, %v357
    %v5392 = vmul.f32 %v5176, %v358
    %v5393 = vmul.f32 %v5177, %v359
    %v5394 = vmul.f32 %v5178, %v360
    %v5395 = vmul.f32 %v5207, %v357
    %v5396 = vmul.f32 %v5208, %v358
    %v5397 = vmul.f32 %v5209, %v359
    %v5398 = vmul.f32 %v5210, %v360
    %v5399 = vmul.f32 %v5239, %v357
    %v5400 = vmul.f32 %v5240, %v358
    %v5401 = vmul.f32 %v5241, %v359
    %v5402 = vmul.f32 %v5242, %v360
    %v5403 = vmul.f32 %v5271, %v357
    %v5404 = vmul.f32 %v5272, %v358
    %v5405 = vmul.f32 %v5273, %v359
    %v5406 = vmul.f32 %v5274, %v360
    %v5407 = vmul.f32 %v5303, %v357
    %v5408 = vmul.f32 %v5304, %v358
    %v5409 = vmul.f32 %v5305, %v359
    %v5410 = vmul.f32 %v5306, %v360
    %v5411 = vmul.f32 %v5335, %v357
    %v5412 = vmul.f32 %v5336, %v358
    %v5413 = vmul.f32 %v5337, %v359
    %v5414 = vmul.f32 %v5338, %v360
    %v5415 = vmul.f32 %v5111, %v377
    %v5416 = vmul.f32 %v5112, %v378
    %v5417 = vmul.f32 %v5113, %v379
    %v5418 = vmul.f32 %v5114, %v380
    %v5419 = vmul.f32 %v5143, %v377
    %v5420 = vmul.f32 %v5144, %v378
    %v5421 = vmul.f32 %v5145, %v379
    %v5422 = vmul.f32 %v5146, %v380
    %v5423 = vmul.f32 %v5175, %v377
    %v5424 = vmul.f32 %v5176, %v378
    %v5425 = vmul.f32 %v5177, %v379
    %v5426 = vmul.f32 %v5178, %v380
    %v5427 = vmul.f32 %v5207, %v377
    %v5428 = vmul.f32 %v5208, %v378
    %v5429 = vmul.f32 %v5209, %v379
    %v5430 = vmul.f32 %v5210, %v380
    %v5431 = vmul.f32 %v5239, %v377
    %v5432 = vmul.f32 %v5240, %v378
    %v5433 = vmul.f32 %v5241, %v379
    %v5434 = vmul.f32 %v5242, %v380
    %v5435 = vmul.f32 %v5271, %v377
    %v5436 = vmul.f32 %v5272, %v378
    %v5437 = vmul.f32 %v5273, %v379
    %v5438 = vmul.f32 %v5274, %v380
    %v5439 = vmul.f32 %v5303, %v377
    %v5440 = vmul.f32 %v5304, %v378
    %v5441 = vmul.f32 %v5305, %v379
    %v5442 = vmul.f32 %v5306, %v380
    %v5443 = vmul.f32 %v5335, %v377
    %v5444 = vmul.f32 %v5336, %v378
    %v5445 = vmul.f32 %v5337, %v379
    %v5446 = vmul.f32 %v5338, %v380
    %v5447 = vmul.f32 %v5111, %v397
    %v5448 = vmul.f32 %v5112, %v398
    %v5449 = vmul.f32 %v5113, %v399
    %v5450 = vmul.f32 %v5114, %v400
    %v5451 = vmul.f32 %v5143, %v397
    %v5452 = vmul.f32 %v5144, %v398
    %v5453 = vmul.f32 %v5145, %v399
    %v5454 = vmul.f32 %v5146, %v400
    %v5455 = vmul.f32 %v5175, %v397
    %v5456 = vmul.f32 %v5176, %v398
    %v5457 = vmul.f32 %v5177, %v399
    %v5458 = vmul.f32 %v5178, %v400
    %v5459 = vmul.f32 %v5207, %v397
    %v5460 = vmul.f32 %v5208, %v398
    %v5461 = vmul.f32 %v5209, %v399
    %v5462 = vmul.f32 %v5210, %v400
    %v5463 = vmul.f32 %v5239, %v397
    %v5464 = vmul.f32 %v5240, %v398
    %v5465 = vmul.f32 %v5241, %v399
    %v5466 = vmul.f32 %v5242, %v400
    %v5467 = vmul.f32 %v5271, %v397
    %v5468 = vmul.f32 %v5272, %v398
    %v5469 = vmul.f32 %v5273, %v399
    %v5470 = vmul.f32 %v5274, %v400
    %v5471 = vmul.f32 %v5303, %v397
    %v5472 = vmul.f32 %v5304, %v398
    %v5473 = vmul.f32 %v5305, %v399
    %v5474 = vmul.f32 %v5306, %v400
    %v5475 = vmul.f32 %v5335, %v397
    %v5476 = vmul.f32 %v5336, %v398
    %v5477 = vmul.f32 %v5337, %v399
    %v5478 = vmul.f32 %v5338, %v400
    %5511 = vrot.lane.b32.xlu0 %v5383, 16
    %v5512 = vpop.permute.xlu0 %5511
    %5513 = vrot.lane.b32.xlu0 %v5384, 16
    %v5514 = vpop.permute.xlu0 %5513
    %5515 = vrot.lane.b32.xlu0 %v5385, 16
    %v5516 = vpop.permute.xlu0 %5515
    %5517 = vrot.lane.b32.xlu0 %v5386, 16
    %v5518 = vpop.permute.xlu0 %5517
    %5519 = vrot.lane.b32.xlu0 %v5387, 16
    %v5520 = vpop.permute.xlu0 %5519
    %5521 = vrot.lane.b32.xlu0 %v5388, 16
    %v5522 = vpop.permute.xlu0 %5521
    %5523 = vrot.lane.b32.xlu0 %v5389, 16
    %v5524 = vpop.permute.xlu0 %5523
    %5525 = vrot.lane.b32.xlu0 %v5390, 16
    %v5526 = vpop.permute.xlu0 %5525
    %5527 = vrot.lane.b32.xlu0 %v5391, 16
    %v5528 = vpop.permute.xlu0 %5527
    %5529 = vrot.lane.b32.xlu0 %v5392, 16
    %v5530 = vpop.permute.xlu0 %5529
    %5531 = vrot.lane.b32.xlu0 %v5393, 16
    %v5532 = vpop.permute.xlu0 %5531
    %5533 = vrot.lane.b32.xlu0 %v5394, 16
    %v5534 = vpop.permute.xlu0 %5533
    %5535 = vrot.lane.b32.xlu0 %v5395, 16
    %v5536 = vpop.permute.xlu0 %5535
    %5537 = vrot.lane.b32.xlu0 %v5396, 16
    %v5538 = vpop.permute.xlu0 %5537
    %5539 = vrot.lane.b32.xlu0 %v5397, 16
    %v5540 = vpop.permute.xlu0 %5539
    %5541 = vrot.lane.b32.xlu0 %v5398, 16
    %v5542 = vpop.permute.xlu0 %5541
    %5543 = vrot.lane.b32.xlu0 %v5399, 16
    %v5544 = vpop.permute.xlu0 %5543
    %5545 = vrot.lane.b32.xlu0 %v5400, 16
    %v5546 = vpop.permute.xlu0 %5545
    %5547 = vrot.lane.b32.xlu0 %v5401, 16
    %v5548 = vpop.permute.xlu0 %5547
    %5549 = vrot.lane.b32.xlu0 %v5402, 16
    %v5550 = vpop.permute.xlu0 %5549
    %5551 = vrot.lane.b32.xlu0 %v5403, 16
    %v5552 = vpop.permute.xlu0 %5551
    %5553 = vrot.lane.b32.xlu0 %v5404, 16
    %v5554 = vpop.permute.xlu0 %5553
    %5555 = vrot.lane.b32.xlu0 %v5405, 16
    %v5556 = vpop.permute.xlu0 %5555
    %5557 = vrot.lane.b32.xlu0 %v5406, 16
    %v5558 = vpop.permute.xlu0 %5557
    %5559 = vrot.lane.b32.xlu0 %v5407, 16
    %v5560 = vpop.permute.xlu0 %5559
    %5561 = vrot.lane.b32.xlu0 %v5408, 16
    %v5562 = vpop.permute.xlu0 %5561
    %5563 = vrot.lane.b32.xlu0 %v5409, 16
    %v5564 = vpop.permute.xlu0 %5563
    %5565 = vrot.lane.b32.xlu0 %v5410, 16
    %v5566 = vpop.permute.xlu0 %5565
    %5567 = vrot.lane.b32.xlu0 %v5411, 16
    %v5568 = vpop.permute.xlu0 %5567
    %5569 = vrot.lane.b32.xlu0 %v5412, 16
    %v5570 = vpop.permute.xlu0 %5569
    %5571 = vrot.lane.b32.xlu0 %v5413, 16
    %v5572 = vpop.permute.xlu0 %5571
    %5573 = vrot.lane.b32.xlu0 %v5414, 16
    %v5574 = vpop.permute.xlu0 %5573
    %5639 = vrot.lane.b32.xlu0 %v5415, 32
    %v5640 = vpop.permute.xlu0 %5639
    %5641 = vrot.lane.b32.xlu0 %v5416, 32
    %v5642 = vpop.permute.xlu0 %5641
    %5643 = vrot.lane.b32.xlu0 %v5417, 32
    %v5644 = vpop.permute.xlu0 %5643
    %5645 = vrot.lane.b32.xlu0 %v5418, 32
    %v5646 = vpop.permute.xlu0 %5645
    %5647 = vrot.lane.b32.xlu0 %v5419, 32
    %v5648 = vpop.permute.xlu0 %5647
    %5649 = vrot.lane.b32.xlu0 %v5420, 32
    %v5650 = vpop.permute.xlu0 %5649
    %5651 = vrot.lane.b32.xlu0 %v5421, 32
    %v5652 = vpop.permute.xlu0 %5651
    %5653 = vrot.lane.b32.xlu0 %v5422, 32
    %v5654 = vpop.permute.xlu0 %5653
    %5655 = vrot.lane.b32.xlu0 %v5423, 32
    %v5656 = vpop.permute.xlu0 %5655
    %5657 = vrot.lane.b32.xlu0 %v5424, 32
    %v5658 = vpop.permute.xlu0 %5657
    %5659 = vrot.lane.b32.xlu0 %v5425, 32
    %v5660 = vpop.permute.xlu0 %5659
    %5661 = vrot.lane.b32.xlu0 %v5426, 32
    %v5662 = vpop.permute.xlu0 %5661
    %5663 = vrot.lane.b32.xlu0 %v5427, 32
    %v5664 = vpop.permute.xlu0 %5663
    %5665 = vrot.lane.b32.xlu0 %v5428, 32
    %v5666 = vpop.permute.xlu0 %5665
    %5667 = vrot.lane.b32.xlu0 %v5429, 32
    %v5668 = vpop.permute.xlu0 %5667
    %5669 = vrot.lane.b32.xlu0 %v5430, 32
    %v5670 = vpop.permute.xlu0 %5669
    %5671 = vrot.lane.b32.xlu0 %v5431, 32
    %v5672 = vpop.permute.xlu0 %5671
    %5673 = vrot.lane.b32.xlu0 %v5432, 32
    %v5674 = vpop.permute.xlu0 %5673
    %5675 = vrot.lane.b32.xlu0 %v5433, 32
    %v5676 = vpop.permute.xlu0 %5675
    %5677 = vrot.lane.b32.xlu0 %v5434, 32
    %v5678 = vpop.permute.xlu0 %5677
    %5679 = vrot.lane.b32.xlu0 %v5435, 32
    %v5680 = vpop.permute.xlu0 %5679
    %5681 = vrot.lane.b32.xlu0 %v5436, 32
    %v5682 = vpop.permute.xlu0 %5681
    %5683 = vrot.lane.b32.xlu0 %v5437, 32
    %v5684 = vpop.permute.xlu0 %5683
    %5685 = vrot.lane.b32.xlu0 %v5438, 32
    %v5686 = vpop.permute.xlu0 %5685
    %5687 = vrot.lane.b32.xlu0 %v5439, 32
    %v5688 = vpop.permute.xlu0 %5687
    %5689 = vrot.lane.b32.xlu0 %v5440, 32
    %v5690 = vpop.permute.xlu0 %5689
    %5691 = vrot.lane.b32.xlu0 %v5441, 32
    %v5692 = vpop.permute.xlu0 %5691
    %5693 = vrot.lane.b32.xlu0 %v5442, 32
    %v5694 = vpop.permute.xlu0 %5693
    %5695 = vrot.lane.b32.xlu0 %v5443, 32
    %v5696 = vpop.permute.xlu0 %5695
    %5697 = vrot.lane.b32.xlu0 %v5444, 32
    %v5698 = vpop.permute.xlu0 %5697
    %5699 = vrot.lane.b32.xlu0 %v5445, 32
    %v5700 = vpop.permute.xlu0 %5699
    %5701 = vrot.lane.b32.xlu0 %v5446, 32
    %v5702 = vpop.permute.xlu0 %5701
    %5767 = vrot.lane.b32.xlu0 %v5447, 48
    %v5768 = vpop.permute.xlu0 %5767
    %5769 = vrot.lane.b32.xlu0 %v5448, 48
    %v5770 = vpop.permute.xlu0 %5769
    %5771 = vrot.lane.b32.xlu0 %v5449, 48
    %v5772 = vpop.permute.xlu0 %5771
    %5773 = vrot.lane.b32.xlu0 %v5450, 48
    %v5774 = vpop.permute.xlu0 %5773
    %5775 = vrot.lane.b32.xlu0 %v5451, 48
    %v5776 = vpop.permute.xlu0 %5775
    %5777 = vrot.lane.b32.xlu0 %v5452, 48
    %v5778 = vpop.permute.xlu0 %5777
    %5779 = vrot.lane.b32.xlu0 %v5453, 48
    %v5780 = vpop.permute.xlu0 %5779
    %5781 = vrot.lane.b32.xlu0 %v5454, 48
    %v5782 = vpop.permute.xlu0 %5781
    %5783 = vrot.lane.b32.xlu0 %v5455, 48
    %v5784 = vpop.permute.xlu0 %5783
    %5785 = vrot.lane.b32.xlu0 %v5456, 48
    %v5786 = vpop.permute.xlu0 %5785
    %5787 = vrot.lane.b32.xlu0 %v5457, 48
    %v5788 = vpop.permute.xlu0 %5787
    %5789 = vrot.lane.b32.xlu0 %v5458, 48
    %v5790 = vpop.permute.xlu0 %5789
    %5791 = vrot.lane.b32.xlu0 %v5459, 48
    %v5792 = vpop.permute.xlu0 %5791
    %5793 = vrot.lane.b32.xlu0 %v5460, 48
    %v5794 = vpop.permute.xlu0 %5793
    %5795 = vrot.lane.b32.xlu0 %v5461, 48
    %v5796 = vpop.permute.xlu0 %5795
    %5797 = vrot.lane.b32.xlu0 %v5462, 48
    %v5798 = vpop.permute.xlu0 %5797
    %5799 = vrot.lane.b32.xlu0 %v5463, 48
    %v5800 = vpop.permute.xlu0 %5799
    %5801 = vrot.lane.b32.xlu0 %v5464, 48
    %v5802 = vpop.permute.xlu0 %5801
    %5803 = vrot.lane.b32.xlu0 %v5465, 48
    %v5804 = vpop.permute.xlu0 %5803
    %5805 = vrot.lane.b32.xlu0 %v5466, 48
    %v5806 = vpop.permute.xlu0 %5805
    %5807 = vrot.lane.b32.xlu0 %v5467, 48
    %v5808 = vpop.permute.xlu0 %5807
    %5809 = vrot.lane.b32.xlu0 %v5468, 48
    %v5810 = vpop.permute.xlu0 %5809
    %5811 = vrot.lane.b32.xlu0 %v5469, 48
    %v5812 = vpop.permute.xlu0 %5811
    %5813 = vrot.lane.b32.xlu0 %v5470, 48
    %v5814 = vpop.permute.xlu0 %5813
    %5815 = vrot.lane.b32.xlu0 %v5471, 48
    %v5816 = vpop.permute.xlu0 %5815
    %5817 = vrot.lane.b32.xlu0 %v5472, 48
    %v5818 = vpop.permute.xlu0 %5817
    %5819 = vrot.lane.b32.xlu0 %v5473, 48
    %v5820 = vpop.permute.xlu0 %5819
    %5821 = vrot.lane.b32.xlu0 %v5474, 48
    %v5822 = vpop.permute.xlu0 %5821
    %5823 = vrot.lane.b32.xlu0 %v5475, 48
    %v5824 = vpop.permute.xlu0 %5823
    %5825 = vrot.lane.b32.xlu0 %v5476, 48
    %v5826 = vpop.permute.xlu0 %5825
    %5827 = vrot.lane.b32.xlu0 %v5477, 48
    %v5828 = vpop.permute.xlu0 %5827
    %5829 = vrot.lane.b32.xlu0 %v5478, 48
    %v5830 = vpop.permute.xlu0 %5829
    %v5863 = vsel %vm289, %v5351, %v5512
    %v5864 = vsel %vm289, %v5352, %v5514
    %v5865 = vsel %vm289, %v5353, %v5516
    %v5866 = vsel %vm289, %v5354, %v5518
    %v5867 = vsel %vm289, %v5355, %v5520
    %v5868 = vsel %vm289, %v5356, %v5522
    %v5869 = vsel %vm289, %v5357, %v5524
    %v5870 = vsel %vm289, %v5358, %v5526
    %v5871 = vsel %vm289, %v5359, %v5528
    %v5872 = vsel %vm289, %v5360, %v5530
    %v5873 = vsel %vm289, %v5361, %v5532
    %v5874 = vsel %vm289, %v5362, %v5534
    %v5875 = vsel %vm289, %v5363, %v5536
    %v5876 = vsel %vm289, %v5364, %v5538
    %v5877 = vsel %vm289, %v5365, %v5540
    %v5878 = vsel %vm289, %v5366, %v5542
    %v5879 = vsel %vm289, %v5367, %v5544
    %v5880 = vsel %vm289, %v5368, %v5546
    %v5881 = vsel %vm289, %v5369, %v5548
    %v5882 = vsel %vm289, %v5370, %v5550
    %v5883 = vsel %vm289, %v5371, %v5552
    %v5884 = vsel %vm289, %v5372, %v5554
    %v5885 = vsel %vm289, %v5373, %v5556
    %v5886 = vsel %vm289, %v5374, %v5558
    %v5887 = vsel %vm289, %v5375, %v5560
    %v5888 = vsel %vm289, %v5376, %v5562
    %v5889 = vsel %vm289, %v5377, %v5564
    %v5890 = vsel %vm289, %v5378, %v5566
    %v5891 = vsel %vm289, %v5379, %v5568
    %v5892 = vsel %vm289, %v5380, %v5570
    %v5893 = vsel %vm289, %v5381, %v5572
    %v5894 = vsel %vm289, %v5382, %v5574
    %v5895 = vsel %vm298, %v5863, %v5640
    %v5896 = vsel %vm298, %v5864, %v5642
    %v5897 = vsel %vm298, %v5865, %v5644
    %v5898 = vsel %vm298, %v5866, %v5646
    %v5899 = vsel %vm298, %v5867, %v5648
    %v5900 = vsel %vm298, %v5868, %v5650
    %v5901 = vsel %vm298, %v5869, %v5652
    %v5902 = vsel %vm298, %v5870, %v5654
    %v5903 = vsel %vm298, %v5871, %v5656
    %v5904 = vsel %vm298, %v5872, %v5658
    %v5905 = vsel %vm298, %v5873, %v5660
    %v5906 = vsel %vm298, %v5874, %v5662
    %v5907 = vsel %vm298, %v5875, %v5664
    %v5908 = vsel %vm298, %v5876, %v5666
    %v5909 = vsel %vm298, %v5877, %v5668
    %v5910 = vsel %vm298, %v5878, %v5670
    %v5911 = vsel %vm298, %v5879, %v5672
    %v5912 = vsel %vm298, %v5880, %v5674
    %v5913 = vsel %vm298, %v5881, %v5676
    %v5914 = vsel %vm298, %v5882, %v5678
    %v5915 = vsel %vm298, %v5883, %v5680
    %v5916 = vsel %vm298, %v5884, %v5682
    %v5917 = vsel %vm298, %v5885, %v5684
    %v5918 = vsel %vm298, %v5886, %v5686
    %v5919 = vsel %vm298, %v5887, %v5688
    %v5920 = vsel %vm298, %v5888, %v5690
    %v5921 = vsel %vm298, %v5889, %v5692
    %v5922 = vsel %vm298, %v5890, %v5694
    %v5923 = vsel %vm298, %v5891, %v5696
    %v5924 = vsel %vm298, %v5892, %v5698
    %v5925 = vsel %vm298, %v5893, %v5700
    %v5926 = vsel %vm298, %v5894, %v5702
    %v5927 = vsel %vm307, %v5895, %v5768
    %v5928 = vsel %vm307, %v5896, %v5770
    %v5929 = vsel %vm307, %v5897, %v5772
    %v5930 = vsel %vm307, %v5898, %v5774
    %v5931 = vsel %vm307, %v5899, %v5776
    %v5932 = vsel %vm307, %v5900, %v5778
    %v5933 = vsel %vm307, %v5901, %v5780
    %v5934 = vsel %vm307, %v5902, %v5782
    %v5935 = vsel %vm307, %v5903, %v5784
    %v5936 = vsel %vm307, %v5904, %v5786
    %v5937 = vsel %vm307, %v5905, %v5788
    %v5938 = vsel %vm307, %v5906, %v5790
    %v5939 = vsel %vm307, %v5907, %v5792
    %v5940 = vsel %vm307, %v5908, %v5794
    %v5941 = vsel %vm307, %v5909, %v5796
    %v5942 = vsel %vm307, %v5910, %v5798
    %v5943 = vsel %vm307, %v5911, %v5800
    %v5944 = vsel %vm307, %v5912, %v5802
    %v5945 = vsel %vm307, %v5913, %v5804
    %v5946 = vsel %vm307, %v5914, %v5806
    %v5947 = vsel %vm307, %v5915, %v5808
    %v5948 = vsel %vm307, %v5916, %v5810
    %v5949 = vsel %vm307, %v5917, %v5812
    %v5950 = vsel %vm307, %v5918, %v5814
    %v5951 = vsel %vm307, %v5919, %v5816
    %v5952 = vsel %vm307, %v5920, %v5818
    %v5953 = vsel %vm307, %v5921, %v5820
    %v5954 = vsel %vm307, %v5922, %v5822
    %v5955 = vsel %vm307, %v5923, %v5824
    %v5956 = vsel %vm307, %v5924, %v5826
    %v5957 = vsel %vm307, %v5925, %v5828
    %v5958 = vsel %vm307, %v5926, %v5830
    %v5959 = vsel %vm298, %v4984, 0
    %v5961 = vsel %vm298, %v4987, 0
    %5963 = vmatpush.msra.mxu0 0.0
    %5964 = vmatpush.msra.mxu0 0.0
    %5965 = vmatpush.msra.mxu0 0.0
    %5966 = vmatpush.msra.mxu0 0.0
    %5967 = vmatpush.msra.mxu0 0.0
    %5968 = vmatpush.msra.mxu0 0.0
    %5969 = vmatpush.msra.mxu0 0.0
    %5970 = vmatpush.msra.mxu0 0.0
    %5971 = vmatpush.msra.mxu0 0.0
    %5972 = vmatpush.msra.mxu0 0.0
    %5973 = vmatpush.msra.mxu0 0.0
    %5974 = vmatpush.msra.mxu0 0.0
    %5975 = vmatpush.msra.mxu0 %v5930
    %5976 = vmatpush.msra.mxu0 %v5929
    %5977 = vmatpush.msra.mxu0 %v5928
    %5978 = vmatpush.msra.mxu0 %v5927
    %5979 = vmatmul.f32.gmra.mxu0 %v5959
    %v5980 = vpop.f32.mrf.mxu0
    %v5981 = vadd.f32 %v308, %v5980
    %5982 = vmatmul.f32.gmra.mxu0 %v5961
    %v5983 = vpop.f32.mrf.mxu0
    %v5984 = vadd.f32 %v308, %v5983
    %5985 = vdwg.mxu0
    %v5986 = vsel %vm298, %v4990, 0
    %v5988 = vsel %vm298, %v4993, 0
    %5990 = vmatpush.msra.mxu0 0.0
    %5991 = vmatpush.msra.mxu0 0.0
    %5992 = vmatpush.msra.mxu0 0.0
    %5993 = vmatpush.msra.mxu0 0.0
    %5994 = vmatpush.msra.mxu0 0.0
    %5995 = vmatpush.msra.mxu0 0.0
    %5996 = vmatpush.msra.mxu0 0.0
    %5997 = vmatpush.msra.mxu0 0.0
    %5998 = vmatpush.msra.mxu0 0.0
    %5999 = vmatpush.msra.mxu0 0.0
    %6000 = vmatpush.msra.mxu0 0.0
    %6001 = vmatpush.msra.mxu0 0.0
    %6002 = vmatpush.msra.mxu0 %v5934
    %6003 = vmatpush.msra.mxu0 %v5933
    %6004 = vmatpush.msra.mxu0 %v5932
    %6005 = vmatpush.msra.mxu0 %v5931
    %6006 = vmatmul.f32.gmra.mxu0 %v5986
    %v6007 = vpop.f32.mrf.mxu0
    %v6008 = vadd.f32 %v309, %v6007
    %6009 = vmatmul.f32.gmra.mxu0 %v5988
    %v6010 = vpop.f32.mrf.mxu0
    %v6011 = vadd.f32 %v309, %v6010
    %6012 = vdwg.mxu0
    %v6013 = vsel %vm298, %v4996, 0
    %v6015 = vsel %vm298, %v4999, 0
    %6017 = vmatpush.msra.mxu0 0.0
    %6018 = vmatpush.msra.mxu0 0.0
    %6019 = vmatpush.msra.mxu0 0.0
    %6020 = vmatpush.msra.mxu0 0.0
    %6021 = vmatpush.msra.mxu0 0.0
    %6022 = vmatpush.msra.mxu0 0.0
    %6023 = vmatpush.msra.mxu0 0.0
    %6024 = vmatpush.msra.mxu0 0.0
    %6025 = vmatpush.msra.mxu0 0.0
    %6026 = vmatpush.msra.mxu0 0.0
    %6027 = vmatpush.msra.mxu0 0.0
    %6028 = vmatpush.msra.mxu0 0.0
    %6029 = vmatpush.msra.mxu0 %v5938
    %6030 = vmatpush.msra.mxu0 %v5937
    %6031 = vmatpush.msra.mxu0 %v5936
    %6032 = vmatpush.msra.mxu0 %v5935
    %6033 = vmatmul.f32.gmra.mxu0 %v6013
    %v6034 = vpop.f32.mrf.mxu0
    %v6035 = vadd.f32 %v310, %v6034
    %6036 = vmatmul.f32.gmra.mxu0 %v6015
    %v6037 = vpop.f32.mrf.mxu0
    %v6038 = vadd.f32 %v310, %v6037
    %6039 = vdwg.mxu0
    %v6040 = vsel %vm298, %v5002, 0
    %v6042 = vsel %vm298, %v5005, 0
    %6044 = vmatpush.msra.mxu0 0.0
    %6045 = vmatpush.msra.mxu0 0.0
    %6046 = vmatpush.msra.mxu0 0.0
    %6047 = vmatpush.msra.mxu0 0.0
    %6048 = vmatpush.msra.mxu0 0.0
    %6049 = vmatpush.msra.mxu0 0.0
    %6050 = vmatpush.msra.mxu0 0.0
    %6051 = vmatpush.msra.mxu0 0.0
    %6052 = vmatpush.msra.mxu0 0.0
    %6053 = vmatpush.msra.mxu0 0.0
    %6054 = vmatpush.msra.mxu0 0.0
    %6055 = vmatpush.msra.mxu0 0.0
    %6056 = vmatpush.msra.mxu0 %v5942
    %6057 = vmatpush.msra.mxu0 %v5941
    %6058 = vmatpush.msra.mxu0 %v5940
    %6059 = vmatpush.msra.mxu0 %v5939
    %6060 = vmatmul.f32.gmra.mxu0 %v6040
    %v6061 = vpop.f32.mrf.mxu0
    %v6062 = vadd.f32 %v311, %v6061
    %6063 = vmatmul.f32.gmra.mxu0 %v6042
    %v6064 = vpop.f32.mrf.mxu0
    %v6065 = vadd.f32 %v311, %v6064
    %6066 = vdwg.mxu0
    %v6067 = vsel %vm298, %v5008, 0
    %v6069 = vsel %vm298, %v5011, 0
    %6071 = vmatpush.msra.mxu0 0.0
    %6072 = vmatpush.msra.mxu0 0.0
    %6073 = vmatpush.msra.mxu0 0.0
    %6074 = vmatpush.msra.mxu0 0.0
    %6075 = vmatpush.msra.mxu0 0.0
    %6076 = vmatpush.msra.mxu0 0.0
    %6077 = vmatpush.msra.mxu0 0.0
    %6078 = vmatpush.msra.mxu0 0.0
    %6079 = vmatpush.msra.mxu0 0.0
    %6080 = vmatpush.msra.mxu0 0.0
    %6081 = vmatpush.msra.mxu0 0.0
    %6082 = vmatpush.msra.mxu0 0.0
    %6083 = vmatpush.msra.mxu0 %v5946
    %6084 = vmatpush.msra.mxu0 %v5945
    %6085 = vmatpush.msra.mxu0 %v5944
    %6086 = vmatpush.msra.mxu0 %v5943
    %6087 = vmatmul.f32.gmra.mxu0 %v6067
    %v6088 = vpop.f32.mrf.mxu0
    %v6089 = vadd.f32 %v312, %v6088
    %6090 = vmatmul.f32.gmra.mxu0 %v6069
    %v6091 = vpop.f32.mrf.mxu0
    %v6092 = vadd.f32 %v312, %v6091
    %6093 = vdwg.mxu0
    %v6094 = vsel %vm298, %v5014, 0
    %v6096 = vsel %vm298, %v5017, 0
    %6098 = vmatpush.msra.mxu0 0.0
    %6099 = vmatpush.msra.mxu0 0.0
    %6100 = vmatpush.msra.mxu0 0.0
    %6101 = vmatpush.msra.mxu0 0.0
    %6102 = vmatpush.msra.mxu0 0.0
    %6103 = vmatpush.msra.mxu0 0.0
    %6104 = vmatpush.msra.mxu0 0.0
    %6105 = vmatpush.msra.mxu0 0.0
    %6106 = vmatpush.msra.mxu0 0.0
    %6107 = vmatpush.msra.mxu0 0.0
    %6108 = vmatpush.msra.mxu0 0.0
    %6109 = vmatpush.msra.mxu0 0.0
    %6110 = vmatpush.msra.mxu0 %v5950
    %6111 = vmatpush.msra.mxu0 %v5949
    %6112 = vmatpush.msra.mxu0 %v5948
    %6113 = vmatpush.msra.mxu0 %v5947
    %6114 = vmatmul.f32.gmra.mxu0 %v6094
    %v6115 = vpop.f32.mrf.mxu0
    %v6116 = vadd.f32 %v313, %v6115
    %6117 = vmatmul.f32.gmra.mxu0 %v6096
    %v6118 = vpop.f32.mrf.mxu0
    %v6119 = vadd.f32 %v313, %v6118
    %6120 = vdwg.mxu0
    %v6121 = vsel %vm298, %v5020, 0
    %v6123 = vsel %vm298, %v5023, 0
    %6125 = vmatpush.msra.mxu0 0.0
    %6126 = vmatpush.msra.mxu0 0.0
    %6127 = vmatpush.msra.mxu0 0.0
    %6128 = vmatpush.msra.mxu0 0.0
    %6129 = vmatpush.msra.mxu0 0.0
    %6130 = vmatpush.msra.mxu0 0.0
    %6131 = vmatpush.msra.mxu0 0.0
    %6132 = vmatpush.msra.mxu0 0.0
    %6133 = vmatpush.msra.mxu0 0.0
    %6134 = vmatpush.msra.mxu0 0.0
    %6135 = vmatpush.msra.mxu0 0.0
    %6136 = vmatpush.msra.mxu0 0.0
    %6137 = vmatpush.msra.mxu0 %v5954
    %6138 = vmatpush.msra.mxu0 %v5953
    %6139 = vmatpush.msra.mxu0 %v5952
    %6140 = vmatpush.msra.mxu0 %v5951
    %6141 = vmatmul.f32.gmra.mxu0 %v6121
    %v6142 = vpop.f32.mrf.mxu0
    %v6143 = vadd.f32 %v314, %v6142
    %6144 = vmatmul.f32.gmra.mxu0 %v6123
    %v6145 = vpop.f32.mrf.mxu0
    %v6146 = vadd.f32 %v314, %v6145
    %6147 = vdwg.mxu0
    %v6148 = vsel %vm298, %v5026, 0
    %v6150 = vsel %vm298, %v5029, 0
    %6152 = vmatpush.msra.mxu0 0.0
    %6153 = vmatpush.msra.mxu0 0.0
    %6154 = vmatpush.msra.mxu0 0.0
    %6155 = vmatpush.msra.mxu0 0.0
    %6156 = vmatpush.msra.mxu0 0.0
    %6157 = vmatpush.msra.mxu0 0.0
    %6158 = vmatpush.msra.mxu0 0.0
    %6159 = vmatpush.msra.mxu0 0.0
    %6160 = vmatpush.msra.mxu0 0.0
    %6161 = vmatpush.msra.mxu0 0.0
    %6162 = vmatpush.msra.mxu0 0.0
    %6163 = vmatpush.msra.mxu0 0.0
    %6164 = vmatpush.msra.mxu0 %v5958
    %6165 = vmatpush.msra.mxu0 %v5957
    %6166 = vmatpush.msra.mxu0 %v5956
    %6167 = vmatpush.msra.mxu0 %v5955
    %6168 = vmatmul.f32.gmra.mxu0 %v6148
    %v6169 = vpop.f32.mrf.mxu0
    %v6170 = vadd.f32 %v315, %v6169
    %6171 = vmatmul.f32.gmra.mxu0 %v6150
    %v6172 = vpop.f32.mrf.mxu0
    %v6173 = vadd.f32 %v315, %v6172
    %6174 = vdwg.mxu0
    %v6175 = vsel %vm289, %v5981, -inf
    %6176 = vmax.xlane.f32.xlu0 %v6175
    %v6177 = vpop.xlane.xlu0 %6176
    %v6178 = vsel %vm289, %v5984, -inf
    %6179 = vmax.xlane.f32.xlu0 %v6178
    %v6180 = vpop.xlane.xlu0 %6179
    %v6181 = vsel %vm289, %v6008, -inf
    %6182 = vmax.xlane.f32.xlu0 %v6181
    %v6183 = vpop.xlane.xlu0 %6182
    %v6184 = vsel %vm289, %v6011, -inf
    %6185 = vmax.xlane.f32.xlu0 %v6184
    %v6186 = vpop.xlane.xlu0 %6185
    %v6187 = vsel %vm289, %v6035, -inf
    %6188 = vmax.xlane.f32.xlu0 %v6187
    %v6189 = vpop.xlane.xlu0 %6188
    %v6190 = vsel %vm289, %v6038, -inf
    %6191 = vmax.xlane.f32.xlu0 %v6190
    %v6192 = vpop.xlane.xlu0 %6191
    %v6193 = vsel %vm289, %v6062, -inf
    %6194 = vmax.xlane.f32.xlu0 %v6193
    %v6195 = vpop.xlane.xlu0 %6194
    %v6196 = vsel %vm289, %v6065, -inf
    %6197 = vmax.xlane.f32.xlu0 %v6196
    %v6198 = vpop.xlane.xlu0 %6197
    %v6199 = vsel %vm289, %v6089, -inf
    %6200 = vmax.xlane.f32.xlu0 %v6199
    %v6201 = vpop.xlane.xlu0 %6200
    %v6202 = vsel %vm289, %v6092, -inf
    %6203 = vmax.xlane.f32.xlu0 %v6202
    %v6204 = vpop.xlane.xlu0 %6203
    %v6205 = vsel %vm289, %v6116, -inf
    %6206 = vmax.xlane.f32.xlu0 %v6205
    %v6207 = vpop.xlane.xlu0 %6206
    %v6208 = vsel %vm289, %v6119, -inf
    %6209 = vmax.xlane.f32.xlu0 %v6208
    %v6210 = vpop.xlane.xlu0 %6209
    %v6211 = vsel %vm289, %v6143, -inf
    %6212 = vmax.xlane.f32.xlu0 %v6211
    %v6213 = vpop.xlane.xlu0 %6212
    %v6214 = vsel %vm289, %v6146, -inf
    %6215 = vmax.xlane.f32.xlu0 %v6214
    %v6216 = vpop.xlane.xlu0 %6215
    %v6217 = vsel %vm289, %v6170, -inf
    %6218 = vmax.xlane.f32.xlu0 %v6217
    %v6219 = vpop.xlane.xlu0 %6218
    %v6220 = vsel %vm289, %v6173, -inf
    %6221 = vmax.xlane.f32.xlu0 %v6220
    %v6222 = vpop.xlane.xlu0 %6221
    %v6223 = vsel %vm1714, %v5981, -inf
    %6224 = vmax.xlane.f32.xlu0 %v6223
    %v6225 = vpop.xlane.xlu0 %6224
    %v6226 = vsel %vm1714, %v5984, -inf
    %6227 = vmax.xlane.f32.xlu0 %v6226
    %v6228 = vpop.xlane.xlu0 %6227
    %v6229 = vsel %vm1714, %v6008, -inf
    %6230 = vmax.xlane.f32.xlu0 %v6229
    %v6231 = vpop.xlane.xlu0 %6230
    %v6232 = vsel %vm1714, %v6011, -inf
    %6233 = vmax.xlane.f32.xlu0 %v6232
    %v6234 = vpop.xlane.xlu0 %6233
    %v6235 = vsel %vm1714, %v6035, -inf
    %6236 = vmax.xlane.f32.xlu0 %v6235
    %v6237 = vpop.xlane.xlu0 %6236
    %v6238 = vsel %vm1714, %v6038, -inf
    %6239 = vmax.xlane.f32.xlu0 %v6238
    %v6240 = vpop.xlane.xlu0 %6239
    %v6241 = vsel %vm1714, %v6062, -inf
    %6242 = vmax.xlane.f32.xlu0 %v6241
    %v6243 = vpop.xlane.xlu0 %6242
    %v6244 = vsel %vm1714, %v6065, -inf
    %6245 = vmax.xlane.f32.xlu0 %v6244
    %v6246 = vpop.xlane.xlu0 %6245
    %v6247 = vsel %vm1714, %v6089, -inf
    %6248 = vmax.xlane.f32.xlu0 %v6247
    %v6249 = vpop.xlane.xlu0 %6248
    %v6250 = vsel %vm1714, %v6092, -inf
    %6251 = vmax.xlane.f32.xlu0 %v6250
    %v6252 = vpop.xlane.xlu0 %6251
    %v6253 = vsel %vm1714, %v6116, -inf
    %6254 = vmax.xlane.f32.xlu0 %v6253
    %v6255 = vpop.xlane.xlu0 %6254
    %v6256 = vsel %vm1714, %v6119, -inf
    %6257 = vmax.xlane.f32.xlu0 %v6256
    %v6258 = vpop.xlane.xlu0 %6257
    %v6259 = vsel %vm1714, %v6143, -inf
    %6260 = vmax.xlane.f32.xlu0 %v6259
    %v6261 = vpop.xlane.xlu0 %6260
    %v6262 = vsel %vm1714, %v6146, -inf
    %6263 = vmax.xlane.f32.xlu0 %v6262
    %v6264 = vpop.xlane.xlu0 %6263
    %v6265 = vsel %vm1714, %v6170, -inf
    %6266 = vmax.xlane.f32.xlu0 %v6265
    %v6267 = vpop.xlane.xlu0 %6266
    %v6268 = vsel %vm1714, %v6173, -inf
    %6269 = vmax.xlane.f32.xlu0 %v6268
    %v6270 = vpop.xlane.xlu0 %6269
    %v6271 = vsel %vm1763, %v5981, -inf
    %6272 = vmax.xlane.f32.xlu0 %v6271
    %v6273 = vpop.xlane.xlu0 %6272
    %v6274 = vsel %vm1763, %v5984, -inf
    %6275 = vmax.xlane.f32.xlu0 %v6274
    %v6276 = vpop.xlane.xlu0 %6275
    %v6277 = vsel %vm1763, %v6008, -inf
    %6278 = vmax.xlane.f32.xlu0 %v6277
    %v6279 = vpop.xlane.xlu0 %6278
    %v6280 = vsel %vm1763, %v6011, -inf
    %6281 = vmax.xlane.f32.xlu0 %v6280
    %v6282 = vpop.xlane.xlu0 %6281
    %v6283 = vsel %vm1763, %v6035, -inf
    %6284 = vmax.xlane.f32.xlu0 %v6283
    %v6285 = vpop.xlane.xlu0 %6284
    %v6286 = vsel %vm1763, %v6038, -inf
    %6287 = vmax.xlane.f32.xlu0 %v6286
    %v6288 = vpop.xlane.xlu0 %6287
    %v6289 = vsel %vm1763, %v6062, -inf
    %6290 = vmax.xlane.f32.xlu0 %v6289
    %v6291 = vpop.xlane.xlu0 %6290
    %v6292 = vsel %vm1763, %v6065, -inf
    %6293 = vmax.xlane.f32.xlu0 %v6292
    %v6294 = vpop.xlane.xlu0 %6293
    %v6295 = vsel %vm1763, %v6089, -inf
    %6296 = vmax.xlane.f32.xlu0 %v6295
    %v6297 = vpop.xlane.xlu0 %6296
    %v6298 = vsel %vm1763, %v6092, -inf
    %6299 = vmax.xlane.f32.xlu0 %v6298
    %v6300 = vpop.xlane.xlu0 %6299
    %v6301 = vsel %vm1763, %v6116, -inf
    %6302 = vmax.xlane.f32.xlu0 %v6301
    %v6303 = vpop.xlane.xlu0 %6302
    %v6304 = vsel %vm1763, %v6119, -inf
    %6305 = vmax.xlane.f32.xlu0 %v6304
    %v6306 = vpop.xlane.xlu0 %6305
    %v6307 = vsel %vm1763, %v6143, -inf
    %6308 = vmax.xlane.f32.xlu0 %v6307
    %v6309 = vpop.xlane.xlu0 %6308
    %v6310 = vsel %vm1763, %v6146, -inf
    %6311 = vmax.xlane.f32.xlu0 %v6310
    %v6312 = vpop.xlane.xlu0 %6311
    %v6313 = vsel %vm1763, %v6170, -inf
    %6314 = vmax.xlane.f32.xlu0 %v6313
    %v6315 = vpop.xlane.xlu0 %6314
    %v6316 = vsel %vm1763, %v6173, -inf
    %6317 = vmax.xlane.f32.xlu0 %v6316
    %v6318 = vpop.xlane.xlu0 %6317
    %v6319 = vsel %vm1812, %v5981, -inf
    %6320 = vmax.xlane.f32.xlu0 %v6319
    %v6321 = vpop.xlane.xlu0 %6320
    %v6322 = vsel %vm1812, %v5984, -inf
    %6323 = vmax.xlane.f32.xlu0 %v6322
    %v6324 = vpop.xlane.xlu0 %6323
    %v6325 = vsel %vm1812, %v6008, -inf
    %6326 = vmax.xlane.f32.xlu0 %v6325
    %v6327 = vpop.xlane.xlu0 %6326
    %v6328 = vsel %vm1812, %v6011, -inf
    %6329 = vmax.xlane.f32.xlu0 %v6328
    %v6330 = vpop.xlane.xlu0 %6329
    %v6331 = vsel %vm1812, %v6035, -inf
    %6332 = vmax.xlane.f32.xlu0 %v6331
    %v6333 = vpop.xlane.xlu0 %6332
    %v6334 = vsel %vm1812, %v6038, -inf
    %6335 = vmax.xlane.f32.xlu0 %v6334
    %v6336 = vpop.xlane.xlu0 %6335
    %v6337 = vsel %vm1812, %v6062, -inf
    %6338 = vmax.xlane.f32.xlu0 %v6337
    %v6339 = vpop.xlane.xlu0 %6338
    %v6340 = vsel %vm1812, %v6065, -inf
    %6341 = vmax.xlane.f32.xlu0 %v6340
    %v6342 = vpop.xlane.xlu0 %6341
    %v6343 = vsel %vm1812, %v6089, -inf
    %6344 = vmax.xlane.f32.xlu0 %v6343
    %v6345 = vpop.xlane.xlu0 %6344
    %v6346 = vsel %vm1812, %v6092, -inf
    %6347 = vmax.xlane.f32.xlu0 %v6346
    %v6348 = vpop.xlane.xlu0 %6347
    %v6349 = vsel %vm1812, %v6116, -inf
    %6350 = vmax.xlane.f32.xlu0 %v6349
    %v6351 = vpop.xlane.xlu0 %6350
    %v6352 = vsel %vm1812, %v6119, -inf
    %6353 = vmax.xlane.f32.xlu0 %v6352
    %v6354 = vpop.xlane.xlu0 %6353
    %v6355 = vsel %vm1812, %v6143, -inf
    %6356 = vmax.xlane.f32.xlu0 %v6355
    %v6357 = vpop.xlane.xlu0 %6356
    %v6358 = vsel %vm1812, %v6146, -inf
    %6359 = vmax.xlane.f32.xlu0 %v6358
    %v6360 = vpop.xlane.xlu0 %6359
    %v6361 = vsel %vm1812, %v6170, -inf
    %6362 = vmax.xlane.f32.xlu0 %v6361
    %v6363 = vpop.xlane.xlu0 %6362
    %v6364 = vsel %vm1812, %v6173, -inf
    %6365 = vmax.xlane.f32.xlu0 %v6364
    %v6366 = vpop.xlane.xlu0 %6365
    %v6367 = vsel %vm289, %v6177, %v6225
    %v6368 = vsel %vm289, %v6180, %v6228
    %v6369 = vsel %vm289, %v6183, %v6231
    %v6370 = vsel %vm289, %v6186, %v6234
    %v6371 = vsel %vm289, %v6189, %v6237
    %v6372 = vsel %vm289, %v6192, %v6240
    %v6373 = vsel %vm289, %v6195, %v6243
    %v6374 = vsel %vm289, %v6198, %v6246
    %v6375 = vsel %vm289, %v6201, %v6249
    %v6376 = vsel %vm289, %v6204, %v6252
    %v6377 = vsel %vm289, %v6207, %v6255
    %v6378 = vsel %vm289, %v6210, %v6258
    %v6379 = vsel %vm289, %v6213, %v6261
    %v6380 = vsel %vm289, %v6216, %v6264
    %v6381 = vsel %vm289, %v6219, %v6267
    %v6382 = vsel %vm289, %v6222, %v6270
    %v6383 = vsel %vm298, %v6367, %v6273
    %v6384 = vsel %vm298, %v6368, %v6276
    %v6385 = vsel %vm298, %v6369, %v6279
    %v6386 = vsel %vm298, %v6370, %v6282
    %v6387 = vsel %vm298, %v6371, %v6285
    %v6388 = vsel %vm298, %v6372, %v6288
    %v6389 = vsel %vm298, %v6373, %v6291
    %v6390 = vsel %vm298, %v6374, %v6294
    %v6391 = vsel %vm298, %v6375, %v6297
    %v6392 = vsel %vm298, %v6376, %v6300
    %v6393 = vsel %vm298, %v6377, %v6303
    %v6394 = vsel %vm298, %v6378, %v6306
    %v6395 = vsel %vm298, %v6379, %v6309
    %v6396 = vsel %vm298, %v6380, %v6312
    %v6397 = vsel %vm298, %v6381, %v6315
    %v6398 = vsel %vm298, %v6382, %v6318
    %v6399 = vsel %vm307, %v6383, %v6321
    %v6400 = vsel %vm307, %v6384, %v6324
    %v6401 = vsel %vm307, %v6385, %v6327
    %v6402 = vsel %vm307, %v6386, %v6330
    %v6403 = vsel %vm307, %v6387, %v6333
    %v6404 = vsel %vm307, %v6388, %v6336
    %v6405 = vsel %vm307, %v6389, %v6339
    %v6406 = vsel %vm307, %v6390, %v6342
    %v6407 = vsel %vm307, %v6391, %v6345
    %v6408 = vsel %vm307, %v6392, %v6348
    %v6409 = vsel %vm307, %v6393, %v6351
    %v6410 = vsel %vm307, %v6394, %v6354
    %v6411 = vsel %vm307, %v6395, %v6357
    %v6412 = vsel %vm307, %v6396, %v6360
    %v6413 = vsel %vm307, %v6397, %v6363
    %v6414 = vsel %vm307, %v6398, %v6366
    %v6415 = vsub.f32 %v5981, %v6399
    %v6416 = vsub.f32 %v5984, %v6400
    %v6417 = vsub.f32 %v6008, %v6401
    %v6418 = vsub.f32 %v6011, %v6402
    %v6419 = vsub.f32 %v6035, %v6403
    %v6420 = vsub.f32 %v6038, %v6404
    %v6421 = vsub.f32 %v6062, %v6405
    %v6422 = vsub.f32 %v6065, %v6406
    %v6423 = vsub.f32 %v6089, %v6407
    %v6424 = vsub.f32 %v6092, %v6408
    %v6425 = vsub.f32 %v6116, %v6409
    %v6426 = vsub.f32 %v6119, %v6410
    %v6427 = vsub.f32 %v6143, %v6411
    %v6428 = vsub.f32 %v6146, %v6412
    %v6429 = vsub.f32 %v6170, %v6413
    %v6430 = vsub.f32 %v6173, %v6414
    %v6431 = vmul.f32 %v6415, 1.442695
    %v6432 = vpow.pop %v6431
    %v6433 = vmul.f32 %v6416, 1.442695
    %v6434 = vpow.pop %v6433
    %v6435 = vmul.f32 %v6417, 1.442695
    %v6436 = vpow.pop %v6435
    %v6437 = vmul.f32 %v6418, 1.442695
    %v6438 = vpow.pop %v6437
    %v6439 = vmul.f32 %v6419, 1.442695
    %v6440 = vpow.pop %v6439
    %v6441 = vmul.f32 %v6420, 1.442695
    %v6442 = vpow.pop %v6441
    %v6443 = vmul.f32 %v6421, 1.442695
    %v6444 = vpow.pop %v6443
    %v6445 = vmul.f32 %v6422, 1.442695
    %v6446 = vpow.pop %v6445
    %v6447 = vmul.f32 %v6423, 1.442695
    %v6448 = vpow.pop %v6447
    %v6449 = vmul.f32 %v6424, 1.442695
    %v6450 = vpow.pop %v6449
    %v6451 = vmul.f32 %v6425, 1.442695
    %v6452 = vpow.pop %v6451
    %v6453 = vmul.f32 %v6426, 1.442695
    %v6454 = vpow.pop %v6453
    %v6455 = vmul.f32 %v6427, 1.442695
    %v6456 = vpow.pop %v6455
    %v6457 = vmul.f32 %v6428, 1.442695
    %v6458 = vpow.pop %v6457
    %v6459 = vmul.f32 %v6429, 1.442695
    %v6460 = vpow.pop %v6459
    %v6461 = vmul.f32 %v6430, 1.442695
    %v6462 = vpow.pop %v6461
    %v6463 = vsel %vm289, %v6432, 0.0
    %6464 = vadd.xlane.f32.xlu0 %v6463
    %v6465 = vpop.xlane.xlu0 %6464
    %v6466 = vsel %vm289, %v6434, 0.0
    %6467 = vadd.xlane.f32.xlu0 %v6466
    %v6468 = vpop.xlane.xlu0 %6467
    %v6469 = vsel %vm289, %v6436, 0.0
    %6470 = vadd.xlane.f32.xlu0 %v6469
    %v6471 = vpop.xlane.xlu0 %6470
    %v6472 = vsel %vm289, %v6438, 0.0
    %6473 = vadd.xlane.f32.xlu0 %v6472
    %v6474 = vpop.xlane.xlu0 %6473
    %v6475 = vsel %vm289, %v6440, 0.0
    %6476 = vadd.xlane.f32.xlu0 %v6475
    %v6477 = vpop.xlane.xlu0 %6476
    %v6478 = vsel %vm289, %v6442, 0.0
    %6479 = vadd.xlane.f32.xlu0 %v6478
    %v6480 = vpop.xlane.xlu0 %6479
    %v6481 = vsel %vm289, %v6444, 0.0
    %6482 = vadd.xlane.f32.xlu0 %v6481
    %v6483 = vpop.xlane.xlu0 %6482
    %v6484 = vsel %vm289, %v6446, 0.0
    %6485 = vadd.xlane.f32.xlu0 %v6484
    %v6486 = vpop.xlane.xlu0 %6485
    %v6487 = vsel %vm289, %v6448, 0.0
    %6488 = vadd.xlane.f32.xlu0 %v6487
    %v6489 = vpop.xlane.xlu0 %6488
    %v6490 = vsel %vm289, %v6450, 0.0
    %6491 = vadd.xlane.f32.xlu0 %v6490
    %v6492 = vpop.xlane.xlu0 %6491
    %v6493 = vsel %vm289, %v6452, 0.0
    %6494 = vadd.xlane.f32.xlu0 %v6493
    %v6495 = vpop.xlane.xlu0 %6494
    %v6496 = vsel %vm289, %v6454, 0.0
    %6497 = vadd.xlane.f32.xlu0 %v6496
    %v6498 = vpop.xlane.xlu0 %6497
    %v6499 = vsel %vm289, %v6456, 0.0
    %6500 = vadd.xlane.f32.xlu0 %v6499
    %v6501 = vpop.xlane.xlu0 %6500
    %v6502 = vsel %vm289, %v6458, 0.0
    %6503 = vadd.xlane.f32.xlu0 %v6502
    %v6504 = vpop.xlane.xlu0 %6503
    %v6505 = vsel %vm289, %v6460, 0.0
    %6506 = vadd.xlane.f32.xlu0 %v6505
    %v6507 = vpop.xlane.xlu0 %6506
    %v6508 = vsel %vm289, %v6462, 0.0
    %6509 = vadd.xlane.f32.xlu0 %v6508
    %v6510 = vpop.xlane.xlu0 %6509
    %v6511 = vrcp.pop %v6465
    %v6512 = vrcp.pop %v6468
    %v6513 = vrcp.pop %v6471
    %v6514 = vrcp.pop %v6474
    %v6515 = vrcp.pop %v6477
    %v6516 = vrcp.pop %v6480
    %v6517 = vrcp.pop %v6483
    %v6518 = vrcp.pop %v6486
    %v6519 = vrcp.pop %v6489
    %v6520 = vrcp.pop %v6492
    %v6521 = vrcp.pop %v6495
    %v6522 = vrcp.pop %v6498
    %v6523 = vrcp.pop %v6501
    %v6524 = vrcp.pop %v6504
    %v6525 = vrcp.pop %v6507
    %v6526 = vrcp.pop %v6510
    %6543 = vrot.lane.b32.xlu0 %v6432, 112
    %v6544 = vpop.permute.xlu0 %6543
    %6545 = vrot.lane.b32.xlu0 %v6434, 112
    %v6546 = vpop.permute.xlu0 %6545
    %6547 = vrot.lane.b32.xlu0 %v6436, 112
    %v6548 = vpop.permute.xlu0 %6547
    %6549 = vrot.lane.b32.xlu0 %v6438, 112
    %v6550 = vpop.permute.xlu0 %6549
    %6551 = vrot.lane.b32.xlu0 %v6440, 112
    %v6552 = vpop.permute.xlu0 %6551
    %6553 = vrot.lane.b32.xlu0 %v6442, 112
    %v6554 = vpop.permute.xlu0 %6553
    %6555 = vrot.lane.b32.xlu0 %v6444, 112
    %v6556 = vpop.permute.xlu0 %6555
    %6557 = vrot.lane.b32.xlu0 %v6446, 112
    %v6558 = vpop.permute.xlu0 %6557
    %6559 = vrot.lane.b32.xlu0 %v6448, 112
    %v6560 = vpop.permute.xlu0 %6559
    %6561 = vrot.lane.b32.xlu0 %v6450, 112
    %v6562 = vpop.permute.xlu0 %6561
    %6563 = vrot.lane.b32.xlu0 %v6452, 112
    %v6564 = vpop.permute.xlu0 %6563
    %6565 = vrot.lane.b32.xlu0 %v6454, 112
    %v6566 = vpop.permute.xlu0 %6565
    %6567 = vrot.lane.b32.xlu0 %v6456, 112
    %v6568 = vpop.permute.xlu0 %6567
    %6569 = vrot.lane.b32.xlu0 %v6458, 112
    %v6570 = vpop.permute.xlu0 %6569
    %6571 = vrot.lane.b32.xlu0 %v6460, 112
    %v6572 = vpop.permute.xlu0 %6571
    %6573 = vrot.lane.b32.xlu0 %v6462, 112
    %v6574 = vpop.permute.xlu0 %6573
    %v6591 = vsel %vm289, %v6544, 0.0
    %6592 = vadd.xlane.f32.xlu0 %v6591
    %v6593 = vpop.xlane.xlu0 %6592
    %v6594 = vsel %vm289, %v6546, 0.0
    %6595 = vadd.xlane.f32.xlu0 %v6594
    %v6596 = vpop.xlane.xlu0 %6595
    %v6597 = vsel %vm289, %v6548, 0.0
    %6598 = vadd.xlane.f32.xlu0 %v6597
    %v6599 = vpop.xlane.xlu0 %6598
    %v6600 = vsel %vm289, %v6550, 0.0
    %6601 = vadd.xlane.f32.xlu0 %v6600
    %v6602 = vpop.xlane.xlu0 %6601
    %v6603 = vsel %vm289, %v6552, 0.0
    %6604 = vadd.xlane.f32.xlu0 %v6603
    %v6605 = vpop.xlane.xlu0 %6604
    %v6606 = vsel %vm289, %v6554, 0.0
    %6607 = vadd.xlane.f32.xlu0 %v6606
    %v6608 = vpop.xlane.xlu0 %6607
    %v6609 = vsel %vm289, %v6556, 0.0
    %6610 = vadd.xlane.f32.xlu0 %v6609
    %v6611 = vpop.xlane.xlu0 %6610
    %v6612 = vsel %vm289, %v6558, 0.0
    %6613 = vadd.xlane.f32.xlu0 %v6612
    %v6614 = vpop.xlane.xlu0 %6613
    %v6615 = vsel %vm289, %v6560, 0.0
    %6616 = vadd.xlane.f32.xlu0 %v6615
    %v6617 = vpop.xlane.xlu0 %6616
    %v6618 = vsel %vm289, %v6562, 0.0
    %6619 = vadd.xlane.f32.xlu0 %v6618
    %v6620 = vpop.xlane.xlu0 %6619
    %v6621 = vsel %vm289, %v6564, 0.0
    %6622 = vadd.xlane.f32.xlu0 %v6621
    %v6623 = vpop.xlane.xlu0 %6622
    %v6624 = vsel %vm289, %v6566, 0.0
    %6625 = vadd.xlane.f32.xlu0 %v6624
    %v6626 = vpop.xlane.xlu0 %6625
    %v6627 = vsel %vm289, %v6568, 0.0
    %6628 = vadd.xlane.f32.xlu0 %v6627
    %v6629 = vpop.xlane.xlu0 %6628
    %v6630 = vsel %vm289, %v6570, 0.0
    %6631 = vadd.xlane.f32.xlu0 %v6630
    %v6632 = vpop.xlane.xlu0 %6631
    %v6633 = vsel %vm289, %v6572, 0.0
    %6634 = vadd.xlane.f32.xlu0 %v6633
    %v6635 = vpop.xlane.xlu0 %6634
    %v6636 = vsel %vm289, %v6574, 0.0
    %6637 = vadd.xlane.f32.xlu0 %v6636
    %v6638 = vpop.xlane.xlu0 %6637
    %v6639 = vrcp.pop %v6593
    %v6640 = vrcp.pop %v6596
    %v6641 = vrcp.pop %v6599
    %v6642 = vrcp.pop %v6602
    %v6643 = vrcp.pop %v6605
    %v6644 = vrcp.pop %v6608
    %v6645 = vrcp.pop %v6611
    %v6646 = vrcp.pop %v6614
    %v6647 = vrcp.pop %v6617
    %v6648 = vrcp.pop %v6620
    %v6649 = vrcp.pop %v6623
    %v6650 = vrcp.pop %v6626
    %v6651 = vrcp.pop %v6629
    %v6652 = vrcp.pop %v6632
    %v6653 = vrcp.pop %v6635
    %v6654 = vrcp.pop %v6638
    %6655 = vrot.lane.b32.xlu0 %v6432, 96
    %v6656 = vpop.permute.xlu0 %6655
    %6657 = vrot.lane.b32.xlu0 %v6434, 96
    %v6658 = vpop.permute.xlu0 %6657
    %6659 = vrot.lane.b32.xlu0 %v6436, 96
    %v6660 = vpop.permute.xlu0 %6659
    %6661 = vrot.lane.b32.xlu0 %v6438, 96
    %v6662 = vpop.permute.xlu0 %6661
    %6663 = vrot.lane.b32.xlu0 %v6440, 96
    %v6664 = vpop.permute.xlu0 %6663
    %6665 = vrot.lane.b32.xlu0 %v6442, 96
    %v6666 = vpop.permute.xlu0 %6665
    %6667 = vrot.lane.b32.xlu0 %v6444, 96
    %v6668 = vpop.permute.xlu0 %6667
    %6669 = vrot.lane.b32.xlu0 %v6446, 96
    %v6670 = vpop.permute.xlu0 %6669
    %6671 = vrot.lane.b32.xlu0 %v6448, 96
    %v6672 = vpop.permute.xlu0 %6671
    %6673 = vrot.lane.b32.xlu0 %v6450, 96
    %v6674 = vpop.permute.xlu0 %6673
    %6675 = vrot.lane.b32.xlu0 %v6452, 96
    %v6676 = vpop.permute.xlu0 %6675
    %6677 = vrot.lane.b32.xlu0 %v6454, 96
    %v6678 = vpop.permute.xlu0 %6677
    %6679 = vrot.lane.b32.xlu0 %v6456, 96
    %v6680 = vpop.permute.xlu0 %6679
    %6681 = vrot.lane.b32.xlu0 %v6458, 96
    %v6682 = vpop.permute.xlu0 %6681
    %6683 = vrot.lane.b32.xlu0 %v6460, 96
    %v6684 = vpop.permute.xlu0 %6683
    %6685 = vrot.lane.b32.xlu0 %v6462, 96
    %v6686 = vpop.permute.xlu0 %6685
    %v6703 = vsel %vm289, %v6656, 0.0
    %6704 = vadd.xlane.f32.xlu0 %v6703
    %v6705 = vpop.xlane.xlu0 %6704
    %v6706 = vsel %vm289, %v6658, 0.0
    %6707 = vadd.xlane.f32.xlu0 %v6706
    %v6708 = vpop.xlane.xlu0 %6707
    %v6709 = vsel %vm289, %v6660, 0.0
    %6710 = vadd.xlane.f32.xlu0 %v6709
    %v6711 = vpop.xlane.xlu0 %6710
    %v6712 = vsel %vm289, %v6662, 0.0
    %6713 = vadd.xlane.f32.xlu0 %v6712
    %v6714 = vpop.xlane.xlu0 %6713
    %v6715 = vsel %vm289, %v6664, 0.0
    %6716 = vadd.xlane.f32.xlu0 %v6715
    %v6717 = vpop.xlane.xlu0 %6716
    %v6718 = vsel %vm289, %v6666, 0.0
    %6719 = vadd.xlane.f32.xlu0 %v6718
    %v6720 = vpop.xlane.xlu0 %6719
    %v6721 = vsel %vm289, %v6668, 0.0
    %6722 = vadd.xlane.f32.xlu0 %v6721
    %v6723 = vpop.xlane.xlu0 %6722
    %v6724 = vsel %vm289, %v6670, 0.0
    %6725 = vadd.xlane.f32.xlu0 %v6724
    %v6726 = vpop.xlane.xlu0 %6725
    %v6727 = vsel %vm289, %v6672, 0.0
    %6728 = vadd.xlane.f32.xlu0 %v6727
    %v6729 = vpop.xlane.xlu0 %6728
    %v6730 = vsel %vm289, %v6674, 0.0
    %6731 = vadd.xlane.f32.xlu0 %v6730
    %v6732 = vpop.xlane.xlu0 %6731
    %v6733 = vsel %vm289, %v6676, 0.0
    %6734 = vadd.xlane.f32.xlu0 %v6733
    %v6735 = vpop.xlane.xlu0 %6734
    %v6736 = vsel %vm289, %v6678, 0.0
    %6737 = vadd.xlane.f32.xlu0 %v6736
    %v6738 = vpop.xlane.xlu0 %6737
    %v6739 = vsel %vm289, %v6680, 0.0
    %6740 = vadd.xlane.f32.xlu0 %v6739
    %v6741 = vpop.xlane.xlu0 %6740
    %v6742 = vsel %vm289, %v6682, 0.0
    %6743 = vadd.xlane.f32.xlu0 %v6742
    %v6744 = vpop.xlane.xlu0 %6743
    %v6745 = vsel %vm289, %v6684, 0.0
    %6746 = vadd.xlane.f32.xlu0 %v6745
    %v6747 = vpop.xlane.xlu0 %6746
    %v6748 = vsel %vm289, %v6686, 0.0
    %6749 = vadd.xlane.f32.xlu0 %v6748
    %v6750 = vpop.xlane.xlu0 %6749
    %v6751 = vrcp.pop %v6705
    %v6752 = vrcp.pop %v6708
    %v6753 = vrcp.pop %v6711
    %v6754 = vrcp.pop %v6714
    %v6755 = vrcp.pop %v6717
    %v6756 = vrcp.pop %v6720
    %v6757 = vrcp.pop %v6723
    %v6758 = vrcp.pop %v6726
    %v6759 = vrcp.pop %v6729
    %v6760 = vrcp.pop %v6732
    %v6761 = vrcp.pop %v6735
    %v6762 = vrcp.pop %v6738
    %v6763 = vrcp.pop %v6741
    %v6764 = vrcp.pop %v6744
    %v6765 = vrcp.pop %v6747
    %v6766 = vrcp.pop %v6750
    %6767 = vrot.lane.b32.xlu0 %v6432, 80
    %v6768 = vpop.permute.xlu0 %6767
    %6769 = vrot.lane.b32.xlu0 %v6434, 80
    %v6770 = vpop.permute.xlu0 %6769
    %6771 = vrot.lane.b32.xlu0 %v6436, 80
    %v6772 = vpop.permute.xlu0 %6771
    %6773 = vrot.lane.b32.xlu0 %v6438, 80
    %v6774 = vpop.permute.xlu0 %6773
    %6775 = vrot.lane.b32.xlu0 %v6440, 80
    %v6776 = vpop.permute.xlu0 %6775
    %6777 = vrot.lane.b32.xlu0 %v6442, 80
    %v6778 = vpop.permute.xlu0 %6777
    %6779 = vrot.lane.b32.xlu0 %v6444, 80
    %v6780 = vpop.permute.xlu0 %6779
    %6781 = vrot.lane.b32.xlu0 %v6446, 80
    %v6782 = vpop.permute.xlu0 %6781
    %6783 = vrot.lane.b32.xlu0 %v6448, 80
    %v6784 = vpop.permute.xlu0 %6783
    %6785 = vrot.lane.b32.xlu0 %v6450, 80
    %v6786 = vpop.permute.xlu0 %6785
    %6787 = vrot.lane.b32.xlu0 %v6452, 80
    %v6788 = vpop.permute.xlu0 %6787
    %6789 = vrot.lane.b32.xlu0 %v6454, 80
    %v6790 = vpop.permute.xlu0 %6789
    %6791 = vrot.lane.b32.xlu0 %v6456, 80
    %v6792 = vpop.permute.xlu0 %6791
    %6793 = vrot.lane.b32.xlu0 %v6458, 80
    %v6794 = vpop.permute.xlu0 %6793
    %6795 = vrot.lane.b32.xlu0 %v6460, 80
    %v6796 = vpop.permute.xlu0 %6795
    %6797 = vrot.lane.b32.xlu0 %v6462, 80
    %v6798 = vpop.permute.xlu0 %6797
    %v6815 = vsel %vm289, %v6768, 0.0
    %6816 = vadd.xlane.f32.xlu0 %v6815
    %v6817 = vpop.xlane.xlu0 %6816
    %v6818 = vsel %vm289, %v6770, 0.0
    %6819 = vadd.xlane.f32.xlu0 %v6818
    %v6820 = vpop.xlane.xlu0 %6819
    %v6821 = vsel %vm289, %v6772, 0.0
    %6822 = vadd.xlane.f32.xlu0 %v6821
    %v6823 = vpop.xlane.xlu0 %6822
    %v6824 = vsel %vm289, %v6774, 0.0
    %6825 = vadd.xlane.f32.xlu0 %v6824
    %v6826 = vpop.xlane.xlu0 %6825
    %v6827 = vsel %vm289, %v6776, 0.0
    %6828 = vadd.xlane.f32.xlu0 %v6827
    %v6829 = vpop.xlane.xlu0 %6828
    %v6830 = vsel %vm289, %v6778, 0.0
    %6831 = vadd.xlane.f32.xlu0 %v6830
    %v6832 = vpop.xlane.xlu0 %6831
    %v6833 = vsel %vm289, %v6780, 0.0
    %6834 = vadd.xlane.f32.xlu0 %v6833
    %v6835 = vpop.xlane.xlu0 %6834
    %v6836 = vsel %vm289, %v6782, 0.0
    %6837 = vadd.xlane.f32.xlu0 %v6836
    %v6838 = vpop.xlane.xlu0 %6837
    %v6839 = vsel %vm289, %v6784, 0.0
    %6840 = vadd.xlane.f32.xlu0 %v6839
    %v6841 = vpop.xlane.xlu0 %6840
    %v6842 = vsel %vm289, %v6786, 0.0
    %6843 = vadd.xlane.f32.xlu0 %v6842
    %v6844 = vpop.xlane.xlu0 %6843
    %v6845 = vsel %vm289, %v6788, 0.0
    %6846 = vadd.xlane.f32.xlu0 %v6845
    %v6847 = vpop.xlane.xlu0 %6846
    %v6848 = vsel %vm289, %v6790, 0.0
    %6849 = vadd.xlane.f32.xlu0 %v6848
    %v6850 = vpop.xlane.xlu0 %6849
    %v6851 = vsel %vm289, %v6792, 0.0
    %6852 = vadd.xlane.f32.xlu0 %v6851
    %v6853 = vpop.xlane.xlu0 %6852
    %v6854 = vsel %vm289, %v6794, 0.0
    %6855 = vadd.xlane.f32.xlu0 %v6854
    %v6856 = vpop.xlane.xlu0 %6855
    %v6857 = vsel %vm289, %v6796, 0.0
    %6858 = vadd.xlane.f32.xlu0 %v6857
    %v6859 = vpop.xlane.xlu0 %6858
    %v6860 = vsel %vm289, %v6798, 0.0
    %6861 = vadd.xlane.f32.xlu0 %v6860
    %v6862 = vpop.xlane.xlu0 %6861
    %v6863 = vrcp.pop %v6817
    %v6864 = vrcp.pop %v6820
    %v6865 = vrcp.pop %v6823
    %v6866 = vrcp.pop %v6826
    %v6867 = vrcp.pop %v6829
    %v6868 = vrcp.pop %v6832
    %v6869 = vrcp.pop %v6835
    %v6870 = vrcp.pop %v6838
    %v6871 = vrcp.pop %v6841
    %v6872 = vrcp.pop %v6844
    %v6873 = vrcp.pop %v6847
    %v6874 = vrcp.pop %v6850
    %v6875 = vrcp.pop %v6853
    %v6876 = vrcp.pop %v6856
    %v6877 = vrcp.pop %v6859
    %v6878 = vrcp.pop %v6862
    %v6879 = vsel %vm289, %v6511, %v6639
    %v6880 = vsel %vm289, %v6512, %v6640
    %v6881 = vsel %vm289, %v6513, %v6641
    %v6882 = vsel %vm289, %v6514, %v6642
    %v6883 = vsel %vm289, %v6515, %v6643
    %v6884 = vsel %vm289, %v6516, %v6644
    %v6885 = vsel %vm289, %v6517, %v6645
    %v6886 = vsel %vm289, %v6518, %v6646
    %v6887 = vsel %vm289, %v6519, %v6647
    %v6888 = vsel %vm289, %v6520, %v6648
    %v6889 = vsel %vm289, %v6521, %v6649
    %v6890 = vsel %vm289, %v6522, %v6650
    %v6891 = vsel %vm289, %v6523, %v6651
    %v6892 = vsel %vm289, %v6524, %v6652
    %v6893 = vsel %vm289, %v6525, %v6653
    %v6894 = vsel %vm289, %v6526, %v6654
    %v6895 = vsel %vm298, %v6879, %v6751
    %v6896 = vsel %vm298, %v6880, %v6752
    %v6897 = vsel %vm298, %v6881, %v6753
    %v6898 = vsel %vm298, %v6882, %v6754
    %v6899 = vsel %vm298, %v6883, %v6755
    %v6900 = vsel %vm298, %v6884, %v6756
    %v6901 = vsel %vm298, %v6885, %v6757
    %v6902 = vsel %vm298, %v6886, %v6758
    %v6903 = vsel %vm298, %v6887, %v6759
    %v6904 = vsel %vm298, %v6888, %v6760
    %v6905 = vsel %vm298, %v6889, %v6761
    %v6906 = vsel %vm298, %v6890, %v6762
    %v6907 = vsel %vm298, %v6891, %v6763
    %v6908 = vsel %vm298, %v6892, %v6764
    %v6909 = vsel %vm298, %v6893, %v6765
    %v6910 = vsel %vm298, %v6894, %v6766
    %v6911 = vsel %vm307, %v6895, %v6863
    %v6912 = vsel %vm307, %v6896, %v6864
    %v6913 = vsel %vm307, %v6897, %v6865
    %v6914 = vsel %vm307, %v6898, %v6866
    %v6915 = vsel %vm307, %v6899, %v6867
    %v6916 = vsel %vm307, %v6900, %v6868
    %v6917 = vsel %vm307, %v6901, %v6869
    %v6918 = vsel %vm307, %v6902, %v6870
    %v6919 = vsel %vm307, %v6903, %v6871
    %v6920 = vsel %vm307, %v6904, %v6872
    %v6921 = vsel %vm307, %v6905, %v6873
    %v6922 = vsel %vm307, %v6906, %v6874
    %v6923 = vsel %vm307, %v6907, %v6875
    %v6924 = vsel %vm307, %v6908, %v6876
    %v6925 = vsel %vm307, %v6909, %v6877
    %v6926 = vsel %vm307, %v6910, %v6878
    %v6927 = vmul.f32 %v6432, %v6911
    %v6928 = vmul.f32 %v6434, %v6912
    %v6929 = vmul.f32 %v6436, %v6913
    %v6930 = vmul.f32 %v6438, %v6914
    %v6931 = vmul.f32 %v6440, %v6915
    %v6932 = vmul.f32 %v6442, %v6916
    %v6933 = vmul.f32 %v6444, %v6917
    %v6934 = vmul.f32 %v6446, %v6918
    %v6935 = vmul.f32 %v6448, %v6919
    %v6936 = vmul.f32 %v6450, %v6920
    %v6937 = vmul.f32 %v6452, %v6921
    %v6938 = vmul.f32 %v6454, %v6922
    %v6939 = vmul.f32 %v6456, %v6923
    %v6940 = vmul.f32 %v6458, %v6924
    %v6941 = vmul.f32 %v6460, %v6925
    %v6942 = vmul.f32 %v6462, %v6926
    %s6943 = scalar_lea.vmem [#allocation5], 32
    %v6944 = vld [vmem:[%s6943] sm:$0xff]
    %v6945 = vld [vmem:[%s6943 + $0x8] sm:$0xff]
    %v6946 = vld [vmem:[%s6943 + $0x10] sm:$0xff]
    %v6947 = vld [vmem:[%s6943 + $0x18] sm:$0xff]
    %6948 = vmatpush.msra.mxu0 0.0
    %6949 = vmatpush.msra.mxu0 0.0
    %6950 = vmatpush.msra.mxu0 0.0
    %6951 = vmatpush.msra.mxu0 0.0
    %6952 = vmatpush.msra.mxu0 0.0
    %6953 = vmatpush.msra.mxu0 0.0
    %6954 = vmatpush.msra.mxu0 0.0
    %6955 = vmatpush.msra.mxu0 0.0
    %6956 = vmatpush.msra.mxu0 0.0
    %6957 = vmatpush.msra.mxu0 0.0
    %6958 = vmatpush.msra.mxu0 0.0
    %6959 = vmatpush.msra.mxu0 0.0
    %6960 = vmatpush.msra.mxu0 %v6947
    %6961 = vmatpush.msra.mxu0 %v6946
    %6962 = vmatpush.msra.mxu0 %v6945
    %6963 = vmatpush.msra.mxu0 %v6944
    %6964 = vmatmul.f32.gmra.mxu0 %v4919
    %v6965 = vpop.f32.mrf.mxu0
    %v6966 = vadd.f32 0.0, %v6965
    %6967 = vmatmul.f32.gmra.mxu0 %v4922
    %v6968 = vpop.f32.mrf.mxu0
    %v6969 = vadd.f32 0.0, %v6968
    %6970 = vmatmul.f32.gmra.mxu0 %v4925
    %v6971 = vpop.f32.mrf.mxu0
    %v6972 = vadd.f32 0.0, %v6971
    %6973 = vmatmul.f32.gmra.mxu0 %v4928
    %v6974 = vpop.f32.mrf.mxu0
    %v6975 = vadd.f32 0.0, %v6974
    %6976 = vmatmul.f32.gmra.mxu0 %v4931
    %v6977 = vpop.f32.mrf.mxu0
    %v6978 = vadd.f32 0.0, %v6977
    %6979 = vmatmul.f32.gmra.mxu0 %v4934
    %v6980 = vpop.f32.mrf.mxu0
    %v6981 = vadd.f32 0.0, %v6980
    %6982 = vmatmul.f32.gmra.mxu0 %v4937
    %v6983 = vpop.f32.mrf.mxu0
    %v6984 = vadd.f32 0.0, %v6983
    %6985 = vmatmul.f32.gmra.mxu0 %v4940
    %v6986 = vpop.f32.mrf.mxu0
    %v6987 = vadd.f32 0.0, %v6986
    %6988 = vmatmul.f32.gmra.mxu0 %v4943
    %v6989 = vpop.f32.mrf.mxu0
    %v6990 = vadd.f32 0.0, %v6989
    %6991 = vmatmul.f32.gmra.mxu0 %v4946
    %v6992 = vpop.f32.mrf.mxu0
    %v6993 = vadd.f32 0.0, %v6992
    %6994 = vmatmul.f32.gmra.mxu0 %v4949
    %v6995 = vpop.f32.mrf.mxu0
    %v6996 = vadd.f32 0.0, %v6995
    %6997 = vmatmul.f32.gmra.mxu0 %v4952
    %v6998 = vpop.f32.mrf.mxu0
    %v6999 = vadd.f32 0.0, %v6998
    %7000 = vmatmul.f32.gmra.mxu0 %v4955
    %v7001 = vpop.f32.mrf.mxu0
    %v7002 = vadd.f32 0.0, %v7001
    %7003 = vmatmul.f32.gmra.mxu0 %v4958
    %v7004 = vpop.f32.mrf.mxu0
    %v7005 = vadd.f32 0.0, %v7004
    %7006 = vmatmul.f32.gmra.mxu0 %v4961
    %v7007 = vpop.f32.mrf.mxu0
    %v7008 = vadd.f32 0.0, %v7007
    %7009 = vmatmul.f32.gmra.mxu0 %v4964
    %v7010 = vpop.f32.mrf.mxu0
    %v7011 = vadd.f32 0.0, %v7010
    %7012 = vdwg.mxu0
    %7015 = vrot.lane.b32.xlu0 %v6927, 112
    %v7016 = vpop.permute.xlu0 %7015
    %7017 = vrot.lane.b32.xlu0 %v6928, 112
    %v7018 = vpop.permute.xlu0 %7017
    %7021 = vrot.lane.b32.xlu0 %v6966, 96
    %v7022 = vpop.permute.xlu0 %7021
    %7023 = vrot.lane.b32.xlu0 %v6969, 96
    %v7024 = vpop.permute.xlu0 %7023
    %v7027 = vsel %vm289, %v7016, 0
    %v7029 = vsel %vm289, %v7018, 0
    %7031 = vmatpush.msra.mxu0 0.0
    %7032 = vmatpush.msra.mxu0 0.0
    %7033 = vmatpush.msra.mxu0 0.0
    %7034 = vmatpush.msra.mxu0 0.0
    %7035 = vmatpush.msra.mxu0 0.0
    %7036 = vmatpush.msra.mxu0 0.0
    %7037 = vmatpush.msra.mxu0 0.0
    %7038 = vmatpush.msra.mxu0 0.0
    %7039 = vmatpush.msra.mxu0 0.0
    %7040 = vmatpush.msra.mxu0 0.0
    %7041 = vmatpush.msra.mxu0 0.0
    %7042 = vmatpush.msra.mxu0 0.0
    %7043 = vmatpush.msra.mxu0 0.0
    %7044 = vmatpush.msra.mxu0 0.0
    %7045 = vmatpush.msra.mxu0 %v7024
    %7046 = vmatpush.msra.mxu0 %v7022
    %7047 = vmatmul.f32.gmra.mxu0 %v7027
    %v7048 = vpop.f32.mrf.mxu0
    %v7049 = vadd.f32 0.0, %v7048
    %7050 = vmatmul.f32.gmra.mxu0 %v7029
    %v7051 = vpop.f32.mrf.mxu0
    %v7052 = vadd.f32 0.0, %v7051
    %7053 = vdwg.mxu0
    %7056 = vrot.lane.b32.xlu0 %v6929, 112
    %v7057 = vpop.permute.xlu0 %7056
    %7058 = vrot.lane.b32.xlu0 %v6930, 112
    %v7059 = vpop.permute.xlu0 %7058
    %7062 = vrot.lane.b32.xlu0 %v6972, 96
    %v7063 = vpop.permute.xlu0 %7062
    %7064 = vrot.lane.b32.xlu0 %v6975, 96
    %v7065 = vpop.permute.xlu0 %7064
    %v7068 = vsel %vm289, %v7057, 0
    %v7070 = vsel %vm289, %v7059, 0
    %7072 = vmatpush.msra.mxu0 0.0
    %7073 = vmatpush.msra.mxu0 0.0
    %7074 = vmatpush.msra.mxu0 0.0
    %7075 = vmatpush.msra.mxu0 0.0
    %7076 = vmatpush.msra.mxu0 0.0
    %7077 = vmatpush.msra.mxu0 0.0
    %7078 = vmatpush.msra.mxu0 0.0
    %7079 = vmatpush.msra.mxu0 0.0
    %7080 = vmatpush.msra.mxu0 0.0
    %7081 = vmatpush.msra.mxu0 0.0
    %7082 = vmatpush.msra.mxu0 0.0
    %7083 = vmatpush.msra.mxu0 0.0
    %7084 = vmatpush.msra.mxu0 0.0
    %7085 = vmatpush.msra.mxu0 0.0
    %7086 = vmatpush.msra.mxu0 %v7065
    %7087 = vmatpush.msra.mxu0 %v7063
    %7088 = vmatmul.f32.gmra.mxu0 %v7068
    %v7089 = vpop.f32.mrf.mxu0
    %v7090 = vadd.f32 0.0, %v7089
    %7091 = vmatmul.f32.gmra.mxu0 %v7070
    %v7092 = vpop.f32.mrf.mxu0
    %v7093 = vadd.f32 0.0, %v7092
    %7094 = vdwg.mxu0
    %7097 = vrot.lane.b32.xlu0 %v6931, 112
    %v7098 = vpop.permute.xlu0 %7097
    %7099 = vrot.lane.b32.xlu0 %v6932, 112
    %v7100 = vpop.permute.xlu0 %7099
    %7103 = vrot.lane.b32.xlu0 %v6978, 96
    %v7104 = vpop.permute.xlu0 %7103
    %7105 = vrot.lane.b32.xlu0 %v6981, 96
    %v7106 = vpop.permute.xlu0 %7105
    %v7109 = vsel %vm289, %v7098, 0
    %v7111 = vsel %vm289, %v7100, 0
    %7113 = vmatpush.msra.mxu0 0.0
    %7114 = vmatpush.msra.mxu0 0.0
    %7115 = vmatpush.msra.mxu0 0.0
    %7116 = vmatpush.msra.mxu0 0.0
    %7117 = vmatpush.msra.mxu0 0.0
    %7118 = vmatpush.msra.mxu0 0.0
    %7119 = vmatpush.msra.mxu0 0.0
    %7120 = vmatpush.msra.mxu0 0.0
    %7121 = vmatpush.msra.mxu0 0.0
    %7122 = vmatpush.msra.mxu0 0.0
    %7123 = vmatpush.msra.mxu0 0.0
    %7124 = vmatpush.msra.mxu0 0.0
    %7125 = vmatpush.msra.mxu0 0.0
    %7126 = vmatpush.msra.mxu0 0.0
    %7127 = vmatpush.msra.mxu0 %v7106
    %7128 = vmatpush.msra.mxu0 %v7104
    %7129 = vmatmul.f32.gmra.mxu0 %v7109
    %v7130 = vpop.f32.mrf.mxu0
    %v7131 = vadd.f32 0.0, %v7130
    %7132 = vmatmul.f32.gmra.mxu0 %v7111
    %v7133 = vpop.f32.mrf.mxu0
    %v7134 = vadd.f32 0.0, %v7133
    %7135 = vdwg.mxu0
    %7138 = vrot.lane.b32.xlu0 %v6933, 112
    %v7139 = vpop.permute.xlu0 %7138
    %7140 = vrot.lane.b32.xlu0 %v6934, 112
    %v7141 = vpop.permute.xlu0 %7140
    %7144 = vrot.lane.b32.xlu0 %v6984, 96
    %v7145 = vpop.permute.xlu0 %7144
    %7146 = vrot.lane.b32.xlu0 %v6987, 96
    %v7147 = vpop.permute.xlu0 %7146
    %v7150 = vsel %vm289, %v7139, 0
    %v7152 = vsel %vm289, %v7141, 0
    %7154 = vmatpush.msra.mxu0 0.0
    %7155 = vmatpush.msra.mxu0 0.0
    %7156 = vmatpush.msra.mxu0 0.0
    %7157 = vmatpush.msra.mxu0 0.0
    %7158 = vmatpush.msra.mxu0 0.0
    %7159 = vmatpush.msra.mxu0 0.0
    %7160 = vmatpush.msra.mxu0 0.0
    %7161 = vmatpush.msra.mxu0 0.0
    %7162 = vmatpush.msra.mxu0 0.0
    %7163 = vmatpush.msra.mxu0 0.0
    %7164 = vmatpush.msra.mxu0 0.0
    %7165 = vmatpush.msra.mxu0 0.0
    %7166 = vmatpush.msra.mxu0 0.0
    %7167 = vmatpush.msra.mxu0 0.0
    %7168 = vmatpush.msra.mxu0 %v7147
    %7169 = vmatpush.msra.mxu0 %v7145
    %7170 = vmatmul.f32.gmra.mxu0 %v7150
    %v7171 = vpop.f32.mrf.mxu0
    %v7172 = vadd.f32 0.0, %v7171
    %7173 = vmatmul.f32.gmra.mxu0 %v7152
    %v7174 = vpop.f32.mrf.mxu0
    %v7175 = vadd.f32 0.0, %v7174
    %7176 = vdwg.mxu0
    %7179 = vrot.lane.b32.xlu0 %v6935, 112
    %v7180 = vpop.permute.xlu0 %7179
    %7181 = vrot.lane.b32.xlu0 %v6936, 112
    %v7182 = vpop.permute.xlu0 %7181
    %7185 = vrot.lane.b32.xlu0 %v6990, 96
    %v7186 = vpop.permute.xlu0 %7185
    %7187 = vrot.lane.b32.xlu0 %v6993, 96
    %v7188 = vpop.permute.xlu0 %7187
    %v7191 = vsel %vm289, %v7180, 0
    %v7193 = vsel %vm289, %v7182, 0
    %7195 = vmatpush.msra.mxu0 0.0
    %7196 = vmatpush.msra.mxu0 0.0
    %7197 = vmatpush.msra.mxu0 0.0
    %7198 = vmatpush.msra.mxu0 0.0
    %7199 = vmatpush.msra.mxu0 0.0
    %7200 = vmatpush.msra.mxu0 0.0
    %7201 = vmatpush.msra.mxu0 0.0
    %7202 = vmatpush.msra.mxu0 0.0
    %7203 = vmatpush.msra.mxu0 0.0
    %7204 = vmatpush.msra.mxu0 0.0
    %7205 = vmatpush.msra.mxu0 0.0
    %7206 = vmatpush.msra.mxu0 0.0
    %7207 = vmatpush.msra.mxu0 0.0
    %7208 = vmatpush.msra.mxu0 0.0
    %7209 = vmatpush.msra.mxu0 %v7188
    %7210 = vmatpush.msra.mxu0 %v7186
    %7211 = vmatmul.f32.gmra.mxu0 %v7191
    %v7212 = vpop.f32.mrf.mxu0
    %v7213 = vadd.f32 0.0, %v7212
    %7214 = vmatmul.f32.gmra.mxu0 %v7193
    %v7215 = vpop.f32.mrf.mxu0
    %v7216 = vadd.f32 0.0, %v7215
    %7217 = vdwg.mxu0
    %7220 = vrot.lane.b32.xlu0 %v6937, 112
    %v7221 = vpop.permute.xlu0 %7220
    %7222 = vrot.lane.b32.xlu0 %v6938, 112
    %v7223 = vpop.permute.xlu0 %7222
    %7226 = vrot.lane.b32.xlu0 %v6996, 96
    %v7227 = vpop.permute.xlu0 %7226
    %7228 = vrot.lane.b32.xlu0 %v6999, 96
    %v7229 = vpop.permute.xlu0 %7228
    %v7232 = vsel %vm289, %v7221, 0
    %v7234 = vsel %vm289, %v7223, 0
    %7236 = vmatpush.msra.mxu0 0.0
    %7237 = vmatpush.msra.mxu0 0.0
    %7238 = vmatpush.msra.mxu0 0.0
    %7239 = vmatpush.msra.mxu0 0.0
    %7240 = vmatpush.msra.mxu0 0.0
    %7241 = vmatpush.msra.mxu0 0.0
    %7242 = vmatpush.msra.mxu0 0.0
    %7243 = vmatpush.msra.mxu0 0.0
    %7244 = vmatpush.msra.mxu0 0.0
    %7245 = vmatpush.msra.mxu0 0.0
    %7246 = vmatpush.msra.mxu0 0.0
    %7247 = vmatpush.msra.mxu0 0.0
    %7248 = vmatpush.msra.mxu0 0.0
    %7249 = vmatpush.msra.mxu0 0.0
    %7250 = vmatpush.msra.mxu0 %v7229
    %7251 = vmatpush.msra.mxu0 %v7227
    %7252 = vmatmul.f32.gmra.mxu0 %v7232
    %v7253 = vpop.f32.mrf.mxu0
    %v7254 = vadd.f32 0.0, %v7253
    %7255 = vmatmul.f32.gmra.mxu0 %v7234
    %v7256 = vpop.f32.mrf.mxu0
    %v7257 = vadd.f32 0.0, %v7256
    %7258 = vdwg.mxu0
    %7261 = vrot.lane.b32.xlu0 %v6939, 112
    %v7262 = vpop.permute.xlu0 %7261
    %7263 = vrot.lane.b32.xlu0 %v6940, 112
    %v7264 = vpop.permute.xlu0 %7263
    %7267 = vrot.lane.b32.xlu0 %v7002, 96
    %v7268 = vpop.permute.xlu0 %7267
    %7269 = vrot.lane.b32.xlu0 %v7005, 96
    %v7270 = vpop.permute.xlu0 %7269
    %v7273 = vsel %vm289, %v7262, 0
    %v7275 = vsel %vm289, %v7264, 0
    %7277 = vmatpush.msra.mxu0 0.0
    %7278 = vmatpush.msra.mxu0 0.0
    %7279 = vmatpush.msra.mxu0 0.0
    %7280 = vmatpush.msra.mxu0 0.0
    %7281 = vmatpush.msra.mxu0 0.0
    %7282 = vmatpush.msra.mxu0 0.0
    %7283 = vmatpush.msra.mxu0 0.0
    %7284 = vmatpush.msra.mxu0 0.0
    %7285 = vmatpush.msra.mxu0 0.0
    %7286 = vmatpush.msra.mxu0 0.0
    %7287 = vmatpush.msra.mxu0 0.0
    %7288 = vmatpush.msra.mxu0 0.0
    %7289 = vmatpush.msra.mxu0 0.0
    %7290 = vmatpush.msra.mxu0 0.0
    %7291 = vmatpush.msra.mxu0 %v7270
    %7292 = vmatpush.msra.mxu0 %v7268
    %7293 = vmatmul.f32.gmra.mxu0 %v7273
    %v7294 = vpop.f32.mrf.mxu0
    %v7295 = vadd.f32 0.0, %v7294
    %7296 = vmatmul.f32.gmra.mxu0 %v7275
    %v7297 = vpop.f32.mrf.mxu0
    %v7298 = vadd.f32 0.0, %v7297
    %7299 = vdwg.mxu0
    %7302 = vrot.lane.b32.xlu0 %v6941, 112
    %v7303 = vpop.permute.xlu0 %7302
    %7304 = vrot.lane.b32.xlu0 %v6942, 112
    %v7305 = vpop.permute.xlu0 %7304
    %7308 = vrot.lane.b32.xlu0 %v7008, 96
    %v7309 = vpop.permute.xlu0 %7308
    %7310 = vrot.lane.b32.xlu0 %v7011, 96
    %v7311 = vpop.permute.xlu0 %7310
    %v7314 = vsel %vm289, %v7303, 0
    %v7316 = vsel %vm289, %v7305, 0
    %7318 = vmatpush.msra.mxu0 0.0
    %7319 = vmatpush.msra.mxu0 0.0
    %7320 = vmatpush.msra.mxu0 0.0
    %7321 = vmatpush.msra.mxu0 0.0
    %7322 = vmatpush.msra.mxu0 0.0
    %7323 = vmatpush.msra.mxu0 0.0
    %7324 = vmatpush.msra.mxu0 0.0
    %7325 = vmatpush.msra.mxu0 0.0
    %7326 = vmatpush.msra.mxu0 0.0
    %7327 = vmatpush.msra.mxu0 0.0
    %7328 = vmatpush.msra.mxu0 0.0
    %7329 = vmatpush.msra.mxu0 0.0
    %7330 = vmatpush.msra.mxu0 0.0
    %7331 = vmatpush.msra.mxu0 0.0
    %7332 = vmatpush.msra.mxu0 %v7311
    %7333 = vmatpush.msra.mxu0 %v7309
    %7334 = vmatmul.f32.gmra.mxu0 %v7314
    %v7335 = vpop.f32.mrf.mxu0
    %v7336 = vadd.f32 0.0, %v7335
    %7337 = vmatmul.f32.gmra.mxu0 %v7316
    %v7338 = vpop.f32.mrf.mxu0
    %v7339 = vadd.f32 0.0, %v7338
    %7340 = vdwg.mxu0
    %v7341 = vsel %vm289, %v6927, 0
    %v7343 = vsel %vm289, %v6928, 0
    %7345 = vmatpush.msra.mxu0 0.0
    %7346 = vmatpush.msra.mxu0 0.0
    %7347 = vmatpush.msra.mxu0 0.0
    %7348 = vmatpush.msra.mxu0 0.0
    %7349 = vmatpush.msra.mxu0 0.0
    %7350 = vmatpush.msra.mxu0 0.0
    %7351 = vmatpush.msra.mxu0 0.0
    %7352 = vmatpush.msra.mxu0 0.0
    %7353 = vmatpush.msra.mxu0 0.0
    %7354 = vmatpush.msra.mxu0 0.0
    %7355 = vmatpush.msra.mxu0 0.0
    %7356 = vmatpush.msra.mxu0 0.0
    %7357 = vmatpush.msra.mxu0 0.0
    %7358 = vmatpush.msra.mxu0 0.0
    %7359 = vmatpush.msra.mxu0 %v6969
    %7360 = vmatpush.msra.mxu0 %v6966
    %7361 = vmatmul.f32.gmra.mxu0 %v7341
    %v7362 = vpop.f32.mrf.mxu0
    %v7363 = vadd.f32 %v7049, %v7362
    %7364 = vmatmul.f32.gmra.mxu0 %v7343
    %v7365 = vpop.f32.mrf.mxu0
    %v7366 = vadd.f32 %v7052, %v7365
    %7367 = vdwg.mxu0
    %v7368 = vsel %vm289, %v6929, 0
    %v7370 = vsel %vm289, %v6930, 0
    %7372 = vmatpush.msra.mxu0 0.0
    %7373 = vmatpush.msra.mxu0 0.0
    %7374 = vmatpush.msra.mxu0 0.0
    %7375 = vmatpush.msra.mxu0 0.0
    %7376 = vmatpush.msra.mxu0 0.0
    %7377 = vmatpush.msra.mxu0 0.0
    %7378 = vmatpush.msra.mxu0 0.0
    %7379 = vmatpush.msra.mxu0 0.0
    %7380 = vmatpush.msra.mxu0 0.0
    %7381 = vmatpush.msra.mxu0 0.0
    %7382 = vmatpush.msra.mxu0 0.0
    %7383 = vmatpush.msra.mxu0 0.0
    %7384 = vmatpush.msra.mxu0 0.0
    %7385 = vmatpush.msra.mxu0 0.0
    %7386 = vmatpush.msra.mxu0 %v6975
    %7387 = vmatpush.msra.mxu0 %v6972
    %7388 = vmatmul.f32.gmra.mxu0 %v7368
    %v7389 = vpop.f32.mrf.mxu0
    %v7390 = vadd.f32 %v7090, %v7389
    %7391 = vmatmul.f32.gmra.mxu0 %v7370
    %v7392 = vpop.f32.mrf.mxu0
    %v7393 = vadd.f32 %v7093, %v7392
    %7394 = vdwg.mxu0
    %v7395 = vsel %vm289, %v6931, 0
    %v7397 = vsel %vm289, %v6932, 0
    %7399 = vmatpush.msra.mxu0 0.0
    %7400 = vmatpush.msra.mxu0 0.0
    %7401 = vmatpush.msra.mxu0 0.0
    %7402 = vmatpush.msra.mxu0 0.0
    %7403 = vmatpush.msra.mxu0 0.0
    %7404 = vmatpush.msra.mxu0 0.0
    %7405 = vmatpush.msra.mxu0 0.0
    %7406 = vmatpush.msra.mxu0 0.0
    %7407 = vmatpush.msra.mxu0 0.0
    %7408 = vmatpush.msra.mxu0 0.0
    %7409 = vmatpush.msra.mxu0 0.0
    %7410 = vmatpush.msra.mxu0 0.0
    %7411 = vmatpush.msra.mxu0 0.0
    %7412 = vmatpush.msra.mxu0 0.0
    %7413 = vmatpush.msra.mxu0 %v6981
    %7414 = vmatpush.msra.mxu0 %v6978
    %7415 = vmatmul.f32.gmra.mxu0 %v7395
    %v7416 = vpop.f32.mrf.mxu0
    %v7417 = vadd.f32 %v7131, %v7416
    %7418 = vmatmul.f32.gmra.mxu0 %v7397
    %v7419 = vpop.f32.mrf.mxu0
    %v7420 = vadd.f32 %v7134, %v7419
    %7421 = vdwg.mxu0
    %v7422 = vsel %vm289, %v6933, 0
    %v7424 = vsel %vm289, %v6934, 0
    %7426 = vmatpush.msra.mxu0 0.0
    %7427 = vmatpush.msra.mxu0 0.0
    %7428 = vmatpush.msra.mxu0 0.0
    %7429 = vmatpush.msra.mxu0 0.0
    %7430 = vmatpush.msra.mxu0 0.0
    %7431 = vmatpush.msra.mxu0 0.0
    %7432 = vmatpush.msra.mxu0 0.0
    %7433 = vmatpush.msra.mxu0 0.0
    %7434 = vmatpush.msra.mxu0 0.0
    %7435 = vmatpush.msra.mxu0 0.0
    %7436 = vmatpush.msra.mxu0 0.0
    %7437 = vmatpush.msra.mxu0 0.0
    %7438 = vmatpush.msra.mxu0 0.0
    %7439 = vmatpush.msra.mxu0 0.0
    %7440 = vmatpush.msra.mxu0 %v6987
    %7441 = vmatpush.msra.mxu0 %v6984
    %7442 = vmatmul.f32.gmra.mxu0 %v7422
    %v7443 = vpop.f32.mrf.mxu0
    %v7444 = vadd.f32 %v7172, %v7443
    %7445 = vmatmul.f32.gmra.mxu0 %v7424
    %v7446 = vpop.f32.mrf.mxu0
    %v7447 = vadd.f32 %v7175, %v7446
    %7448 = vdwg.mxu0
    %v7449 = vsel %vm289, %v6935, 0
    %v7451 = vsel %vm289, %v6936, 0
    %7453 = vmatpush.msra.mxu0 0.0
    %7454 = vmatpush.msra.mxu0 0.0
    %7455 = vmatpush.msra.mxu0 0.0
    %7456 = vmatpush.msra.mxu0 0.0
    %7457 = vmatpush.msra.mxu0 0.0
    %7458 = vmatpush.msra.mxu0 0.0
    %7459 = vmatpush.msra.mxu0 0.0
    %7460 = vmatpush.msra.mxu0 0.0
    %7461 = vmatpush.msra.mxu0 0.0
    %7462 = vmatpush.msra.mxu0 0.0
    %7463 = vmatpush.msra.mxu0 0.0
    %7464 = vmatpush.msra.mxu0 0.0
    %7465 = vmatpush.msra.mxu0 0.0
    %7466 = vmatpush.msra.mxu0 0.0
    %7467 = vmatpush.msra.mxu0 %v6993
    %7468 = vmatpush.msra.mxu0 %v6990
    %7469 = vmatmul.f32.gmra.mxu0 %v7449
    %v7470 = vpop.f32.mrf.mxu0
    %v7471 = vadd.f32 %v7213, %v7470
    %7472 = vmatmul.f32.gmra.mxu0 %v7451
    %v7473 = vpop.f32.mrf.mxu0
    %v7474 = vadd.f32 %v7216, %v7473
    %7475 = vdwg.mxu0
    %v7476 = vsel %vm289, %v6937, 0
    %v7478 = vsel %vm289, %v6938, 0
    %7480 = vmatpush.msra.mxu0 0.0
    %7481 = vmatpush.msra.mxu0 0.0
    %7482 = vmatpush.msra.mxu0 0.0
    %7483 = vmatpush.msra.mxu0 0.0
    %7484 = vmatpush.msra.mxu0 0.0
    %7485 = vmatpush.msra.mxu0 0.0
    %7486 = vmatpush.msra.mxu0 0.0
    %7487 = vmatpush.msra.mxu0 0.0
    %7488 = vmatpush.msra.mxu0 0.0
    %7489 = vmatpush.msra.mxu0 0.0
    %7490 = vmatpush.msra.mxu0 0.0
    %7491 = vmatpush.msra.mxu0 0.0
    %7492 = vmatpush.msra.mxu0 0.0
    %7493 = vmatpush.msra.mxu0 0.0
    %7494 = vmatpush.msra.mxu0 %v6999
    %7495 = vmatpush.msra.mxu0 %v6996
    %7496 = vmatmul.f32.gmra.mxu0 %v7476
    %v7497 = vpop.f32.mrf.mxu0
    %v7498 = vadd.f32 %v7254, %v7497
    %7499 = vmatmul.f32.gmra.mxu0 %v7478
    %v7500 = vpop.f32.mrf.mxu0
    %v7501 = vadd.f32 %v7257, %v7500
    %7502 = vdwg.mxu0
    %v7503 = vsel %vm289, %v6939, 0
    %v7505 = vsel %vm289, %v6940, 0
    %7507 = vmatpush.msra.mxu0 0.0
    %7508 = vmatpush.msra.mxu0 0.0
    %7509 = vmatpush.msra.mxu0 0.0
    %7510 = vmatpush.msra.mxu0 0.0
    %7511 = vmatpush.msra.mxu0 0.0
    %7512 = vmatpush.msra.mxu0 0.0
    %7513 = vmatpush.msra.mxu0 0.0
    %7514 = vmatpush.msra.mxu0 0.0
    %7515 = vmatpush.msra.mxu0 0.0
    %7516 = vmatpush.msra.mxu0 0.0
    %7517 = vmatpush.msra.mxu0 0.0
    %7518 = vmatpush.msra.mxu0 0.0
    %7519 = vmatpush.msra.mxu0 0.0
    %7520 = vmatpush.msra.mxu0 0.0
    %7521 = vmatpush.msra.mxu0 %v7005
    %7522 = vmatpush.msra.mxu0 %v7002
    %7523 = vmatmul.f32.gmra.mxu0 %v7503
    %v7524 = vpop.f32.mrf.mxu0
    %v7525 = vadd.f32 %v7295, %v7524
    %7526 = vmatmul.f32.gmra.mxu0 %v7505
    %v7527 = vpop.f32.mrf.mxu0
    %v7528 = vadd.f32 %v7298, %v7527
    %7529 = vdwg.mxu0
    %v7530 = vsel %vm289, %v6941, 0
    %v7532 = vsel %vm289, %v6942, 0
    %7534 = vmatpush.msra.mxu0 0.0
    %7535 = vmatpush.msra.mxu0 0.0
    %7536 = vmatpush.msra.mxu0 0.0
    %7537 = vmatpush.msra.mxu0 0.0
    %7538 = vmatpush.msra.mxu0 0.0
    %7539 = vmatpush.msra.mxu0 0.0
    %7540 = vmatpush.msra.mxu0 0.0
    %7541 = vmatpush.msra.mxu0 0.0
    %7542 = vmatpush.msra.mxu0 0.0
    %7543 = vmatpush.msra.mxu0 0.0
    %7544 = vmatpush.msra.mxu0 0.0
    %7545 = vmatpush.msra.mxu0 0.0
    %7546 = vmatpush.msra.mxu0 0.0
    %7547 = vmatpush.msra.mxu0 0.0
    %7548 = vmatpush.msra.mxu0 %v7011
    %7549 = vmatpush.msra.mxu0 %v7008
    %7550 = vmatmul.f32.gmra.mxu0 %v7530
    %v7551 = vpop.f32.mrf.mxu0
    %v7552 = vadd.f32 %v7336, %v7551
    %7553 = vmatmul.f32.gmra.mxu0 %v7532
    %v7554 = vpop.f32.mrf.mxu0
    %v7555 = vadd.f32 %v7339, %v7554
    %7556 = vdwg.mxu0
    %7557 = vrot.lane.b32.xlu0 %v6927, 96
    %v7558 = vpop.permute.xlu0 %7557
    %7559 = vrot.lane.b32.xlu0 %v6928, 96
    %v7560 = vpop.permute.xlu0 %7559
    %7561 = vrot.lane.b32.xlu0 %v6966, 64
    %v7562 = vpop.permute.xlu0 %7561
    %7563 = vrot.lane.b32.xlu0 %v6969, 64
    %v7564 = vpop.permute.xlu0 %7563
    %v7567 = vsel %vm289, %v7558, 0
    %v7569 = vsel %vm289, %v7560, 0
    %7571 = vmatpush.msra.mxu0 0.0
    %7572 = vmatpush.msra.mxu0 0.0
    %7573 = vmatpush.msra.mxu0 0.0
    %7574 = vmatpush.msra.mxu0 0.0
    %7575 = vmatpush.msra.mxu0 0.0
    %7576 = vmatpush.msra.mxu0 0.0
    %7577 = vmatpush.msra.mxu0 0.0
    %7578 = vmatpush.msra.mxu0 0.0
    %7579 = vmatpush.msra.mxu0 0.0
    %7580 = vmatpush.msra.mxu0 0.0
    %7581 = vmatpush.msra.mxu0 0.0
    %7582 = vmatpush.msra.mxu0 0.0
    %7583 = vmatpush.msra.mxu0 0.0
    %7584 = vmatpush.msra.mxu0 0.0
    %7585 = vmatpush.msra.mxu0 %v7564
    %7586 = vmatpush.msra.mxu0 %v7562
    %7587 = vmatmul.f32.gmra.mxu0 %v7567
    %v7588 = vpop.f32.mrf.mxu0
    %v7589 = vadd.f32 0.0, %v7588
    %7590 = vmatmul.f32.gmra.mxu0 %v7569
    %v7591 = vpop.f32.mrf.mxu0
    %v7592 = vadd.f32 0.0, %v7591
    %7593 = vdwg.mxu0
    %7594 = vrot.lane.b32.xlu0 %v6929, 96
    %v7595 = vpop.permute.xlu0 %7594
    %7596 = vrot.lane.b32.xlu0 %v6930, 96
    %v7597 = vpop.permute.xlu0 %7596
    %7598 = vrot.lane.b32.xlu0 %v6972, 64
    %v7599 = vpop.permute.xlu0 %7598
    %7600 = vrot.lane.b32.xlu0 %v6975, 64
    %v7601 = vpop.permute.xlu0 %7600
    %v7604 = vsel %vm289, %v7595, 0
    %v7606 = vsel %vm289, %v7597, 0
    %7608 = vmatpush.msra.mxu0 0.0
    %7609 = vmatpush.msra.mxu0 0.0
    %7610 = vmatpush.msra.mxu0 0.0
    %7611 = vmatpush.msra.mxu0 0.0
    %7612 = vmatpush.msra.mxu0 0.0
    %7613 = vmatpush.msra.mxu0 0.0
    %7614 = vmatpush.msra.mxu0 0.0
    %7615 = vmatpush.msra.mxu0 0.0
    %7616 = vmatpush.msra.mxu0 0.0
    %7617 = vmatpush.msra.mxu0 0.0
    %7618 = vmatpush.msra.mxu0 0.0
    %7619 = vmatpush.msra.mxu0 0.0
    %7620 = vmatpush.msra.mxu0 0.0
    %7621 = vmatpush.msra.mxu0 0.0
    %7622 = vmatpush.msra.mxu0 %v7601
    %7623 = vmatpush.msra.mxu0 %v7599
    %7624 = vmatmul.f32.gmra.mxu0 %v7604
    %v7625 = vpop.f32.mrf.mxu0
    %v7626 = vadd.f32 0.0, %v7625
    %7627 = vmatmul.f32.gmra.mxu0 %v7606
    %v7628 = vpop.f32.mrf.mxu0
    %v7629 = vadd.f32 0.0, %v7628
    %7630 = vdwg.mxu0
    %7631 = vrot.lane.b32.xlu0 %v6931, 96
    %v7632 = vpop.permute.xlu0 %7631
    %7633 = vrot.lane.b32.xlu0 %v6932, 96
    %v7634 = vpop.permute.xlu0 %7633
    %7635 = vrot.lane.b32.xlu0 %v6978, 64
    %v7636 = vpop.permute.xlu0 %7635
    %7637 = vrot.lane.b32.xlu0 %v6981, 64
    %v7638 = vpop.permute.xlu0 %7637
    %v7641 = vsel %vm289, %v7632, 0
    %v7643 = vsel %vm289, %v7634, 0
    %7645 = vmatpush.msra.mxu0 0.0
    %7646 = vmatpush.msra.mxu0 0.0
    %7647 = vmatpush.msra.mxu0 0.0
    %7648 = vmatpush.msra.mxu0 0.0
    %7649 = vmatpush.msra.mxu0 0.0
    %7650 = vmatpush.msra.mxu0 0.0
    %7651 = vmatpush.msra.mxu0 0.0
    %7652 = vmatpush.msra.mxu0 0.0
    %7653 = vmatpush.msra.mxu0 0.0
    %7654 = vmatpush.msra.mxu0 0.0
    %7655 = vmatpush.msra.mxu0 0.0
    %7656 = vmatpush.msra.mxu0 0.0
    %7657 = vmatpush.msra.mxu0 0.0
    %7658 = vmatpush.msra.mxu0 0.0
    %7659 = vmatpush.msra.mxu0 %v7638
    %7660 = vmatpush.msra.mxu0 %v7636
    %7661 = vmatmul.f32.gmra.mxu0 %v7641
    %v7662 = vpop.f32.mrf.mxu0
    %v7663 = vadd.f32 0.0, %v7662
    %7664 = vmatmul.f32.gmra.mxu0 %v7643
    %v7665 = vpop.f32.mrf.mxu0
    %v7666 = vadd.f32 0.0, %v7665
    %7667 = vdwg.mxu0
    %7668 = vrot.lane.b32.xlu0 %v6933, 96
    %v7669 = vpop.permute.xlu0 %7668
    %7670 = vrot.lane.b32.xlu0 %v6934, 96
    %v7671 = vpop.permute.xlu0 %7670
    %7672 = vrot.lane.b32.xlu0 %v6984, 64
    %v7673 = vpop.permute.xlu0 %7672
    %7674 = vrot.lane.b32.xlu0 %v6987, 64
    %v7675 = vpop.permute.xlu0 %7674
    %v7678 = vsel %vm289, %v7669, 0
    %v7680 = vsel %vm289, %v7671, 0
    %7682 = vmatpush.msra.mxu0 0.0
    %7683 = vmatpush.msra.mxu0 0.0
    %7684 = vmatpush.msra.mxu0 0.0
    %7685 = vmatpush.msra.mxu0 0.0
    %7686 = vmatpush.msra.mxu0 0.0
    %7687 = vmatpush.msra.mxu0 0.0
    %7688 = vmatpush.msra.mxu0 0.0
    %7689 = vmatpush.msra.mxu0 0.0
    %7690 = vmatpush.msra.mxu0 0.0
    %7691 = vmatpush.msra.mxu0 0.0
    %7692 = vmatpush.msra.mxu0 0.0
    %7693 = vmatpush.msra.mxu0 0.0
    %7694 = vmatpush.msra.mxu0 0.0
    %7695 = vmatpush.msra.mxu0 0.0
    %7696 = vmatpush.msra.mxu0 %v7675
    %7697 = vmatpush.msra.mxu0 %v7673
    %7698 = vmatmul.f32.gmra.mxu0 %v7678
    %v7699 = vpop.f32.mrf.mxu0
    %v7700 = vadd.f32 0.0, %v7699
    %7701 = vmatmul.f32.gmra.mxu0 %v7680
    %v7702 = vpop.f32.mrf.mxu0
    %v7703 = vadd.f32 0.0, %v7702
    %7704 = vdwg.mxu0
    %7705 = vrot.lane.b32.xlu0 %v6935, 96
    %v7706 = vpop.permute.xlu0 %7705
    %7707 = vrot.lane.b32.xlu0 %v6936, 96
    %v7708 = vpop.permute.xlu0 %7707
    %7709 = vrot.lane.b32.xlu0 %v6990, 64
    %v7710 = vpop.permute.xlu0 %7709
    %7711 = vrot.lane.b32.xlu0 %v6993, 64
    %v7712 = vpop.permute.xlu0 %7711
    %v7715 = vsel %vm289, %v7706, 0
    %v7717 = vsel %vm289, %v7708, 0
    %7719 = vmatpush.msra.mxu0 0.0
    %7720 = vmatpush.msra.mxu0 0.0
    %7721 = vmatpush.msra.mxu0 0.0
    %7722 = vmatpush.msra.mxu0 0.0
    %7723 = vmatpush.msra.mxu0 0.0
    %7724 = vmatpush.msra.mxu0 0.0
    %7725 = vmatpush.msra.mxu0 0.0
    %7726 = vmatpush.msra.mxu0 0.0
    %7727 = vmatpush.msra.mxu0 0.0
    %7728 = vmatpush.msra.mxu0 0.0
    %7729 = vmatpush.msra.mxu0 0.0
    %7730 = vmatpush.msra.mxu0 0.0
    %7731 = vmatpush.msra.mxu0 0.0
    %7732 = vmatpush.msra.mxu0 0.0
    %7733 = vmatpush.msra.mxu0 %v7712
    %7734 = vmatpush.msra.mxu0 %v7710
    %7735 = vmatmul.f32.gmra.mxu0 %v7715
    %v7736 = vpop.f32.mrf.mxu0
    %v7737 = vadd.f32 0.0, %v7736
    %7738 = vmatmul.f32.gmra.mxu0 %v7717
    %v7739 = vpop.f32.mrf.mxu0
    %v7740 = vadd.f32 0.0, %v7739
    %7741 = vdwg.mxu0
    %7742 = vrot.lane.b32.xlu0 %v6937, 96
    %v7743 = vpop.permute.xlu0 %7742
    %7744 = vrot.lane.b32.xlu0 %v6938, 96
    %v7745 = vpop.permute.xlu0 %7744
    %7746 = vrot.lane.b32.xlu0 %v6996, 64
    %v7747 = vpop.permute.xlu0 %7746
    %7748 = vrot.lane.b32.xlu0 %v6999, 64
    %v7749 = vpop.permute.xlu0 %7748
    %v7752 = vsel %vm289, %v7743, 0
    %v7754 = vsel %vm289, %v7745, 0
    %7756 = vmatpush.msra.mxu0 0.0
    %7757 = vmatpush.msra.mxu0 0.0
    %7758 = vmatpush.msra.mxu0 0.0
    %7759 = vmatpush.msra.mxu0 0.0
    %7760 = vmatpush.msra.mxu0 0.0
    %7761 = vmatpush.msra.mxu0 0.0
    %7762 = vmatpush.msra.mxu0 0.0
    %7763 = vmatpush.msra.mxu0 0.0
    %7764 = vmatpush.msra.mxu0 0.0
    %7765 = vmatpush.msra.mxu0 0.0
    %7766 = vmatpush.msra.mxu0 0.0
    %7767 = vmatpush.msra.mxu0 0.0
    %7768 = vmatpush.msra.mxu0 0.0
    %7769 = vmatpush.msra.mxu0 0.0
    %7770 = vmatpush.msra.mxu0 %v7749
    %7771 = vmatpush.msra.mxu0 %v7747
    %7772 = vmatmul.f32.gmra.mxu0 %v7752
    %v7773 = vpop.f32.mrf.mxu0
    %v7774 = vadd.f32 0.0, %v7773
    %7775 = vmatmul.f32.gmra.mxu0 %v7754
    %v7776 = vpop.f32.mrf.mxu0
    %v7777 = vadd.f32 0.0, %v7776
    %7778 = vdwg.mxu0
    %7779 = vrot.lane.b32.xlu0 %v6939, 96
    %v7780 = vpop.permute.xlu0 %7779
    %7781 = vrot.lane.b32.xlu0 %v6940, 96
    %v7782 = vpop.permute.xlu0 %7781
    %7783 = vrot.lane.b32.xlu0 %v7002, 64
    %v7784 = vpop.permute.xlu0 %7783
    %7785 = vrot.lane.b32.xlu0 %v7005, 64
    %v7786 = vpop.permute.xlu0 %7785
    %v7789 = vsel %vm289, %v7780, 0
    %v7791 = vsel %vm289, %v7782, 0
    %7793 = vmatpush.msra.mxu0 0.0
    %7794 = vmatpush.msra.mxu0 0.0
    %7795 = vmatpush.msra.mxu0 0.0
    %7796 = vmatpush.msra.mxu0 0.0
    %7797 = vmatpush.msra.mxu0 0.0
    %7798 = vmatpush.msra.mxu0 0.0
    %7799 = vmatpush.msra.mxu0 0.0
    %7800 = vmatpush.msra.mxu0 0.0
    %7801 = vmatpush.msra.mxu0 0.0
    %7802 = vmatpush.msra.mxu0 0.0
    %7803 = vmatpush.msra.mxu0 0.0
    %7804 = vmatpush.msra.mxu0 0.0
    %7805 = vmatpush.msra.mxu0 0.0
    %7806 = vmatpush.msra.mxu0 0.0
    %7807 = vmatpush.msra.mxu0 %v7786
    %7808 = vmatpush.msra.mxu0 %v7784
    %7809 = vmatmul.f32.gmra.mxu0 %v7789
    %v7810 = vpop.f32.mrf.mxu0
    %v7811 = vadd.f32 0.0, %v7810
    %7812 = vmatmul.f32.gmra.mxu0 %v7791
    %v7813 = vpop.f32.mrf.mxu0
    %v7814 = vadd.f32 0.0, %v7813
    %7815 = vdwg.mxu0
    %7816 = vrot.lane.b32.xlu0 %v6941, 96
    %v7817 = vpop.permute.xlu0 %7816
    %7818 = vrot.lane.b32.xlu0 %v6942, 96
    %v7819 = vpop.permute.xlu0 %7818
    %7820 = vrot.lane.b32.xlu0 %v7008, 64
    %v7821 = vpop.permute.xlu0 %7820
    %7822 = vrot.lane.b32.xlu0 %v7011, 64
    %v7823 = vpop.permute.xlu0 %7822
    %v7826 = vsel %vm289, %v7817, 0
    %v7828 = vsel %vm289, %v7819, 0
    %7830 = vmatpush.msra.mxu0 0.0
    %7831 = vmatpush.msra.mxu0 0.0
    %7832 = vmatpush.msra.mxu0 0.0
    %7833 = vmatpush.msra.mxu0 0.0
    %7834 = vmatpush.msra.mxu0 0.0
    %7835 = vmatpush.msra.mxu0 0.0
    %7836 = vmatpush.msra.mxu0 0.0
    %7837 = vmatpush.msra.mxu0 0.0
    %7838 = vmatpush.msra.mxu0 0.0
    %7839 = vmatpush.msra.mxu0 0.0
    %7840 = vmatpush.msra.mxu0 0.0
    %7841 = vmatpush.msra.mxu0 0.0
    %7842 = vmatpush.msra.mxu0 0.0
    %7843 = vmatpush.msra.mxu0 0.0
    %7844 = vmatpush.msra.mxu0 %v7823
    %7845 = vmatpush.msra.mxu0 %v7821
    %7846 = vmatmul.f32.gmra.mxu0 %v7826
    %v7847 = vpop.f32.mrf.mxu0
    %v7848 = vadd.f32 0.0, %v7847
    %7849 = vmatmul.f32.gmra.mxu0 %v7828
    %v7850 = vpop.f32.mrf.mxu0
    %v7851 = vadd.f32 0.0, %v7850
    %7852 = vdwg.mxu0
    %v7853 = vadd.f32 %v7363, %v7589
    %v7854 = vadd.f32 %v7366, %v7592
    %v7855 = vadd.f32 %v7390, %v7626
    %v7856 = vadd.f32 %v7393, %v7629
    %v7857 = vadd.f32 %v7417, %v7663
    %v7858 = vadd.f32 %v7420, %v7666
    %v7859 = vadd.f32 %v7444, %v7700
    %v7860 = vadd.f32 %v7447, %v7703
    %v7861 = vadd.f32 %v7471, %v7737
    %v7862 = vadd.f32 %v7474, %v7740
    %v7863 = vadd.f32 %v7498, %v7774
    %v7864 = vadd.f32 %v7501, %v7777
    %v7865 = vadd.f32 %v7525, %v7811
    %v7866 = vadd.f32 %v7528, %v7814
    %v7867 = vadd.f32 %v7552, %v7848
    %v7868 = vadd.f32 %v7555, %v7851
    %7869 = vrot.lane.b32.xlu0 %v6927, 80
    %v7870 = vpop.permute.xlu0 %7869
    %7871 = vrot.lane.b32.xlu0 %v6928, 80
    %v7872 = vpop.permute.xlu0 %7871
    %7873 = vrot.lane.b32.xlu0 %v6966, 32
    %v7874 = vpop.permute.xlu0 %7873
    %7875 = vrot.lane.b32.xlu0 %v6969, 32
    %v7876 = vpop.permute.xlu0 %7875
    %v7879 = vsel %vm289, %v7870, 0
    %v7881 = vsel %vm289, %v7872, 0
    %7883 = vmatpush.msra.mxu0 0.0
    %7884 = vmatpush.msra.mxu0 0.0
    %7885 = vmatpush.msra.mxu0 0.0
    %7886 = vmatpush.msra.mxu0 0.0
    %7887 = vmatpush.msra.mxu0 0.0
    %7888 = vmatpush.msra.mxu0 0.0
    %7889 = vmatpush.msra.mxu0 0.0
    %7890 = vmatpush.msra.mxu0 0.0
    %7891 = vmatpush.msra.mxu0 0.0
    %7892 = vmatpush.msra.mxu0 0.0
    %7893 = vmatpush.msra.mxu0 0.0
    %7894 = vmatpush.msra.mxu0 0.0
    %7895 = vmatpush.msra.mxu0 0.0
    %7896 = vmatpush.msra.mxu0 0.0
    %7897 = vmatpush.msra.mxu0 %v7876
    %7898 = vmatpush.msra.mxu0 %v7874
    %7899 = vmatmul.f32.gmra.mxu0 %v7879
    %v7900 = vpop.f32.mrf.mxu0
    %v7901 = vadd.f32 0.0, %v7900
    %7902 = vmatmul.f32.gmra.mxu0 %v7881
    %v7903 = vpop.f32.mrf.mxu0
    %v7904 = vadd.f32 0.0, %v7903
    %7905 = vdwg.mxu0
    %7906 = vrot.lane.b32.xlu0 %v6929, 80
    %v7907 = vpop.permute.xlu0 %7906
    %7908 = vrot.lane.b32.xlu0 %v6930, 80
    %v7909 = vpop.permute.xlu0 %7908
    %7910 = vrot.lane.b32.xlu0 %v6972, 32
    %v7911 = vpop.permute.xlu0 %7910
    %7912 = vrot.lane.b32.xlu0 %v6975, 32
    %v7913 = vpop.permute.xlu0 %7912
    %v7916 = vsel %vm289, %v7907, 0
    %v7918 = vsel %vm289, %v7909, 0
    %7920 = vmatpush.msra.mxu0 0.0
    %7921 = vmatpush.msra.mxu0 0.0
    %7922 = vmatpush.msra.mxu0 0.0
    %7923 = vmatpush.msra.mxu0 0.0
    %7924 = vmatpush.msra.mxu0 0.0
    %7925 = vmatpush.msra.mxu0 0.0
    %7926 = vmatpush.msra.mxu0 0.0
    %7927 = vmatpush.msra.mxu0 0.0
    %7928 = vmatpush.msra.mxu0 0.0
    %7929 = vmatpush.msra.mxu0 0.0
    %7930 = vmatpush.msra.mxu0 0.0
    %7931 = vmatpush.msra.mxu0 0.0
    %7932 = vmatpush.msra.mxu0 0.0
    %7933 = vmatpush.msra.mxu0 0.0
    %7934 = vmatpush.msra.mxu0 %v7913
    %7935 = vmatpush.msra.mxu0 %v7911
    %7936 = vmatmul.f32.gmra.mxu0 %v7916
    %v7937 = vpop.f32.mrf.mxu0
    %v7938 = vadd.f32 0.0, %v7937
    %7939 = vmatmul.f32.gmra.mxu0 %v7918
    %v7940 = vpop.f32.mrf.mxu0
    %v7941 = vadd.f32 0.0, %v7940
    %7942 = vdwg.mxu0
    %7943 = vrot.lane.b32.xlu0 %v6931, 80
    %v7944 = vpop.permute.xlu0 %7943
    %7945 = vrot.lane.b32.xlu0 %v6932, 80
    %v7946 = vpop.permute.xlu0 %7945
    %7947 = vrot.lane.b32.xlu0 %v6978, 32
    %v7948 = vpop.permute.xlu0 %7947
    %7949 = vrot.lane.b32.xlu0 %v6981, 32
    %v7950 = vpop.permute.xlu0 %7949
    %v7953 = vsel %vm289, %v7944, 0
    %v7955 = vsel %vm289, %v7946, 0
    %7957 = vmatpush.msra.mxu0 0.0
    %7958 = vmatpush.msra.mxu0 0.0
    %7959 = vmatpush.msra.mxu0 0.0
    %7960 = vmatpush.msra.mxu0 0.0
    %7961 = vmatpush.msra.mxu0 0.0
    %7962 = vmatpush.msra.mxu0 0.0
    %7963 = vmatpush.msra.mxu0 0.0
    %7964 = vmatpush.msra.mxu0 0.0
    %7965 = vmatpush.msra.mxu0 0.0
    %7966 = vmatpush.msra.mxu0 0.0
    %7967 = vmatpush.msra.mxu0 0.0
    %7968 = vmatpush.msra.mxu0 0.0
    %7969 = vmatpush.msra.mxu0 0.0
    %7970 = vmatpush.msra.mxu0 0.0
    %7971 = vmatpush.msra.mxu0 %v7950
    %7972 = vmatpush.msra.mxu0 %v7948
    %7973 = vmatmul.f32.gmra.mxu0 %v7953
    %v7974 = vpop.f32.mrf.mxu0
    %v7975 = vadd.f32 0.0, %v7974
    %7976 = vmatmul.f32.gmra.mxu0 %v7955
    %v7977 = vpop.f32.mrf.mxu0
    %v7978 = vadd.f32 0.0, %v7977
    %7979 = vdwg.mxu0
    %7980 = vrot.lane.b32.xlu0 %v6933, 80
    %v7981 = vpop.permute.xlu0 %7980
    %7982 = vrot.lane.b32.xlu0 %v6934, 80
    %v7983 = vpop.permute.xlu0 %7982
    %7984 = vrot.lane.b32.xlu0 %v6984, 32
    %v7985 = vpop.permute.xlu0 %7984
    %7986 = vrot.lane.b32.xlu0 %v6987, 32
    %v7987 = vpop.permute.xlu0 %7986
    %v7990 = vsel %vm289, %v7981, 0
    %v7992 = vsel %vm289, %v7983, 0
    %7994 = vmatpush.msra.mxu0 0.0
    %7995 = vmatpush.msra.mxu0 0.0
    %7996 = vmatpush.msra.mxu0 0.0
    %7997 = vmatpush.msra.mxu0 0.0
    %7998 = vmatpush.msra.mxu0 0.0
    %7999 = vmatpush.msra.mxu0 0.0
    %8000 = vmatpush.msra.mxu0 0.0
    %8001 = vmatpush.msra.mxu0 0.0
    %8002 = vmatpush.msra.mxu0 0.0
    %8003 = vmatpush.msra.mxu0 0.0
    %8004 = vmatpush.msra.mxu0 0.0
    %8005 = vmatpush.msra.mxu0 0.0
    %8006 = vmatpush.msra.mxu0 0.0
    %8007 = vmatpush.msra.mxu0 0.0
    %8008 = vmatpush.msra.mxu0 %v7987
    %8009 = vmatpush.msra.mxu0 %v7985
    %8010 = vmatmul.f32.gmra.mxu0 %v7990
    %v8011 = vpop.f32.mrf.mxu0
    %v8012 = vadd.f32 0.0, %v8011
    %8013 = vmatmul.f32.gmra.mxu0 %v7992
    %v8014 = vpop.f32.mrf.mxu0
    %v8015 = vadd.f32 0.0, %v8014
    %8016 = vdwg.mxu0
    %8017 = vrot.lane.b32.xlu0 %v6935, 80
    %v8018 = vpop.permute.xlu0 %8017
    %8019 = vrot.lane.b32.xlu0 %v6936, 80
    %v8020 = vpop.permute.xlu0 %8019
    %8021 = vrot.lane.b32.xlu0 %v6990, 32
    %v8022 = vpop.permute.xlu0 %8021
    %8023 = vrot.lane.b32.xlu0 %v6993, 32
    %v8024 = vpop.permute.xlu0 %8023
    %v8027 = vsel %vm289, %v8018, 0
    %v8029 = vsel %vm289, %v8020, 0
    %8031 = vmatpush.msra.mxu0 0.0
    %8032 = vmatpush.msra.mxu0 0.0
    %8033 = vmatpush.msra.mxu0 0.0
    %8034 = vmatpush.msra.mxu0 0.0
    %8035 = vmatpush.msra.mxu0 0.0
    %8036 = vmatpush.msra.mxu0 0.0
    %8037 = vmatpush.msra.mxu0 0.0
    %8038 = vmatpush.msra.mxu0 0.0
    %8039 = vmatpush.msra.mxu0 0.0
    %8040 = vmatpush.msra.mxu0 0.0
    %8041 = vmatpush.msra.mxu0 0.0
    %8042 = vmatpush.msra.mxu0 0.0
    %8043 = vmatpush.msra.mxu0 0.0
    %8044 = vmatpush.msra.mxu0 0.0
    %8045 = vmatpush.msra.mxu0 %v8024
    %8046 = vmatpush.msra.mxu0 %v8022
    %8047 = vmatmul.f32.gmra.mxu0 %v8027
    %v8048 = vpop.f32.mrf.mxu0
    %v8049 = vadd.f32 0.0, %v8048
    %8050 = vmatmul.f32.gmra.mxu0 %v8029
    %v8051 = vpop.f32.mrf.mxu0
    %v8052 = vadd.f32 0.0, %v8051
    %8053 = vdwg.mxu0
    %8054 = vrot.lane.b32.xlu0 %v6937, 80
    %v8055 = vpop.permute.xlu0 %8054
    %8056 = vrot.lane.b32.xlu0 %v6938, 80
    %v8057 = vpop.permute.xlu0 %8056
    %8058 = vrot.lane.b32.xlu0 %v6996, 32
    %v8059 = vpop.permute.xlu0 %8058
    %8060 = vrot.lane.b32.xlu0 %v6999, 32
    %v8061 = vpop.permute.xlu0 %8060
    %v8064 = vsel %vm289, %v8055, 0
    %v8066 = vsel %vm289, %v8057, 0
    %8068 = vmatpush.msra.mxu0 0.0
    %8069 = vmatpush.msra.mxu0 0.0
    %8070 = vmatpush.msra.mxu0 0.0
    %8071 = vmatpush.msra.mxu0 0.0
    %8072 = vmatpush.msra.mxu0 0.0
    %8073 = vmatpush.msra.mxu0 0.0
    %8074 = vmatpush.msra.mxu0 0.0
    %8075 = vmatpush.msra.mxu0 0.0
    %8076 = vmatpush.msra.mxu0 0.0
    %8077 = vmatpush.msra.mxu0 0.0
    %8078 = vmatpush.msra.mxu0 0.0
    %8079 = vmatpush.msra.mxu0 0.0
    %8080 = vmatpush.msra.mxu0 0.0
    %8081 = vmatpush.msra.mxu0 0.0
    %8082 = vmatpush.msra.mxu0 %v8061
    %8083 = vmatpush.msra.mxu0 %v8059
    %8084 = vmatmul.f32.gmra.mxu0 %v8064
    %v8085 = vpop.f32.mrf.mxu0
    %v8086 = vadd.f32 0.0, %v8085
    %8087 = vmatmul.f32.gmra.mxu0 %v8066
    %v8088 = vpop.f32.mrf.mxu0
    %v8089 = vadd.f32 0.0, %v8088
    %8090 = vdwg.mxu0
    %8091 = vrot.lane.b32.xlu0 %v6939, 80
    %v8092 = vpop.permute.xlu0 %8091
    %8093 = vrot.lane.b32.xlu0 %v6940, 80
    %v8094 = vpop.permute.xlu0 %8093
    %8095 = vrot.lane.b32.xlu0 %v7002, 32
    %v8096 = vpop.permute.xlu0 %8095
    %8097 = vrot.lane.b32.xlu0 %v7005, 32
    %v8098 = vpop.permute.xlu0 %8097
    %v8101 = vsel %vm289, %v8092, 0
    %v8103 = vsel %vm289, %v8094, 0
    %8105 = vmatpush.msra.mxu0 0.0
    %8106 = vmatpush.msra.mxu0 0.0
    %8107 = vmatpush.msra.mxu0 0.0
    %8108 = vmatpush.msra.mxu0 0.0
    %8109 = vmatpush.msra.mxu0 0.0
    %8110 = vmatpush.msra.mxu0 0.0
    %8111 = vmatpush.msra.mxu0 0.0
    %8112 = vmatpush.msra.mxu0 0.0
    %8113 = vmatpush.msra.mxu0 0.0
    %8114 = vmatpush.msra.mxu0 0.0
    %8115 = vmatpush.msra.mxu0 0.0
    %8116 = vmatpush.msra.mxu0 0.0
    %8117 = vmatpush.msra.mxu0 0.0
    %8118 = vmatpush.msra.mxu0 0.0
    %8119 = vmatpush.msra.mxu0 %v8098
    %8120 = vmatpush.msra.mxu0 %v8096
    %8121 = vmatmul.f32.gmra.mxu0 %v8101
    %v8122 = vpop.f32.mrf.mxu0
    %v8123 = vadd.f32 0.0, %v8122
    %8124 = vmatmul.f32.gmra.mxu0 %v8103
    %v8125 = vpop.f32.mrf.mxu0
    %v8126 = vadd.f32 0.0, %v8125
    %8127 = vdwg.mxu0
    %8128 = vrot.lane.b32.xlu0 %v6941, 80
    %v8129 = vpop.permute.xlu0 %8128
    %8130 = vrot.lane.b32.xlu0 %v6942, 80
    %v8131 = vpop.permute.xlu0 %8130
    %8132 = vrot.lane.b32.xlu0 %v7008, 32
    %v8133 = vpop.permute.xlu0 %8132
    %8134 = vrot.lane.b32.xlu0 %v7011, 32
    %v8135 = vpop.permute.xlu0 %8134
    %v8138 = vsel %vm289, %v8129, 0
    %v8140 = vsel %vm289, %v8131, 0
    %8142 = vmatpush.msra.mxu0 0.0
    %8143 = vmatpush.msra.mxu0 0.0
    %8144 = vmatpush.msra.mxu0 0.0
    %8145 = vmatpush.msra.mxu0 0.0
    %8146 = vmatpush.msra.mxu0 0.0
    %8147 = vmatpush.msra.mxu0 0.0
    %8148 = vmatpush.msra.mxu0 0.0
    %8149 = vmatpush.msra.mxu0 0.0
    %8150 = vmatpush.msra.mxu0 0.0
    %8151 = vmatpush.msra.mxu0 0.0
    %8152 = vmatpush.msra.mxu0 0.0
    %8153 = vmatpush.msra.mxu0 0.0
    %8154 = vmatpush.msra.mxu0 0.0
    %8155 = vmatpush.msra.mxu0 0.0
    %8156 = vmatpush.msra.mxu0 %v8135
    %8157 = vmatpush.msra.mxu0 %v8133
    %8158 = vmatmul.f32.gmra.mxu0 %v8138
    %v8159 = vpop.f32.mrf.mxu0
    %v8160 = vadd.f32 0.0, %v8159
    %8161 = vmatmul.f32.gmra.mxu0 %v8140
    %v8162 = vpop.f32.mrf.mxu0
    %v8163 = vadd.f32 0.0, %v8162
    %8164 = vdwg.mxu0
    %v8165 = vadd.f32 %v7853, %v7901
    %v8166 = vadd.f32 %v7854, %v7904
    %v8167 = vadd.f32 %v7855, %v7938
    %v8168 = vadd.f32 %v7856, %v7941
    %v8169 = vadd.f32 %v7857, %v7975
    %v8170 = vadd.f32 %v7858, %v7978
    %v8171 = vadd.f32 %v7859, %v8012
    %v8172 = vadd.f32 %v7860, %v8015
    %v8173 = vadd.f32 %v7861, %v8049
    %v8174 = vadd.f32 %v7862, %v8052
    %v8175 = vadd.f32 %v7863, %v8086
    %v8176 = vadd.f32 %v7864, %v8089
    %v8177 = vadd.f32 %v7865, %v8123
    %v8178 = vadd.f32 %v7866, %v8126
    %v8179 = vadd.f32 %v7867, %v8160
    %v8180 = vadd.f32 %v7868, %v8163
    %s8181 = scalar_lea.vmem [#allocation7], 1
    %v8182 = vld [vmem:[%s8181] sm:$0x1]
    %v8184 = vperm.slane %v8182, 0
    %v8186 = vadd.f32 %v8165, %v8184
    %v8187 = vadd.f32 %v8166, %v8184
    %v8188 = vadd.f32 %v8167, %v8184
    %v8189 = vadd.f32 %v8168, %v8184
    %v8190 = vadd.f32 %v8169, %v8184
    %v8191 = vadd.f32 %v8170, %v8184
    %v8192 = vadd.f32 %v8171, %v8184
    %v8193 = vadd.f32 %v8172, %v8184
    %v8194 = vadd.f32 %v8173, %v8184
    %v8195 = vadd.f32 %v8174, %v8184
    %v8196 = vadd.f32 %v8175, %v8184
    %v8197 = vadd.f32 %v8176, %v8184
    %v8198 = vadd.f32 %v8177, %v8184
    %v8199 = vadd.f32 %v8178, %v8184
    %v8200 = vadd.f32 %v8179, %v8184
    %v8201 = vadd.f32 %v8180, %v8184
    %v8202 = vadd.f32 %v4892, %v8186
    %v8203 = vadd.f32 %v4893, %v8187
    %v8204 = vadd.f32 %v4894, %v8188
    %v8205 = vadd.f32 %v4895, %v8189
    %v8206 = vadd.f32 %v4896, %v8190
    %v8207 = vadd.f32 %v4897, %v8191
    %v8208 = vadd.f32 %v4898, %v8192
    %v8209 = vadd.f32 %v4899, %v8193
    %v8210 = vadd.f32 %v4900, %v8194
    %v8211 = vadd.f32 %v4901, %v8195
    %v8212 = vadd.f32 %v4902, %v8196
    %v8213 = vadd.f32 %v4903, %v8197
    %v8214 = vadd.f32 %v4904, %v8198
    %v8215 = vadd.f32 %v4905, %v8199
    %v8216 = vadd.f32 %v4906, %v8200
    %v8217 = vadd.f32 %v4907, %v8201
    %s8218 = scalar_lea.vmem %s6, 1
    %v8219 = vld [vmem:[%s8218] sm:$0x1]
    %s8220 = scalar_lea.vmem [#allocation8], 1
    %v8221 = vld [vmem:[%s8220] sm:$0x1]
    %v8222 = vsel %vm298, %v8202, 0.0
    %8223 = vadd.xlane.f32.xlu0 %v8222
    %v8224 = vpop.xlane.xlu0 %8223
    %v8225 = vsel %vm298, %v8203, 0.0
    %8226 = vadd.xlane.f32.xlu0 %v8225
    %v8227 = vpop.xlane.xlu0 %8226
    %v8228 = vsel %vm298, %v8204, 0.0
    %8229 = vadd.xlane.f32.xlu0 %v8228
    %v8230 = vpop.xlane.xlu0 %8229
    %v8231 = vsel %vm298, %v8205, 0.0
    %8232 = vadd.xlane.f32.xlu0 %v8231
    %v8233 = vpop.xlane.xlu0 %8232
    %v8234 = vsel %vm298, %v8206, 0.0
    %8235 = vadd.xlane.f32.xlu0 %v8234
    %v8236 = vpop.xlane.xlu0 %8235
    %v8237 = vsel %vm298, %v8207, 0.0
    %8238 = vadd.xlane.f32.xlu0 %v8237
    %v8239 = vpop.xlane.xlu0 %8238
    %v8240 = vsel %vm298, %v8208, 0.0
    %8241 = vadd.xlane.f32.xlu0 %v8240
    %v8242 = vpop.xlane.xlu0 %8241
    %v8243 = vsel %vm298, %v8209, 0.0
    %8244 = vadd.xlane.f32.xlu0 %v8243
    %v8245 = vpop.xlane.xlu0 %8244
    %v8246 = vsel %vm298, %v8210, 0.0
    %8247 = vadd.xlane.f32.xlu0 %v8246
    %v8248 = vpop.xlane.xlu0 %8247
    %v8249 = vsel %vm298, %v8211, 0.0
    %8250 = vadd.xlane.f32.xlu0 %v8249
    %v8251 = vpop.xlane.xlu0 %8250
    %v8252 = vsel %vm298, %v8212, 0.0
    %8253 = vadd.xlane.f32.xlu0 %v8252
    %v8254 = vpop.xlane.xlu0 %8253
    %v8255 = vsel %vm298, %v8213, 0.0
    %8256 = vadd.xlane.f32.xlu0 %v8255
    %v8257 = vpop.xlane.xlu0 %8256
    %v8258 = vsel %vm298, %v8214, 0.0
    %8259 = vadd.xlane.f32.xlu0 %v8258
    %v8260 = vpop.xlane.xlu0 %8259
    %v8261 = vsel %vm298, %v8215, 0.0
    %8262 = vadd.xlane.f32.xlu0 %v8261
    %v8263 = vpop.xlane.xlu0 %8262
    %v8264 = vsel %vm298, %v8216, 0.0
    %8265 = vadd.xlane.f32.xlu0 %v8264
    %v8266 = vpop.xlane.xlu0 %8265
    %v8267 = vsel %vm298, %v8217, 0.0
    %8268 = vadd.xlane.f32.xlu0 %v8267
    %v8269 = vpop.xlane.xlu0 %8268
    %v8270 = vmul.f32 %v8224, %v3766
    %v8271 = vmul.f32 %v8227, %v3766
    %v8272 = vmul.f32 %v8230, %v3766
    %v8273 = vmul.f32 %v8233, %v3766
    %v8274 = vmul.f32 %v8236, %v3766
    %v8275 = vmul.f32 %v8239, %v3766
    %v8276 = vmul.f32 %v8242, %v3766
    %v8277 = vmul.f32 %v8245, %v3766
    %v8278 = vmul.f32 %v8248, %v3766
    %v8279 = vmul.f32 %v8251, %v3766
    %v8280 = vmul.f32 %v8254, %v3766
    %v8281 = vmul.f32 %v8257, %v3766
    %v8282 = vmul.f32 %v8260, %v3766
    %v8283 = vmul.f32 %v8263, %v3766
    %v8284 = vmul.f32 %v8266, %v3766
    %v8285 = vmul.f32 %v8269, %v3766
    %v8286 = vsub.f32 %v8202, %v8270
    %v8287 = vsub.f32 %v8203, %v8271
    %v8288 = vsub.f32 %v8204, %v8272
    %v8289 = vsub.f32 %v8205, %v8273
    %v8290 = vsub.f32 %v8206, %v8274
    %v8291 = vsub.f32 %v8207, %v8275
    %v8292 = vsub.f32 %v8208, %v8276
    %v8293 = vsub.f32 %v8209, %v8277
    %v8294 = vsub.f32 %v8210, %v8278
    %v8295 = vsub.f32 %v8211, %v8279
    %v8296 = vsub.f32 %v8212, %v8280
    %v8297 = vsub.f32 %v8213, %v8281
    %v8298 = vsub.f32 %v8214, %v8282
    %v8299 = vsub.f32 %v8215, %v8283
    %v8300 = vsub.f32 %v8216, %v8284
    %v8301 = vsub.f32 %v8217, %v8285
    %v8302 = vmul.f32 %v8286, %v8286
    %v8303 = vmul.f32 %v8287, %v8287
    %v8304 = vmul.f32 %v8288, %v8288
    %v8305 = vmul.f32 %v8289, %v8289
    %v8306 = vmul.f32 %v8290, %v8290
    %v8307 = vmul.f32 %v8291, %v8291
    %v8308 = vmul.f32 %v8292, %v8292
    %v8309 = vmul.f32 %v8293, %v8293
    %v8310 = vmul.f32 %v8294, %v8294
    %v8311 = vmul.f32 %v8295, %v8295
    %v8312 = vmul.f32 %v8296, %v8296
    %v8313 = vmul.f32 %v8297, %v8297
    %v8314 = vmul.f32 %v8298, %v8298
    %v8315 = vmul.f32 %v8299, %v8299
    %v8316 = vmul.f32 %v8300, %v8300
    %v8317 = vmul.f32 %v8301, %v8301
    %v8318 = vsel %vm298, %v8302, 0.0
    %8319 = vadd.xlane.f32.xlu0 %v8318
    %v8320 = vpop.xlane.xlu0 %8319
    %v8321 = vsel %vm298, %v8303, 0.0
    %8322 = vadd.xlane.f32.xlu0 %v8321
    %v8323 = vpop.xlane.xlu0 %8322
    %v8324 = vsel %vm298, %v8304, 0.0
    %8325 = vadd.xlane.f32.xlu0 %v8324
    %v8326 = vpop.xlane.xlu0 %8325
    %v8327 = vsel %vm298, %v8305, 0.0
    %8328 = vadd.xlane.f32.xlu0 %v8327
    %v8329 = vpop.xlane.xlu0 %8328
    %v8330 = vsel %vm298, %v8306, 0.0
    %8331 = vadd.xlane.f32.xlu0 %v8330
    %v8332 = vpop.xlane.xlu0 %8331
    %v8333 = vsel %vm298, %v8307, 0.0
    %8334 = vadd.xlane.f32.xlu0 %v8333
    %v8335 = vpop.xlane.xlu0 %8334
    %v8336 = vsel %vm298, %v8308, 0.0
    %8337 = vadd.xlane.f32.xlu0 %v8336
    %v8338 = vpop.xlane.xlu0 %8337
    %v8339 = vsel %vm298, %v8309, 0.0
    %8340 = vadd.xlane.f32.xlu0 %v8339
    %v8341 = vpop.xlane.xlu0 %8340
    %v8342 = vsel %vm298, %v8310, 0.0
    %8343 = vadd.xlane.f32.xlu0 %v8342
    %v8344 = vpop.xlane.xlu0 %8343
    %v8345 = vsel %vm298, %v8311, 0.0
    %8346 = vadd.xlane.f32.xlu0 %v8345
    %v8347 = vpop.xlane.xlu0 %8346
    %v8348 = vsel %vm298, %v8312, 0.0
    %8349 = vadd.xlane.f32.xlu0 %v8348
    %v8350 = vpop.xlane.xlu0 %8349
    %v8351 = vsel %vm298, %v8313, 0.0
    %8352 = vadd.xlane.f32.xlu0 %v8351
    %v8353 = vpop.xlane.xlu0 %8352
    %v8354 = vsel %vm298, %v8314, 0.0
    %8355 = vadd.xlane.f32.xlu0 %v8354
    %v8356 = vpop.xlane.xlu0 %8355
    %v8357 = vsel %vm298, %v8315, 0.0
    %8358 = vadd.xlane.f32.xlu0 %v8357
    %v8359 = vpop.xlane.xlu0 %8358
    %v8360 = vsel %vm298, %v8316, 0.0
    %8361 = vadd.xlane.f32.xlu0 %v8360
    %v8362 = vpop.xlane.xlu0 %8361
    %v8363 = vsel %vm298, %v8317, 0.0
    %8364 = vadd.xlane.f32.xlu0 %v8363
    %v8365 = vpop.xlane.xlu0 %8364
    %v8366 = vmul.f32 %v8320, %v3766
    %v8367 = vmul.f32 %v8323, %v3766
    %v8368 = vmul.f32 %v8326, %v3766
    %v8369 = vmul.f32 %v8329, %v3766
    %v8370 = vmul.f32 %v8332, %v3766
    %v8371 = vmul.f32 %v8335, %v3766
    %v8372 = vmul.f32 %v8338, %v3766
    %v8373 = vmul.f32 %v8341, %v3766
    %v8374 = vmul.f32 %v8344, %v3766
    %v8375 = vmul.f32 %v8347, %v3766
    %v8376 = vmul.f32 %v8350, %v3766
    %v8377 = vmul.f32 %v8353, %v3766
    %v8378 = vmul.f32 %v8356, %v3766
    %v8379 = vmul.f32 %v8359, %v3766
    %v8380 = vmul.f32 %v8362, %v3766
    %v8381 = vmul.f32 %v8365, %v3766
    %v8382 = vadd.f32 %v8366, 1e-05
    %v8383 = vadd.f32 %v8367, 1e-05
    %v8384 = vadd.f32 %v8368, 1e-05
    %v8385 = vadd.f32 %v8369, 1e-05
    %v8386 = vadd.f32 %v8370, 1e-05
    %v8387 = vadd.f32 %v8371, 1e-05
    %v8388 = vadd.f32 %v8372, 1e-05
    %v8389 = vadd.f32 %v8373, 1e-05
    %v8390 = vadd.f32 %v8374, 1e-05
    %v8391 = vadd.f32 %v8375, 1e-05
    %v8392 = vadd.f32 %v8376, 1e-05
    %v8393 = vadd.f32 %v8377, 1e-05
    %v8394 = vadd.f32 %v8378, 1e-05
    %v8395 = vadd.f32 %v8379, 1e-05
    %v8396 = vadd.f32 %v8380, 1e-05
    %v8397 = vadd.f32 %v8381, 1e-05
    %v8398 = vrsqrt.pop %v8382
    %v8399 = vmul.f32 %v8398, %v8382
    %v8400 = vmul.f32 %v8399, %v8398
    %v8401 = vmul.f32 0.5, %v8400
    %v8402 = vsub.f32 1.5, %v8401
    %v8403 = vmul.f32 %v8398, %v8402
    %vm8404 = vweird.f32 %v8382
    %vm8405 = vweird.f32 %v8398
    %vm8406 = vmor %vm8404, %vm8405
    %v8407 = vsel %vm8406, %v8398, %v8403
    %v8408 = vrsqrt.pop %v8383
    %v8409 = vmul.f32 %v8408, %v8383
    %v8410 = vmul.f32 %v8409, %v8408
    %v8411 = vmul.f32 0.5, %v8410
    %v8412 = vsub.f32 1.5, %v8411
    %v8413 = vmul.f32 %v8408, %v8412
    %vm8414 = vweird.f32 %v8383
    %vm8415 = vweird.f32 %v8408
    %vm8416 = vmor %vm8414, %vm8415
    %v8417 = vsel %vm8416, %v8408, %v8413
    %v8418 = vrsqrt.pop %v8384
    %v8419 = vmul.f32 %v8418, %v8384
    %v8420 = vmul.f32 %v8419, %v8418
    %v8421 = vmul.f32 0.5, %v8420
    %v8422 = vsub.f32 1.5, %v8421
    %v8423 = vmul.f32 %v8418, %v8422
    %vm8424 = vweird.f32 %v8384
    %vm8425 = vweird.f32 %v8418
    %vm8426 = vmor %vm8424, %vm8425
    %v8427 = vsel %vm8426, %v8418, %v8423
    %v8428 = vrsqrt.pop %v8385
    %v8429 = vmul.f32 %v8428, %v8385
    %v8430 = vmul.f32 %v8429, %v8428
    %v8431 = vmul.f32 0.5, %v8430
    %v8432 = vsub.f32 1.5, %v8431
    %v8433 = vmul.f32 %v8428, %v8432
    %vm8434 = vweird.f32 %v8385
    %vm8435 = vweird.f32 %v8428
    %vm8436 = vmor %vm8434, %vm8435
    %v8437 = vsel %vm8436, %v8428, %v8433
    %v8438 = vrsqrt.pop %v8386
    %v8439 = vmul.f32 %v8438, %v8386
    %v8440 = vmul.f32 %v8439, %v8438
    %v8441 = vmul.f32 0.5, %v8440
    %v8442 = vsub.f32 1.5, %v8441
    %v8443 = vmul.f32 %v8438, %v8442
    %vm8444 = vweird.f32 %v8386
    %vm8445 = vweird.f32 %v8438
    %vm8446 = vmor %vm8444, %vm8445
    %v8447 = vsel %vm8446, %v8438, %v8443
    %v8448 = vrsqrt.pop %v8387
    %v8449 = vmul.f32 %v8448, %v8387
    %v8450 = vmul.f32 %v8449, %v8448
    %v8451 = vmul.f32 0.5, %v8450
    %v8452 = vsub.f32 1.5, %v8451
    %v8453 = vmul.f32 %v8448, %v8452
    %vm8454 = vweird.f32 %v8387
    %vm8455 = vweird.f32 %v8448
    %vm8456 = vmor %vm8454, %vm8455
    %v8457 = vsel %vm8456, %v8448, %v8453
    %v8458 = vrsqrt.pop %v8388
    %v8459 = vmul.f32 %v8458, %v8388
    %v8460 = vmul.f32 %v8459, %v8458
    %v8461 = vmul.f32 0.5, %v8460
    %v8462 = vsub.f32 1.5, %v8461
    %v8463 = vmul.f32 %v8458, %v8462
    %vm8464 = vweird.f32 %v8388
    %vm8465 = vweird.f32 %v8458
    %vm8466 = vmor %vm8464, %vm8465
    %v8467 = vsel %vm8466, %v8458, %v8463
    %v8468 = vrsqrt.pop %v8389
    %v8469 = vmul.f32 %v8468, %v8389
    %v8470 = vmul.f32 %v8469, %v8468
    %v8471 = vmul.f32 0.5, %v8470
    %v8472 = vsub.f32 1.5, %v8471
    %v8473 = vmul.f32 %v8468, %v8472
    %vm8474 = vweird.f32 %v8389
    %vm8475 = vweird.f32 %v8468
    %vm8476 = vmor %vm8474, %vm8475
    %v8477 = vsel %vm8476, %v8468, %v8473
    %v8478 = vrsqrt.pop %v8390
    %v8479 = vmul.f32 %v8478, %v8390
    %v8480 = vmul.f32 %v8479, %v8478
    %v8481 = vmul.f32 0.5, %v8480
    %v8482 = vsub.f32 1.5, %v8481
    %v8483 = vmul.f32 %v8478, %v8482
    %vm8484 = vweird.f32 %v8390
    %vm8485 = vweird.f32 %v8478
    %vm8486 = vmor %vm8484, %vm8485
    %v8487 = vsel %vm8486, %v8478, %v8483
    %v8488 = vrsqrt.pop %v8391
    %v8489 = vmul.f32 %v8488, %v8391
    %v8490 = vmul.f32 %v8489, %v8488
    %v8491 = vmul.f32 0.5, %v8490
    %v8492 = vsub.f32 1.5, %v8491
    %v8493 = vmul.f32 %v8488, %v8492
    %vm8494 = vweird.f32 %v8391
    %vm8495 = vweird.f32 %v8488
    %vm8496 = vmor %vm8494, %vm8495
    %v8497 = vsel %vm8496, %v8488, %v8493
    %v8498 = vrsqrt.pop %v8392
    %v8499 = vmul.f32 %v8498, %v8392
    %v8500 = vmul.f32 %v8499, %v8498
    %v8501 = vmul.f32 0.5, %v8500
    %v8502 = vsub.f32 1.5, %v8501
    %v8503 = vmul.f32 %v8498, %v8502
    %vm8504 = vweird.f32 %v8392
    %vm8505 = vweird.f32 %v8498
    %vm8506 = vmor %vm8504, %vm8505
    %v8507 = vsel %vm8506, %v8498, %v8503
    %v8508 = vrsqrt.pop %v8393
    %v8509 = vmul.f32 %v8508, %v8393
    %v8510 = vmul.f32 %v8509, %v8508
    %v8511 = vmul.f32 0.5, %v8510
    %v8512 = vsub.f32 1.5, %v8511
    %v8513 = vmul.f32 %v8508, %v8512
    %vm8514 = vweird.f32 %v8393
    %vm8515 = vweird.f32 %v8508
    %vm8516 = vmor %vm8514, %vm8515
    %v8517 = vsel %vm8516, %v8508, %v8513
    %v8518 = vrsqrt.pop %v8394
    %v8519 = vmul.f32 %v8518, %v8394
    %v8520 = vmul.f32 %v8519, %v8518
    %v8521 = vmul.f32 0.5, %v8520
    %v8522 = vsub.f32 1.5, %v8521
    %v8523 = vmul.f32 %v8518, %v8522
    %vm8524 = vweird.f32 %v8394
    %vm8525 = vweird.f32 %v8518
    %vm8526 = vmor %vm8524, %vm8525
    %v8527 = vsel %vm8526, %v8518, %v8523
    %v8528 = vrsqrt.pop %v8395
    %v8529 = vmul.f32 %v8528, %v8395
    %v8530 = vmul.f32 %v8529, %v8528
    %v8531 = vmul.f32 0.5, %v8530
    %v8532 = vsub.f32 1.5, %v8531
    %v8533 = vmul.f32 %v8528, %v8532
    %vm8534 = vweird.f32 %v8395
    %vm8535 = vweird.f32 %v8528
    %vm8536 = vmor %vm8534, %vm8535
    %v8537 = vsel %vm8536, %v8528, %v8533
    %v8538 = vrsqrt.pop %v8396
    %v8539 = vmul.f32 %v8538, %v8396
    %v8540 = vmul.f32 %v8539, %v8538
    %v8541 = vmul.f32 0.5, %v8540
    %v8542 = vsub.f32 1.5, %v8541
    %v8543 = vmul.f32 %v8538, %v8542
    %vm8544 = vweird.f32 %v8396
    %vm8545 = vweird.f32 %v8538
    %vm8546 = vmor %vm8544, %vm8545
    %v8547 = vsel %vm8546, %v8538, %v8543
    %v8548 = vrsqrt.pop %v8397
    %v8549 = vmul.f32 %v8548, %v8397
    %v8550 = vmul.f32 %v8549, %v8548
    %v8551 = vmul.f32 0.5, %v8550
    %v8552 = vsub.f32 1.5, %v8551
    %v8553 = vmul.f32 %v8548, %v8552
    %vm8554 = vweird.f32 %v8397
    %vm8555 = vweird.f32 %v8548
    %vm8556 = vmor %vm8554, %vm8555
    %v8557 = vsel %vm8556, %v8548, %v8553
    %v8558 = vmul.f32 %v8286, %v8407
    %v8559 = vmul.f32 %v8287, %v8417
    %v8560 = vmul.f32 %v8288, %v8427
    %v8561 = vmul.f32 %v8289, %v8437
    %v8562 = vmul.f32 %v8290, %v8447
    %v8563 = vmul.f32 %v8291, %v8457
    %v8564 = vmul.f32 %v8292, %v8467
    %v8565 = vmul.f32 %v8293, %v8477
    %v8566 = vmul.f32 %v8294, %v8487
    %v8567 = vmul.f32 %v8295, %v8497
    %v8568 = vmul.f32 %v8296, %v8507
    %v8569 = vmul.f32 %v8297, %v8517
    %v8570 = vmul.f32 %v8298, %v8527
    %v8571 = vmul.f32 %v8299, %v8537
    %v8572 = vmul.f32 %v8300, %v8547
    %v8573 = vmul.f32 %v8301, %v8557
    %v8575 = vperm.slane %v8219, 0
    %v8577 = vmul.f32 %v8558, %v8575
    %v8578 = vmul.f32 %v8559, %v8575
    %v8579 = vmul.f32 %v8560, %v8575
    %v8580 = vmul.f32 %v8561, %v8575
    %v8581 = vmul.f32 %v8562, %v8575
    %v8582 = vmul.f32 %v8563, %v8575
    %v8583 = vmul.f32 %v8564, %v8575
    %v8584 = vmul.f32 %v8565, %v8575
    %v8585 = vmul.f32 %v8566, %v8575
    %v8586 = vmul.f32 %v8567, %v8575
    %v8587 = vmul.f32 %v8568, %v8575
    %v8588 = vmul.f32 %v8569, %v8575
    %v8589 = vmul.f32 %v8570, %v8575
    %v8590 = vmul.f32 %v8571, %v8575
    %v8591 = vmul.f32 %v8572, %v8575
    %v8592 = vmul.f32 %v8573, %v8575
    %v8594 = vperm.slane %v8221, 0
    %v8596 = vadd.f32 %v8577, %v8594
    %v8597 = vadd.f32 %v8578, %v8594
    %v8598 = vadd.f32 %v8579, %v8594
    %v8599 = vadd.f32 %v8580, %v8594
    %v8600 = vadd.f32 %v8581, %v8594
    %v8601 = vadd.f32 %v8582, %v8594
    %v8602 = vadd.f32 %v8583, %v8594
    %v8603 = vadd.f32 %v8584, %v8594
    %v8604 = vadd.f32 %v8585, %v8594
    %v8605 = vadd.f32 %v8586, %v8594
    %v8606 = vadd.f32 %v8587, %v8594
    %v8607 = vadd.f32 %v8588, %v8594
    %v8608 = vadd.f32 %v8589, %v8594
    %v8609 = vadd.f32 %v8590, %v8594
    %v8610 = vadd.f32 %v8591, %v8594
    %v8611 = vadd.f32 %v8592, %v8594
    %s8612 = scalar_lea.vmem [#allocation10], 32
    %v8613 = vld [vmem:[%s8612] sm:$0xff]
    %v8614 = vld [vmem:[%s8612 + $0x8] sm:$0xff]
    %v8615 = vld [vmem:[%s8612 + $0x10] sm:$0xff]
    %v8616 = vld [vmem:[%s8612 + $0x18] sm:$0xff]
    %s8617 = scalar_lea.vmem %s9, 1
    %v8618 = vld [vmem:[%s8617] sm:$0x1]
    %v8620 = vperm.slane %v8618, 0
    %v8623 = vsel %vm298, %v8596, 0
    %v8626 = vsel %vm298, %v8597, 0
    %v8629 = vsel %vm298, %v8598, 0
    %v8632 = vsel %vm298, %v8599, 0
    %v8635 = vsel %vm298, %v8600, 0
    %v8638 = vsel %vm298, %v8601, 0
    %v8641 = vsel %vm298, %v8602, 0
    %v8644 = vsel %vm298, %v8603, 0
    %v8647 = vsel %vm298, %v8604, 0
    %v8650 = vsel %vm298, %v8605, 0
    %v8653 = vsel %vm298, %v8606, 0
    %v8656 = vsel %vm298, %v8607, 0
    %v8659 = vsel %vm298, %v8608, 0
    %v8662 = vsel %vm298, %v8609, 0
    %v8665 = vsel %vm298, %v8610, 0
    %v8668 = vsel %vm298, %v8611, 0
    %8670 = vmatpush.msra.mxu0 0.0
    %8671 = vmatpush.msra.mxu0 0.0
    %8672 = vmatpush.msra.mxu0 0.0
    %8673 = vmatpush.msra.mxu0 0.0
    %8674 = vmatpush.msra.mxu0 0.0
    %8675 = vmatpush.msra.mxu0 0.0
    %8676 = vmatpush.msra.mxu0 0.0
    %8677 = vmatpush.msra.mxu0 0.0
    %8678 = vmatpush.msra.mxu0 0.0
    %8679 = vmatpush.msra.mxu0 0.0
    %8680 = vmatpush.msra.mxu0 0.0
    %8681 = vmatpush.msra.mxu0 0.0
    %8682 = vmatpush.msra.mxu0 %v8616
    %8683 = vmatpush.msra.mxu0 %v8615
    %8684 = vmatpush.msra.mxu0 %v8614
    %8685 = vmatpush.msra.mxu0 %v8613
    %8686 = vmatmul.f32.gmra.mxu0 %v8623
    %v8687 = vpop.f32.mrf.mxu0
    %v8688 = vadd.f32 %v8620, %v8687
    %8689 = vmatmul.f32.gmra.mxu0 %v8626
    %v8690 = vpop.f32.mrf.mxu0
    %v8691 = vadd.f32 %v8620, %v8690
    %8692 = vmatmul.f32.gmra.mxu0 %v8629
    %v8693 = vpop.f32.mrf.mxu0
    %v8694 = vadd.f32 %v8620, %v8693
    %8695 = vmatmul.f32.gmra.mxu0 %v8632
    %v8696 = vpop.f32.mrf.mxu0
    %v8697 = vadd.f32 %v8620, %v8696
    %8698 = vmatmul.f32.gmra.mxu0 %v8635
    %v8699 = vpop.f32.mrf.mxu0
    %v8700 = vadd.f32 %v8620, %v8699
    %8701 = vmatmul.f32.gmra.mxu0 %v8638
    %v8702 = vpop.f32.mrf.mxu0
    %v8703 = vadd.f32 %v8620, %v8702
    %8704 = vmatmul.f32.gmra.mxu0 %v8641
    %v8705 = vpop.f32.mrf.mxu0
    %v8706 = vadd.f32 %v8620, %v8705
    %8707 = vmatmul.f32.gmra.mxu0 %v8644
    %v8708 = vpop.f32.mrf.mxu0
    %v8709 = vadd.f32 %v8620, %v8708
    %8710 = vmatmul.f32.gmra.mxu0 %v8647
    %v8711 = vpop.f32.mrf.mxu0
    %v8712 = vadd.f32 %v8620, %v8711
    %8713 = vmatmul.f32.gmra.mxu0 %v8650
    %v8714 = vpop.f32.mrf.mxu0
    %v8715 = vadd.f32 %v8620, %v8714
    %8716 = vmatmul.f32.gmra.mxu0 %v8653
    %v8717 = vpop.f32.mrf.mxu0
    %v8718 = vadd.f32 %v8620, %v8717
    %8719 = vmatmul.f32.gmra.mxu0 %v8656
    %v8720 = vpop.f32.mrf.mxu0
    %v8721 = vadd.f32 %v8620, %v8720
    %8722 = vmatmul.f32.gmra.mxu0 %v8659
    %v8723 = vpop.f32.mrf.mxu0
    %v8724 = vadd.f32 %v8620, %v8723
    %8725 = vmatmul.f32.gmra.mxu0 %v8662
    %v8726 = vpop.f32.mrf.mxu0
    %v8727 = vadd.f32 %v8620, %v8726
    %8728 = vmatmul.f32.gmra.mxu0 %v8665
    %v8729 = vpop.f32.mrf.mxu0
    %v8730 = vadd.f32 %v8620, %v8729
    %8731 = vmatmul.f32.gmra.mxu0 %v8668
    %v8732 = vpop.f32.mrf.mxu0
    %v8733 = vadd.f32 %v8620, %v8732
    %8734 = vdwg.mxu0
    %v8735 = vmul.f32 %v8688, 0.5
    %v8736 = vmul.f32 %v8691, 0.5
    %v8737 = vmul.f32 %v8694, 0.5
    %v8738 = vmul.f32 %v8697, 0.5
    %v8739 = vmul.f32 %v8700, 0.5
    %v8740 = vmul.f32 %v8703, 0.5
    %v8741 = vmul.f32 %v8706, 0.5
    %v8742 = vmul.f32 %v8709, 0.5
    %v8743 = vmul.f32 %v8712, 0.5
    %v8744 = vmul.f32 %v8715, 0.5
    %v8745 = vmul.f32 %v8718, 0.5
    %v8746 = vmul.f32 %v8721, 0.5
    %v8747 = vmul.f32 %v8724, 0.5
    %v8748 = vmul.f32 %v8727, 0.5
    %v8749 = vmul.f32 %v8730, 0.5
    %v8750 = vmul.f32 %v8733, 0.5
    %v8751 = vmul.f32 %v8688, %v8688
    %v8752 = vmul.f32 %v8691, %v8691
    %v8753 = vmul.f32 %v8694, %v8694
    %v8754 = vmul.f32 %v8697, %v8697
    %v8755 = vmul.f32 %v8700, %v8700
    %v8756 = vmul.f32 %v8703, %v8703
    %v8757 = vmul.f32 %v8706, %v8706
    %v8758 = vmul.f32 %v8709, %v8709
    %v8759 = vmul.f32 %v8712, %v8712
    %v8760 = vmul.f32 %v8715, %v8715
    %v8761 = vmul.f32 %v8718, %v8718
    %v8762 = vmul.f32 %v8721, %v8721
    %v8763 = vmul.f32 %v8724, %v8724
    %v8764 = vmul.f32 %v8727, %v8727
    %v8765 = vmul.f32 %v8730, %v8730
    %v8766 = vmul.f32 %v8733, %v8733
    %v8767 = vmul.f32 %v8751, %v8688
    %v8768 = vmul.f32 %v8752, %v8691
    %v8769 = vmul.f32 %v8753, %v8694
    %v8770 = vmul.f32 %v8754, %v8697
    %v8771 = vmul.f32 %v8755, %v8700
    %v8772 = vmul.f32 %v8756, %v8703
    %v8773 = vmul.f32 %v8757, %v8706
    %v8774 = vmul.f32 %v8758, %v8709
    %v8775 = vmul.f32 %v8759, %v8712
    %v8776 = vmul.f32 %v8760, %v8715
    %v8777 = vmul.f32 %v8761, %v8718
    %v8778 = vmul.f32 %v8762, %v8721
    %v8779 = vmul.f32 %v8763, %v8724
    %v8780 = vmul.f32 %v8764, %v8727
    %v8781 = vmul.f32 %v8765, %v8730
    %v8782 = vmul.f32 %v8766, %v8733
    %v8783 = vmul.f32 %v8767, 0.044715
    %v8784 = vmul.f32 %v8768, 0.044715
    %v8785 = vmul.f32 %v8769, 0.044715
    %v8786 = vmul.f32 %v8770, 0.044715
    %v8787 = vmul.f32 %v8771, 0.044715
    %v8788 = vmul.f32 %v8772, 0.044715
    %v8789 = vmul.f32 %v8773, 0.044715
    %v8790 = vmul.f32 %v8774, 0.044715
    %v8791 = vmul.f32 %v8775, 0.044715
    %v8792 = vmul.f32 %v8776, 0.044715
    %v8793 = vmul.f32 %v8777, 0.044715
    %v8794 = vmul.f32 %v8778, 0.044715
    %v8795 = vmul.f32 %v8779, 0.044715
    %v8796 = vmul.f32 %v8780, 0.044715
    %v8797 = vmul.f32 %v8781, 0.044715
    %v8798 = vmul.f32 %v8782, 0.044715
    %v8799 = vadd.f32 %v8688, %v8783
    %v8800 = vadd.f32 %v8691, %v8784
    %v8801 = vadd.f32 %v8694, %v8785
    %v8802 = vadd.f32 %v8697, %v8786
    %v8803 = vadd.f32 %v8700, %v8787
    %v8804 = vadd.f32 %v8703, %v8788
    %v8805 = vadd.f32 %v8706, %v8789
    %v8806 = vadd.f32 %v8709, %v8790
    %v8807 = vadd.f32 %v8712, %v8791
    %v8808 = vadd.f32 %v8715, %v8792
    %v8809 = vadd.f32 %v8718, %v8793
    %v8810 = vadd.f32 %v8721, %v8794
    %v8811 = vadd.f32 %v8724, %v8795
    %v8812 = vadd.f32 %v8727, %v8796
    %v8813 = vadd.f32 %v8730, %v8797
    %v8814 = vadd.f32 %v8733, %v8798
    %v8815 = vmul.f32 %v8799, 0.7978846
    %v8816 = vmul.f32 %v8800, 0.7978846
    %v8817 = vmul.f32 %v8801, 0.7978846
    %v8818 = vmul.f32 %v8802, 0.7978846
    %v8819 = vmul.f32 %v8803, 0.7978846
    %v8820 = vmul.f32 %v8804, 0.7978846
    %v8821 = vmul.f32 %v8805, 0.7978846
    %v8822 = vmul.f32 %v8806, 0.7978846
    %v8823 = vmul.f32 %v8807, 0.7978846
    %v8824 = vmul.f32 %v8808, 0.7978846
    %v8825 = vmul.f32 %v8809, 0.7978846
    %v8826 = vmul.f32 %v8810, 0.7978846
    %v8827 = vmul.f32 %v8811, 0.7978846
    %v8828 = vmul.f32 %v8812, 0.7978846
    %v8829 = vmul.f32 %v8813, 0.7978846
    %v8830 = vmul.f32 %v8814, 0.7978846
    %v8831 = vtanh.pop %v8815
    %v8832 = vtanh.pop %v8816
    %v8833 = vtanh.pop %v8817
    %v8834 = vtanh.pop %v8818
    %v8835 = vtanh.pop %v8819
    %v8836 = vtanh.pop %v8820
    %v8837 = vtanh.pop %v8821
    %v8838 = vtanh.pop %v8822
    %v8839 = vtanh.pop %v8823
    %v8840 = vtanh.pop %v8824
    %v8841 = vtanh.pop %v8825
    %v8842 = vtanh.pop %v8826
    %v8843 = vtanh.pop %v8827
    %v8844 = vtanh.pop %v8828
    %v8845 = vtanh.pop %v8829
    %v8846 = vtanh.pop %v8830
    %v8847 = vadd.f32 %v8831, 1.0
    %v8848 = vadd.f32 %v8832, 1.0
    %v8849 = vadd.f32 %v8833, 1.0
    %v8850 = vadd.f32 %v8834, 1.0
    %v8851 = vadd.f32 %v8835, 1.0
    %v8852 = vadd.f32 %v8836, 1.0
    %v8853 = vadd.f32 %v8837, 1.0
    %v8854 = vadd.f32 %v8838, 1.0
    %v8855 = vadd.f32 %v8839, 1.0
    %v8856 = vadd.f32 %v8840, 1.0
    %v8857 = vadd.f32 %v8841, 1.0
    %v8858 = vadd.f32 %v8842, 1.0
    %v8859 = vadd.f32 %v8843, 1.0
    %v8860 = vadd.f32 %v8844, 1.0
    %v8861 = vadd.f32 %v8845, 1.0
    %v8862 = vadd.f32 %v8846, 1.0
    %v8863 = vmul.f32 %v8735, %v8847
    %v8864 = vmul.f32 %v8736, %v8848
    %v8865 = vmul.f32 %v8737, %v8849
    %v8866 = vmul.f32 %v8738, %v8850
    %v8867 = vmul.f32 %v8739, %v8851
    %v8868 = vmul.f32 %v8740, %v8852
    %v8869 = vmul.f32 %v8741, %v8853
    %v8870 = vmul.f32 %v8742, %v8854
    %v8871 = vmul.f32 %v8743, %v8855
    %v8872 = vmul.f32 %v8744, %v8856
    %v8873 = vmul.f32 %v8745, %v8857
    %v8874 = vmul.f32 %v8746, %v8858
    %v8875 = vmul.f32 %v8747, %v8859
    %v8876 = vmul.f32 %v8748, %v8860
    %v8877 = vmul.f32 %v8749, %v8861
    %v8878 = vmul.f32 %v8750, %v8862
    %s8879 = scalar_lea.vmem %s10, 64
    %v8880 = vld [vmem:[%s8879] sm:$0xff]
    %v8881 = vld [vmem:[%s8879 + $0x8] sm:$0xff]
    %v8882 = vld [vmem:[%s8879 + $0x10] sm:$0xff]
    %v8883 = vld [vmem:[%s8879 + $0x18] sm:$0xff]
    %v8884 = vld [vmem:[%s8879 + $0x20] sm:$0xff]
    %v8885 = vld [vmem:[%s8879 + $0x28] sm:$0xff]
    %v8886 = vld [vmem:[%s8879 + $0x30] sm:$0xff]
    %v8887 = vld [vmem:[%s8879 + $0x38] sm:$0xff]
    %s8888 = scalar_lea.vmem %s11, 1
    %v8889 = vld [vmem:[%s8888] sm:$0x1]
    %v8891 = vperm.slane %v8889, 0
    %v8894 = vsel %vm4386, %v8863, 0
    %v8897 = vsel %vm4386, %v8864, 0
    %v8900 = vsel %vm4386, %v8865, 0
    %v8903 = vsel %vm4386, %v8866, 0
    %v8906 = vsel %vm4386, %v8867, 0
    %v8909 = vsel %vm4386, %v8868, 0
    %v8912 = vsel %vm4386, %v8869, 0
    %v8915 = vsel %vm4386, %v8870, 0
    %v8918 = vsel %vm4386, %v8871, 0
    %v8921 = vsel %vm4386, %v8872, 0
    %v8924 = vsel %vm4386, %v8873, 0
    %v8927 = vsel %vm4386, %v8874, 0
    %v8930 = vsel %vm4386, %v8875, 0
    %v8933 = vsel %vm4386, %v8876, 0
    %v8936 = vsel %vm4386, %v8877, 0
    %v8939 = vsel %vm4386, %v8878, 0
    %8941 = vmatpush.msra.mxu0 0.0
    %8942 = vmatpush.msra.mxu0 0.0
    %8943 = vmatpush.msra.mxu0 0.0
    %8944 = vmatpush.msra.mxu0 0.0
    %8945 = vmatpush.msra.mxu0 0.0
    %8946 = vmatpush.msra.mxu0 0.0
    %8947 = vmatpush.msra.mxu0 0.0
    %8948 = vmatpush.msra.mxu0 0.0
    %8949 = vmatpush.msra.mxu0 %v8887
    %8950 = vmatpush.msra.mxu0 %v8886
    %8951 = vmatpush.msra.mxu0 %v8885
    %8952 = vmatpush.msra.mxu0 %v8884
    %8953 = vmatpush.msra.mxu0 %v8883
    %8954 = vmatpush.msra.mxu0 %v8882
    %8955 = vmatpush.msra.mxu0 %v8881
    %8956 = vmatpush.msra.mxu0 %v8880
    %8957 = vmatmul.f32.gmra.mxu0 %v8894
    %v8958 = vpop.f32.mrf.mxu0
    %v8959 = vadd.f32 %v8891, %v8958
    %8960 = vmatmul.f32.gmra.mxu0 %v8897
    %v8961 = vpop.f32.mrf.mxu0
    %v8962 = vadd.f32 %v8891, %v8961
    %8963 = vmatmul.f32.gmra.mxu0 %v8900
    %v8964 = vpop.f32.mrf.mxu0
    %v8965 = vadd.f32 %v8891, %v8964
    %8966 = vmatmul.f32.gmra.mxu0 %v8903
    %v8967 = vpop.f32.mrf.mxu0
    %v8968 = vadd.f32 %v8891, %v8967
    %8969 = vmatmul.f32.gmra.mxu0 %v8906
    %v8970 = vpop.f32.mrf.mxu0
    %v8971 = vadd.f32 %v8891, %v8970
    %8972 = vmatmul.f32.gmra.mxu0 %v8909
    %v8973 = vpop.f32.mrf.mxu0
    %v8974 = vadd.f32 %v8891, %v8973
    %8975 = vmatmul.f32.gmra.mxu0 %v8912
    %v8976 = vpop.f32.mrf.mxu0
    %v8977 = vadd.f32 %v8891, %v8976
    %8978 = vmatmul.f32.gmra.mxu0 %v8915
    %v8979 = vpop.f32.mrf.mxu0
    %v8980 = vadd.f32 %v8891, %v8979
    %8981 = vmatmul.f32.gmra.mxu0 %v8918
    %v8982 = vpop.f32.mrf.mxu0
    %v8983 = vadd.f32 %v8891, %v8982
    %8984 = vmatmul.f32.gmra.mxu0 %v8921
    %v8985 = vpop.f32.mrf.mxu0
    %v8986 = vadd.f32 %v8891, %v8985
    %8987 = vmatmul.f32.gmra.mxu0 %v8924
    %v8988 = vpop.f32.mrf.mxu0
    %v8989 = vadd.f32 %v8891, %v8988
    %8990 = vmatmul.f32.gmra.mxu0 %v8927
    %v8991 = vpop.f32.mrf.mxu0
    %v8992 = vadd.f32 %v8891, %v8991
    %8993 = vmatmul.f32.gmra.mxu0 %v8930
    %v8994 = vpop.f32.mrf.mxu0
    %v8995 = vadd.f32 %v8891, %v8994
    %8996 = vmatmul.f32.gmra.mxu0 %v8933
    %v8997 = vpop.f32.mrf.mxu0
    %v8998 = vadd.f32 %v8891, %v8997
    %8999 = vmatmul.f32.gmra.mxu0 %v8936
    %v9000 = vpop.f32.mrf.mxu0
    %v9001 = vadd.f32 %v8891, %v9000
    %9002 = vmatmul.f32.gmra.mxu0 %v8939
    %v9003 = vpop.f32.mrf.mxu0
    %v9004 = vadd.f32 %v8891, %v9003
    %9005 = vdwg.mxu0
    %v9006 = vadd.f32 %v8596, %v8959
    %v9007 = vadd.f32 %v8597, %v8962
    %v9008 = vadd.f32 %v8598, %v8965
    %v9009 = vadd.f32 %v8599, %v8968
    %v9010 = vadd.f32 %v8600, %v8971
    %v9011 = vadd.f32 %v8601, %v8974
    %v9012 = vadd.f32 %v8602, %v8977
    %v9013 = vadd.f32 %v8603, %v8980
    %v9014 = vadd.f32 %v8604, %v8983
    %v9015 = vadd.f32 %v8605, %v8986
    %v9016 = vadd.f32 %v8606, %v8989
    %v9017 = vadd.f32 %v8607, %v8992
    %v9018 = vadd.f32 %v8608, %v8995
    %v9019 = vadd.f32 %v8609, %v8998
    %v9020 = vadd.f32 %v8610, %v9001
    %v9021 = vadd.f32 %v8611, %v9004
    %s9022 = scalar_lea.vmem %s12, 1
    %v9023 = vld [vmem:[%s9022] sm:$0x1]
    %s9024 = scalar_lea.vmem [#allocation11], 1
    %v9025 = vld [vmem:[%s9024] sm:$0x1]
    %v9026 = vsel %vm298, %v9006, 0.0
    %9027 = vadd.xlane.f32.xlu0 %v9026
    %v9028 = vpop.xlane.xlu0 %9027
    %v9029 = vsel %vm298, %v9007, 0.0
    %9030 = vadd.xlane.f32.xlu0 %v9029
    %v9031 = vpop.xlane.xlu0 %9030
    %v9032 = vsel %vm298, %v9008, 0.0
    %9033 = vadd.xlane.f32.xlu0 %v9032
    %v9034 = vpop.xlane.xlu0 %9033
    %v9035 = vsel %vm298, %v9009, 0.0
    %9036 = vadd.xlane.f32.xlu0 %v9035
    %v9037 = vpop.xlane.xlu0 %9036
    %v9038 = vsel %vm298, %v9010, 0.0
    %9039 = vadd.xlane.f32.xlu0 %v9038
    %v9040 = vpop.xlane.xlu0 %9039
    %v9041 = vsel %vm298, %v9011, 0.0
    %9042 = vadd.xlane.f32.xlu0 %v9041
    %v9043 = vpop.xlane.xlu0 %9042
    %v9044 = vsel %vm298, %v9012, 0.0
    %9045 = vadd.xlane.f32.xlu0 %v9044
    %v9046 = vpop.xlane.xlu0 %9045
    %v9047 = vsel %vm298, %v9013, 0.0
    %9048 = vadd.xlane.f32.xlu0 %v9047
    %v9049 = vpop.xlane.xlu0 %9048
    %v9050 = vsel %vm298, %v9014, 0.0
    %9051 = vadd.xlane.f32.xlu0 %v9050
    %v9052 = vpop.xlane.xlu0 %9051
    %v9053 = vsel %vm298, %v9015, 0.0
    %9054 = vadd.xlane.f32.xlu0 %v9053
    %v9055 = vpop.xlane.xlu0 %9054
    %v9056 = vsel %vm298, %v9016, 0.0
    %9057 = vadd.xlane.f32.xlu0 %v9056
    %v9058 = vpop.xlane.xlu0 %9057
    %v9059 = vsel %vm298, %v9017, 0.0
    %9060 = vadd.xlane.f32.xlu0 %v9059
    %v9061 = vpop.xlane.xlu0 %9060
    %v9062 = vsel %vm298, %v9018, 0.0
    %9063 = vadd.xlane.f32.xlu0 %v9062
    %v9064 = vpop.xlane.xlu0 %9063
    %v9065 = vsel %vm298, %v9019, 0.0
    %9066 = vadd.xlane.f32.xlu0 %v9065
    %v9067 = vpop.xlane.xlu0 %9066
    %v9068 = vsel %vm298, %v9020, 0.0
    %9069 = vadd.xlane.f32.xlu0 %v9068
    %v9070 = vpop.xlane.xlu0 %9069
    %v9071 = vsel %vm298, %v9021, 0.0
    %9072 = vadd.xlane.f32.xlu0 %v9071
    %v9073 = vpop.xlane.xlu0 %9072
    %v9074 = vmul.f32 %v9028, %v3766
    %v9075 = vmul.f32 %v9031, %v3766
    %v9076 = vmul.f32 %v9034, %v3766
    %v9077 = vmul.f32 %v9037, %v3766
    %v9078 = vmul.f32 %v9040, %v3766
    %v9079 = vmul.f32 %v9043, %v3766
    %v9080 = vmul.f32 %v9046, %v3766
    %v9081 = vmul.f32 %v9049, %v3766
    %v9082 = vmul.f32 %v9052, %v3766
    %v9083 = vmul.f32 %v9055, %v3766
    %v9084 = vmul.f32 %v9058, %v3766
    %v9085 = vmul.f32 %v9061, %v3766
    %v9086 = vmul.f32 %v9064, %v3766
    %v9087 = vmul.f32 %v9067, %v3766
    %v9088 = vmul.f32 %v9070, %v3766
    %v9089 = vmul.f32 %v9073, %v3766
    %v9090 = vsub.f32 %v9006, %v9074
    %v9091 = vsub.f32 %v9007, %v9075
    %v9092 = vsub.f32 %v9008, %v9076
    %v9093 = vsub.f32 %v9009, %v9077
    %v9094 = vsub.f32 %v9010, %v9078
    %v9095 = vsub.f32 %v9011, %v9079
    %v9096 = vsub.f32 %v9012, %v9080
    %v9097 = vsub.f32 %v9013, %v9081
    %v9098 = vsub.f32 %v9014, %v9082
    %v9099 = vsub.f32 %v9015, %v9083
    %v9100 = vsub.f32 %v9016, %v9084
    %v9101 = vsub.f32 %v9017, %v9085
    %v9102 = vsub.f32 %v9018, %v9086
    %v9103 = vsub.f32 %v9019, %v9087
    %v9104 = vsub.f32 %v9020, %v9088
    %v9105 = vsub.f32 %v9021, %v9089
    %v9106 = vmul.f32 %v9090, %v9090
    %v9107 = vmul.f32 %v9091, %v9091
    %v9108 = vmul.f32 %v9092, %v9092
    %v9109 = vmul.f32 %v9093, %v9093
    %v9110 = vmul.f32 %v9094, %v9094
    %v9111 = vmul.f32 %v9095, %v9095
    %v9112 = vmul.f32 %v9096, %v9096
    %v9113 = vmul.f32 %v9097, %v9097
    %v9114 = vmul.f32 %v9098, %v9098
    %v9115 = vmul.f32 %v9099, %v9099
    %v9116 = vmul.f32 %v9100, %v9100
    %v9117 = vmul.f32 %v9101, %v9101
    %v9118 = vmul.f32 %v9102, %v9102
    %v9119 = vmul.f32 %v9103, %v9103
    %v9120 = vmul.f32 %v9104, %v9104
    %v9121 = vmul.f32 %v9105, %v9105
    %v9122 = vsel %vm298, %v9106, 0.0
    %9123 = vadd.xlane.f32.xlu0 %v9122
    %v9124 = vpop.xlane.xlu0 %9123
    %v9125 = vsel %vm298, %v9107, 0.0
    %9126 = vadd.xlane.f32.xlu0 %v9125
    %v9127 = vpop.xlane.xlu0 %9126
    %v9128 = vsel %vm298, %v9108, 0.0
    %9129 = vadd.xlane.f32.xlu0 %v9128
    %v9130 = vpop.xlane.xlu0 %9129
    %v9131 = vsel %vm298, %v9109, 0.0
    %9132 = vadd.xlane.f32.xlu0 %v9131
    %v9133 = vpop.xlane.xlu0 %9132
    %v9134 = vsel %vm298, %v9110, 0.0
    %9135 = vadd.xlane.f32.xlu0 %v9134
    %v9136 = vpop.xlane.xlu0 %9135
    %v9137 = vsel %vm298, %v9111, 0.0
    %9138 = vadd.xlane.f32.xlu0 %v9137
    %v9139 = vpop.xlane.xlu0 %9138
    %v9140 = vsel %vm298, %v9112, 0.0
    %9141 = vadd.xlane.f32.xlu0 %v9140
    %v9142 = vpop.xlane.xlu0 %9141
    %v9143 = vsel %vm298, %v9113, 0.0
    %9144 = vadd.xlane.f32.xlu0 %v9143
    %v9145 = vpop.xlane.xlu0 %9144
    %v9146 = vsel %vm298, %v9114, 0.0
    %9147 = vadd.xlane.f32.xlu0 %v9146
    %v9148 = vpop.xlane.xlu0 %9147
    %v9149 = vsel %vm298, %v9115, 0.0
    %9150 = vadd.xlane.f32.xlu0 %v9149
    %v9151 = vpop.xlane.xlu0 %9150
    %v9152 = vsel %vm298, %v9116, 0.0
    %9153 = vadd.xlane.f32.xlu0 %v9152
    %v9154 = vpop.xlane.xlu0 %9153
    %v9155 = vsel %vm298, %v9117, 0.0
    %9156 = vadd.xlane.f32.xlu0 %v9155
    %v9157 = vpop.xlane.xlu0 %9156
    %v9158 = vsel %vm298, %v9118, 0.0
    %9159 = vadd.xlane.f32.xlu0 %v9158
    %v9160 = vpop.xlane.xlu0 %9159
    %v9161 = vsel %vm298, %v9119, 0.0
    %9162 = vadd.xlane.f32.xlu0 %v9161
    %v9163 = vpop.xlane.xlu0 %9162
    %v9164 = vsel %vm298, %v9120, 0.0
    %9165 = vadd.xlane.f32.xlu0 %v9164
    %v9166 = vpop.xlane.xlu0 %9165
    %v9167 = vsel %vm298, %v9121, 0.0
    %9168 = vadd.xlane.f32.xlu0 %v9167
    %v9169 = vpop.xlane.xlu0 %9168
    %v9170 = vmul.f32 %v9124, %v3766
    %v9171 = vmul.f32 %v9127, %v3766
    %v9172 = vmul.f32 %v9130, %v3766
    %v9173 = vmul.f32 %v9133, %v3766
    %v9174 = vmul.f32 %v9136, %v3766
    %v9175 = vmul.f32 %v9139, %v3766
    %v9176 = vmul.f32 %v9142, %v3766
    %v9177 = vmul.f32 %v9145, %v3766
    %v9178 = vmul.f32 %v9148, %v3766
    %v9179 = vmul.f32 %v9151, %v3766
    %v9180 = vmul.f32 %v9154, %v3766
    %v9181 = vmul.f32 %v9157, %v3766
    %v9182 = vmul.f32 %v9160, %v3766
    %v9183 = vmul.f32 %v9163, %v3766
    %v9184 = vmul.f32 %v9166, %v3766
    %v9185 = vmul.f32 %v9169, %v3766
    %v9186 = vadd.f32 %v9170, 1e-05
    %v9187 = vadd.f32 %v9171, 1e-05
    %v9188 = vadd.f32 %v9172, 1e-05
    %v9189 = vadd.f32 %v9173, 1e-05
    %v9190 = vadd.f32 %v9174, 1e-05
    %v9191 = vadd.f32 %v9175, 1e-05
    %v9192 = vadd.f32 %v9176, 1e-05
    %v9193 = vadd.f32 %v9177, 1e-05
    %v9194 = vadd.f32 %v9178, 1e-05
    %v9195 = vadd.f32 %v9179, 1e-05
    %v9196 = vadd.f32 %v9180, 1e-05
    %v9197 = vadd.f32 %v9181, 1e-05
    %v9198 = vadd.f32 %v9182, 1e-05
    %v9199 = vadd.f32 %v9183, 1e-05
    %v9200 = vadd.f32 %v9184, 1e-05
    %v9201 = vadd.f32 %v9185, 1e-05
    %v9202 = vrsqrt.pop %v9186
    %v9203 = vmul.f32 %v9202, %v9186
    %v9204 = vmul.f32 %v9203, %v9202
    %v9205 = vmul.f32 0.5, %v9204
    %v9206 = vsub.f32 1.5, %v9205
    %v9207 = vmul.f32 %v9202, %v9206
    %vm9208 = vweird.f32 %v9186
    %vm9209 = vweird.f32 %v9202
    %vm9210 = vmor %vm9208, %vm9209
    %v9211 = vsel %vm9210, %v9202, %v9207
    %v9212 = vrsqrt.pop %v9187
    %v9213 = vmul.f32 %v9212, %v9187
    %v9214 = vmul.f32 %v9213, %v9212
    %v9215 = vmul.f32 0.5, %v9214
    %v9216 = vsub.f32 1.5, %v9215
    %v9217 = vmul.f32 %v9212, %v9216
    %vm9218 = vweird.f32 %v9187
    %vm9219 = vweird.f32 %v9212
    %vm9220 = vmor %vm9218, %vm9219
    %v9221 = vsel %vm9220, %v9212, %v9217
    %v9222 = vrsqrt.pop %v9188
    %v9223 = vmul.f32 %v9222, %v9188
    %v9224 = vmul.f32 %v9223, %v9222
    %v9225 = vmul.f32 0.5, %v9224
    %v9226 = vsub.f32 1.5, %v9225
    %v9227 = vmul.f32 %v9222, %v9226
    %vm9228 = vweird.f32 %v9188
    %vm9229 = vweird.f32 %v9222
    %vm9230 = vmor %vm9228, %vm9229
    %v9231 = vsel %vm9230, %v9222, %v9227
    %v9232 = vrsqrt.pop %v9189
    %v9233 = vmul.f32 %v9232, %v9189
    %v9234 = vmul.f32 %v9233, %v9232
    %v9235 = vmul.f32 0.5, %v9234
    %v9236 = vsub.f32 1.5, %v9235
    %v9237 = vmul.f32 %v9232, %v9236
    %vm9238 = vweird.f32 %v9189
    %vm9239 = vweird.f32 %v9232
    %vm9240 = vmor %vm9238, %vm9239
    %v9241 = vsel %vm9240, %v9232, %v9237
    %v9242 = vrsqrt.pop %v9190
    %v9243 = vmul.f32 %v9242, %v9190
    %v9244 = vmul.f32 %v9243, %v9242
    %v9245 = vmul.f32 0.5, %v9244
    %v9246 = vsub.f32 1.5, %v9245
    %v9247 = vmul.f32 %v9242, %v9246
    %vm9248 = vweird.f32 %v9190
    %vm9249 = vweird.f32 %v9242
    %vm9250 = vmor %vm9248, %vm9249
    %v9251 = vsel %vm9250, %v9242, %v9247
    %v9252 = vrsqrt.pop %v9191
    %v9253 = vmul.f32 %v9252, %v9191
    %v9254 = vmul.f32 %v9253, %v9252
    %v9255 = vmul.f32 0.5, %v9254
    %v9256 = vsub.f32 1.5, %v9255
    %v9257 = vmul.f32 %v9252, %v9256
    %vm9258 = vweird.f32 %v9191
    %vm9259 = vweird.f32 %v9252
    %vm9260 = vmor %vm9258, %vm9259
    %v9261 = vsel %vm9260, %v9252, %v9257
    %v9262 = vrsqrt.pop %v9192
    %v9263 = vmul.f32 %v9262, %v9192
    %v9264 = vmul.f32 %v9263, %v9262
    %v9265 = vmul.f32 0.5, %v9264
    %v9266 = vsub.f32 1.5, %v9265
    %v9267 = vmul.f32 %v9262, %v9266
    %vm9268 = vweird.f32 %v9192
    %vm9269 = vweird.f32 %v9262
    %vm9270 = vmor %vm9268, %vm9269
    %v9271 = vsel %vm9270, %v9262, %v9267
    %v9272 = vrsqrt.pop %v9193
    %v9273 = vmul.f32 %v9272, %v9193
    %v9274 = vmul.f32 %v9273, %v9272
    %v9275 = vmul.f32 0.5, %v9274
    %v9276 = vsub.f32 1.5, %v9275
    %v9277 = vmul.f32 %v9272, %v9276
    %vm9278 = vweird.f32 %v9193
    %vm9279 = vweird.f32 %v9272
    %vm9280 = vmor %vm9278, %vm9279
    %v9281 = vsel %vm9280, %v9272, %v9277
    %v9282 = vrsqrt.pop %v9194
    %v9283 = vmul.f32 %v9282, %v9194
    %v9284 = vmul.f32 %v9283, %v9282
    %v9285 = vmul.f32 0.5, %v9284
    %v9286 = vsub.f32 1.5, %v9285
    %v9287 = vmul.f32 %v9282, %v9286
    %vm9288 = vweird.f32 %v9194
    %vm9289 = vweird.f32 %v9282
    %vm9290 = vmor %vm9288, %vm9289
    %v9291 = vsel %vm9290, %v9282, %v9287
    %v9292 = vrsqrt.pop %v9195
    %v9293 = vmul.f32 %v9292, %v9195
    %v9294 = vmul.f32 %v9293, %v9292
    %v9295 = vmul.f32 0.5, %v9294
    %v9296 = vsub.f32 1.5, %v9295
    %v9297 = vmul.f32 %v9292, %v9296
    %vm9298 = vweird.f32 %v9195
    %vm9299 = vweird.f32 %v9292
    %vm9300 = vmor %vm9298, %vm9299
    %v9301 = vsel %vm9300, %v9292, %v9297
    %v9302 = vrsqrt.pop %v9196
    %v9303 = vmul.f32 %v9302, %v9196
    %v9304 = vmul.f32 %v9303, %v9302
    %v9305 = vmul.f32 0.5, %v9304
    %v9306 = vsub.f32 1.5, %v9305
    %v9307 = vmul.f32 %v9302, %v9306
    %vm9308 = vweird.f32 %v9196
    %vm9309 = vweird.f32 %v9302
    %vm9310 = vmor %vm9308, %vm9309
    %v9311 = vsel %vm9310, %v9302, %v9307
    %v9312 = vrsqrt.pop %v9197
    %v9313 = vmul.f32 %v9312, %v9197
    %v9314 = vmul.f32 %v9313, %v9312
    %v9315 = vmul.f32 0.5, %v9314
    %v9316 = vsub.f32 1.5, %v9315
    %v9317 = vmul.f32 %v9312, %v9316
    %vm9318 = vweird.f32 %v9197
    %vm9319 = vweird.f32 %v9312
    %vm9320 = vmor %vm9318, %vm9319
    %v9321 = vsel %vm9320, %v9312, %v9317
    %v9322 = vrsqrt.pop %v9198
    %v9323 = vmul.f32 %v9322, %v9198
    %v9324 = vmul.f32 %v9323, %v9322
    %v9325 = vmul.f32 0.5, %v9324
    %v9326 = vsub.f32 1.5, %v9325
    %v9327 = vmul.f32 %v9322, %v9326
    %vm9328 = vweird.f32 %v9198
    %vm9329 = vweird.f32 %v9322
    %vm9330 = vmor %vm9328, %vm9329
    %v9331 = vsel %vm9330, %v9322, %v9327
    %v9332 = vrsqrt.pop %v9199
    %v9333 = vmul.f32 %v9332, %v9199
    %v9334 = vmul.f32 %v9333, %v9332
    %v9335 = vmul.f32 0.5, %v9334
    %v9336 = vsub.f32 1.5, %v9335
    %v9337 = vmul.f32 %v9332, %v9336
    %vm9338 = vweird.f32 %v9199
    %vm9339 = vweird.f32 %v9332
    %vm9340 = vmor %vm9338, %vm9339
    %v9341 = vsel %vm9340, %v9332, %v9337
    %v9342 = vrsqrt.pop %v9200
    %v9343 = vmul.f32 %v9342, %v9200
    %v9344 = vmul.f32 %v9343, %v9342
    %v9345 = vmul.f32 0.5, %v9344
    %v9346 = vsub.f32 1.5, %v9345
    %v9347 = vmul.f32 %v9342, %v9346
    %vm9348 = vweird.f32 %v9200
    %vm9349 = vweird.f32 %v9342
    %vm9350 = vmor %vm9348, %vm9349
    %v9351 = vsel %vm9350, %v9342, %v9347
    %v9352 = vrsqrt.pop %v9201
    %v9353 = vmul.f32 %v9352, %v9201
    %v9354 = vmul.f32 %v9353, %v9352
    %v9355 = vmul.f32 0.5, %v9354
    %v9356 = vsub.f32 1.5, %v9355
    %v9357 = vmul.f32 %v9352, %v9356
    %vm9358 = vweird.f32 %v9201
    %vm9359 = vweird.f32 %v9352
    %vm9360 = vmor %vm9358, %vm9359
    %v9361 = vsel %vm9360, %v9352, %v9357
    %v9362 = vmul.f32 %v9090, %v9211
    %v9363 = vmul.f32 %v9091, %v9221
    %v9364 = vmul.f32 %v9092, %v9231
    %v9365 = vmul.f32 %v9093, %v9241
    %v9366 = vmul.f32 %v9094, %v9251
    %v9367 = vmul.f32 %v9095, %v9261
    %v9368 = vmul.f32 %v9096, %v9271
    %v9369 = vmul.f32 %v9097, %v9281
    %v9370 = vmul.f32 %v9098, %v9291
    %v9371 = vmul.f32 %v9099, %v9301
    %v9372 = vmul.f32 %v9100, %v9311
    %v9373 = vmul.f32 %v9101, %v9321
    %v9374 = vmul.f32 %v9102, %v9331
    %v9375 = vmul.f32 %v9103, %v9341
    %v9376 = vmul.f32 %v9104, %v9351
    %v9377 = vmul.f32 %v9105, %v9361
    %v9379 = vperm.slane %v9023, 0
    %v9381 = vmul.f32 %v9362, %v9379
    %v9382 = vmul.f32 %v9363, %v9379
    %v9383 = vmul.f32 %v9364, %v9379
    %v9384 = vmul.f32 %v9365, %v9379
    %v9385 = vmul.f32 %v9366, %v9379
    %v9386 = vmul.f32 %v9367, %v9379
    %v9387 = vmul.f32 %v9368, %v9379
    %v9388 = vmul.f32 %v9369, %v9379
    %v9389 = vmul.f32 %v9370, %v9379
    %v9390 = vmul.f32 %v9371, %v9379
    %v9391 = vmul.f32 %v9372, %v9379
    %v9392 = vmul.f32 %v9373, %v9379
    %v9393 = vmul.f32 %v9374, %v9379
    %v9394 = vmul.f32 %v9375, %v9379
    %v9395 = vmul.f32 %v9376, %v9379
    %v9396 = vmul.f32 %v9377, %v9379
    %v9398 = vperm.slane %v9025, 0
    %v9400 = vadd.f32 %v9381, %v9398
    %v9401 = vadd.f32 %v9382, %v9398
    %v9402 = vadd.f32 %v9383, %v9398
    %v9403 = vadd.f32 %v9384, %v9398
    %v9404 = vadd.f32 %v9385, %v9398
    %v9405 = vadd.f32 %v9386, %v9398
    %v9406 = vadd.f32 %v9387, %v9398
    %v9407 = vadd.f32 %v9388, %v9398
    %v9408 = vadd.f32 %v9389, %v9398
    %v9409 = vadd.f32 %v9390, %v9398
    %v9410 = vadd.f32 %v9391, %v9398
    %v9411 = vadd.f32 %v9392, %v9398
    %v9412 = vadd.f32 %v9393, %v9398
    %v9413 = vadd.f32 %v9394, %v9398
    %v9414 = vadd.f32 %v9395, %v9398
    %v9415 = vadd.f32 %v9396, %v9398
    %v9416 = vld [vmem:[%s14] sm:$0x1]
    %v9417 = vld [vmem:[%s15] sm:$0x1]
    %v9418 = vsel %vm298, %v9400, 0.0
    %9419 = vadd.xlane.f32.xlu0 %v9418
    %v9420 = vpop.xlane.xlu0 %9419
    %v9421 = vsel %vm298, %v9401, 0.0
    %9422 = vadd.xlane.f32.xlu0 %v9421
    %v9423 = vpop.xlane.xlu0 %9422
    %v9424 = vsel %vm298, %v9402, 0.0
    %9425 = vadd.xlane.f32.xlu0 %v9424
    %v9426 = vpop.xlane.xlu0 %9425
    %v9427 = vsel %vm298, %v9403, 0.0
    %9428 = vadd.xlane.f32.xlu0 %v9427
    %v9429 = vpop.xlane.xlu0 %9428
    %v9430 = vsel %vm298, %v9404, 0.0
    %9431 = vadd.xlane.f32.xlu0 %v9430
    %v9432 = vpop.xlane.xlu0 %9431
    %v9433 = vsel %vm298, %v9405, 0.0
    %9434 = vadd.xlane.f32.xlu0 %v9433
    %v9435 = vpop.xlane.xlu0 %9434
    %v9436 = vsel %vm298, %v9406, 0.0
    %9437 = vadd.xlane.f32.xlu0 %v9436
    %v9438 = vpop.xlane.xlu0 %9437
    %v9439 = vsel %vm298, %v9407, 0.0
    %9440 = vadd.xlane.f32.xlu0 %v9439
    %v9441 = vpop.xlane.xlu0 %9440
    %v9442 = vsel %vm298, %v9408, 0.0
    %9443 = vadd.xlane.f32.xlu0 %v9442
    %v9444 = vpop.xlane.xlu0 %9443
    %v9445 = vsel %vm298, %v9409, 0.0
    %9446 = vadd.xlane.f32.xlu0 %v9445
    %v9447 = vpop.xlane.xlu0 %9446
    %v9448 = vsel %vm298, %v9410, 0.0
    %9449 = vadd.xlane.f32.xlu0 %v9448
    %v9450 = vpop.xlane.xlu0 %9449
    %v9451 = vsel %vm298, %v9411, 0.0
    %9452 = vadd.xlane.f32.xlu0 %v9451
    %v9453 = vpop.xlane.xlu0 %9452
    %v9454 = vsel %vm298, %v9412, 0.0
    %9455 = vadd.xlane.f32.xlu0 %v9454
    %v9456 = vpop.xlane.xlu0 %9455
    %v9457 = vsel %vm298, %v9413, 0.0
    %9458 = vadd.xlane.f32.xlu0 %v9457
    %v9459 = vpop.xlane.xlu0 %9458
    %v9460 = vsel %vm298, %v9414, 0.0
    %9461 = vadd.xlane.f32.xlu0 %v9460
    %v9462 = vpop.xlane.xlu0 %9461
    %v9463 = vsel %vm298, %v9415, 0.0
    %9464 = vadd.xlane.f32.xlu0 %v9463
    %v9465 = vpop.xlane.xlu0 %9464
    %v9466 = vmul.f32 %v9420, %v3766
    %v9467 = vmul.f32 %v9423, %v3766
    %v9468 = vmul.f32 %v9426, %v3766
    %v9469 = vmul.f32 %v9429, %v3766
    %v9470 = vmul.f32 %v9432, %v3766
    %v9471 = vmul.f32 %v9435, %v3766
    %v9472 = vmul.f32 %v9438, %v3766
    %v9473 = vmul.f32 %v9441, %v3766
    %v9474 = vmul.f32 %v9444, %v3766
    %v9475 = vmul.f32 %v9447, %v3766
    %v9476 = vmul.f32 %v9450, %v3766
    %v9477 = vmul.f32 %v9453, %v3766
    %v9478 = vmul.f32 %v9456, %v3766
    %v9479 = vmul.f32 %v9459, %v3766
    %v9480 = vmul.f32 %v9462, %v3766
    %v9481 = vmul.f32 %v9465, %v3766
    %v9482 = vsub.f32 %v9400, %v9466
    %v9483 = vsub.f32 %v9401, %v9467
    %v9484 = vsub.f32 %v9402, %v9468
    %v9485 = vsub.f32 %v9403, %v9469
    %v9486 = vsub.f32 %v9404, %v9470
    %v9487 = vsub.f32 %v9405, %v9471
    %v9488 = vsub.f32 %v9406, %v9472
    %v9489 = vsub.f32 %v9407, %v9473
    %v9490 = vsub.f32 %v9408, %v9474
    %v9491 = vsub.f32 %v9409, %v9475
    %v9492 = vsub.f32 %v9410, %v9476
    %v9493 = vsub.f32 %v9411, %v9477
    %v9494 = vsub.f32 %v9412, %v9478
    %v9495 = vsub.f32 %v9413, %v9479
    %v9496 = vsub.f32 %v9414, %v9480
    %v9497 = vsub.f32 %v9415, %v9481
    %v9498 = vmul.f32 %v9482, %v9482
    %v9499 = vmul.f32 %v9483, %v9483
    %v9500 = vmul.f32 %v9484, %v9484
    %v9501 = vmul.f32 %v9485, %v9485
    %v9502 = vmul.f32 %v9486, %v9486
    %v9503 = vmul.f32 %v9487, %v9487
    %v9504 = vmul.f32 %v9488, %v9488
    %v9505 = vmul.f32 %v9489, %v9489
    %v9506 = vmul.f32 %v9490, %v9490
    %v9507 = vmul.f32 %v9491, %v9491
    %v9508 = vmul.f32 %v9492, %v9492
    %v9509 = vmul.f32 %v9493, %v9493
    %v9510 = vmul.f32 %v9494, %v9494
    %v9511 = vmul.f32 %v9495, %v9495
    %v9512 = vmul.f32 %v9496, %v9496
    %v9513 = vmul.f32 %v9497, %v9497
    %v9514 = vsel %vm298, %v9498, 0.0
    %9515 = vadd.xlane.f32.xlu0 %v9514
    %v9516 = vpop.xlane.xlu0 %9515
    %v9517 = vsel %vm298, %v9499, 0.0
    %9518 = vadd.xlane.f32.xlu0 %v9517
    %v9519 = vpop.xlane.xlu0 %9518
    %v9520 = vsel %vm298, %v9500, 0.0
    %9521 = vadd.xlane.f32.xlu0 %v9520
    %v9522 = vpop.xlane.xlu0 %9521
    %v9523 = vsel %vm298, %v9501, 0.0
    %9524 = vadd.xlane.f32.xlu0 %v9523
    %v9525 = vpop.xlane.xlu0 %9524
    %v9526 = vsel %vm298, %v9502, 0.0
    %9527 = vadd.xlane.f32.xlu0 %v9526
    %v9528 = vpop.xlane.xlu0 %9527
    %v9529 = vsel %vm298, %v9503, 0.0
    %9530 = vadd.xlane.f32.xlu0 %v9529
    %v9531 = vpop.xlane.xlu0 %9530
    %v9532 = vsel %vm298, %v9504, 0.0
    %9533 = vadd.xlane.f32.xlu0 %v9532
    %v9534 = vpop.xlane.xlu0 %9533
    %v9535 = vsel %vm298, %v9505, 0.0
    %9536 = vadd.xlane.f32.xlu0 %v9535
    %v9537 = vpop.xlane.xlu0 %9536
    %v9538 = vsel %vm298, %v9506, 0.0
    %9539 = vadd.xlane.f32.xlu0 %v9538
    %v9540 = vpop.xlane.xlu0 %9539
    %v9541 = vsel %vm298, %v9507, 0.0
    %9542 = vadd.xlane.f32.xlu0 %v9541
    %v9543 = vpop.xlane.xlu0 %9542
    %v9544 = vsel %vm298, %v9508, 0.0
    %9545 = vadd.xlane.f32.xlu0 %v9544
    %v9546 = vpop.xlane.xlu0 %9545
    %v9547 = vsel %vm298, %v9509, 0.0
    %9548 = vadd.xlane.f32.xlu0 %v9547
    %v9549 = vpop.xlane.xlu0 %9548
    %v9550 = vsel %vm298, %v9510, 0.0
    %9551 = vadd.xlane.f32.xlu0 %v9550
    %v9552 = vpop.xlane.xlu0 %9551
    %v9553 = vsel %vm298, %v9511, 0.0
    %9554 = vadd.xlane.f32.xlu0 %v9553
    %v9555 = vpop.xlane.xlu0 %9554
    %v9556 = vsel %vm298, %v9512, 0.0
    %9557 = vadd.xlane.f32.xlu0 %v9556
    %v9558 = vpop.xlane.xlu0 %9557
    %v9559 = vsel %vm298, %v9513, 0.0
    %9560 = vadd.xlane.f32.xlu0 %v9559
    %v9561 = vpop.xlane.xlu0 %9560
    %v9562 = vmul.f32 %v9516, %v3766
    %v9563 = vmul.f32 %v9519, %v3766
    %v9564 = vmul.f32 %v9522, %v3766
    %v9565 = vmul.f32 %v9525, %v3766
    %v9566 = vmul.f32 %v9528, %v3766
    %v9567 = vmul.f32 %v9531, %v3766
    %v9568 = vmul.f32 %v9534, %v3766
    %v9569 = vmul.f32 %v9537, %v3766
    %v9570 = vmul.f32 %v9540, %v3766
    %v9571 = vmul.f32 %v9543, %v3766
    %v9572 = vmul.f32 %v9546, %v3766
    %v9573 = vmul.f32 %v9549, %v3766
    %v9574 = vmul.f32 %v9552, %v3766
    %v9575 = vmul.f32 %v9555, %v3766
    %v9576 = vmul.f32 %v9558, %v3766
    %v9577 = vmul.f32 %v9561, %v3766
    %v9578 = vadd.f32 %v9562, 1e-05
    %v9579 = vadd.f32 %v9563, 1e-05
    %v9580 = vadd.f32 %v9564, 1e-05
    %v9581 = vadd.f32 %v9565, 1e-05
    %v9582 = vadd.f32 %v9566, 1e-05
    %v9583 = vadd.f32 %v9567, 1e-05
    %v9584 = vadd.f32 %v9568, 1e-05
    %v9585 = vadd.f32 %v9569, 1e-05
    %v9586 = vadd.f32 %v9570, 1e-05
    %v9587 = vadd.f32 %v9571, 1e-05
    %v9588 = vadd.f32 %v9572, 1e-05
    %v9589 = vadd.f32 %v9573, 1e-05
    %v9590 = vadd.f32 %v9574, 1e-05
    %v9591 = vadd.f32 %v9575, 1e-05
    %v9592 = vadd.f32 %v9576, 1e-05
    %v9593 = vadd.f32 %v9577, 1e-05
    %v9594 = vrsqrt.pop %v9578
    %v9595 = vmul.f32 %v9594, %v9578
    %v9596 = vmul.f32 %v9595, %v9594
    %v9597 = vmul.f32 0.5, %v9596
    %v9598 = vsub.f32 1.5, %v9597
    %v9599 = vmul.f32 %v9594, %v9598
    %vm9600 = vweird.f32 %v9578
    %vm9601 = vweird.f32 %v9594
    %vm9602 = vmor %vm9600, %vm9601
    %v9603 = vsel %vm9602, %v9594, %v9599
    %v9604 = vrsqrt.pop %v9579
    %v9605 = vmul.f32 %v9604, %v9579
    %v9606 = vmul.f32 %v9605, %v9604
    %v9607 = vmul.f32 0.5, %v9606
    %v9608 = vsub.f32 1.5, %v9607
    %v9609 = vmul.f32 %v9604, %v9608
    %vm9610 = vweird.f32 %v9579
    %vm9611 = vweird.f32 %v9604
    %vm9612 = vmor %vm9610, %vm9611
    %v9613 = vsel %vm9612, %v9604, %v9609
    %v9614 = vrsqrt.pop %v9580
    %v9615 = vmul.f32 %v9614, %v9580
    %v9616 = vmul.f32 %v9615, %v9614
    %v9617 = vmul.f32 0.5, %v9616
    %v9618 = vsub.f32 1.5, %v9617
    %v9619 = vmul.f32 %v9614, %v9618
    %vm9620 = vweird.f32 %v9580
    %vm9621 = vweird.f32 %v9614
    %vm9622 = vmor %vm9620, %vm9621
    %v9623 = vsel %vm9622, %v9614, %v9619
    %v9624 = vrsqrt.pop %v9581
    %v9625 = vmul.f32 %v9624, %v9581
    %v9626 = vmul.f32 %v9625, %v9624
    %v9627 = vmul.f32 0.5, %v9626
    %v9628 = vsub.f32 1.5, %v9627
    %v9629 = vmul.f32 %v9624, %v9628
    %vm9630 = vweird.f32 %v9581
    %vm9631 = vweird.f32 %v9624
    %vm9632 = vmor %vm9630, %vm9631
    %v9633 = vsel %vm9632, %v9624, %v9629
    %v9634 = vrsqrt.pop %v9582
    %v9635 = vmul.f32 %v9634, %v9582
    %v9636 = vmul.f32 %v9635, %v9634
    %v9637 = vmul.f32 0.5, %v9636
    %v9638 = vsub.f32 1.5, %v9637
    %v9639 = vmul.f32 %v9634, %v9638
    %vm9640 = vweird.f32 %v9582
    %vm9641 = vweird.f32 %v9634
    %vm9642 = vmor %vm9640, %vm9641
    %v9643 = vsel %vm9642, %v9634, %v9639
    %v9644 = vrsqrt.pop %v9583
    %v9645 = vmul.f32 %v9644, %v9583
    %v9646 = vmul.f32 %v9645, %v9644
    %v9647 = vmul.f32 0.5, %v9646
    %v9648 = vsub.f32 1.5, %v9647
    %v9649 = vmul.f32 %v9644, %v9648
    %vm9650 = vweird.f32 %v9583
    %vm9651 = vweird.f32 %v9644
    %vm9652 = vmor %vm9650, %vm9651
    %v9653 = vsel %vm9652, %v9644, %v9649
    %v9654 = vrsqrt.pop %v9584
    %v9655 = vmul.f32 %v9654, %v9584
    %v9656 = vmul.f32 %v9655, %v9654
    %v9657 = vmul.f32 0.5, %v9656
    %v9658 = vsub.f32 1.5, %v9657
    %v9659 = vmul.f32 %v9654, %v9658
    %vm9660 = vweird.f32 %v9584
    %vm9661 = vweird.f32 %v9654
    %vm9662 = vmor %vm9660, %vm9661
    %v9663 = vsel %vm9662, %v9654, %v9659
    %v9664 = vrsqrt.pop %v9585
    %v9665 = vmul.f32 %v9664, %v9585
    %v9666 = vmul.f32 %v9665, %v9664
    %v9667 = vmul.f32 0.5, %v9666
    %v9668 = vsub.f32 1.5, %v9667
    %v9669 = vmul.f32 %v9664, %v9668
    %vm9670 = vweird.f32 %v9585
    %vm9671 = vweird.f32 %v9664
    %vm9672 = vmor %vm9670, %vm9671
    %v9673 = vsel %vm9672, %v9664, %v9669
    %v9674 = vrsqrt.pop %v9586
    %v9675 = vmul.f32 %v9674, %v9586
    %v9676 = vmul.f32 %v9675, %v9674
    %v9677 = vmul.f32 0.5, %v9676
    %v9678 = vsub.f32 1.5, %v9677
    %v9679 = vmul.f32 %v9674, %v9678
    %vm9680 = vweird.f32 %v9586
    %vm9681 = vweird.f32 %v9674
    %vm9682 = vmor %vm9680, %vm9681
    %v9683 = vsel %vm9682, %v9674, %v9679
    %v9684 = vrsqrt.pop %v9587
    %v9685 = vmul.f32 %v9684, %v9587
    %v9686 = vmul.f32 %v9685, %v9684
    %v9687 = vmul.f32 0.5, %v9686
    %v9688 = vsub.f32 1.5, %v9687
    %v9689 = vmul.f32 %v9684, %v9688
    %vm9690 = vweird.f32 %v9587
    %vm9691 = vweird.f32 %v9684
    %vm9692 = vmor %vm9690, %vm9691
    %v9693 = vsel %vm9692, %v9684, %v9689
    %v9694 = vrsqrt.pop %v9588
    %v9695 = vmul.f32 %v9694, %v9588
    %v9696 = vmul.f32 %v9695, %v9694
    %v9697 = vmul.f32 0.5, %v9696
    %v9698 = vsub.f32 1.5, %v9697
    %v9699 = vmul.f32 %v9694, %v9698
    %vm9700 = vweird.f32 %v9588
    %vm9701 = vweird.f32 %v9694
    %vm9702 = vmor %vm9700, %vm9701
    %v9703 = vsel %vm9702, %v9694, %v9699
    %v9704 = vrsqrt.pop %v9589
    %v9705 = vmul.f32 %v9704, %v9589
    %v9706 = vmul.f32 %v9705, %v9704
    %v9707 = vmul.f32 0.5, %v9706
    %v9708 = vsub.f32 1.5, %v9707
    %v9709 = vmul.f32 %v9704, %v9708
    %vm9710 = vweird.f32 %v9589
    %vm9711 = vweird.f32 %v9704
    %vm9712 = vmor %vm9710, %vm9711
    %v9713 = vsel %vm9712, %v9704, %v9709
    %v9714 = vrsqrt.pop %v9590
    %v9715 = vmul.f32 %v9714, %v9590
    %v9716 = vmul.f32 %v9715, %v9714
    %v9717 = vmul.f32 0.5, %v9716
    %v9718 = vsub.f32 1.5, %v9717
    %v9719 = vmul.f32 %v9714, %v9718
    %vm9720 = vweird.f32 %v9590
    %vm9721 = vweird.f32 %v9714
    %vm9722 = vmor %vm9720, %vm9721
    %v9723 = vsel %vm9722, %v9714, %v9719
    %v9724 = vrsqrt.pop %v9591
    %v9725 = vmul.f32 %v9724, %v9591
    %v9726 = vmul.f32 %v9725, %v9724
    %v9727 = vmul.f32 0.5, %v9726
    %v9728 = vsub.f32 1.5, %v9727
    %v9729 = vmul.f32 %v9724, %v9728
    %vm9730 = vweird.f32 %v9591
    %vm9731 = vweird.f32 %v9724
    %vm9732 = vmor %vm9730, %vm9731
    %v9733 = vsel %vm9732, %v9724, %v9729
    %v9734 = vrsqrt.pop %v9592
    %v9735 = vmul.f32 %v9734, %v9592
    %v9736 = vmul.f32 %v9735, %v9734
    %v9737 = vmul.f32 0.5, %v9736
    %v9738 = vsub.f32 1.5, %v9737
    %v9739 = vmul.f32 %v9734, %v9738
    %vm9740 = vweird.f32 %v9592
    %vm9741 = vweird.f32 %v9734
    %vm9742 = vmor %vm9740, %vm9741
    %v9743 = vsel %vm9742, %v9734, %v9739
    %v9744 = vrsqrt.pop %v9593
    %v9745 = vmul.f32 %v9744, %v9593
    %v9746 = vmul.f32 %v9745, %v9744
    %v9747 = vmul.f32 0.5, %v9746
    %v9748 = vsub.f32 1.5, %v9747
    %v9749 = vmul.f32 %v9744, %v9748
    %vm9750 = vweird.f32 %v9593
    %vm9751 = vweird.f32 %v9744
    %vm9752 = vmor %vm9750, %vm9751
    %v9753 = vsel %vm9752, %v9744, %v9749
    %v9754 = vmul.f32 %v9482, %v9603
    %v9755 = vmul.f32 %v9483, %v9613
    %v9756 = vmul.f32 %v9484, %v9623
    %v9757 = vmul.f32 %v9485, %v9633
    %v9758 = vmul.f32 %v9486, %v9643
    %v9759 = vmul.f32 %v9487, %v9653
    %v9760 = vmul.f32 %v9488, %v9663
    %v9761 = vmul.f32 %v9489, %v9673
    %v9762 = vmul.f32 %v9490, %v9683
    %v9763 = vmul.f32 %v9491, %v9693
    %v9764 = vmul.f32 %v9492, %v9703
    %v9765 = vmul.f32 %v9493, %v9713
    %v9766 = vmul.f32 %v9494, %v9723
    %v9767 = vmul.f32 %v9495, %v9733
    %v9768 = vmul.f32 %v9496, %v9743
    %v9769 = vmul.f32 %v9497, %v9753
    %v9771 = vperm.slane %v9416, 0
    %v9773 = vmul.f32 %v9754, %v9771
    %v9774 = vmul.f32 %v9755, %v9771
    %v9775 = vmul.f32 %v9756, %v9771
    %v9776 = vmul.f32 %v9757, %v9771
    %v9777 = vmul.f32 %v9758, %v9771
    %v9778 = vmul.f32 %v9759, %v9771
    %v9779 = vmul.f32 %v9760, %v9771
    %v9780 = vmul.f32 %v9761, %v9771
    %v9781 = vmul.f32 %v9762, %v9771
    %v9782 = vmul.f32 %v9763, %v9771
    %v9783 = vmul.f32 %v9764, %v9771
    %v9784 = vmul.f32 %v9765, %v9771
    %v9785 = vmul.f32 %v9766, %v9771
    %v9786 = vmul.f32 %v9767, %v9771
    %v9787 = vmul.f32 %v9768, %v9771
    %v9788 = vmul.f32 %v9769, %v9771
    %v9790 = vperm.slane %v9417, 0
    %v9792 = vadd.f32 %v9773, %v9790
    %v9793 = vadd.f32 %v9774, %v9790
    %v9794 = vadd.f32 %v9775, %v9790
    %v9795 = vadd.f32 %v9776, %v9790
    %v9796 = vadd.f32 %v9777, %v9790
    %v9797 = vadd.f32 %v9778, %v9790
    %v9798 = vadd.f32 %v9779, %v9790
    %v9799 = vadd.f32 %v9780, %v9790
    %v9800 = vadd.f32 %v9781, %v9790
    %v9801 = vadd.f32 %v9782, %v9790
    %v9802 = vadd.f32 %v9783, %v9790
    %v9803 = vadd.f32 %v9784, %v9790
    %v9804 = vadd.f32 %v9785, %v9790
    %v9805 = vadd.f32 %v9786, %v9790
    %v9806 = vadd.f32 %v9787, %v9790
    %v9807 = vadd.f32 %v9788, %v9790
    %vm9808 = vcmp.lt.s32.totalorder %v317, 14
    %vm9809 = vcmp.lt.s32.totalorder %v318, 14
    %v9810 = vsel %vm9808, 1, 0
    %v9811 = vsel %vm9809, 1, 0
    %v9812 = vcvt.s32.f32 %v9810
    %v9813 = vcvt.s32.f32 %v9811
    %v9814 = vmul.f32 %v9792, %v9812
    %v9815 = vmul.f32 %v9793, %v9813
    %v9816 = vmul.f32 %v9794, %v9812
    %v9817 = vmul.f32 %v9795, %v9813
    %v9818 = vmul.f32 %v9796, %v9812
    %v9819 = vmul.f32 %v9797, %v9813
    %v9820 = vmul.f32 %v9798, %v9812
    %v9821 = vmul.f32 %v9799, %v9813
    %v9822 = vmul.f32 %v9800, %v9812
    %v9823 = vmul.f32 %v9801, %v9813
    %v9824 = vmul.f32 %v9802, %v9812
    %v9825 = vmul.f32 %v9803, %v9813
    %v9826 = vmul.f32 %v9804, %v9812
    %v9827 = vmul.f32 %v9805, %v9813
    %v9828 = vmul.f32 %v9806, %v9812
    %v9829 = vmul.f32 %v9807, %v9813
    %v9830 = vsel %vm298, %v9814, 0.0
    %v9831 = vsel %vm298, %v9815, 0.0
    %v9832 = vadd.f32 %v9830, %v9831
    %v9833 = vrot.slane %v9832, 4
    %v9834 = vadd.f32 %v9832, %v9833
    %v9835 = vrot.slane %v9834, 2
    %v9836 = vadd.f32 %v9834, %v9835
    %v9837 = vrot.slane %v9836, 1
    %v9838 = vadd.f32 %v9836, %v9837
    %v9839 = vsel %vm298, %v9816, 0.0
    %v9840 = vsel %vm298, %v9817, 0.0
    %v9841 = vadd.f32 %v9839, %v9840
    %v9842 = vrot.slane %v9841, 4
    %v9843 = vadd.f32 %v9841, %v9842
    %v9844 = vrot.slane %v9843, 2
    %v9845 = vadd.f32 %v9843, %v9844
    %v9846 = vrot.slane %v9845, 1
    %v9847 = vadd.f32 %v9845, %v9846
    %v9848 = vsel %vm298, %v9818, 0.0
    %v9849 = vsel %vm298, %v9819, 0.0
    %v9850 = vadd.f32 %v9848, %v9849
    %v9851 = vrot.slane %v9850, 4
    %v9852 = vadd.f32 %v9850, %v9851
    %v9853 = vrot.slane %v9852, 2
    %v9854 = vadd.f32 %v9852, %v9853
    %v9855 = vrot.slane %v9854, 1
    %v9856 = vadd.f32 %v9854, %v9855
    %v9857 = vsel %vm298, %v9820, 0.0
    %v9858 = vsel %vm298, %v9821, 0.0
    %v9859 = vadd.f32 %v9857, %v9858
    %v9860 = vrot.slane %v9859, 4
    %v9861 = vadd.f32 %v9859, %v9860
    %v9862 = vrot.slane %v9861, 2
    %v9863 = vadd.f32 %v9861, %v9862
    %v9864 = vrot.slane %v9863, 1
    %v9865 = vadd.f32 %v9863, %v9864
    %v9866 = vsel %vm298, %v9822, 0.0
    %v9867 = vsel %vm298, %v9823, 0.0
    %v9868 = vadd.f32 %v9866, %v9867
    %v9869 = vrot.slane %v9868, 4
    %v9870 = vadd.f32 %v9868, %v9869
    %v9871 = vrot.slane %v9870, 2
    %v9872 = vadd.f32 %v9870, %v9871
    %v9873 = vrot.slane %v9872, 1
    %v9874 = vadd.f32 %v9872, %v9873
    %v9875 = vsel %vm298, %v9824, 0.0
    %v9876 = vsel %vm298, %v9825, 0.0
    %v9877 = vadd.f32 %v9875, %v9876
    %v9878 = vrot.slane %v9877, 4
    %v9879 = vadd.f32 %v9877, %v9878
    %v9880 = vrot.slane %v9879, 2
    %v9881 = vadd.f32 %v9879, %v9880
    %v9882 = vrot.slane %v9881, 1
    %v9883 = vadd.f32 %v9881, %v9882
    %v9884 = vsel %vm298, %v9826, 0.0
    %v9885 = vsel %vm298, %v9827, 0.0
    %v9886 = vadd.f32 %v9884, %v9885
    %v9887 = vrot.slane %v9886, 4
    %v9888 = vadd.f32 %v9886, %v9887
    %v9889 = vrot.slane %v9888, 2
    %v9890 = vadd.f32 %v9888, %v9889
    %v9891 = vrot.slane %v9890, 1
    %v9892 = vadd.f32 %v9890, %v9891
    %v9893 = vsel %vm298, %v9828, 0.0
    %v9894 = vsel %vm298, %v9829, 0.0
    %v9895 = vadd.f32 %v9893, %v9894
    %v9896 = vrot.slane %v9895, 4
    %v9897 = vadd.f32 %v9895, %v9896
    %v9898 = vrot.slane %v9897, 2
    %v9899 = vadd.f32 %v9897, %v9898
    %v9900 = vrot.slane %v9899, 1
    %v9901 = vadd.f32 %v9899, %v9900
    %v9902 = vmul.f32 %v9838, 0.071428575
    %v9903 = vmul.f32 %v9847, 0.071428575
    %v9904 = vmul.f32 %v9856, 0.071428575
    %v9905 = vmul.f32 %v9865, 0.071428575
    %v9906 = vmul.f32 %v9874, 0.071428575
    %v9907 = vmul.f32 %v9883, 0.071428575
    %v9908 = vmul.f32 %v9892, 0.071428575
    %v9909 = vmul.f32 %v9901, 0.071428575
    %v9910 = vld [vmem:[#allocation13] sm:$0xff]
    %v9911 = vld [vmem:[#allocation13 + $0x8] sm:$0xff]
    %v9912 = vld [vmem:[#allocation13 + $0x10] sm:$0xff]
    %v9913 = vld [vmem:[#allocation13 + $0x18] sm:$0xff]
    %v9914 = vld [vmem:[%s17] sm:$0x1]
    %v9916 = vperm.slane %v9914, 0
    %vm9926 = vcmask 1041409
    %v9927 = vsel %vm9926, %v9903, %v9902
    %vm9928 = vcmask 1042434
    %v9929 = vsel %vm9928, %v9904, %v9927
    %vm9930 = vcmask 1043459
    %v9931 = vsel %vm9930, %v9905, %v9929
    %vm9932 = vcmask 1044484
    %v9933 = vsel %vm9932, %v9906, %v9931
    %vm9934 = vcmask 1045509
    %v9935 = vsel %vm9934, %v9907, %v9933
    %vm9936 = vcmask 1046534
    %v9937 = vsel %vm9936, %v9908, %v9935
    %vm9938 = vcmask 1047559
    %v9939 = vsel %vm9938, %v9909, %v9937
    %v9940 = vsel %vm298, %v9939, 0
    %9942 = vmatpush.msra.mxu0 0.0
    %9943 = vmatpush.msra.mxu0 0.0
    %9944 = vmatpush.msra.mxu0 0.0
    %9945 = vmatpush.msra.mxu0 0.0
    %9946 = vmatpush.msra.mxu0 0.0
    %9947 = vmatpush.msra.mxu0 0.0
    %9948 = vmatpush.msra.mxu0 0.0
    %9949 = vmatpush.msra.mxu0 0.0
    %9950 = vmatpush.msra.mxu0 0.0
    %9951 = vmatpush.msra.mxu0 0.0
    %9952 = vmatpush.msra.mxu0 0.0
    %9953 = vmatpush.msra.mxu0 0.0
    %9954 = vmatpush.msra.mxu0 %v9913
    %9955 = vmatpush.msra.mxu0 %v9912
    %9956 = vmatpush.msra.mxu0 %v9911
    %9957 = vmatpush.msra.mxu0 %v9910
    %9958 = vmatmul.f32.gmra.mxu0 %v9940
    %v9959 = vpop.f32.mrf.mxu0
    %v9960 = vadd.f32 %v9916, %v9959
    %9961 = vdwg.mxu0
    %9962 = vst [vmem:[#allocation14] sm:$0xff] %v9960
    // Predicated region
    $region102: #{tpu_custom_call.1} parent=1 // pred_check
      _
    $region103: #{tpu_custom_call.1} parent=1 // pred_check_branch
      %9964 = sbr.rel (0) target = $region105
    $region104: #{tpu_custom_call.1} parent=1 // pred_region
      %9966 = vsyncadd [#allocation4], 0
      %s9968 = sshll.u32 [#allocation14], 4
      %s9969 = int_to_ptr.vmem [resolvable:$true] %s9968
      %s9970 = sshll.u32 %s18, 4
      %s9971 = int_to_ptr.hbm [resolvable:$true] %s9970
      %9973 = dma.vmem_to_hbm [thread:$0]  %s9969, 128, %s9971, [#allocation4]
    $region105: #{tpu_custom_call.1} parent=1 // pred_fallthru
      _
    // Predicated region
    $region106: #{tpu_custom_call.1} parent=1 // pred_check
      _
    $region107: #{tpu_custom_call.1} parent=1 // pred_check_branch
      %9975 = sbr.rel (0) target = $region109
    $region108: #{tpu_custom_call.1} parent=1 // pred_region
      %9977 = dma.done [#allocation4], 128
    $region109: #{tpu_custom_call.1} parent=1 // pred_fallthru
      _
    %9978 = vsyncpa [#allocation3], 1
    %9979 = vsyncpa [#allocation6], 1
    %9980 = vsyncpa [#allocation9], 1
    %9981 = vsyncpa [#allocation12], 1
    %9982 = vsyncpa [#allocation4], 1

</llo_original>
